<compile_context>
chip_gen: v5e
topology: v5e:2x2
jax: 0.10.0
libtpu: 0.0.40
codegen_flags: <defaults>
</compile_context>

<pallas_src>
import math

import numpy as np
import jax
import jax.numpy as jnp
from jax import lax
from jax.experimental import pallas as pl
from jax.experimental.pallas import tpu as pltpu

H = 161            # real LSTM hidden size
HP = 256           # hidden padded to a multiple of 128 (padding is exact, see header)
G4 = 4 * HP        # 1024: width of one full 4-gate block
D_MODEL = 4
FFN = 2048
EPS = 1e-5
N_TR_LAYERS = 2

# rows inside the packed small-parameter slab (lane width 128)
ROW_PE = 0
ROW_NOISE = 1
ROW_BL = 2
ROW_LAYER0 = 3
ROWS_PER_LAYER = 7          # bqkv, bo, ln1w, ln1b, ln2w, ln2b, fb2
SMALL_ROWS = 24             # 3 + 2*7 = 17, padded up to a multiple of 8

_VMEM = pl.BlockSpec(memory_space=pltpu.MemorySpace.VMEM)
_ANY = pl.BlockSpec(memory_space=pl.ANY)


# ----------------------------------------------------------------------------
# Fused kernel: transformer branch first (hides recurrent-weight DMA), then
# the software-pipelined LSTM recurrence, head Linear, reparam sample, add.
# ----------------------------------------------------------------------------
def net_kernel(x_ref, sp_ref, wih0_ref, b0_ref, b1_ref, wl_ref,
               wqkv_ref, wo_ref, fb1_ref, w1_ref, w2_ref,
               wa_hbm_ref, wb_hbm_ref,
               out_ref,
               wa_vmem, wb_vmem, dma_sem):
    S = x_ref.shape[0]
    T = min(S, 5)                 # reference truncates to the last 5 steps when seq > 5

    # ---- kick off the big recurrent-weight DMAs; they overlap everything below ----
    copy_a = pltpu.make_async_copy(wa_hbm_ref, wa_vmem, dma_sem.at[0])
    copy_a.start()
    copy_b = None
    if T > 1:
        copy_b = pltpu.make_async_copy(wb_hbm_ref, wb_vmem, dma_sem.at[1])
        copy_b.start()

    x = x_ref[...]                # (S, 4)
    sp = sp_ref[...]              # (SMALL_ROWS, 128) packed small params

    # ------------------- Transformer branch (result2) -- runs under the DMA ----------
    # PositionalEncoding: the reference indexes pe[:x.size(1)] with x.size(1)==batch==1,
    # so only row pe[0] = [0,1,0,1] is broadcast-added to every time step.
    src = x + sp[ROW_PE:ROW_PE + 1, 0:D_MODEL]

    def layernorm(y, w, b):
        mean = jnp.mean(y, axis=-1, keepdims=True)
        var = jnp.mean((y - mean) ** 2, axis=-1, keepdims=True)
        return (y - mean) * lax.rsqrt(var + EPS) * w + b

    inv_sqrt_d = 1.0 / math.sqrt(D_MODEL)
    for l in range(N_TR_LAYERS):
        base = ROW_LAYER0 + ROWS_PER_LAYER * l
        bqkv = sp[base + 0:base + 1, 0:3 * D_MODEL]
        bo   = sp[base + 1:base + 2, 0:D_MODEL]
        ln1w = sp[base + 2:base + 3, 0:D_MODEL]
        ln1b = sp[base + 3:base + 4, 0:D_MODEL]
        ln2w = sp[base + 4:base + 5, 0:D_MODEL]
        ln2b = sp[base + 5:base + 6, 0:D_MODEL]
        fb2  = sp[base + 6:base + 7, 0:D_MODEL]

        # fused q/k/v projection: one (S,4)x(4,12) matmul
        qkv = jnp.dot(src, wqkv_ref[l], preferred_element_type=jnp.float32) + bqkv
        q = qkv[:, 0:4]
        k = qkv[:, 4:8]
        v = qkv[:, 8:12]
        scores = lax.dot_general(q, k, (((1,), (1,)), ((), ())),
                                 preferred_element_type=jnp.float32) * inv_sqrt_d
        scores = scores - jnp.max(scores, axis=-1, keepdims=True)
        p = jnp.exp(scores)
        p = p / jnp.sum(p, axis=-1, keepdims=True)        # exact divide (parity w/ PyTorch)
        attn = jnp.dot(p, v, preferred_element_type=jnp.float32)            # (S, 4)
        attn = jnp.dot(attn, wo_ref[l], preferred_element_type=jnp.float32) + bo
        # TODO(synk): dropout (p=0.1, train mode) implemented as identity (eval semantics).
        src = layernorm(src + attn, ln1w, ln1b)

        # feed forward; w2 kept lane-dense as (4, 2048), contracted via trans_b
        hmid = jnp.dot(src, w1_ref[l], preferred_element_type=jnp.float32) + fb1_ref[l]
        hmid = jnp.maximum(hmid, 0.0)
        ff = lax.dot_general(hmid, w2_ref[l], (((1,), (1,)), ((), ())),
                             preferred_element_type=jnp.float32) + fb2
        src = layernorm(src + ff, ln2w, ln2b)

    result2 = src[S - 1:S, :]                               # (1, 4)

    # -------------------------- LSTM branch (result1) --------------------------------
    x_lstm = x[S - T:, :]                                   # last T steps (static slice)
    b1 = b1_ref[...]                                        # (1, 4*HP)

    # hoisted layer-0 input projection for all timesteps at once (small K=4 matmul)
    gates0_x = (jnp.dot(x_lstm, wih0_ref[...], preferred_element_type=jnp.float32)
                + b0_ref[...])                              # (T, 4*HP)

    def gate_apply(g, c):
        i = jax.nn.sigmoid(g[:, 0 * HP:1 * HP])
        f = jax.nn.sigmoid(g[:, 1 * HP:2 * HP])
        gg = jnp.tanh(g[:, 2 * HP:3 * HP])
        o = jax.nn.sigmoid(g[:, 3 * HP:4 * HP])
        c_new = f * c + i * gg
        h_new = o * jnp.tanh(c_new)
        return h_new, c_new

    zeros_h = jnp.zeros((1, HP), jnp.float32)
    # prologue: step 0 of layer 0 needs no recurrent matmul (h0(-1) == 0)
    h0, c0 = gate_apply(gates0_x[0:1, :], zeros_h)
    h1, c1 = zeros_h, zeros_h

    # only now do we need the big recurrent weights
    copy_a.wait()
    wa = wa_vmem[...]                                       # (HP, 8*HP) = [whh0 | wih1]
    wb = None

    # software-pipelined recurrence: each step issues one fused matmul producing
    # [ g0_rec(t+1) | g1_inp(t) ] plus an independent h1 @ whh1 that co-issues.
    for t in range(T):                                      # fully unrolled, T <= 5 static
        fA = jnp.dot(h0, wa, preferred_element_type=jnp.float32)        # (1, 8*HP)
        g1 = fA[:, G4:2 * G4] + b1
        if t == 1:
            copy_b.wait()                                   # 1 MiB hidden behind step 0
            wb = wb_vmem[...]                               # (HP, 4*HP) = whh1
        if t > 0:
            g1 = g1 + jnp.dot(h1, wb, preferred_element_type=jnp.float32)
        h1, c1 = gate_apply(g1, c1)
        if t + 1 < T:
            g0 = fA[:, 0:G4] + gates0_x[t + 1:t + 2, :]
            h0, c0 = gate_apply(g0, c0)

    # head Linear kept lane-dense as (8, HP); contract with trans_b
    line = (lax.dot_general(h1, wl_ref[...], (((1,), (1,)), ((), ())),
                            preferred_element_type=jnp.float32)
            + sp[ROW_BL:ROW_BL + 1, 0:8])                   # (1, 8)
    noise = sp[ROW_NOISE:ROW_NOISE + 1, 0:4]
    result1 = line[:, 0:4] + line[:, 4:8] * noise           # mu + sigma * noise

    out_ref[...] = result1 + result2                        # (1, 4)


# ----------------------------------------------------------------------------
# Deterministic parameter construction (synthetic init, PyTorch-like scales)
# ----------------------------------------------------------------------------
def _uniform(key, shape, k):
    return jax.random.uniform(key, shape, jnp.float32, -k, k)


def _pad_gates_T(W, in_pad):
    """(4H, in_dim) PyTorch LSTM weight -> (in_pad, 4*HP), transposed, per-gate lane blocks."""
    W = np.asarray(W, np.float32)
    in_dim = W.shape[1]
    out = np.zeros((in_pad, 4 * HP), np.float32)
    for g in range(4):
        out[:in_dim, g * HP:g * HP + H] = W[g * H:(g + 1) * H, :].T
    return out


def _pad_bias(b_ih, b_hh):
    b = np.asarray(b_ih, np.float32) + np.asarray(b_hh, np.float32)
    out = np.zeros((1, 4 * HP), np.float32)
    for g in range(4):
        out[0, g * HP:g * HP + H] = b[g * H:(g + 1) * H]
    return out


def make_params(key):
    k_lstm, k_tr = jax.random.split(key)

    # ---- LSTM + head ----
    k = 1.0 / math.sqrt(H)
    keys = jax.random.split(k_lstm, 10)
    w_ih_l0 = _uniform(keys[0], (4 * H, 4), k)
    w_hh_l0 = _uniform(keys[1], (4 * H, H), k)
    b_ih_l0 = _uniform(keys[2], (4 * H,), k)
    b_hh_l0 = _uniform(keys[3], (4 * H,), k)
    w_ih_l1 = _uniform(keys[4], (4 * H, H), k)
    w_hh_l1 = _uniform(keys[5], (4 * H, H), k)
    b_ih_l1 = _uniform(keys[6], (4 * H,), k)
    b_hh_l1 = _uniform(keys[7], (4 * H,), k)
    w_line = _uniform(keys[8], (8, H), k)
    b_line = _uniform(keys[9], (8,), k)

    wih0 = jnp.asarray(_pad_gates_T(w_ih_l0, 4))                      # (4, 1024)
    b0 = jnp.asarray(_pad_bias(b_ih_l0, b_hh_l0))                     # (1, 1024)
    b1 = jnp.asarray(_pad_bias(b_ih_l1, b_hh_l1))                     # (1, 1024)
    # fused per-step weight A = [whh0 | wih1]: cols 0:4HP -> g0(t+1), cols 4HP:8HP -> g1(t)
    w_a = jnp.asarray(np.concatenate([_pad_gates_T(w_hh_l0, HP),
                                      _pad_gates_T(w_ih_l1, HP)], axis=1))   # (256, 2048)
    w_b = jnp.asarray(_pad_gates_T(w_hh_l1, HP))                      # (256, 1024)

    wl = np.zeros((8, HP), np.float32)                                # lane-dense (out, in)
    wl[:, :H] = np.asarray(w_line, np.float32)
    wl = jnp.asarray(wl)

    # ---- transformer + packed small-parameter slab ----
    d, f = D_MODEL, FFN
    kd, kf = 1.0 / math.sqrt(d), 1.0 / math.sqrt(f)
    small = np.zeros((SMALL_ROWS, 128), np.float32)

    # PositionalEncoding row 0 of the reference (x.size(1) == batch == 1): [0,1,0,1]
    div_term = np.exp(np.arange(0, d, 2, dtype=np.float32) * (-math.log(10000.0) / d))
    small[ROW_PE, 0:d:2] = np.sin(0.0 * div_term)
    small[ROW_PE, 1:d:2] = np.cos(0.0 * div_term)
    small[ROW_BL, 0:8] = np.asarray(b_line, np.float32)

    wqkv, wo, fb1, w1, w2 = [], [], [], [], []
    for l in range(N_TR_LAYERS):
        ks = jax.random.split(jax.random.fold_in(k_tr, l), 12)
        wq = _uniform(ks[0], (d, d), kd).T
        bq = _uniform(ks[1], (d,), kd)
        wk = _uniform(ks[2], (d, d), kd).T
        bk = _uniform(ks[3], (d,), kd)
        wv = _uniform(ks[4], (d, d), kd).T
        bv = _uniform(ks[5], (d,), kd)
        wqkv.append(jnp.concatenate([wq, wk, wv], axis=1))            # (4, 12)
        wo.append(_uniform(ks[6], (d, d), kd).T)                      # (4, 4)
        bo = _uniform(ks[7], (d,), kd)
        w1.append(_uniform(ks[8], (f, d), kd).T)                      # (4, 2048)  in->out
        fb1.append(_uniform(ks[9], (1, f), kd))                       # (1, 2048)
        w2.append(_uniform(ks[10], (d, f), kf))                       # (4, 2048)  PyTorch (out,in)
        fb2 = _uniform(ks[11], (d,), kf)

        base = ROW_LAYER0 + ROWS_PER_LAYER * l
        small[base + 0, 0:3 * d] = np.concatenate(
            [np.asarray(bq), np.asarray(bk), np.asarray(bv)]).astype(np.float32)
        small[base + 1, 0:d] = np.asarray(bo, np.float32)
        small[base + 2, 0:d] = 1.0        # ln1 weight
        small[base + 3, 0:d] = 0.0        # ln1 bias
        small[base + 4, 0:d] = 1.0        # ln2 weight
        small[base + 5, 0:d] = 0.0        # ln2 bias
        small[base + 6, 0:d] = np.asarray(fb2, np.float32)

    stack = lambda xs: jnp.stack(xs, axis=0)
    return dict(
        small_template=jnp.asarray(small),        # (24, 128): pe, noise slot, bl, per-layer smalls
        wih0=wih0, b0=b0, b1=b1, wl=wl,
        wqkv=stack(wqkv),                         # (2, 4, 12)
        wo=stack(wo),                             # (2, 4, 4)
        fb1=stack(fb1),                           # (2, 1, 2048)
        w1=stack(w1),                             # (2, 4, 2048)
        w2=stack(w2),                             # (2, 4, 2048)
        w_a=w_a,                                  # (256, 2048)  manual-DMA
        w_b=w_b,                                  # (256, 1024)  manual-DMA
    )


# ----------------------------------------------------------------------------
# Full Net.forward (single pallas_call)
# ----------------------------------------------------------------------------
def net_forward(inp, params, noise):
    b, s, d = inp.shape                 # (batch=1, seq, 4)
    assert b == 1, "reference model requires batch == 1 (lineOut.view(8))"
    # torch .view(shape[1], shape[0], shape[2]); batch dim squeezed out.
    x2d = jnp.reshape(inp, (s, b, d))[:, 0, :]                 # (seq, 4)

    # drop the runtime noise sample into its slot of the packed small-param slab
    small = lax.dynamic_update_slice(params["small_template"],
                                     jnp.reshape(noise, (1, 4)), (ROW_NOISE, 0))

    kernel = pl.pallas_call(
        net_kernel,
        out_shape=jax.ShapeDtypeStruct((1, 4), jnp.float32),
        in_specs=[_VMEM] * 11 + [_ANY, _ANY],       # big recurrent weights stay in HBM
        out_specs=_VMEM,
        scratch_shapes=[
            pltpu.VMEM((HP, 8 * HP), jnp.float32),  # w_A landing buffer (2 MiB)
            pltpu.VMEM((HP, 4 * HP), jnp.float32),  # w_B landing buffer (1 MiB)
            pltpu.SemaphoreType.DMA((2,)),
        ],
    )
    return kernel(x2d, small,
                  params["wih0"], params["b0"], params["b1"], params["wl"],
                  params["wqkv"], params["wo"], params["fb1"], params["w1"], params["w2"],
                  params["w_a"], params["w_b"])


if __name__ == "__main__":
    key = jax.random.PRNGKey(0)
    k_in, k_params, k_noise = jax.random.split(key, 3)

    # input: (batch=1, seq=8, features=4) -> matches Net(input_size=4)
    inp = jax.random.normal(k_in, (1, 8, 4), jnp.float32)
    params = make_params(k_params)
    noise = jax.random.normal(k_noise, (1, 4), jnp.float32)   # stands in for torch.randn_like

    fwd = jax.jit(net_forward)
    out = fwd(inp, params, noise)
    out = jax.block_until_ready(out)
    assert out.shape == (1, 4) and out.dtype == jnp.float32
    print("KERNEL_OK")
</pallas_src>

<mosaic_0001>
module attributes {stable_mosaic.version = 11 : i64} {
  func.func @net_kernel(%arg0: memref<8x4xf32, #tpu.memory_space<vmem>>, %arg1: memref<24x128xf32, #tpu.memory_space<vmem>>, %arg2: memref<4x1024xf32, #tpu.memory_space<vmem>>, %arg3: memref<1x1024xf32, #tpu.memory_space<vmem>>, %arg4: memref<1x1024xf32, #tpu.memory_space<vmem>>, %arg5: memref<8x256xf32, #tpu.memory_space<vmem>>, %arg6: memref<2x4x12xf32, #tpu.memory_space<vmem>>, %arg7: memref<2x4x4xf32, #tpu.memory_space<vmem>>, %arg8: memref<2x1x2048xf32, #tpu.memory_space<vmem>>, %arg9: memref<2x4x2048xf32, #tpu.memory_space<vmem>>, %arg10: memref<2x4x2048xf32, #tpu.memory_space<vmem>>, %arg11: memref<256x2048xf32, #tpu.memory_space<any>>, %arg12: memref<256x1024xf32, #tpu.memory_space<any>>, %arg13: memref<1x4xf32, #tpu.memory_space<vmem>>, %arg14: memref<256x2048xf32, #tpu.memory_space<vmem>>, %arg15: memref<256x1024xf32, #tpu.memory_space<vmem>>, %arg16: memref<2x!tpu.dma_semaphore, #tpu.memory_space<semaphore_mem>>) attributes {dimension_semantics = [], scalar_prefetch = 0 : i64, scratch_operands = 3 : i64, tpu.core_type = #tpu.core_type<tc>} {
    %c0_i32 = arith.constant 0 : i32
    %0 = tpu.memref_slice %arg16[%c0_i32] : memref<2x!tpu.dma_semaphore, #tpu.memory_space<semaphore_mem>> -> memref<1x!tpu.dma_semaphore, #tpu.memory_space<semaphore_mem>>
    %1 = tpu.memref_squeeze %0 : memref<1x!tpu.dma_semaphore, #tpu.memory_space<semaphore_mem>> -> memref<!tpu.dma_semaphore, #tpu.memory_space<semaphore_mem>>
    tpu.enqueue_dma source(%arg11 : memref<256x2048xf32, #tpu.memory_space<any>>) target(%arg14 : memref<256x2048xf32, #tpu.memory_space<vmem>>) target_semaphore(%1 : memref<!tpu.dma_semaphore, #tpu.memory_space<semaphore_mem>>)
    %c1_i32 = arith.constant 1 : i32
    %2 = tpu.memref_slice %arg16[%c1_i32] : memref<2x!tpu.dma_semaphore, #tpu.memory_space<semaphore_mem>> -> memref<1x!tpu.dma_semaphore, #tpu.memory_space<semaphore_mem>>
    %3 = tpu.memref_squeeze %2 : memref<1x!tpu.dma_semaphore, #tpu.memory_space<semaphore_mem>> -> memref<!tpu.dma_semaphore, #tpu.memory_space<semaphore_mem>>
    tpu.enqueue_dma source(%arg12 : memref<256x1024xf32, #tpu.memory_space<any>>) target(%arg15 : memref<256x1024xf32, #tpu.memory_space<vmem>>) target_semaphore(%3 : memref<!tpu.dma_semaphore, #tpu.memory_space<semaphore_mem>>)
    %c0 = arith.constant 0 : index
    %c0_0 = arith.constant 0 : index
    %4 = vector.load %arg0[%c0, %c0_0] : memref<8x4xf32, #tpu.memory_space<vmem>>, vector<8x4xf32>
    %c0_1 = arith.constant 0 : index
    %c0_2 = arith.constant 0 : index
    %5 = vector.load %arg1[%c0_1, %c0_2] : memref<24x128xf32, #tpu.memory_space<vmem>>, vector<24x128xf32>
    %6 = vector.extract_strided_slice %5 {offsets = [0, 0], sizes = [1, 4], strides = [1, 1]} : vector<24x128xf32> to vector<1x4xf32>
    %7 = vector.broadcast %6 : vector<1x4xf32> to vector<8x4xf32>
    %8 = arith.addf %4, %7 : vector<8x4xf32>
    %9 = vector.extract_strided_slice %5 {offsets = [3, 0], sizes = [1, 12], strides = [1, 1]} : vector<24x128xf32> to vector<1x12xf32>
    %10 = vector.extract_strided_slice %5 {offsets = [4, 0], sizes = [1, 4], strides = [1, 1]} : vector<24x128xf32> to vector<1x4xf32>
    %11 = vector.extract_strided_slice %5 {offsets = [5, 0], sizes = [1, 4], strides = [1, 1]} : vector<24x128xf32> to vector<1x4xf32>
    %12 = vector.extract_strided_slice %5 {offsets = [6, 0], sizes = [1, 4], strides = [1, 1]} : vector<24x128xf32> to vector<1x4xf32>
    %13 = vector.extract_strided_slice %5 {offsets = [7, 0], sizes = [1, 4], strides = [1, 1]} : vector<24x128xf32> to vector<1x4xf32>
    %14 = vector.extract_strided_slice %5 {offsets = [8, 0], sizes = [1, 4], strides = [1, 1]} : vector<24x128xf32> to vector<1x4xf32>
    %15 = vector.extract_strided_slice %5 {offsets = [9, 0], sizes = [1, 4], strides = [1, 1]} : vector<24x128xf32> to vector<1x4xf32>
    %c0_3 = arith.constant 0 : index
    %c0_4 = arith.constant 0 : index
    %c0_5 = arith.constant 0 : index
    %16 = vector.load %arg6[%c0_3, %c0_4, %c0_5] : memref<2x4x12xf32, #tpu.memory_space<vmem>>, vector<1x4x12xf32>
    %17 = vector.shape_cast %16 : vector<1x4x12xf32> to vector<4x12xf32>
    %cst = arith.constant dense<0.000000e+00> : vector<8x12xf32>
    %18 = tpu.matmul %8, %17, %cst {dimension_numbers = #tpu.dot_dimension_numbers<[1], [0], [0], [1], [0, 0, 1, 1], [], []>} : vector<8x4xf32>, vector<4x12xf32>, vector<8x12xf32> -> vector<8x12xf32>
    %19 = vector.broadcast %9 : vector<1x12xf32> to vector<8x12xf32>
    %20 = arith.addf %18, %19 : vector<8x12xf32>
    %21 = vector.extract_strided_slice %20 {offsets = [0, 0], sizes = [8, 4], strides = [1, 1]} : vector<8x12xf32> to vector<8x4xf32>
    %22 = vector.extract_strided_slice %20 {offsets = [0, 4], sizes = [8, 4], strides = [1, 1]} : vector<8x12xf32> to vector<8x4xf32>
    %23 = vector.extract_strided_slice %20 {offsets = [0, 8], sizes = [8, 4], strides = [1, 1]} : vector<8x12xf32> to vector<8x4xf32>
    %cst_6 = arith.constant dense<0.000000e+00> : vector<8x8xf32>
    %24 = tpu.matmul %21, %22, %cst_6 {dimension_numbers = #tpu.dot_dimension_numbers<[1], [1], [0], [0], [0, 0, 1, 0], [], []>} : vector<8x4xf32>, vector<8x4xf32>, vector<8x8xf32> -> vector<8x8xf32>
    %cst_7 = arith.constant 5.000000e-01 : f32
    %25 = vector.broadcast %cst_7 : f32 to vector<8x8xf32>
    %26 = arith.mulf %24, %25 : vector<8x8xf32>
    %cst_8 = arith.constant dense<0xFF800000> : vector<8xf32>
    %27 = vector.multi_reduction <maximumf>, %26, %cst_8 [1] : vector<8x8xf32> to vector<8xf32>
    %28 = vector.shape_cast %27 : vector<8xf32> to vector<8x1xf32>
    %29 = vector.broadcast %28 : vector<8x1xf32> to vector<8x8xf32>
    %30 = arith.subf %26, %29 : vector<8x8xf32>
    %31 = math.exp %30 : vector<8x8xf32>
    %cst_9 = arith.constant dense<0.000000e+00> : vector<8xf32>
    %32 = vector.multi_reduction <add>, %31, %cst_9 [1] : vector<8x8xf32> to vector<8xf32>
    %33 = vector.shape_cast %32 : vector<8xf32> to vector<8x1xf32>
    %34 = vector.broadcast %33 : vector<8x1xf32> to vector<8x8xf32>
    %35 = arith.divf %31, %34 : vector<8x8xf32>
    %cst_10 = arith.constant dense<0.000000e+00> : vector<8x4xf32>
    %36 = tpu.matmul %35, %23, %cst_10 {dimension_numbers = #tpu.dot_dimension_numbers<[1], [0], [0], [1], [0, 0, 1, 1], [], []>} : vector<8x8xf32>, vector<8x4xf32>, vector<8x4xf32> -> vector<8x4xf32>
    %c0_11 = arith.constant 0 : index
    %c0_12 = arith.constant 0 : index
    %c0_13 = arith.constant 0 : index
    %37 = vector.load %arg7[%c0_11, %c0_12, %c0_13] : memref<2x4x4xf32, #tpu.memory_space<vmem>>, vector<1x4x4xf32>
    %38 = vector.shape_cast %37 : vector<1x4x4xf32> to vector<4x4xf32>
    %cst_14 = arith.constant dense<0.000000e+00> : vector<8x4xf32>
    %39 = tpu.matmul %36, %38, %cst_14 {dimension_numbers = #tpu.dot_dimension_numbers<[1], [0], [0], [1], [0, 0, 1, 1], [], []>} : vector<8x4xf32>, vector<4x4xf32>, vector<8x4xf32> -> vector<8x4xf32>
    %40 = vector.broadcast %10 : vector<1x4xf32> to vector<8x4xf32>
    %41 = arith.addf %39, %40 : vector<8x4xf32>
    %42 = arith.addf %8, %41 : vector<8x4xf32>
    %cst_15 = arith.constant dense<0.000000e+00> : vector<8xf32>
    %43 = vector.multi_reduction <add>, %42, %cst_15 [1] : vector<8x4xf32> to vector<8xf32>
    %44 = vector.shape_cast %43 : vector<8xf32> to vector<8x1xf32>
    %cst_16 = arith.constant 4.000000e+00 : f32
    %45 = vector.broadcast %cst_16 : f32 to vector<8x1xf32>
    %46 = arith.divf %44, %45 : vector<8x1xf32>
    %47 = vector.broadcast %46 : vector<8x1xf32> to vector<8x4xf32>
    %48 = arith.subf %42, %47 : vector<8x4xf32>
    %49 = arith.mulf %48, %48 : vector<8x4xf32>
    %cst_17 = arith.constant dense<0.000000e+00> : vector<8xf32>
    %50 = vector.multi_reduction <add>, %49, %cst_17 [1] : vector<8x4xf32> to vector<8xf32>
    %51 = vector.shape_cast %50 : vector<8xf32> to vector<8x1xf32>
    %cst_18 = arith.constant 4.000000e+00 : f32
    %52 = vector.broadcast %cst_18 : f32 to vector<8x1xf32>
    %53 = arith.divf %51, %52 : vector<8x1xf32>
    %54 = vector.broadcast %46 : vector<8x1xf32> to vector<8x4xf32>
    %55 = arith.subf %42, %54 : vector<8x4xf32>
    %cst_19 = arith.constant 9.99999974E-6 : f32
    %56 = vector.broadcast %cst_19 : f32 to vector<8x1xf32>
    %57 = arith.addf %53, %56 : vector<8x1xf32>
    %58 = math.rsqrt %57 : vector<8x1xf32>
    %59 = vector.broadcast %58 : vector<8x1xf32> to vector<8x4xf32>
    %60 = arith.mulf %55, %59 : vector<8x4xf32>
    %61 = vector.broadcast %11 : vector<1x4xf32> to vector<8x4xf32>
    %62 = arith.mulf %60, %61 : vector<8x4xf32>
    %63 = vector.broadcast %12 : vector<1x4xf32> to vector<8x4xf32>
    %64 = arith.addf %62, %63 : vector<8x4xf32>
    %c0_20 = arith.constant 0 : index
    %c0_21 = arith.constant 0 : index
    %c0_22 = arith.constant 0 : index
    %65 = vector.load %arg9[%c0_20, %c0_21, %c0_22] : memref<2x4x2048xf32, #tpu.memory_space<vmem>>, vector<1x4x2048xf32>
    %66 = vector.shape_cast %65 : vector<1x4x2048xf32> to vector<4x2048xf32>
    %cst_23 = arith.constant dense<0.000000e+00> : vector<8x2048xf32>
    %67 = tpu.matmul %64, %66, %cst_23 {dimension_numbers = #tpu.dot_dimension_numbers<[1], [0], [0], [1], [0, 0, 1, 1], [], []>} : vector<8x4xf32>, vector<4x2048xf32>, vector<8x2048xf32> -> vector<8x2048xf32>
    %c0_24 = arith.constant 0 : index
    %c0_25 = arith.constant 0 : index
    %c0_26 = arith.constant 0 : index
    %68 = vector.load %arg8[%c0_24, %c0_25, %c0_26] : memref<2x1x2048xf32, #tpu.memory_space<vmem>>, vector<1x1x2048xf32>
    %69 = vector.shape_cast %68 : vector<1x1x2048xf32> to vector<1x2048xf32>
    %70 = vector.broadcast %69 : vector<1x2048xf32> to vector<8x2048xf32>
    %71 = arith.addf %67, %70 : vector<8x2048xf32>
    %cst_27 = arith.constant 0.000000e+00 : f32
    %72 = vector.broadcast %cst_27 : f32 to vector<8x2048xf32>
    %73 = arith.maximumf %71, %72 : vector<8x2048xf32>
    %c0_28 = arith.constant 0 : index
    %c0_29 = arith.constant 0 : index
    %c0_30 = arith.constant 0 : index
    %74 = vector.load %arg10[%c0_28, %c0_29, %c0_30] : memref<2x4x2048xf32, #tpu.memory_space<vmem>>, vector<1x4x2048xf32>
    %75 = vector.shape_cast %74 : vector<1x4x2048xf32> to vector<4x2048xf32>
    %cst_31 = arith.constant dense<0.000000e+00> : vector<8x4xf32>
    %76 = tpu.matmul %73, %75, %cst_31 {dimension_numbers = #tpu.dot_dimension_numbers<[1], [1], [0], [0], [0, 0, 1, 0], [], []>} : vector<8x2048xf32>, vector<4x2048xf32>, vector<8x4xf32> -> vector<8x4xf32>
    %77 = vector.broadcast %15 : vector<1x4xf32> to vector<8x4xf32>
    %78 = arith.addf %76, %77 : vector<8x4xf32>
    %79 = arith.addf %64, %78 : vector<8x4xf32>
    %cst_32 = arith.constant dense<0.000000e+00> : vector<8xf32>
    %80 = vector.multi_reduction <add>, %79, %cst_32 [1] : vector<8x4xf32> to vector<8xf32>
    %81 = vector.shape_cast %80 : vector<8xf32> to vector<8x1xf32>
    %cst_33 = arith.constant 4.000000e+00 : f32
    %82 = vector.broadcast %cst_33 : f32 to vector<8x1xf32>
    %83 = arith.divf %81, %82 : vector<8x1xf32>
    %84 = vector.broadcast %83 : vector<8x1xf32> to vector<8x4xf32>
    %85 = arith.subf %79, %84 : vector<8x4xf32>
    %86 = arith.mulf %85, %85 : vector<8x4xf32>
    %cst_34 = arith.constant dense<0.000000e+00> : vector<8xf32>
    %87 = vector.multi_reduction <add>, %86, %cst_34 [1] : vector<8x4xf32> to vector<8xf32>
    %88 = vector.shape_cast %87 : vector<8xf32> to vector<8x1xf32>
    %cst_35 = arith.constant 4.000000e+00 : f32
    %89 = vector.broadcast %cst_35 : f32 to vector<8x1xf32>
    %90 = arith.divf %88, %89 : vector<8x1xf32>
    %91 = vector.broadcast %83 : vector<8x1xf32> to vector<8x4xf32>
    %92 = arith.subf %79, %91 : vector<8x4xf32>
    %cst_36 = arith.constant 9.99999974E-6 : f32
    %93 = vector.broadcast %cst_36 : f32 to vector<8x1xf32>
    %94 = arith.addf %90, %93 : vector<8x1xf32>
    %95 = math.rsqrt %94 : vector<8x1xf32>
    %96 = vector.broadcast %95 : vector<8x1xf32> to vector<8x4xf32>
    %97 = arith.mulf %92, %96 : vector<8x4xf32>
    %98 = vector.broadcast %13 : vector<1x4xf32> to vector<8x4xf32>
    %99 = arith.mulf %97, %98 : vector<8x4xf32>
    %100 = vector.broadcast %14 : vector<1x4xf32> to vector<8x4xf32>
    %101 = arith.addf %99, %100 : vector<8x4xf32>
    %102 = vector.extract_strided_slice %5 {offsets = [10, 0], sizes = [1, 12], strides = [1, 1]} : vector<24x128xf32> to vector<1x12xf32>
    %103 = vector.extract_strided_slice %5 {offsets = [11, 0], sizes = [1, 4], strides = [1, 1]} : vector<24x128xf32> to vector<1x4xf32>
    %104 = vector.extract_strided_slice %5 {offsets = [12, 0], sizes = [1, 4], strides = [1, 1]} : vector<24x128xf32> to vector<1x4xf32>
    %105 = vector.extract_strided_slice %5 {offsets = [13, 0], sizes = [1, 4], strides = [1, 1]} : vector<24x128xf32> to vector<1x4xf32>
    %106 = vector.extract_strided_slice %5 {offsets = [14, 0], sizes = [1, 4], strides = [1, 1]} : vector<24x128xf32> to vector<1x4xf32>
    %107 = vector.extract_strided_slice %5 {offsets = [15, 0], sizes = [1, 4], strides = [1, 1]} : vector<24x128xf32> to vector<1x4xf32>
    %108 = vector.extract_strided_slice %5 {offsets = [16, 0], sizes = [1, 4], strides = [1, 1]} : vector<24x128xf32> to vector<1x4xf32>
    %c1 = arith.constant 1 : index
    %c0_37 = arith.constant 0 : index
    %c0_38 = arith.constant 0 : index
    %109 = vector.load %arg6[%c1, %c0_37, %c0_38] : memref<2x4x12xf32, #tpu.memory_space<vmem>>, vector<1x4x12xf32>
    %110 = vector.shape_cast %109 : vector<1x4x12xf32> to vector<4x12xf32>
    %cst_39 = arith.constant dense<0.000000e+00> : vector<8x12xf32>
    %111 = tpu.matmul %101, %110, %cst_39 {dimension_numbers = #tpu.dot_dimension_numbers<[1], [0], [0], [1], [0, 0, 1, 1], [], []>} : vector<8x4xf32>, vector<4x12xf32>, vector<8x12xf32> -> vector<8x12xf32>
    %112 = vector.broadcast %102 : vector<1x12xf32> to vector<8x12xf32>
    %113 = arith.addf %111, %112 : vector<8x12xf32>
    %114 = vector.extract_strided_slice %113 {offsets = [0, 0], sizes = [8, 4], strides = [1, 1]} : vector<8x12xf32> to vector<8x4xf32>
    %115 = vector.extract_strided_slice %113 {offsets = [0, 4], sizes = [8, 4], strides = [1, 1]} : vector<8x12xf32> to vector<8x4xf32>
    %116 = vector.extract_strided_slice %113 {offsets = [0, 8], sizes = [8, 4], strides = [1, 1]} : vector<8x12xf32> to vector<8x4xf32>
    %cst_40 = arith.constant dense<0.000000e+00> : vector<8x8xf32>
    %117 = tpu.matmul %114, %115, %cst_40 {dimension_numbers = #tpu.dot_dimension_numbers<[1], [1], [0], [0], [0, 0, 1, 0], [], []>} : vector<8x4xf32>, vector<8x4xf32>, vector<8x8xf32> -> vector<8x8xf32>
    %cst_41 = arith.constant 5.000000e-01 : f32
    %118 = vector.broadcast %cst_41 : f32 to vector<8x8xf32>
    %119 = arith.mulf %117, %118 : vector<8x8xf32>
    %cst_42 = arith.constant dense<0xFF800000> : vector<8xf32>
    %120 = vector.multi_reduction <maximumf>, %119, %cst_42 [1] : vector<8x8xf32> to vector<8xf32>
    %121 = vector.shape_cast %120 : vector<8xf32> to vector<8x1xf32>
    %122 = vector.broadcast %121 : vector<8x1xf32> to vector<8x8xf32>
    %123 = arith.subf %119, %122 : vector<8x8xf32>
    %124 = math.exp %123 : vector<8x8xf32>
    %cst_43 = arith.constant dense<0.000000e+00> : vector<8xf32>
    %125 = vector.multi_reduction <add>, %124, %cst_43 [1] : vector<8x8xf32> to vector<8xf32>
    %126 = vector.shape_cast %125 : vector<8xf32> to vector<8x1xf32>
    %127 = vector.broadcast %126 : vector<8x1xf32> to vector<8x8xf32>
    %128 = arith.divf %124, %127 : vector<8x8xf32>
    %cst_44 = arith.constant dense<0.000000e+00> : vector<8x4xf32>
    %129 = tpu.matmul %128, %116, %cst_44 {dimension_numbers = #tpu.dot_dimension_numbers<[1], [0], [0], [1], [0, 0, 1, 1], [], []>} : vector<8x8xf32>, vector<8x4xf32>, vector<8x4xf32> -> vector<8x4xf32>
    %c1_45 = arith.constant 1 : index
    %c0_46 = arith.constant 0 : index
    %c0_47 = arith.constant 0 : index
    %130 = vector.load %arg7[%c1_45, %c0_46, %c0_47] : memref<2x4x4xf32, #tpu.memory_space<vmem>>, vector<1x4x4xf32>
    %131 = vector.shape_cast %130 : vector<1x4x4xf32> to vector<4x4xf32>
    %cst_48 = arith.constant dense<0.000000e+00> : vector<8x4xf32>
    %132 = tpu.matmul %129, %131, %cst_48 {dimension_numbers = #tpu.dot_dimension_numbers<[1], [0], [0], [1], [0, 0, 1, 1], [], []>} : vector<8x4xf32>, vector<4x4xf32>, vector<8x4xf32> -> vector<8x4xf32>
    %133 = vector.broadcast %103 : vector<1x4xf32> to vector<8x4xf32>
    %134 = arith.addf %132, %133 : vector<8x4xf32>
    %135 = arith.addf %101, %134 : vector<8x4xf32>
    %cst_49 = arith.constant dense<0.000000e+00> : vector<8xf32>
    %136 = vector.multi_reduction <add>, %135, %cst_49 [1] : vector<8x4xf32> to vector<8xf32>
    %137 = vector.shape_cast %136 : vector<8xf32> to vector<8x1xf32>
    %cst_50 = arith.constant 4.000000e+00 : f32
    %138 = vector.broadcast %cst_50 : f32 to vector<8x1xf32>
    %139 = arith.divf %137, %138 : vector<8x1xf32>
    %140 = vector.broadcast %139 : vector<8x1xf32> to vector<8x4xf32>
    %141 = arith.subf %135, %140 : vector<8x4xf32>
    %142 = arith.mulf %141, %141 : vector<8x4xf32>
    %cst_51 = arith.constant dense<0.000000e+00> : vector<8xf32>
    %143 = vector.multi_reduction <add>, %142, %cst_51 [1] : vector<8x4xf32> to vector<8xf32>
    %144 = vector.shape_cast %143 : vector<8xf32> to vector<8x1xf32>
    %cst_52 = arith.constant 4.000000e+00 : f32
    %145 = vector.broadcast %cst_52 : f32 to vector<8x1xf32>
    %146 = arith.divf %144, %145 : vector<8x1xf32>
    %147 = vector.broadcast %139 : vector<8x1xf32> to vector<8x4xf32>
    %148 = arith.subf %135, %147 : vector<8x4xf32>
    %cst_53 = arith.constant 9.99999974E-6 : f32
    %149 = vector.broadcast %cst_53 : f32 to vector<8x1xf32>
    %150 = arith.addf %146, %149 : vector<8x1xf32>
    %151 = math.rsqrt %150 : vector<8x1xf32>
    %152 = vector.broadcast %151 : vector<8x1xf32> to vector<8x4xf32>
    %153 = arith.mulf %148, %152 : vector<8x4xf32>
    %154 = vector.broadcast %104 : vector<1x4xf32> to vector<8x4xf32>
    %155 = arith.mulf %153, %154 : vector<8x4xf32>
    %156 = vector.broadcast %105 : vector<1x4xf32> to vector<8x4xf32>
    %157 = arith.addf %155, %156 : vector<8x4xf32>
    %c1_54 = arith.constant 1 : index
    %c0_55 = arith.constant 0 : index
    %c0_56 = arith.constant 0 : index
    %158 = vector.load %arg9[%c1_54, %c0_55, %c0_56] : memref<2x4x2048xf32, #tpu.memory_space<vmem>>, vector<1x4x2048xf32>
    %159 = vector.shape_cast %158 : vector<1x4x2048xf32> to vector<4x2048xf32>
    %cst_57 = arith.constant dense<0.000000e+00> : vector<8x2048xf32>
    %160 = tpu.matmul %157, %159, %cst_57 {dimension_numbers = #tpu.dot_dimension_numbers<[1], [0], [0], [1], [0, 0, 1, 1], [], []>} : vector<8x4xf32>, vector<4x2048xf32>, vector<8x2048xf32> -> vector<8x2048xf32>
    %c1_58 = arith.constant 1 : index
    %c0_59 = arith.constant 0 : index
    %c0_60 = arith.constant 0 : index
    %161 = vector.load %arg8[%c1_58, %c0_59, %c0_60] : memref<2x1x2048xf32, #tpu.memory_space<vmem>>, vector<1x1x2048xf32>
    %162 = vector.shape_cast %161 : vector<1x1x2048xf32> to vector<1x2048xf32>
    %163 = vector.broadcast %162 : vector<1x2048xf32> to vector<8x2048xf32>
    %164 = arith.addf %160, %163 : vector<8x2048xf32>
    %cst_61 = arith.constant 0.000000e+00 : f32
    %165 = vector.broadcast %cst_61 : f32 to vector<8x2048xf32>
    %166 = arith.maximumf %164, %165 : vector<8x2048xf32>
    %c1_62 = arith.constant 1 : index
    %c0_63 = arith.constant 0 : index
    %c0_64 = arith.constant 0 : index
    %167 = vector.load %arg10[%c1_62, %c0_63, %c0_64] : memref<2x4x2048xf32, #tpu.memory_space<vmem>>, vector<1x4x2048xf32>
    %168 = vector.shape_cast %167 : vector<1x4x2048xf32> to vector<4x2048xf32>
    %cst_65 = arith.constant dense<0.000000e+00> : vector<8x4xf32>
    %169 = tpu.matmul %166, %168, %cst_65 {dimension_numbers = #tpu.dot_dimension_numbers<[1], [1], [0], [0], [0, 0, 1, 0], [], []>} : vector<8x2048xf32>, vector<4x2048xf32>, vector<8x4xf32> -> vector<8x4xf32>
    %170 = vector.broadcast %108 : vector<1x4xf32> to vector<8x4xf32>
    %171 = arith.addf %169, %170 : vector<8x4xf32>
    %172 = arith.addf %157, %171 : vector<8x4xf32>
    %cst_66 = arith.constant dense<0.000000e+00> : vector<8xf32>
    %173 = vector.multi_reduction <add>, %172, %cst_66 [1] : vector<8x4xf32> to vector<8xf32>
    %174 = vector.shape_cast %173 : vector<8xf32> to vector<8x1xf32>
    %cst_67 = arith.constant 4.000000e+00 : f32
    %175 = vector.broadcast %cst_67 : f32 to vector<8x1xf32>
    %176 = arith.divf %174, %175 : vector<8x1xf32>
    %177 = vector.broadcast %176 : vector<8x1xf32> to vector<8x4xf32>
    %178 = arith.subf %172, %177 : vector<8x4xf32>
    %179 = arith.mulf %178, %178 : vector<8x4xf32>
    %cst_68 = arith.constant dense<0.000000e+00> : vector<8xf32>
    %180 = vector.multi_reduction <add>, %179, %cst_68 [1] : vector<8x4xf32> to vector<8xf32>
    %181 = vector.shape_cast %180 : vector<8xf32> to vector<8x1xf32>
    %cst_69 = arith.constant 4.000000e+00 : f32
    %182 = vector.broadcast %cst_69 : f32 to vector<8x1xf32>
    %183 = arith.divf %181, %182 : vector<8x1xf32>
    %184 = vector.broadcast %176 : vector<8x1xf32> to vector<8x4xf32>
    %185 = arith.subf %172, %184 : vector<8x4xf32>
    %cst_70 = arith.constant 9.99999974E-6 : f32
    %186 = vector.broadcast %cst_70 : f32 to vector<8x1xf32>
    %187 = arith.addf %183, %186 : vector<8x1xf32>
    %188 = math.rsqrt %187 : vector<8x1xf32>
    %189 = vector.broadcast %188 : vector<8x1xf32> to vector<8x4xf32>
    %190 = arith.mulf %185, %189 : vector<8x4xf32>
    %191 = vector.broadcast %106 : vector<1x4xf32> to vector<8x4xf32>
    %192 = arith.mulf %190, %191 : vector<8x4xf32>
    %193 = vector.broadcast %107 : vector<1x4xf32> to vector<8x4xf32>
    %194 = arith.addf %192, %193 : vector<8x4xf32>
    %195 = vector.extract_strided_slice %194 {offsets = [7, 0], sizes = [1, 4], strides = [1, 1]} : vector<8x4xf32> to vector<1x4xf32>
    %196 = vector.extract_strided_slice %4 {offsets = [3, 0], sizes = [5, 4], strides = [1, 1]} : vector<8x4xf32> to vector<5x4xf32>
    %c0_71 = arith.constant 0 : index
    %c0_72 = arith.constant 0 : index
    %197 = vector.load %arg4[%c0_71, %c0_72] : memref<1x1024xf32, #tpu.memory_space<vmem>>, vector<1x1024xf32>
    %c0_73 = arith.constant 0 : index
    %c0_74 = arith.constant 0 : index
    %198 = vector.load %arg2[%c0_73, %c0_74] : memref<4x1024xf32, #tpu.memory_space<vmem>>, vector<4x1024xf32>
    %cst_75 = arith.constant dense<0.000000e+00> : vector<5x1024xf32>
    %199 = tpu.matmul %196, %198, %cst_75 {dimension_numbers = #tpu.dot_dimension_numbers<[1], [0], [0], [1], [0, 0, 1, 1], [], []>} : vector<5x4xf32>, vector<4x1024xf32>, vector<5x1024xf32> -> vector<5x1024xf32>
    %c0_76 = arith.constant 0 : index
    %c0_77 = arith.constant 0 : index
    %200 = vector.load %arg3[%c0_76, %c0_77] : memref<1x1024xf32, #tpu.memory_space<vmem>>, vector<1x1024xf32>
    %201 = vector.broadcast %200 : vector<1x1024xf32> to vector<5x1024xf32>
    %202 = arith.addf %199, %201 : vector<5x1024xf32>
    %cst_78 = arith.constant 0.000000e+00 : f32
    %203 = vector.broadcast %cst_78 : f32 to vector<1x256xf32>
    %204 = vector.extract_strided_slice %202 {offsets = [0, 0], sizes = [1, 1024], strides = [1, 1]} : vector<5x1024xf32> to vector<1x1024xf32>
    %205 = vector.extract_strided_slice %204 {offsets = [0, 0], sizes = [1, 256], strides = [1, 1]} : vector<1x1024xf32> to vector<1x256xf32>
    %206 = arith.negf %205 : vector<1x256xf32>
    %207 = math.exp %206 : vector<1x256xf32>
    %cst_79 = arith.constant 1.000000e+00 : f32
    %208 = vector.broadcast %cst_79 : f32 to vector<1x256xf32>
    %209 = arith.addf %208, %207 : vector<1x256xf32>
    %210 = arith.divf %208, %209 : vector<1x256xf32>
    %211 = vector.extract_strided_slice %204 {offsets = [0, 256], sizes = [1, 256], strides = [1, 1]} : vector<1x1024xf32> to vector<1x256xf32>
    %212 = arith.negf %211 : vector<1x256xf32>
    %213 = math.exp %212 : vector<1x256xf32>
    %cst_80 = arith.constant 1.000000e+00 : f32
    %214 = vector.broadcast %cst_80 : f32 to vector<1x256xf32>
    %215 = arith.addf %214, %213 : vector<1x256xf32>
    %216 = arith.divf %214, %215 : vector<1x256xf32>
    %217 = vector.extract_strided_slice %204 {offsets = [0, 512], sizes = [1, 256], strides = [1, 1]} : vector<1x1024xf32> to vector<1x256xf32>
    %218 = math.tanh %217 : vector<1x256xf32>
    %219 = vector.extract_strided_slice %204 {offsets = [0, 768], sizes = [1, 256], strides = [1, 1]} : vector<1x1024xf32> to vector<1x256xf32>
    %220 = arith.negf %219 : vector<1x256xf32>
    %221 = math.exp %220 : vector<1x256xf32>
    %cst_81 = arith.constant 1.000000e+00 : f32
    %222 = vector.broadcast %cst_81 : f32 to vector<1x256xf32>
    %223 = arith.addf %222, %221 : vector<1x256xf32>
    %224 = arith.divf %222, %223 : vector<1x256xf32>
    %225 = arith.mulf %216, %203 : vector<1x256xf32>
    %226 = arith.mulf %210, %218 : vector<1x256xf32>
    %227 = arith.addf %225, %226 : vector<1x256xf32>
    %228 = math.tanh %227 : vector<1x256xf32>
    %229 = arith.mulf %224, %228 : vector<1x256xf32>
    %c0_i32_82 = arith.constant 0 : i32
    %230 = tpu.memref_slice %arg16[%c0_i32_82] : memref<2x!tpu.dma_semaphore, #tpu.memory_space<semaphore_mem>> -> memref<1x!tpu.dma_semaphore, #tpu.memory_space<semaphore_mem>>
    %231 = tpu.memref_squeeze %230 : memref<1x!tpu.dma_semaphore, #tpu.memory_space<semaphore_mem>> -> memref<!tpu.dma_semaphore, #tpu.memory_space<semaphore_mem>>
    tpu.wait_dma2 semaphore(%231 : memref<!tpu.dma_semaphore, #tpu.memory_space<semaphore_mem>>) src(%arg11 : memref<256x2048xf32, #tpu.memory_space<any>>) dst(%arg14 : memref<256x2048xf32, #tpu.memory_space<vmem>>)
    %c0_83 = arith.constant 0 : index
    %c0_84 = arith.constant 0 : index
    %232 = vector.load %arg14[%c0_83, %c0_84] : memref<256x2048xf32, #tpu.memory_space<vmem>>, vector<256x2048xf32>
    %cst_85 = arith.constant dense<0.000000e+00> : vector<1x2048xf32>
    %233 = tpu.matmul %229, %232, %cst_85 {dimension_numbers = #tpu.dot_dimension_numbers<[1], [0], [0], [1], [0, 0, 1, 1], [], []>} : vector<1x256xf32>, vector<256x2048xf32>, vector<1x2048xf32> -> vector<1x2048xf32>
    %234 = vector.extract_strided_slice %233 {offsets = [0, 1024], sizes = [1, 1024], strides = [1, 1]} : vector<1x2048xf32> to vector<1x1024xf32>
    %235 = arith.addf %234, %197 : vector<1x1024xf32>
    %236 = vector.extract_strided_slice %235 {offsets = [0, 0], sizes = [1, 256], strides = [1, 1]} : vector<1x1024xf32> to vector<1x256xf32>
    %237 = arith.negf %236 : vector<1x256xf32>
    %238 = math.exp %237 : vector<1x256xf32>
    %cst_86 = arith.constant 1.000000e+00 : f32
    %239 = vector.broadcast %cst_86 : f32 to vector<1x256xf32>
    %240 = arith.addf %239, %238 : vector<1x256xf32>
    %241 = arith.divf %239, %240 : vector<1x256xf32>
    %242 = vector.extract_strided_slice %235 {offsets = [0, 256], sizes = [1, 256], strides = [1, 1]} : vector<1x1024xf32> to vector<1x256xf32>
    %243 = arith.negf %242 : vector<1x256xf32>
    %244 = math.exp %243 : vector<1x256xf32>
    %cst_87 = arith.constant 1.000000e+00 : f32
    %245 = vector.broadcast %cst_87 : f32 to vector<1x256xf32>
    %246 = arith.addf %245, %244 : vector<1x256xf32>
    %247 = arith.divf %245, %246 : vector<1x256xf32>
    %248 = vector.extract_strided_slice %235 {offsets = [0, 512], sizes = [1, 256], strides = [1, 1]} : vector<1x1024xf32> to vector<1x256xf32>
    %249 = math.tanh %248 : vector<1x256xf32>
    %250 = vector.extract_strided_slice %235 {offsets = [0, 768], sizes = [1, 256], strides = [1, 1]} : vector<1x1024xf32> to vector<1x256xf32>
    %251 = arith.negf %250 : vector<1x256xf32>
    %252 = math.exp %251 : vector<1x256xf32>
    %cst_88 = arith.constant 1.000000e+00 : f32
    %253 = vector.broadcast %cst_88 : f32 to vector<1x256xf32>
    %254 = arith.addf %253, %252 : vector<1x256xf32>
    %255 = arith.divf %253, %254 : vector<1x256xf32>
    %256 = arith.mulf %247, %203 : vector<1x256xf32>
    %257 = arith.mulf %241, %249 : vector<1x256xf32>
    %258 = arith.addf %256, %257 : vector<1x256xf32>
    %259 = math.tanh %258 : vector<1x256xf32>
    %260 = arith.mulf %255, %259 : vector<1x256xf32>
    %261 = vector.extract_strided_slice %233 {offsets = [0, 0], sizes = [1, 1024], strides = [1, 1]} : vector<1x2048xf32> to vector<1x1024xf32>
    %262 = vector.extract_strided_slice %202 {offsets = [1, 0], sizes = [1, 1024], strides = [1, 1]} : vector<5x1024xf32> to vector<1x1024xf32>
    %263 = arith.addf %261, %262 : vector<1x1024xf32>
    %264 = vector.extract_strided_slice %263 {offsets = [0, 0], sizes = [1, 256], strides = [1, 1]} : vector<1x1024xf32> to vector<1x256xf32>
    %265 = arith.negf %264 : vector<1x256xf32>
    %266 = math.exp %265 : vector<1x256xf32>
    %cst_89 = arith.constant 1.000000e+00 : f32
    %267 = vector.broadcast %cst_89 : f32 to vector<1x256xf32>
    %268 = arith.addf %267, %266 : vector<1x256xf32>
    %269 = arith.divf %267, %268 : vector<1x256xf32>
    %270 = vector.extract_strided_slice %263 {offsets = [0, 256], sizes = [1, 256], strides = [1, 1]} : vector<1x1024xf32> to vector<1x256xf32>
    %271 = arith.negf %270 : vector<1x256xf32>
    %272 = math.exp %271 : vector<1x256xf32>
    %cst_90 = arith.constant 1.000000e+00 : f32
    %273 = vector.broadcast %cst_90 : f32 to vector<1x256xf32>
    %274 = arith.addf %273, %272 : vector<1x256xf32>
    %275 = arith.divf %273, %274 : vector<1x256xf32>
    %276 = vector.extract_strided_slice %263 {offsets = [0, 512], sizes = [1, 256], strides = [1, 1]} : vector<1x1024xf32> to vector<1x256xf32>
    %277 = math.tanh %276 : vector<1x256xf32>
    %278 = vector.extract_strided_slice %263 {offsets = [0, 768], sizes = [1, 256], strides = [1, 1]} : vector<1x1024xf32> to vector<1x256xf32>
    %279 = arith.negf %278 : vector<1x256xf32>
    %280 = math.exp %279 : vector<1x256xf32>
    %cst_91 = arith.constant 1.000000e+00 : f32
    %281 = vector.broadcast %cst_91 : f32 to vector<1x256xf32>
    %282 = arith.addf %281, %280 : vector<1x256xf32>
    %283 = arith.divf %281, %282 : vector<1x256xf32>
    %284 = arith.mulf %275, %227 : vector<1x256xf32>
    %285 = arith.mulf %269, %277 : vector<1x256xf32>
    %286 = arith.addf %284, %285 : vector<1x256xf32>
    %287 = math.tanh %286 : vector<1x256xf32>
    %288 = arith.mulf %283, %287 : vector<1x256xf32>
    %cst_92 = arith.constant dense<0.000000e+00> : vector<1x2048xf32>
    %289 = tpu.matmul %288, %232, %cst_92 {dimension_numbers = #tpu.dot_dimension_numbers<[1], [0], [0], [1], [0, 0, 1, 1], [], []>} : vector<1x256xf32>, vector<256x2048xf32>, vector<1x2048xf32> -> vector<1x2048xf32>
    %290 = vector.extract_strided_slice %289 {offsets = [0, 1024], sizes = [1, 1024], strides = [1, 1]} : vector<1x2048xf32> to vector<1x1024xf32>
    %291 = arith.addf %290, %197 : vector<1x1024xf32>
    %c1_i32_93 = arith.constant 1 : i32
    %292 = tpu.memref_slice %arg16[%c1_i32_93] : memref<2x!tpu.dma_semaphore, #tpu.memory_space<semaphore_mem>> -> memref<1x!tpu.dma_semaphore, #tpu.memory_space<semaphore_mem>>
    %293 = tpu.memref_squeeze %292 : memref<1x!tpu.dma_semaphore, #tpu.memory_space<semaphore_mem>> -> memref<!tpu.dma_semaphore, #tpu.memory_space<semaphore_mem>>
    tpu.wait_dma2 semaphore(%293 : memref<!tpu.dma_semaphore, #tpu.memory_space<semaphore_mem>>) src(%arg12 : memref<256x1024xf32, #tpu.memory_space<any>>) dst(%arg15 : memref<256x1024xf32, #tpu.memory_space<vmem>>)
    %c0_94 = arith.constant 0 : index
    %c0_95 = arith.constant 0 : index
    %294 = vector.load %arg15[%c0_94, %c0_95] : memref<256x1024xf32, #tpu.memory_space<vmem>>, vector<256x1024xf32>
    %cst_96 = arith.constant dense<0.000000e+00> : vector<1x1024xf32>
    %295 = tpu.matmul %260, %294, %cst_96 {dimension_numbers = #tpu.dot_dimension_numbers<[1], [0], [0], [1], [0, 0, 1, 1], [], []>} : vector<1x256xf32>, vector<256x1024xf32>, vector<1x1024xf32> -> vector<1x1024xf32>
    %296 = arith.addf %291, %295 : vector<1x1024xf32>
    %297 = vector.extract_strided_slice %296 {offsets = [0, 0], sizes = [1, 256], strides = [1, 1]} : vector<1x1024xf32> to vector<1x256xf32>
    %298 = arith.negf %297 : vector<1x256xf32>
    %299 = math.exp %298 : vector<1x256xf32>
    %cst_97 = arith.constant 1.000000e+00 : f32
    %300 = vector.broadcast %cst_97 : f32 to vector<1x256xf32>
    %301 = arith.addf %300, %299 : vector<1x256xf32>
    %302 = arith.divf %300, %301 : vector<1x256xf32>
    %303 = vector.extract_strided_slice %296 {offsets = [0, 256], sizes = [1, 256], strides = [1, 1]} : vector<1x1024xf32> to vector<1x256xf32>
    %304 = arith.negf %303 : vector<1x256xf32>
    %305 = math.exp %304 : vector<1x256xf32>
    %cst_98 = arith.constant 1.000000e+00 : f32
    %306 = vector.broadcast %cst_98 : f32 to vector<1x256xf32>
    %307 = arith.addf %306, %305 : vector<1x256xf32>
    %308 = arith.divf %306, %307 : vector<1x256xf32>
    %309 = vector.extract_strided_slice %296 {offsets = [0, 512], sizes = [1, 256], strides = [1, 1]} : vector<1x1024xf32> to vector<1x256xf32>
    %310 = math.tanh %309 : vector<1x256xf32>
    %311 = vector.extract_strided_slice %296 {offsets = [0, 768], sizes = [1, 256], strides = [1, 1]} : vector<1x1024xf32> to vector<1x256xf32>
    %312 = arith.negf %311 : vector<1x256xf32>
    %313 = math.exp %312 : vector<1x256xf32>
    %cst_99 = arith.constant 1.000000e+00 : f32
    %314 = vector.broadcast %cst_99 : f32 to vector<1x256xf32>
    %315 = arith.addf %314, %313 : vector<1x256xf32>
    %316 = arith.divf %314, %315 : vector<1x256xf32>
    %317 = arith.mulf %308, %258 : vector<1x256xf32>
    %318 = arith.mulf %302, %310 : vector<1x256xf32>
    %319 = arith.addf %317, %318 : vector<1x256xf32>
    %320 = math.tanh %319 : vector<1x256xf32>
    %321 = arith.mulf %316, %320 : vector<1x256xf32>
    %322 = vector.extract_strided_slice %289 {offsets = [0, 0], sizes = [1, 1024], strides = [1, 1]} : vector<1x2048xf32> to vector<1x1024xf32>
    %323 = vector.extract_strided_slice %202 {offsets = [2, 0], sizes = [1, 1024], strides = [1, 1]} : vector<5x1024xf32> to vector<1x1024xf32>
    %324 = arith.addf %322, %323 : vector<1x1024xf32>
    %325 = vector.extract_strided_slice %324 {offsets = [0, 0], sizes = [1, 256], strides = [1, 1]} : vector<1x1024xf32> to vector<1x256xf32>
    %326 = arith.negf %325 : vector<1x256xf32>
    %327 = math.exp %326 : vector<1x256xf32>
    %cst_100 = arith.constant 1.000000e+00 : f32
    %328 = vector.broadcast %cst_100 : f32 to vector<1x256xf32>
    %329 = arith.addf %328, %327 : vector<1x256xf32>
    %330 = arith.divf %328, %329 : vector<1x256xf32>
    %331 = vector.extract_strided_slice %324 {offsets = [0, 256], sizes = [1, 256], strides = [1, 1]} : vector<1x1024xf32> to vector<1x256xf32>
    %332 = arith.negf %331 : vector<1x256xf32>
    %333 = math.exp %332 : vector<1x256xf32>
    %cst_101 = arith.constant 1.000000e+00 : f32
    %334 = vector.broadcast %cst_101 : f32 to vector<1x256xf32>
    %335 = arith.addf %334, %333 : vector<1x256xf32>
    %336 = arith.divf %334, %335 : vector<1x256xf32>
    %337 = vector.extract_strided_slice %324 {offsets = [0, 512], sizes = [1, 256], strides = [1, 1]} : vector<1x1024xf32> to vector<1x256xf32>
    %338 = math.tanh %337 : vector<1x256xf32>
    %339 = vector.extract_strided_slice %324 {offsets = [0, 768], sizes = [1, 256], strides = [1, 1]} : vector<1x1024xf32> to vector<1x256xf32>
    %340 = arith.negf %339 : vector<1x256xf32>
    %341 = math.exp %340 : vector<1x256xf32>
    %cst_102 = arith.constant 1.000000e+00 : f32
    %342 = vector.broadcast %cst_102 : f32 to vector<1x256xf32>
    %343 = arith.addf %342, %341 : vector<1x256xf32>
    %344 = arith.divf %342, %343 : vector<1x256xf32>
    %345 = arith.mulf %336, %286 : vector<1x256xf32>
    %346 = arith.mulf %330, %338 : vector<1x256xf32>
    %347 = arith.addf %345, %346 : vector<1x256xf32>
    %348 = math.tanh %347 : vector<1x256xf32>
    %349 = arith.mulf %344, %348 : vector<1x256xf32>
    %cst_103 = arith.constant dense<0.000000e+00> : vector<1x2048xf32>
    %350 = tpu.matmul %349, %232, %cst_103 {dimension_numbers = #tpu.dot_dimension_numbers<[1], [0], [0], [1], [0, 0, 1, 1], [], []>} : vector<1x256xf32>, vector<256x2048xf32>, vector<1x2048xf32> -> vector<1x2048xf32>
    %351 = vector.extract_strided_slice %350 {offsets = [0, 1024], sizes = [1, 1024], strides = [1, 1]} : vector<1x2048xf32> to vector<1x1024xf32>
    %352 = arith.addf %351, %197 : vector<1x1024xf32>
    %cst_104 = arith.constant dense<0.000000e+00> : vector<1x1024xf32>
    %353 = tpu.matmul %321, %294, %cst_104 {dimension_numbers = #tpu.dot_dimension_numbers<[1], [0], [0], [1], [0, 0, 1, 1], [], []>} : vector<1x256xf32>, vector<256x1024xf32>, vector<1x1024xf32> -> vector<1x1024xf32>
    %354 = arith.addf %352, %353 : vector<1x1024xf32>
    %355 = vector.extract_strided_slice %354 {offsets = [0, 0], sizes = [1, 256], strides = [1, 1]} : vector<1x1024xf32> to vector<1x256xf32>
    %356 = arith.negf %355 : vector<1x256xf32>
    %357 = math.exp %356 : vector<1x256xf32>
    %cst_105 = arith.constant 1.000000e+00 : f32
    %358 = vector.broadcast %cst_105 : f32 to vector<1x256xf32>
    %359 = arith.addf %358, %357 : vector<1x256xf32>
    %360 = arith.divf %358, %359 : vector<1x256xf32>
    %361 = vector.extract_strided_slice %354 {offsets = [0, 256], sizes = [1, 256], strides = [1, 1]} : vector<1x1024xf32> to vector<1x256xf32>
    %362 = arith.negf %361 : vector<1x256xf32>
    %363 = math.exp %362 : vector<1x256xf32>
    %cst_106 = arith.constant 1.000000e+00 : f32
    %364 = vector.broadcast %cst_106 : f32 to vector<1x256xf32>
    %365 = arith.addf %364, %363 : vector<1x256xf32>
    %366 = arith.divf %364, %365 : vector<1x256xf32>
    %367 = vector.extract_strided_slice %354 {offsets = [0, 512], sizes = [1, 256], strides = [1, 1]} : vector<1x1024xf32> to vector<1x256xf32>
    %368 = math.tanh %367 : vector<1x256xf32>
    %369 = vector.extract_strided_slice %354 {offsets = [0, 768], sizes = [1, 256], strides = [1, 1]} : vector<1x1024xf32> to vector<1x256xf32>
    %370 = arith.negf %369 : vector<1x256xf32>
    %371 = math.exp %370 : vector<1x256xf32>
    %cst_107 = arith.constant 1.000000e+00 : f32
    %372 = vector.broadcast %cst_107 : f32 to vector<1x256xf32>
    %373 = arith.addf %372, %371 : vector<1x256xf32>
    %374 = arith.divf %372, %373 : vector<1x256xf32>
    %375 = arith.mulf %366, %319 : vector<1x256xf32>
    %376 = arith.mulf %360, %368 : vector<1x256xf32>
    %377 = arith.addf %375, %376 : vector<1x256xf32>
    %378 = math.tanh %377 : vector<1x256xf32>
    %379 = arith.mulf %374, %378 : vector<1x256xf32>
    %380 = vector.extract_strided_slice %350 {offsets = [0, 0], sizes = [1, 1024], strides = [1, 1]} : vector<1x2048xf32> to vector<1x1024xf32>
    %381 = vector.extract_strided_slice %202 {offsets = [3, 0], sizes = [1, 1024], strides = [1, 1]} : vector<5x1024xf32> to vector<1x1024xf32>
    %382 = arith.addf %380, %381 : vector<1x1024xf32>
    %383 = vector.extract_strided_slice %382 {offsets = [0, 0], sizes = [1, 256], strides = [1, 1]} : vector<1x1024xf32> to vector<1x256xf32>
    %384 = arith.negf %383 : vector<1x256xf32>
    %385 = math.exp %384 : vector<1x256xf32>
    %cst_108 = arith.constant 1.000000e+00 : f32
    %386 = vector.broadcast %cst_108 : f32 to vector<1x256xf32>
    %387 = arith.addf %386, %385 : vector<1x256xf32>
    %388 = arith.divf %386, %387 : vector<1x256xf32>
    %389 = vector.extract_strided_slice %382 {offsets = [0, 256], sizes = [1, 256], strides = [1, 1]} : vector<1x1024xf32> to vector<1x256xf32>
    %390 = arith.negf %389 : vector<1x256xf32>
    %391 = math.exp %390 : vector<1x256xf32>
    %cst_109 = arith.constant 1.000000e+00 : f32
    %392 = vector.broadcast %cst_109 : f32 to vector<1x256xf32>
    %393 = arith.addf %392, %391 : vector<1x256xf32>
    %394 = arith.divf %392, %393 : vector<1x256xf32>
    %395 = vector.extract_strided_slice %382 {offsets = [0, 512], sizes = [1, 256], strides = [1, 1]} : vector<1x1024xf32> to vector<1x256xf32>
    %396 = math.tanh %395 : vector<1x256xf32>
    %397 = vector.extract_strided_slice %382 {offsets = [0, 768], sizes = [1, 256], strides = [1, 1]} : vector<1x1024xf32> to vector<1x256xf32>
    %398 = arith.negf %397 : vector<1x256xf32>
    %399 = math.exp %398 : vector<1x256xf32>
    %cst_110 = arith.constant 1.000000e+00 : f32
    %400 = vector.broadcast %cst_110 : f32 to vector<1x256xf32>
    %401 = arith.addf %400, %399 : vector<1x256xf32>
    %402 = arith.divf %400, %401 : vector<1x256xf32>
    %403 = arith.mulf %394, %347 : vector<1x256xf32>
    %404 = arith.mulf %388, %396 : vector<1x256xf32>
    %405 = arith.addf %403, %404 : vector<1x256xf32>
    %406 = math.tanh %405 : vector<1x256xf32>
    %407 = arith.mulf %402, %406 : vector<1x256xf32>
    %cst_111 = arith.constant dense<0.000000e+00> : vector<1x2048xf32>
    %408 = tpu.matmul %407, %232, %cst_111 {dimension_numbers = #tpu.dot_dimension_numbers<[1], [0], [0], [1], [0, 0, 1, 1], [], []>} : vector<1x256xf32>, vector<256x2048xf32>, vector<1x2048xf32> -> vector<1x2048xf32>
    %409 = vector.extract_strided_slice %408 {offsets = [0, 1024], sizes = [1, 1024], strides = [1, 1]} : vector<1x2048xf32> to vector<1x1024xf32>
    %410 = arith.addf %409, %197 : vector<1x1024xf32>
    %cst_112 = arith.constant dense<0.000000e+00> : vector<1x1024xf32>
    %411 = tpu.matmul %379, %294, %cst_112 {dimension_numbers = #tpu.dot_dimension_numbers<[1], [0], [0], [1], [0, 0, 1, 1], [], []>} : vector<1x256xf32>, vector<256x1024xf32>, vector<1x1024xf32> -> vector<1x1024xf32>
    %412 = arith.addf %410, %411 : vector<1x1024xf32>
    %413 = vector.extract_strided_slice %412 {offsets = [0, 0], sizes = [1, 256], strides = [1, 1]} : vector<1x1024xf32> to vector<1x256xf32>
    %414 = arith.negf %413 : vector<1x256xf32>
    %415 = math.exp %414 : vector<1x256xf32>
    %cst_113 = arith.constant 1.000000e+00 : f32
    %416 = vector.broadcast %cst_113 : f32 to vector<1x256xf32>
    %417 = arith.addf %416, %415 : vector<1x256xf32>
    %418 = arith.divf %416, %417 : vector<1x256xf32>
    %419 = vector.extract_strided_slice %412 {offsets = [0, 256], sizes = [1, 256], strides = [1, 1]} : vector<1x1024xf32> to vector<1x256xf32>
    %420 = arith.negf %419 : vector<1x256xf32>
    %421 = math.exp %420 : vector<1x256xf32>
    %cst_114 = arith.constant 1.000000e+00 : f32
    %422 = vector.broadcast %cst_114 : f32 to vector<1x256xf32>
    %423 = arith.addf %422, %421 : vector<1x256xf32>
    %424 = arith.divf %422, %423 : vector<1x256xf32>
    %425 = vector.extract_strided_slice %412 {offsets = [0, 512], sizes = [1, 256], strides = [1, 1]} : vector<1x1024xf32> to vector<1x256xf32>
    %426 = math.tanh %425 : vector<1x256xf32>
    %427 = vector.extract_strided_slice %412 {offsets = [0, 768], sizes = [1, 256], strides = [1, 1]} : vector<1x1024xf32> to vector<1x256xf32>
    %428 = arith.negf %427 : vector<1x256xf32>
    %429 = math.exp %428 : vector<1x256xf32>
    %cst_115 = arith.constant 1.000000e+00 : f32
    %430 = vector.broadcast %cst_115 : f32 to vector<1x256xf32>
    %431 = arith.addf %430, %429 : vector<1x256xf32>
    %432 = arith.divf %430, %431 : vector<1x256xf32>
    %433 = arith.mulf %424, %377 : vector<1x256xf32>
    %434 = arith.mulf %418, %426 : vector<1x256xf32>
    %435 = arith.addf %433, %434 : vector<1x256xf32>
    %436 = math.tanh %435 : vector<1x256xf32>
    %437 = arith.mulf %432, %436 : vector<1x256xf32>
    %438 = vector.extract_strided_slice %408 {offsets = [0, 0], sizes = [1, 1024], strides = [1, 1]} : vector<1x2048xf32> to vector<1x1024xf32>
    %439 = vector.extract_strided_slice %202 {offsets = [4, 0], sizes = [1, 1024], strides = [1, 1]} : vector<5x1024xf32> to vector<1x1024xf32>
    %440 = arith.addf %438, %439 : vector<1x1024xf32>
    %441 = vector.extract_strided_slice %440 {offsets = [0, 0], sizes = [1, 256], strides = [1, 1]} : vector<1x1024xf32> to vector<1x256xf32>
    %442 = arith.negf %441 : vector<1x256xf32>
    %443 = math.exp %442 : vector<1x256xf32>
    %cst_116 = arith.constant 1.000000e+00 : f32
    %444 = vector.broadcast %cst_116 : f32 to vector<1x256xf32>
    %445 = arith.addf %444, %443 : vector<1x256xf32>
    %446 = arith.divf %444, %445 : vector<1x256xf32>
    %447 = vector.extract_strided_slice %440 {offsets = [0, 256], sizes = [1, 256], strides = [1, 1]} : vector<1x1024xf32> to vector<1x256xf32>
    %448 = arith.negf %447 : vector<1x256xf32>
    %449 = math.exp %448 : vector<1x256xf32>
    %cst_117 = arith.constant 1.000000e+00 : f32
    %450 = vector.broadcast %cst_117 : f32 to vector<1x256xf32>
    %451 = arith.addf %450, %449 : vector<1x256xf32>
    %452 = arith.divf %450, %451 : vector<1x256xf32>
    %453 = vector.extract_strided_slice %440 {offsets = [0, 512], sizes = [1, 256], strides = [1, 1]} : vector<1x1024xf32> to vector<1x256xf32>
    %454 = math.tanh %453 : vector<1x256xf32>
    %455 = vector.extract_strided_slice %440 {offsets = [0, 768], sizes = [1, 256], strides = [1, 1]} : vector<1x1024xf32> to vector<1x256xf32>
    %456 = arith.negf %455 : vector<1x256xf32>
    %457 = math.exp %456 : vector<1x256xf32>
    %cst_118 = arith.constant 1.000000e+00 : f32
    %458 = vector.broadcast %cst_118 : f32 to vector<1x256xf32>
    %459 = arith.addf %458, %457 : vector<1x256xf32>
    %460 = arith.divf %458, %459 : vector<1x256xf32>
    %461 = arith.mulf %452, %405 : vector<1x256xf32>
    %462 = arith.mulf %446, %454 : vector<1x256xf32>
    %463 = arith.addf %461, %462 : vector<1x256xf32>
    %464 = math.tanh %463 : vector<1x256xf32>
    %465 = arith.mulf %460, %464 : vector<1x256xf32>
    %cst_119 = arith.constant dense<0.000000e+00> : vector<1x2048xf32>
    %466 = tpu.matmul %465, %232, %cst_119 {dimension_numbers = #tpu.dot_dimension_numbers<[1], [0], [0], [1], [0, 0, 1, 1], [], []>} : vector<1x256xf32>, vector<256x2048xf32>, vector<1x2048xf32> -> vector<1x2048xf32>
    %467 = vector.extract_strided_slice %466 {offsets = [0, 1024], sizes = [1, 1024], strides = [1, 1]} : vector<1x2048xf32> to vector<1x1024xf32>
    %468 = arith.addf %467, %197 : vector<1x1024xf32>
    %cst_120 = arith.constant dense<0.000000e+00> : vector<1x1024xf32>
    %469 = tpu.matmul %437, %294, %cst_120 {dimension_numbers = #tpu.dot_dimension_numbers<[1], [0], [0], [1], [0, 0, 1, 1], [], []>} : vector<1x256xf32>, vector<256x1024xf32>, vector<1x1024xf32> -> vector<1x1024xf32>
    %470 = arith.addf %468, %469 : vector<1x1024xf32>
    %471 = vector.extract_strided_slice %470 {offsets = [0, 0], sizes = [1, 256], strides = [1, 1]} : vector<1x1024xf32> to vector<1x256xf32>
    %472 = arith.negf %471 : vector<1x256xf32>
    %473 = math.exp %472 : vector<1x256xf32>
    %cst_121 = arith.constant 1.000000e+00 : f32
    %474 = vector.broadcast %cst_121 : f32 to vector<1x256xf32>
    %475 = arith.addf %474, %473 : vector<1x256xf32>
    %476 = arith.divf %474, %475 : vector<1x256xf32>
    %477 = vector.extract_strided_slice %470 {offsets = [0, 256], sizes = [1, 256], strides = [1, 1]} : vector<1x1024xf32> to vector<1x256xf32>
    %478 = arith.negf %477 : vector<1x256xf32>
    %479 = math.exp %478 : vector<1x256xf32>
    %cst_122 = arith.constant 1.000000e+00 : f32
    %480 = vector.broadcast %cst_122 : f32 to vector<1x256xf32>
    %481 = arith.addf %480, %479 : vector<1x256xf32>
    %482 = arith.divf %480, %481 : vector<1x256xf32>
    %483 = vector.extract_strided_slice %470 {offsets = [0, 512], sizes = [1, 256], strides = [1, 1]} : vector<1x1024xf32> to vector<1x256xf32>
    %484 = math.tanh %483 : vector<1x256xf32>
    %485 = vector.extract_strided_slice %470 {offsets = [0, 768], sizes = [1, 256], strides = [1, 1]} : vector<1x1024xf32> to vector<1x256xf32>
    %486 = arith.negf %485 : vector<1x256xf32>
    %487 = math.exp %486 : vector<1x256xf32>
    %cst_123 = arith.constant 1.000000e+00 : f32
    %488 = vector.broadcast %cst_123 : f32 to vector<1x256xf32>
    %489 = arith.addf %488, %487 : vector<1x256xf32>
    %490 = arith.divf %488, %489 : vector<1x256xf32>
    %491 = arith.mulf %482, %435 : vector<1x256xf32>
    %492 = arith.mulf %476, %484 : vector<1x256xf32>
    %493 = arith.addf %491, %492 : vector<1x256xf32>
    %494 = math.tanh %493 : vector<1x256xf32>
    %495 = arith.mulf %490, %494 : vector<1x256xf32>
    %c0_124 = arith.constant 0 : index
    %c0_125 = arith.constant 0 : index
    %496 = vector.load %arg5[%c0_124, %c0_125] : memref<8x256xf32, #tpu.memory_space<vmem>>, vector<8x256xf32>
    %cst_126 = arith.constant dense<0.000000e+00> : vector<1x8xf32>
    %497 = tpu.matmul %495, %496, %cst_126 {dimension_numbers = #tpu.dot_dimension_numbers<[1], [1], [0], [0], [0, 0, 1, 0], [], []>} : vector<1x256xf32>, vector<8x256xf32>, vector<1x8xf32> -> vector<1x8xf32>
    %498 = vector.extract_strided_slice %5 {offsets = [2, 0], sizes = [1, 8], strides = [1, 1]} : vector<24x128xf32> to vector<1x8xf32>
    %499 = arith.addf %497, %498 : vector<1x8xf32>
    %500 = vector.extract_strided_slice %5 {offsets = [1, 0], sizes = [1, 4], strides = [1, 1]} : vector<24x128xf32> to vector<1x4xf32>
    %501 = vector.extract_strided_slice %499 {offsets = [0, 0], sizes = [1, 4], strides = [1, 1]} : vector<1x8xf32> to vector<1x4xf32>
    %502 = vector.extract_strided_slice %499 {offsets = [0, 4], sizes = [1, 4], strides = [1, 1]} : vector<1x8xf32> to vector<1x4xf32>
    %503 = arith.mulf %502, %500 : vector<1x4xf32>
    %504 = arith.addf %501, %503 : vector<1x4xf32>
    %505 = arith.addf %504, %195 : vector<1x4xf32>
    %c0_127 = arith.constant 0 : index
    %c0_128 = arith.constant 0 : index
    %506 = vector.load %arg13[%c0_127, %c0_128] : memref<1x4xf32, #tpu.memory_space<vmem>>, vector<1x4xf32>
    tpu.vector_store %arg13[%c0_127, %c0_128], %505 {strides = array<i32>} : memref<1x4xf32, #tpu.memory_space<vmem>>, vector<1x4xf32>,
    return
  }
}

</mosaic_0001>

<llo_original>
// kernel: net_forward.1
$region0: #{net_forward.1}
  #allocation0 [shape = 'u32[]', space=smem, size = 0x4, offset = 0x4, fixed_abs, tag = 'smem constant byte address 0x4 - core index']
  #allocation1 [shape = 'u32[72,128]{1,0:T(1,128)}', space=vmem, size = 0x9000, scoped, tag = 'internal scratch']
  #allocation2 [shape = 'f32[256,2048]{1,0:T(8,128)}', space=vmem, size = 0x200000, scoped, tag = 'scratch operand']
  #allocation3 [shape = 'f32[256,1024]{1,0:T(8,128)}', space=vmem, size = 0x100000, scoped, tag = 'scratch operand']
  #allocation4 [shape = 's32[2]{0}', space=sflag, size = 0x8, scoped, tag = 'scratch operand']
  #allocation21 [shape = 's32[]', space=sflag, size = 0x4, offset = 0, fixed_abs, tag = 'sflag constant byte address 0x0 - dummy sync flag']
  #allocation22 [shape = 's32[]', space=sflag, size = 0x4, offset = 0, fixed_abs, tag = 'sflag constant byte address 0x0 - dummy sync flag']
  #allocation23 [shape = 'u32[]', space=smem, size = 0x4, offset = 0x44, fixed_abs, tag = 'smem constant byte address 0x44 - assertion arg 0']
  #allocation24 [shape = 'u32[]', space=smem, size = 0x4, offset = 0x48, fixed_abs, tag = 'smem constant byte address 0x48 - assertion arg 1']
  #allocation25 [shape = 's32[]', space=sflag, size = 0x4, offset = 0, fixed_abs, tag = 'sflag constant byte address 0x0 - dummy sync flag']
  #allocation26 [shape = 's32[]', space=sflag, size = 0x4, offset = 0, fixed_abs, tag = 'sflag constant byte address 0x0 - dummy sync flag']
  %s0 = inlined_call_operand.vmem [shape: f32[8,4], index: 0, kind: input, shape index: {}]
  %s1 = inlined_call_operand.vmem [shape: f32[24,128], index: 1, kind: input, shape index: {}]
  %s2 = inlined_call_operand.hbm [shape: f32[4,1024], index: 2, kind: input, shape index: {}]
  %s3 = inlined_call_operand.hbm [shape: f32[1,1024], index: 3, kind: input, shape index: {}]
  %s4 = inlined_call_operand.hbm [shape: f32[1,1024], index: 4, kind: input, shape index: {}]
  %s5 = inlined_call_operand.hbm [shape: f32[8,256], index: 5, kind: input, shape index: {}]
  %s6 = inlined_call_operand.hbm [shape: f32[2,4,12], index: 6, kind: input, shape index: {}]
  %s7 = inlined_call_operand.hbm [shape: f32[2,4,4], index: 7, kind: input, shape index: {}]
  %s8 = inlined_call_operand.hbm [shape: f32[2,1,2048], index: 8, kind: input, shape index: {}]
  %s9 = inlined_call_operand.hbm [shape: f32[2,4,2048], index: 9, kind: input, shape index: {}]
  %s10 = inlined_call_operand.hbm [shape: f32[2,4,2048], index: 10, kind: input, shape index: {}]
  %s11 = inlined_call_operand.hbm [shape: f32[256,2048], index: 11, kind: input, shape index: {}]
  %s12 = inlined_call_operand.hbm [shape: f32[256,1024], index: 12, kind: input, shape index: {}]
  %s13 = inlined_call_operand.hbm [shape: f32[1,4], index: 13, kind: output, shape index: {}]
  %s14 = sld [smem:[#allocation0]]
  $region98: #{net_forward.1} parent=0
    _
  %s16 = ssub.s32 1, %s14
  %s17 = scalar_select 0, %s16, %s14
  $region1: #{net_forward.1} parent=0
    #allocation5 [shape = 'u8[16384]{0}', space=vmem, size = 0x4000, scoped, tag = 'input window, operand 2, single buffered']
    #allocation6 [shape = 's32[1]{0}', space=sflag, size = 0x4, scoped, tag = 'scoped memory for net_forward.1']
    #allocation7 [shape = 's32[1]{0}', space=sflag, size = 0x4, scoped, tag = 'scoped memory for net_forward.1']
    #allocation8 [shape = 'u8[4096]{0}', space=vmem, size = 0x1000, scoped, tag = 'input window, operand 3, single buffered']
    #allocation9 [shape = 's32[1]{0}', space=sflag, size = 0x4, scoped, tag = 'scoped memory for net_forward.1']
    #allocation10 [shape = 'u8[4096]{0}', space=vmem, size = 0x1000, scoped, tag = 'input window, operand 4, single buffered']
    #allocation11 [shape = 'u8[8192]{0}', space=vmem, size = 0x2000, scoped, tag = 'input window, operand 5, single buffered']
    #allocation12 [shape = 's32[1]{0}', space=sflag, size = 0x4, scoped, tag = 'scoped memory for net_forward.1']
    #allocation13 [shape = 'u8[4096]{0}', space=vmem, size = 0x1000, scoped, tag = 'input window, operand 6, single buffered']
    #allocation14 [shape = 'u8[4096]{0}', space=vmem, size = 0x1000, scoped, tag = 'input window, operand 7, single buffered']
    #allocation15 [shape = 's32[1]{0}', space=sflag, size = 0x4, scoped, tag = 'scoped memory for net_forward.1']
    #allocation16 [shape = 'u8[16384]{0}', space=vmem, size = 0x4000, scoped, tag = 'input window, operand 8, single buffered']
    #allocation17 [shape = 'u8[65536]{0}', space=vmem, size = 0x10000, scoped, tag = 'input window, operand 9, single buffered']
    #allocation18 [shape = 's32[1]{0}', space=sflag, size = 0x4, scoped, tag = 'scoped memory for net_forward.1']
    #allocation19 [shape = 'u8[65536]{0}', space=vmem, size = 0x10000, scoped, tag = 'input window, operand 10, single buffered']
    #allocation20 [shape = 'u8[512]{0}', space=vmem, size = 0x400, scoped, tag = 'output window, operand 0, single buffered']
    %18 = vsyncpa [#allocation6], 0
    %19 = vsyncpa [#allocation9], 0
    %20 = vsyncpa [#allocation12], 0
    %21 = vsyncpa [#allocation15], 0
    %22 = vsyncpa [#allocation18], 0
    %23 = vsyncpa [#allocation7], 0
    // Predicated region
    $region2: #{net_forward.1} parent=1 // pred_check
      _
    $region3: #{net_forward.1} parent=1 // pred_check_branch
      %25 = sbr.rel (0) target = $region5
    $region4: #{net_forward.1} parent=1 // pred_region
      _
    $region5: #{net_forward.1} parent=1 // pred_fallthru
      _
    // Predicated region
    $region6: #{net_forward.1} parent=1 // pred_check
      _
    $region7: #{net_forward.1} parent=1 // pred_check_branch
      %27 = sbr.rel (0) target = $region9
    $region8: #{net_forward.1} parent=1 // pred_region
      _
    $region9: #{net_forward.1} parent=1 // pred_fallthru
      _
    // Predicated region
    $region10: #{net_forward.1} parent=1 // pred_check
      _
    $region11: #{net_forward.1} parent=1 // pred_check_branch
      %29 = sbr.rel (0) target = $region13
    $region12: #{net_forward.1} parent=1 // pred_region
      %31 = vsyncadd [#allocation6], 0
      %s33 = sshll.u32 %s2, 4
      %s34 = int_to_ptr.hbm [resolvable:$true] %s33
      %s35 = sshll.u32 [#allocation5], 4
      %s36 = int_to_ptr.vmem [resolvable:$true] %s35
      %38 = dma.hbm_to_vmem [thread:$0]  %s34, 512, %s36, [#allocation6]
    $region13: #{net_forward.1} parent=1 // pred_fallthru
      _
    // Predicated region
    $region14: #{net_forward.1} parent=1 // pred_check
      _
    $region15: #{net_forward.1} parent=1 // pred_check_branch
      %40 = sbr.rel (0) target = $region17
    $region16: #{net_forward.1} parent=1 // pred_region
      %42 = vsyncadd [#allocation9], 0
      %s44 = sshll.u32 %s3, 4
      %s45 = int_to_ptr.hbm [resolvable:$true] %s44
      %s46 = sshll.u32 [#allocation8], 4
      %s47 = int_to_ptr.vmem [resolvable:$true] %s46
      %49 = dma.hbm_to_vmem [thread:$0]  %s45, 128, %s47, [#allocation9]
    $region17: #{net_forward.1} parent=1 // pred_fallthru
      _
    // Predicated region
    $region18: #{net_forward.1} parent=1 // pred_check
      _
    $region19: #{net_forward.1} parent=1 // pred_check_branch
      %51 = sbr.rel (0) target = $region21
    $region20: #{net_forward.1} parent=1 // pred_region
      %53 = vsyncadd [#allocation9], 0
      %s55 = sshll.u32 %s4, 4
      %s56 = int_to_ptr.hbm [resolvable:$true] %s55
      %s57 = sshll.u32 [#allocation10], 4
      %s58 = int_to_ptr.vmem [resolvable:$true] %s57
      %60 = dma.hbm_to_vmem [thread:$0]  %s56, 128, %s58, [#allocation9]
    $region21: #{net_forward.1} parent=1 // pred_fallthru
      _
    // Predicated region
    $region22: #{net_forward.1} parent=1 // pred_check
      _
    $region23: #{net_forward.1} parent=1 // pred_check_branch
      %62 = sbr.rel (0) target = $region25
    $region24: #{net_forward.1} parent=1 // pred_region
      %64 = vsyncadd [#allocation12], 0
      %s66 = sshll.u32 %s5, 4
      %s67 = int_to_ptr.hbm [resolvable:$true] %s66
      %s68 = sshll.u32 [#allocation11], 4
      %s69 = int_to_ptr.vmem [resolvable:$true] %s68
      %71 = dma.hbm_to_vmem [thread:$0]  %s67, 256, %s69, [#allocation12]
    $region25: #{net_forward.1} parent=1 // pred_fallthru
      _
    // Predicated region
    $region26: #{net_forward.1} parent=1 // pred_check
      _
    $region27: #{net_forward.1} parent=1 // pred_check_branch
      %73 = sbr.rel (0) target = $region29
    $region28: #{net_forward.1} parent=1 // pred_region
      %75 = vsyncadd [#allocation12], 0
      %s76 = sshll.u32 %s6, 4
      %s77 = int_to_ptr.hbm [resolvable:$true] %s76
      %s78 = sshll.u32 [#allocation13], 4
      %s79 = int_to_ptr.vmem [resolvable:$true] %s78
      %84 = dma.hbm_to_vmem [thread:$0]  %s77, 128, %s79, [#allocation12], 64, 64, 4
    $region29: #{net_forward.1} parent=1 // pred_fallthru
      _
    // Predicated region
    $region30: #{net_forward.1} parent=1 // pred_check
      _
    $region31: #{net_forward.1} parent=1 // pred_check_branch
      %86 = sbr.rel (0) target = $region33
    $region32: #{net_forward.1} parent=1 // pred_region
      %88 = vsyncadd [#allocation15], 0
      %s89 = sshll.u32 %s7, 4
      %s90 = int_to_ptr.hbm [resolvable:$true] %s89
      %s91 = sshll.u32 [#allocation14], 4
      %s92 = int_to_ptr.vmem [resolvable:$true] %s91
      %97 = dma.hbm_to_vmem [thread:$0]  %s90, 128, %s92, [#allocation15], 64, 64, 4
    $region33: #{net_forward.1} parent=1 // pred_fallthru
      _
    // Predicated region
    $region34: #{net_forward.1} parent=1 // pred_check
      _
    $region35: #{net_forward.1} parent=1 // pred_check_branch
      %99 = sbr.rel (0) target = $region37
    $region36: #{net_forward.1} parent=1 // pred_region
      %101 = vsyncadd [#allocation15], 0
      %s102 = sshll.u32 %s8, 4
      %s103 = int_to_ptr.hbm [resolvable:$true] %s102
      %s104 = sshll.u32 [#allocation16], 4
      %s105 = int_to_ptr.vmem [resolvable:$true] %s104
      %110 = dma.hbm_to_vmem [thread:$0]  %s103, 512, %s105, [#allocation15], 256, 256, 16
    $region37: #{net_forward.1} parent=1 // pred_fallthru
      _
    // Predicated region
    $region38: #{net_forward.1} parent=1 // pred_check
      _
    $region39: #{net_forward.1} parent=1 // pred_check_branch
      %112 = sbr.rel (0) target = $region41
    $region40: #{net_forward.1} parent=1 // pred_region
      %114 = vsyncadd [#allocation18], 0
      %s115 = sshll.u32 %s9, 4
      %s116 = int_to_ptr.hbm [resolvable:$true] %s115
      %s117 = sshll.u32 [#allocation17], 4
      %s118 = int_to_ptr.vmem [resolvable:$true] %s117
      %123 = dma.hbm_to_vmem [thread:$0]  %s116, 2048, %s118, [#allocation18], 1024, 1024, 64
    $region41: #{net_forward.1} parent=1 // pred_fallthru
      _
    // Predicated region
    $region42: #{net_forward.1} parent=1 // pred_check
      _
    $region43: #{net_forward.1} parent=1 // pred_check_branch
      %125 = sbr.rel (0) target = $region45
    $region44: #{net_forward.1} parent=1 // pred_region
      %127 = vsyncadd [#allocation18], 0
      %s128 = sshll.u32 %s10, 4
      %s129 = int_to_ptr.hbm [resolvable:$true] %s128
      %s130 = sshll.u32 [#allocation19], 4
      %s131 = int_to_ptr.vmem [resolvable:$true] %s130
      %136 = dma.hbm_to_vmem [thread:$0]  %s129, 2048, %s131, [#allocation18], 1024, 1024, 64
    $region45: #{net_forward.1} parent=1 // pred_fallthru
      _
    // Predicated region
    $region46: #{net_forward.1} parent=1 // pred_check
      _
    $region47: #{net_forward.1} parent=1 // pred_check_branch
      %138 = sbr.rel (0) target = $region49
    $region48: #{net_forward.1} parent=1 // pred_region
      %140 = dma.done [#allocation6], 512
    $region49: #{net_forward.1} parent=1 // pred_fallthru
      _
    // Predicated region
    $region50: #{net_forward.1} parent=1 // pred_check
      _
    $region51: #{net_forward.1} parent=1 // pred_check_branch
      %142 = sbr.rel (0) target = $region53
    $region52: #{net_forward.1} parent=1 // pred_region
      %144 = dma.done [#allocation9], 128
    $region53: #{net_forward.1} parent=1 // pred_fallthru
      _
    // Predicated region
    $region54: #{net_forward.1} parent=1 // pred_check
      _
    $region55: #{net_forward.1} parent=1 // pred_check_branch
      %146 = sbr.rel (0) target = $region57
    $region56: #{net_forward.1} parent=1 // pred_region
      %148 = dma.done [#allocation9], 128
    $region57: #{net_forward.1} parent=1 // pred_fallthru
      _
    // Predicated region
    $region58: #{net_forward.1} parent=1 // pred_check
      _
    $region59: #{net_forward.1} parent=1 // pred_check_branch
      %150 = sbr.rel (0) target = $region61
    $region60: #{net_forward.1} parent=1 // pred_region
      %152 = dma.done [#allocation12], 256
    $region61: #{net_forward.1} parent=1 // pred_fallthru
      _
    // Predicated region
    $region62: #{net_forward.1} parent=1 // pred_check
      _
    $region63: #{net_forward.1} parent=1 // pred_check_branch
      %154 = sbr.rel (0) target = $region65
    $region64: #{net_forward.1} parent=1 // pred_region
      %156 = dma.done [#allocation12], 128
    $region65: #{net_forward.1} parent=1 // pred_fallthru
      _
    // Predicated region
    $region66: #{net_forward.1} parent=1 // pred_check
      _
    $region67: #{net_forward.1} parent=1 // pred_check_branch
      %158 = sbr.rel (0) target = $region69
    $region68: #{net_forward.1} parent=1 // pred_region
      %160 = dma.done [#allocation15], 128
    $region69: #{net_forward.1} parent=1 // pred_fallthru
      _
    // Predicated region
    $region70: #{net_forward.1} parent=1 // pred_check
      _
    $region71: #{net_forward.1} parent=1 // pred_check_branch
      %162 = sbr.rel (0) target = $region73
    $region72: #{net_forward.1} parent=1 // pred_region
      %164 = dma.done [#allocation15], 512
    $region73: #{net_forward.1} parent=1 // pred_fallthru
      _
    // Predicated region
    $region74: #{net_forward.1} parent=1 // pred_check
      _
    $region75: #{net_forward.1} parent=1 // pred_check_branch
      %166 = sbr.rel (0) target = $region77
    $region76: #{net_forward.1} parent=1 // pred_region
      %168 = dma.done [#allocation18], 2048
    $region77: #{net_forward.1} parent=1 // pred_fallthru
      _
    // Predicated region
    $region78: #{net_forward.1} parent=1 // pred_check
      _
    $region79: #{net_forward.1} parent=1 // pred_check_branch
      %170 = sbr.rel (0) target = $region81
    $region80: #{net_forward.1} parent=1 // pred_region
      %172 = dma.done [#allocation18], 2048
    $region81: #{net_forward.1} parent=1 // pred_fallthru
      _
    // Predicated region
    $region82: #{net_forward.1} parent=1 // pred_check
      _
    $region83: #{net_forward.1} parent=1 // pred_check_branch
      %174 = sbr.rel target = $region85
    $region84: #{net_forward.1} parent=1 // pred_region
      %175 = sst [smem:[#allocation23]] [#allocation22]
      %176 = sst [smem:[#allocation24]] [#allocation21]
    $region85: #{net_forward.1} parent=1 // pred_fallthru
      _
    %178 = shalt.err (0)
    %s180 = sshll.u32 %s11, 4
    %s181 = int_to_ptr.hbm [resolvable:$true] %s180
    %s182 = sshll.u32 [#allocation2], 4
    %s183 = int_to_ptr.vmem [resolvable:$true] %s182
    %185 = dma.hbm_to_vmem [thread:$0]  %s181, 65536, %s183, [#allocation4]
    %s186 = scalar_lea.sflag [#allocation4], 1
    // Predicated region
    $region86: #{net_forward.1} parent=1 // pred_check
      _
    $region87: #{net_forward.1} parent=1 // pred_check_branch
      %188 = sbr.rel target = $region89
    $region88: #{net_forward.1} parent=1 // pred_region
      %189 = sst [smem:[#allocation23]] [#allocation26]
      %190 = sst [smem:[#allocation24]] [#allocation25]
    $region89: #{net_forward.1} parent=1 // pred_fallthru
      _
    %192 = shalt.err (0)
    %s194 = sshll.u32 %s12, 4
    %s195 = int_to_ptr.hbm [resolvable:$true] %s194
    %s196 = sshll.u32 [#allocation3], 4
    %s197 = int_to_ptr.vmem [resolvable:$true] %s196
    %199 = dma.hbm_to_vmem [thread:$0]  %s195, 32768, %s197, %s186
    %v200 = vld [vmem:[%s0] sm:$0xff]
    %v201 = vld [vmem:[%s1] sm:$0xff]
    %v202 = vld [vmem:[%s1 + $0x8] sm:$0xff]
    %v203 = vld [vmem:[%s1 + $0x10] sm:$0xff]
    %v204 = vperm.slane %v201, 0
    %v205 = vadd.f32 %v200, %v204
    %v206 = vld [vmem:[#allocation13] sm:$0xf]
    %v207 = vperm.slane %v201, 3
    %vm208 = vcmask 31744
    %v210 = vsel %vm208, %v205, 0
    %vm212 = vcmask 1043456
    %v214 = vsel %vm212, %v206, 0
    %216 = vmatpush.msra.mxu0 0.0
    %217 = vmatpush.msra.mxu0 0.0
    %218 = vmatpush.msra.mxu0 0.0
    %219 = vmatpush.msra.mxu0 0.0
    %220 = vmatpush.msra.mxu0 0.0
    %221 = vmatpush.msra.mxu0 0.0
    %222 = vmatpush.msra.mxu0 0.0
    %223 = vmatpush.msra.mxu0 0.0
    %224 = vmatpush.msra.mxu0 0.0
    %225 = vmatpush.msra.mxu0 0.0
    %226 = vmatpush.msra.mxu0 0.0
    %227 = vmatpush.msra.mxu0 0.0
    %228 = vmatpush.msra.mxu0 0.0
    %229 = vmatpush.msra.mxu0 0.0
    %230 = vmatpush.msra.mxu0 0.0
    %231 = vmatpush.msra.mxu0 %v214
    %232 = vmatmul.f32.gmra.mxu0 %v210
    %v233 = vpop.f32.mrf.mxu0
    %v234 = vadd.f32 %v207, %v233
    %235 = vdwg.mxu0
    %237 = vrot.lane.b32.xlu0 %v234, 124
    %v238 = vpop.permute.xlu0 %237
    %v239 = vsel %vm208, %v234, 0
    %v241 = vsel %vm208, %v238, 0
    %243 = vmatpush.xpose.msra.mxu0 0.0
    %244 = vmatpush.xpose.msra.mxu0 0.0
    %245 = vmatpush.xpose.msra.mxu0 0.0
    %246 = vmatpush.xpose.msra.mxu0 0.0
    %247 = vmatpush.xpose.msra.mxu0 0.0
    %248 = vmatpush.xpose.msra.mxu0 0.0
    %249 = vmatpush.xpose.msra.mxu0 0.0
    %250 = vmatpush.xpose.msra.mxu0 0.0
    %251 = vmatpush.xpose.msra.mxu0 0.0
    %252 = vmatpush.xpose.msra.mxu0 0.0
    %253 = vmatpush.xpose.msra.mxu0 0.0
    %254 = vmatpush.xpose.msra.mxu0 0.0
    %255 = vmatpush.xpose.msra.mxu0 0.0
    %256 = vmatpush.xpose.msra.mxu0 0.0
    %257 = vmatpush.xpose.msra.mxu0 0.0
    %258 = vmatpush.xpose.msra.mxu0 %v241
    %259 = vmatmul.f32.gmra.mxu0 %v239
    %v260 = vpop.f32.mrf.mxu0
    %v261 = vadd.f32 0.0, %v260
    %262 = vdwg.mxu0
    %v263 = vmul.f32 %v261, 0.5
    %vm264 = vcmask 64512
    %v265 = vsel %vm264, %v263, -inf
    %266 = vmax.xlane.f32.xlu0 %v265
    %v267 = vpop.xlane.xlu0 %266
    %v268 = vsub.f32 %v263, %v267
    %v269 = vmul.f32 %v268, 1.442695
    %v270 = vpow.pop %v269
    %v271 = vsel %vm264, %v270, 0.0
    %272 = vadd.xlane.f32.xlu0 %v271
    %v273 = vpop.xlane.xlu0 %272
    %v274 = vrcp.pop %v273
    %v275 = vmul.f32 %v273, %v274
    %v276 = vsub.f32 1.0, %v275
    %v277 = vmul.f32 %v274, %v276
    %v278 = vadd.f32 %v274, %v277
    %vm279 = vweird.f32 %v273
    %vm280 = vweird.f32 %v274
    %vm281 = vmor %vm279, %vm280
    %v282 = vsel %vm281, %v274, %v278
    %v283 = vand.u32 2147483647, %v273
    %vm284 = vcmp.eq.f32.partialorder %v283, 8.507059e+37
    %v285 = vand.u32 %v273, 2147483648
    %v286 = vor.u32 1.1754944e-38, %v285
    %v287 = vsel %vm284, %v286, %v282
    %v288 = vmul.f32 %v270, %v287
    %289 = vrot.lane.b32.xlu0 %v234, 120
    %v290 = vpop.permute.xlu0 %289
    %v293 = vsel %vm264, %v288, 0
    %295 = vmatpush.msra.mxu0 0.0
    %296 = vmatpush.msra.mxu0 0.0
    %297 = vmatpush.msra.mxu0 0.0
    %298 = vmatpush.msra.mxu0 0.0
    %299 = vmatpush.msra.mxu0 0.0
    %300 = vmatpush.msra.mxu0 0.0
    %301 = vmatpush.msra.mxu0 0.0
    %302 = vmatpush.msra.mxu0 0.0
    %303 = vmatpush.msra.mxu0 0.0
    %304 = vmatpush.msra.mxu0 0.0
    %305 = vmatpush.msra.mxu0 0.0
    %306 = vmatpush.msra.mxu0 0.0
    %307 = vmatpush.msra.mxu0 0.0
    %308 = vmatpush.msra.mxu0 0.0
    %309 = vmatpush.msra.mxu0 0.0
    %310 = vmatpush.msra.mxu0 %v290
    %311 = vmatmul.f32.gmra.mxu0 %v293
    %v312 = vpop.f32.mrf.mxu0
    %v313 = vadd.f32 0.0, %v312
    %314 = vdwg.mxu0
    %v315 = vld [vmem:[#allocation14] sm:$0xf]
    %v316 = vperm.slane %v201, 4
    %v318 = vsel %vm208, %v313, 0
    %v321 = vsel %vm212, %v315, 0
    %323 = vmatpush.msra.mxu0 0.0
    %324 = vmatpush.msra.mxu0 0.0
    %325 = vmatpush.msra.mxu0 0.0
    %326 = vmatpush.msra.mxu0 0.0
    %327 = vmatpush.msra.mxu0 0.0
    %328 = vmatpush.msra.mxu0 0.0
    %329 = vmatpush.msra.mxu0 0.0
    %330 = vmatpush.msra.mxu0 0.0
    %331 = vmatpush.msra.mxu0 0.0
    %332 = vmatpush.msra.mxu0 0.0
    %333 = vmatpush.msra.mxu0 0.0
    %334 = vmatpush.msra.mxu0 0.0
    %335 = vmatpush.msra.mxu0 0.0
    %336 = vmatpush.msra.mxu0 0.0
    %337 = vmatpush.msra.mxu0 0.0
    %338 = vmatpush.msra.mxu0 %v321
    %339 = vmatmul.f32.gmra.mxu0 %v318
    %v340 = vpop.f32.mrf.mxu0
    %v341 = vadd.f32 %v316, %v340
    %342 = vdwg.mxu0
    %v343 = vadd.f32 %v205, %v341
    %v344 = vsel %vm208, %v343, 0.0
    %345 = vadd.xlane.f32.xlu0 %v344
    %v346 = vpop.xlane.xlu0 %345
    %v347 = vrcp.pop 4.0
    %v348 = vmul.f32 4.0, %v347
    %v349 = vsub.f32 1.0, %v348
    %v350 = vmul.f32 %v347, %v349
    %v351 = vadd.f32 %v347, %v350
    %vm352 = vweird.f32 %v347
    %v353 = vsel %vm352, %v347, %v351
    %v354 = vmul.f32 %v346, %v353
    %v355 = vsub.f32 %v343, %v354
    %v356 = vmul.f32 %v355, %v355
    %v357 = vsel %vm208, %v356, 0.0
    %358 = vadd.xlane.f32.xlu0 %v357
    %v359 = vpop.xlane.xlu0 %358
    %v360 = vmul.f32 %v359, %v353
    %v361 = vadd.f32 %v360, 1e-05
    %v362 = vrsqrt.pop %v361
    %v363 = vmul.f32 %v362, %v361
    %v364 = vmul.f32 %v363, %v362
    %v365 = vmul.f32 0.5, %v364
    %v366 = vsub.f32 1.5, %v365
    %v367 = vmul.f32 %v362, %v366
    %vm368 = vweird.f32 %v361
    %vm369 = vweird.f32 %v362
    %vm370 = vmor %vm368, %vm369
    %v371 = vsel %vm370, %v362, %v367
    %v372 = vmul.f32 %v355, %v371
    %v373 = vperm.slane %v201, 5
    %v374 = vmul.f32 %v372, %v373
    %v375 = vperm.slane %v201, 6
    %v376 = vadd.f32 %v374, %v375
    %v377 = vld [vmem:[#allocation17] sm:$0xff]
    %v378 = vld [vmem:[#allocation17 + $0x8] sm:$0xff]
    %v379 = vld [vmem:[#allocation17 + $0x10] sm:$0xff]
    %v380 = vld [vmem:[#allocation17 + $0x18] sm:$0xff]
    %v381 = vld [vmem:[#allocation17 + $0x20] sm:$0xff]
    %v382 = vld [vmem:[#allocation17 + $0x28] sm:$0xff]
    %v383 = vld [vmem:[#allocation17 + $0x30] sm:$0xff]
    %v384 = vld [vmem:[#allocation17 + $0x38] sm:$0xff]
    %v385 = vld [vmem:[#allocation16] sm:$0xff]
    %v386 = vld [vmem:[#allocation16 + $0x8] sm:$0xff]
    %v389 = vperm.slane %v385, 0
    %v390 = vperm.slane %v385, 1
    %v391 = vperm.slane %v385, 2
    %v392 = vperm.slane %v385, 3
    %v393 = vperm.slane %v385, 4
    %v394 = vperm.slane %v385, 5
    %v395 = vperm.slane %v385, 6
    %v396 = vperm.slane %v385, 7
    %v397 = vperm.slane %v386, 0
    %v398 = vperm.slane %v386, 1
    %v399 = vperm.slane %v386, 2
    %v400 = vperm.slane %v386, 3
    %v401 = vperm.slane %v386, 4
    %v402 = vperm.slane %v386, 5
    %v403 = vperm.slane %v386, 6
    %v404 = vperm.slane %v386, 7
    %429 = vst [vmem:[#allocation1] ss:$2 sm:$0xff] %v377
    %s430 = scalar_lea.vmem [#allocation1], 16
    %431 = vst [vmem:[%s430] ss:$2 sm:$0xff] %v378
    %s432 = scalar_lea.vmem [#allocation1], 32
    %433 = vst [vmem:[%s432] ss:$2 sm:$0xff] %v379
    %s434 = scalar_lea.vmem [#allocation1], 48
    %435 = vst [vmem:[%s434] ss:$2 sm:$0xff] %v380
    %v436 = vld.sshfl [vmem:[#allocation1] sm:$0xff pattern:$0x75316420]
    %v437 = vld.sshfl [vmem:[#allocation1 + $0x8] sm:$0xff pattern:$0x75316420]
    %v438 = vld.sshfl [vmem:[#allocation1 + $0x10] sm:$0xff pattern:$0x75316420]
    %v439 = vld.sshfl [vmem:[#allocation1 + $0x18] sm:$0xff pattern:$0x75316420]
    %v440 = vld.sshfl [vmem:[#allocation1 + $0x20] sm:$0xff pattern:$0x75316420]
    %v441 = vld.sshfl [vmem:[#allocation1 + $0x28] sm:$0xff pattern:$0x75316420]
    %v442 = vld.sshfl [vmem:[#allocation1 + $0x30] sm:$0xff pattern:$0x75316420]
    %v443 = vld.sshfl [vmem:[#allocation1 + $0x38] sm:$0xff pattern:$0x75316420]
    %444 = vst [vmem:[#allocation1] ss:$2 sm:$0xff] %v381
    %445 = vst [vmem:[%s430] ss:$2 sm:$0xff] %v382
    %446 = vst [vmem:[%s432] ss:$2 sm:$0xff] %v383
    %447 = vst [vmem:[%s434] ss:$2 sm:$0xff] %v384
    %v448 = vld.sshfl [vmem:[#allocation1] sm:$0xff pattern:$0x75316420]
    %v449 = vld.sshfl [vmem:[#allocation1 + $0x8] sm:$0xff pattern:$0x75316420]
    %v450 = vld.sshfl [vmem:[#allocation1 + $0x10] sm:$0xff pattern:$0x75316420]
    %v451 = vld.sshfl [vmem:[#allocation1 + $0x18] sm:$0xff pattern:$0x75316420]
    %v452 = vld.sshfl [vmem:[#allocation1 + $0x20] sm:$0xff pattern:$0x75316420]
    %v453 = vld.sshfl [vmem:[#allocation1 + $0x28] sm:$0xff pattern:$0x75316420]
    %v454 = vld.sshfl [vmem:[#allocation1 + $0x30] sm:$0xff pattern:$0x75316420]
    %v455 = vld.sshfl [vmem:[#allocation1 + $0x38] sm:$0xff pattern:$0x75316420]
    %v457 = vsel %vm208, %v376, 0
    %v459 = vsel %vm212, %v436, 0
    %v461 = vsel %vm212, %v437, 0
    %v463 = vsel %vm212, %v438, 0
    %v465 = vsel %vm212, %v439, 0
    %v467 = vsel %vm212, %v440, 0
    %v469 = vsel %vm212, %v441, 0
    %v471 = vsel %vm212, %v442, 0
    %v473 = vsel %vm212, %v443, 0
    %v475 = vsel %vm212, %v448, 0
    %v477 = vsel %vm212, %v449, 0
    %v479 = vsel %vm212, %v450, 0
    %v481 = vsel %vm212, %v451, 0
    %v483 = vsel %vm212, %v452, 0
    %v485 = vsel %vm212, %v453, 0
    %v487 = vsel %vm212, %v454, 0
    %v489 = vsel %vm212, %v455, 0
    %491 = vmatpush.msra.mxu0 0.0
    %492 = vmatpush.msra.mxu0 0.0
    %493 = vmatpush.msra.mxu0 0.0
    %494 = vmatpush.msra.mxu0 0.0
    %495 = vmatpush.msra.mxu0 0.0
    %496 = vmatpush.msra.mxu0 0.0
    %497 = vmatpush.msra.mxu0 0.0
    %498 = vmatpush.msra.mxu0 0.0
    %499 = vmatpush.msra.mxu0 0.0
    %500 = vmatpush.msra.mxu0 0.0
    %501 = vmatpush.msra.mxu0 0.0
    %502 = vmatpush.msra.mxu0 0.0
    %503 = vmatpush.msra.mxu0 0.0
    %504 = vmatpush.msra.mxu0 0.0
    %505 = vmatpush.msra.mxu0 0.0
    %506 = vmatpush.msra.mxu0 %v459
    %507 = vmatmul.f32.gmra.mxu0 %v457
    %v508 = vpop.f32.mrf.mxu0
    %v509 = vadd.f32 %v389, %v508
    %510 = vdwg.mxu0
    %511 = vmatpush.msra.mxu0 0.0
    %512 = vmatpush.msra.mxu0 0.0
    %513 = vmatpush.msra.mxu0 0.0
    %514 = vmatpush.msra.mxu0 0.0
    %515 = vmatpush.msra.mxu0 0.0
    %516 = vmatpush.msra.mxu0 0.0
    %517 = vmatpush.msra.mxu0 0.0
    %518 = vmatpush.msra.mxu0 0.0
    %519 = vmatpush.msra.mxu0 0.0
    %520 = vmatpush.msra.mxu0 0.0
    %521 = vmatpush.msra.mxu0 0.0
    %522 = vmatpush.msra.mxu0 0.0
    %523 = vmatpush.msra.mxu0 0.0
    %524 = vmatpush.msra.mxu0 0.0
    %525 = vmatpush.msra.mxu0 0.0
    %526 = vmatpush.msra.mxu0 %v461
    %527 = vmatmul.f32.gmra.mxu0 %v457
    %v528 = vpop.f32.mrf.mxu0
    %v529 = vadd.f32 %v390, %v528
    %530 = vdwg.mxu0
    %531 = vmatpush.msra.mxu0 0.0
    %532 = vmatpush.msra.mxu0 0.0
    %533 = vmatpush.msra.mxu0 0.0
    %534 = vmatpush.msra.mxu0 0.0
    %535 = vmatpush.msra.mxu0 0.0
    %536 = vmatpush.msra.mxu0 0.0
    %537 = vmatpush.msra.mxu0 0.0
    %538 = vmatpush.msra.mxu0 0.0
    %539 = vmatpush.msra.mxu0 0.0
    %540 = vmatpush.msra.mxu0 0.0
    %541 = vmatpush.msra.mxu0 0.0
    %542 = vmatpush.msra.mxu0 0.0
    %543 = vmatpush.msra.mxu0 0.0
    %544 = vmatpush.msra.mxu0 0.0
    %545 = vmatpush.msra.mxu0 0.0
    %546 = vmatpush.msra.mxu0 %v463
    %547 = vmatmul.f32.gmra.mxu0 %v457
    %v548 = vpop.f32.mrf.mxu0
    %v549 = vadd.f32 %v391, %v548
    %550 = vdwg.mxu0
    %551 = vmatpush.msra.mxu0 0.0
    %552 = vmatpush.msra.mxu0 0.0
    %553 = vmatpush.msra.mxu0 0.0
    %554 = vmatpush.msra.mxu0 0.0
    %555 = vmatpush.msra.mxu0 0.0
    %556 = vmatpush.msra.mxu0 0.0
    %557 = vmatpush.msra.mxu0 0.0
    %558 = vmatpush.msra.mxu0 0.0
    %559 = vmatpush.msra.mxu0 0.0
    %560 = vmatpush.msra.mxu0 0.0
    %561 = vmatpush.msra.mxu0 0.0
    %562 = vmatpush.msra.mxu0 0.0
    %563 = vmatpush.msra.mxu0 0.0
    %564 = vmatpush.msra.mxu0 0.0
    %565 = vmatpush.msra.mxu0 0.0
    %566 = vmatpush.msra.mxu0 %v465
    %567 = vmatmul.f32.gmra.mxu0 %v457
    %v568 = vpop.f32.mrf.mxu0
    %v569 = vadd.f32 %v392, %v568
    %570 = vdwg.mxu0
    %571 = vmatpush.msra.mxu0 0.0
    %572 = vmatpush.msra.mxu0 0.0
    %573 = vmatpush.msra.mxu0 0.0
    %574 = vmatpush.msra.mxu0 0.0
    %575 = vmatpush.msra.mxu0 0.0
    %576 = vmatpush.msra.mxu0 0.0
    %577 = vmatpush.msra.mxu0 0.0
    %578 = vmatpush.msra.mxu0 0.0
    %579 = vmatpush.msra.mxu0 0.0
    %580 = vmatpush.msra.mxu0 0.0
    %581 = vmatpush.msra.mxu0 0.0
    %582 = vmatpush.msra.mxu0 0.0
    %583 = vmatpush.msra.mxu0 0.0
    %584 = vmatpush.msra.mxu0 0.0
    %585 = vmatpush.msra.mxu0 0.0
    %586 = vmatpush.msra.mxu0 %v467
    %587 = vmatmul.f32.gmra.mxu0 %v457
    %v588 = vpop.f32.mrf.mxu0
    %v589 = vadd.f32 %v393, %v588
    %590 = vdwg.mxu0
    %591 = vmatpush.msra.mxu0 0.0
    %592 = vmatpush.msra.mxu0 0.0
    %593 = vmatpush.msra.mxu0 0.0
    %594 = vmatpush.msra.mxu0 0.0
    %595 = vmatpush.msra.mxu0 0.0
    %596 = vmatpush.msra.mxu0 0.0
    %597 = vmatpush.msra.mxu0 0.0
    %598 = vmatpush.msra.mxu0 0.0
    %599 = vmatpush.msra.mxu0 0.0
    %600 = vmatpush.msra.mxu0 0.0
    %601 = vmatpush.msra.mxu0 0.0
    %602 = vmatpush.msra.mxu0 0.0
    %603 = vmatpush.msra.mxu0 0.0
    %604 = vmatpush.msra.mxu0 0.0
    %605 = vmatpush.msra.mxu0 0.0
    %606 = vmatpush.msra.mxu0 %v469
    %607 = vmatmul.f32.gmra.mxu0 %v457
    %v608 = vpop.f32.mrf.mxu0
    %v609 = vadd.f32 %v394, %v608
    %610 = vdwg.mxu0
    %611 = vmatpush.msra.mxu0 0.0
    %612 = vmatpush.msra.mxu0 0.0
    %613 = vmatpush.msra.mxu0 0.0
    %614 = vmatpush.msra.mxu0 0.0
    %615 = vmatpush.msra.mxu0 0.0
    %616 = vmatpush.msra.mxu0 0.0
    %617 = vmatpush.msra.mxu0 0.0
    %618 = vmatpush.msra.mxu0 0.0
    %619 = vmatpush.msra.mxu0 0.0
    %620 = vmatpush.msra.mxu0 0.0
    %621 = vmatpush.msra.mxu0 0.0
    %622 = vmatpush.msra.mxu0 0.0
    %623 = vmatpush.msra.mxu0 0.0
    %624 = vmatpush.msra.mxu0 0.0
    %625 = vmatpush.msra.mxu0 0.0
    %626 = vmatpush.msra.mxu0 %v471
    %627 = vmatmul.f32.gmra.mxu0 %v457
    %v628 = vpop.f32.mrf.mxu0
    %v629 = vadd.f32 %v395, %v628
    %630 = vdwg.mxu0
    %631 = vmatpush.msra.mxu0 0.0
    %632 = vmatpush.msra.mxu0 0.0
    %633 = vmatpush.msra.mxu0 0.0
    %634 = vmatpush.msra.mxu0 0.0
    %635 = vmatpush.msra.mxu0 0.0
    %636 = vmatpush.msra.mxu0 0.0
    %637 = vmatpush.msra.mxu0 0.0
    %638 = vmatpush.msra.mxu0 0.0
    %639 = vmatpush.msra.mxu0 0.0
    %640 = vmatpush.msra.mxu0 0.0
    %641 = vmatpush.msra.mxu0 0.0
    %642 = vmatpush.msra.mxu0 0.0
    %643 = vmatpush.msra.mxu0 0.0
    %644 = vmatpush.msra.mxu0 0.0
    %645 = vmatpush.msra.mxu0 0.0
    %646 = vmatpush.msra.mxu0 %v473
    %647 = vmatmul.f32.gmra.mxu0 %v457
    %v648 = vpop.f32.mrf.mxu0
    %v649 = vadd.f32 %v396, %v648
    %650 = vdwg.mxu0
    %651 = vmatpush.msra.mxu0 0.0
    %652 = vmatpush.msra.mxu0 0.0
    %653 = vmatpush.msra.mxu0 0.0
    %654 = vmatpush.msra.mxu0 0.0
    %655 = vmatpush.msra.mxu0 0.0
    %656 = vmatpush.msra.mxu0 0.0
    %657 = vmatpush.msra.mxu0 0.0
    %658 = vmatpush.msra.mxu0 0.0
    %659 = vmatpush.msra.mxu0 0.0
    %660 = vmatpush.msra.mxu0 0.0
    %661 = vmatpush.msra.mxu0 0.0
    %662 = vmatpush.msra.mxu0 0.0
    %663 = vmatpush.msra.mxu0 0.0
    %664 = vmatpush.msra.mxu0 0.0
    %665 = vmatpush.msra.mxu0 0.0
    %666 = vmatpush.msra.mxu0 %v475
    %667 = vmatmul.f32.gmra.mxu0 %v457
    %v668 = vpop.f32.mrf.mxu0
    %v669 = vadd.f32 %v397, %v668
    %670 = vdwg.mxu0
    %671 = vmatpush.msra.mxu0 0.0
    %672 = vmatpush.msra.mxu0 0.0
    %673 = vmatpush.msra.mxu0 0.0
    %674 = vmatpush.msra.mxu0 0.0
    %675 = vmatpush.msra.mxu0 0.0
    %676 = vmatpush.msra.mxu0 0.0
    %677 = vmatpush.msra.mxu0 0.0
    %678 = vmatpush.msra.mxu0 0.0
    %679 = vmatpush.msra.mxu0 0.0
    %680 = vmatpush.msra.mxu0 0.0
    %681 = vmatpush.msra.mxu0 0.0
    %682 = vmatpush.msra.mxu0 0.0
    %683 = vmatpush.msra.mxu0 0.0
    %684 = vmatpush.msra.mxu0 0.0
    %685 = vmatpush.msra.mxu0 0.0
    %686 = vmatpush.msra.mxu0 %v477
    %687 = vmatmul.f32.gmra.mxu0 %v457
    %v688 = vpop.f32.mrf.mxu0
    %v689 = vadd.f32 %v398, %v688
    %690 = vdwg.mxu0
    %691 = vmatpush.msra.mxu0 0.0
    %692 = vmatpush.msra.mxu0 0.0
    %693 = vmatpush.msra.mxu0 0.0
    %694 = vmatpush.msra.mxu0 0.0
    %695 = vmatpush.msra.mxu0 0.0
    %696 = vmatpush.msra.mxu0 0.0
    %697 = vmatpush.msra.mxu0 0.0
    %698 = vmatpush.msra.mxu0 0.0
    %699 = vmatpush.msra.mxu0 0.0
    %700 = vmatpush.msra.mxu0 0.0
    %701 = vmatpush.msra.mxu0 0.0
    %702 = vmatpush.msra.mxu0 0.0
    %703 = vmatpush.msra.mxu0 0.0
    %704 = vmatpush.msra.mxu0 0.0
    %705 = vmatpush.msra.mxu0 0.0
    %706 = vmatpush.msra.mxu0 %v479
    %707 = vmatmul.f32.gmra.mxu0 %v457
    %v708 = vpop.f32.mrf.mxu0
    %v709 = vadd.f32 %v399, %v708
    %710 = vdwg.mxu0
    %711 = vmatpush.msra.mxu0 0.0
    %712 = vmatpush.msra.mxu0 0.0
    %713 = vmatpush.msra.mxu0 0.0
    %714 = vmatpush.msra.mxu0 0.0
    %715 = vmatpush.msra.mxu0 0.0
    %716 = vmatpush.msra.mxu0 0.0
    %717 = vmatpush.msra.mxu0 0.0
    %718 = vmatpush.msra.mxu0 0.0
    %719 = vmatpush.msra.mxu0 0.0
    %720 = vmatpush.msra.mxu0 0.0
    %721 = vmatpush.msra.mxu0 0.0
    %722 = vmatpush.msra.mxu0 0.0
    %723 = vmatpush.msra.mxu0 0.0
    %724 = vmatpush.msra.mxu0 0.0
    %725 = vmatpush.msra.mxu0 0.0
    %726 = vmatpush.msra.mxu0 %v481
    %727 = vmatmul.f32.gmra.mxu0 %v457
    %v728 = vpop.f32.mrf.mxu0
    %v729 = vadd.f32 %v400, %v728
    %730 = vdwg.mxu0
    %731 = vmatpush.msra.mxu0 0.0
    %732 = vmatpush.msra.mxu0 0.0
    %733 = vmatpush.msra.mxu0 0.0
    %734 = vmatpush.msra.mxu0 0.0
    %735 = vmatpush.msra.mxu0 0.0
    %736 = vmatpush.msra.mxu0 0.0
    %737 = vmatpush.msra.mxu0 0.0
    %738 = vmatpush.msra.mxu0 0.0
    %739 = vmatpush.msra.mxu0 0.0
    %740 = vmatpush.msra.mxu0 0.0
    %741 = vmatpush.msra.mxu0 0.0
    %742 = vmatpush.msra.mxu0 0.0
    %743 = vmatpush.msra.mxu0 0.0
    %744 = vmatpush.msra.mxu0 0.0
    %745 = vmatpush.msra.mxu0 0.0
    %746 = vmatpush.msra.mxu0 %v483
    %747 = vmatmul.f32.gmra.mxu0 %v457
    %v748 = vpop.f32.mrf.mxu0
    %v749 = vadd.f32 %v401, %v748
    %750 = vdwg.mxu0
    %751 = vmatpush.msra.mxu0 0.0
    %752 = vmatpush.msra.mxu0 0.0
    %753 = vmatpush.msra.mxu0 0.0
    %754 = vmatpush.msra.mxu0 0.0
    %755 = vmatpush.msra.mxu0 0.0
    %756 = vmatpush.msra.mxu0 0.0
    %757 = vmatpush.msra.mxu0 0.0
    %758 = vmatpush.msra.mxu0 0.0
    %759 = vmatpush.msra.mxu0 0.0
    %760 = vmatpush.msra.mxu0 0.0
    %761 = vmatpush.msra.mxu0 0.0
    %762 = vmatpush.msra.mxu0 0.0
    %763 = vmatpush.msra.mxu0 0.0
    %764 = vmatpush.msra.mxu0 0.0
    %765 = vmatpush.msra.mxu0 0.0
    %766 = vmatpush.msra.mxu0 %v485
    %767 = vmatmul.f32.gmra.mxu0 %v457
    %v768 = vpop.f32.mrf.mxu0
    %v769 = vadd.f32 %v402, %v768
    %770 = vdwg.mxu0
    %771 = vmatpush.msra.mxu0 0.0
    %772 = vmatpush.msra.mxu0 0.0
    %773 = vmatpush.msra.mxu0 0.0
    %774 = vmatpush.msra.mxu0 0.0
    %775 = vmatpush.msra.mxu0 0.0
    %776 = vmatpush.msra.mxu0 0.0
    %777 = vmatpush.msra.mxu0 0.0
    %778 = vmatpush.msra.mxu0 0.0
    %779 = vmatpush.msra.mxu0 0.0
    %780 = vmatpush.msra.mxu0 0.0
    %781 = vmatpush.msra.mxu0 0.0
    %782 = vmatpush.msra.mxu0 0.0
    %783 = vmatpush.msra.mxu0 0.0
    %784 = vmatpush.msra.mxu0 0.0
    %785 = vmatpush.msra.mxu0 0.0
    %786 = vmatpush.msra.mxu0 %v487
    %787 = vmatmul.f32.gmra.mxu0 %v457
    %v788 = vpop.f32.mrf.mxu0
    %v789 = vadd.f32 %v403, %v788
    %790 = vdwg.mxu0
    %791 = vmatpush.msra.mxu0 0.0
    %792 = vmatpush.msra.mxu0 0.0
    %793 = vmatpush.msra.mxu0 0.0
    %794 = vmatpush.msra.mxu0 0.0
    %795 = vmatpush.msra.mxu0 0.0
    %796 = vmatpush.msra.mxu0 0.0
    %797 = vmatpush.msra.mxu0 0.0
    %798 = vmatpush.msra.mxu0 0.0
    %799 = vmatpush.msra.mxu0 0.0
    %800 = vmatpush.msra.mxu0 0.0
    %801 = vmatpush.msra.mxu0 0.0
    %802 = vmatpush.msra.mxu0 0.0
    %803 = vmatpush.msra.mxu0 0.0
    %804 = vmatpush.msra.mxu0 0.0
    %805 = vmatpush.msra.mxu0 0.0
    %806 = vmatpush.msra.mxu0 %v489
    %807 = vmatmul.f32.gmra.mxu0 %v457
    %v808 = vpop.f32.mrf.mxu0
    %v809 = vadd.f32 %v404, %v808
    %810 = vdwg.mxu0
    %v811 = vmax.f32 %v509, 0.0
    %v812 = vmax.f32 %v529, 0.0
    %v813 = vmax.f32 %v549, 0.0
    %v814 = vmax.f32 %v569, 0.0
    %v815 = vmax.f32 %v589, 0.0
    %v816 = vmax.f32 %v609, 0.0
    %v817 = vmax.f32 %v629, 0.0
    %v818 = vmax.f32 %v649, 0.0
    %v819 = vmax.f32 %v669, 0.0
    %v820 = vmax.f32 %v689, 0.0
    %v821 = vmax.f32 %v709, 0.0
    %v822 = vmax.f32 %v729, 0.0
    %v823 = vmax.f32 %v749, 0.0
    %v824 = vmax.f32 %v769, 0.0
    %v825 = vmax.f32 %v789, 0.0
    %v826 = vmax.f32 %v809, 0.0
    %v827 = vld [vmem:[#allocation19] sm:$0xff]
    %v828 = vld [vmem:[#allocation19 + $0x8] sm:$0xff]
    %v829 = vld [vmem:[#allocation19 + $0x10] sm:$0xff]
    %v830 = vld [vmem:[#allocation19 + $0x18] sm:$0xff]
    %v831 = vld [vmem:[#allocation19 + $0x20] sm:$0xff]
    %v832 = vld [vmem:[#allocation19 + $0x28] sm:$0xff]
    %v833 = vld [vmem:[#allocation19 + $0x30] sm:$0xff]
    %v834 = vld [vmem:[#allocation19 + $0x38] sm:$0xff]
    %v835 = vperm.slane %v202, 1
    %844 = vst [vmem:[#allocation1] ss:$2 sm:$0xff] %v827
    %s845 = scalar_lea.vmem [#allocation1], 16
    %846 = vst [vmem:[%s845] ss:$2 sm:$0xff] %v828
    %s847 = scalar_lea.vmem [#allocation1], 32
    %848 = vst [vmem:[%s847] ss:$2 sm:$0xff] %v829
    %s849 = scalar_lea.vmem [#allocation1], 48
    %850 = vst [vmem:[%s849] ss:$2 sm:$0xff] %v830
    %v851 = vld.sshfl [vmem:[#allocation1] sm:$0xff pattern:$0x75316420]
    %v852 = vld.sshfl [vmem:[#allocation1 + $0x8] sm:$0xff pattern:$0x75316420]
    %v853 = vld.sshfl [vmem:[#allocation1 + $0x10] sm:$0xff pattern:$0x75316420]
    %v854 = vld.sshfl [vmem:[#allocation1 + $0x18] sm:$0xff pattern:$0x75316420]
    %v855 = vld.sshfl [vmem:[#allocation1 + $0x20] sm:$0xff pattern:$0x75316420]
    %v856 = vld.sshfl [vmem:[#allocation1 + $0x28] sm:$0xff pattern:$0x75316420]
    %v857 = vld.sshfl [vmem:[#allocation1 + $0x30] sm:$0xff pattern:$0x75316420]
    %v858 = vld.sshfl [vmem:[#allocation1 + $0x38] sm:$0xff pattern:$0x75316420]
    %859 = vst [vmem:[#allocation1] ss:$2 sm:$0xff] %v831
    %860 = vst [vmem:[%s845] ss:$2 sm:$0xff] %v832
    %861 = vst [vmem:[%s847] ss:$2 sm:$0xff] %v833
    %862 = vst [vmem:[%s849] ss:$2 sm:$0xff] %v834
    %v863 = vld.sshfl [vmem:[#allocation1] sm:$0xff pattern:$0x75316420]
    %v864 = vld.sshfl [vmem:[#allocation1 + $0x8] sm:$0xff pattern:$0x75316420]
    %v865 = vld.sshfl [vmem:[#allocation1 + $0x10] sm:$0xff pattern:$0x75316420]
    %v866 = vld.sshfl [vmem:[#allocation1 + $0x18] sm:$0xff pattern:$0x75316420]
    %v867 = vld.sshfl [vmem:[#allocation1 + $0x20] sm:$0xff pattern:$0x75316420]
    %v868 = vld.sshfl [vmem:[#allocation1 + $0x28] sm:$0xff pattern:$0x75316420]
    %v869 = vld.sshfl [vmem:[#allocation1 + $0x30] sm:$0xff pattern:$0x75316420]
    %v870 = vld.sshfl [vmem:[#allocation1 + $0x38] sm:$0xff pattern:$0x75316420]
    %887 = vmatpush.xpose.msra.mxu0 0.0
    %888 = vmatpush.xpose.msra.mxu0 0.0
    %889 = vmatpush.xpose.msra.mxu0 0.0
    %890 = vmatpush.xpose.msra.mxu0 0.0
    %891 = vmatpush.xpose.msra.mxu0 0.0
    %892 = vmatpush.xpose.msra.mxu0 0.0
    %893 = vmatpush.xpose.msra.mxu0 0.0
    %894 = vmatpush.xpose.msra.mxu0 0.0
    %895 = vmatpush.xpose.msra.mxu0 0.0
    %896 = vmatpush.xpose.msra.mxu0 0.0
    %897 = vmatpush.xpose.msra.mxu0 0.0
    %898 = vmatpush.xpose.msra.mxu0 0.0
    %899 = vmatpush.xpose.msra.mxu0 0.0
    %900 = vmatpush.xpose.msra.mxu0 0.0
    %901 = vmatpush.xpose.msra.mxu0 0.0
    %902 = vmatpush.xpose.msra.mxu0 %v851
    %903 = vmatmul.f32.gmra.mxu0 %v811
    %v904 = vpop.f32.mrf.mxu0
    %v905 = vadd.f32 %v835, %v904
    %906 = vdwg.mxu0
    %907 = vmatpush.xpose.msra.mxu0 0.0
    %908 = vmatpush.xpose.msra.mxu0 0.0
    %909 = vmatpush.xpose.msra.mxu0 0.0
    %910 = vmatpush.xpose.msra.mxu0 0.0
    %911 = vmatpush.xpose.msra.mxu0 0.0
    %912 = vmatpush.xpose.msra.mxu0 0.0
    %913 = vmatpush.xpose.msra.mxu0 0.0
    %914 = vmatpush.xpose.msra.mxu0 0.0
    %915 = vmatpush.xpose.msra.mxu0 0.0
    %916 = vmatpush.xpose.msra.mxu0 0.0
    %917 = vmatpush.xpose.msra.mxu0 0.0
    %918 = vmatpush.xpose.msra.mxu0 0.0
    %919 = vmatpush.xpose.msra.mxu0 0.0
    %920 = vmatpush.xpose.msra.mxu0 0.0
    %921 = vmatpush.xpose.msra.mxu0 0.0
    %922 = vmatpush.xpose.msra.mxu0 %v852
    %923 = vmatmul.f32.gmra.mxu0 %v812
    %v924 = vpop.f32.mrf.mxu0
    %v925 = vadd.f32 %v905, %v924
    %926 = vdwg.mxu0
    %927 = vmatpush.xpose.msra.mxu0 0.0
    %928 = vmatpush.xpose.msra.mxu0 0.0
    %929 = vmatpush.xpose.msra.mxu0 0.0
    %930 = vmatpush.xpose.msra.mxu0 0.0
    %931 = vmatpush.xpose.msra.mxu0 0.0
    %932 = vmatpush.xpose.msra.mxu0 0.0
    %933 = vmatpush.xpose.msra.mxu0 0.0
    %934 = vmatpush.xpose.msra.mxu0 0.0
    %935 = vmatpush.xpose.msra.mxu0 0.0
    %936 = vmatpush.xpose.msra.mxu0 0.0
    %937 = vmatpush.xpose.msra.mxu0 0.0
    %938 = vmatpush.xpose.msra.mxu0 0.0
    %939 = vmatpush.xpose.msra.mxu0 0.0
    %940 = vmatpush.xpose.msra.mxu0 0.0
    %941 = vmatpush.xpose.msra.mxu0 0.0
    %942 = vmatpush.xpose.msra.mxu0 %v853
    %943 = vmatmul.f32.gmra.mxu0 %v813
    %v944 = vpop.f32.mrf.mxu0
    %v945 = vadd.f32 %v925, %v944
    %946 = vdwg.mxu0
    %947 = vmatpush.xpose.msra.mxu0 0.0
    %948 = vmatpush.xpose.msra.mxu0 0.0
    %949 = vmatpush.xpose.msra.mxu0 0.0
    %950 = vmatpush.xpose.msra.mxu0 0.0
    %951 = vmatpush.xpose.msra.mxu0 0.0
    %952 = vmatpush.xpose.msra.mxu0 0.0
    %953 = vmatpush.xpose.msra.mxu0 0.0
    %954 = vmatpush.xpose.msra.mxu0 0.0
    %955 = vmatpush.xpose.msra.mxu0 0.0
    %956 = vmatpush.xpose.msra.mxu0 0.0
    %957 = vmatpush.xpose.msra.mxu0 0.0
    %958 = vmatpush.xpose.msra.mxu0 0.0
    %959 = vmatpush.xpose.msra.mxu0 0.0
    %960 = vmatpush.xpose.msra.mxu0 0.0
    %961 = vmatpush.xpose.msra.mxu0 0.0
    %962 = vmatpush.xpose.msra.mxu0 %v854
    %963 = vmatmul.f32.gmra.mxu0 %v814
    %v964 = vpop.f32.mrf.mxu0
    %v965 = vadd.f32 %v945, %v964
    %966 = vdwg.mxu0
    %967 = vmatpush.xpose.msra.mxu0 0.0
    %968 = vmatpush.xpose.msra.mxu0 0.0
    %969 = vmatpush.xpose.msra.mxu0 0.0
    %970 = vmatpush.xpose.msra.mxu0 0.0
    %971 = vmatpush.xpose.msra.mxu0 0.0
    %972 = vmatpush.xpose.msra.mxu0 0.0
    %973 = vmatpush.xpose.msra.mxu0 0.0
    %974 = vmatpush.xpose.msra.mxu0 0.0
    %975 = vmatpush.xpose.msra.mxu0 0.0
    %976 = vmatpush.xpose.msra.mxu0 0.0
    %977 = vmatpush.xpose.msra.mxu0 0.0
    %978 = vmatpush.xpose.msra.mxu0 0.0
    %979 = vmatpush.xpose.msra.mxu0 0.0
    %980 = vmatpush.xpose.msra.mxu0 0.0
    %981 = vmatpush.xpose.msra.mxu0 0.0
    %982 = vmatpush.xpose.msra.mxu0 %v855
    %983 = vmatmul.f32.gmra.mxu0 %v815
    %v984 = vpop.f32.mrf.mxu0
    %v985 = vadd.f32 %v965, %v984
    %986 = vdwg.mxu0
    %987 = vmatpush.xpose.msra.mxu0 0.0
    %988 = vmatpush.xpose.msra.mxu0 0.0
    %989 = vmatpush.xpose.msra.mxu0 0.0
    %990 = vmatpush.xpose.msra.mxu0 0.0
    %991 = vmatpush.xpose.msra.mxu0 0.0
    %992 = vmatpush.xpose.msra.mxu0 0.0
    %993 = vmatpush.xpose.msra.mxu0 0.0
    %994 = vmatpush.xpose.msra.mxu0 0.0
    %995 = vmatpush.xpose.msra.mxu0 0.0
    %996 = vmatpush.xpose.msra.mxu0 0.0
    %997 = vmatpush.xpose.msra.mxu0 0.0
    %998 = vmatpush.xpose.msra.mxu0 0.0
    %999 = vmatpush.xpose.msra.mxu0 0.0
    %1000 = vmatpush.xpose.msra.mxu0 0.0
    %1001 = vmatpush.xpose.msra.mxu0 0.0
    %1002 = vmatpush.xpose.msra.mxu0 %v856
    %1003 = vmatmul.f32.gmra.mxu0 %v816
    %v1004 = vpop.f32.mrf.mxu0
    %v1005 = vadd.f32 %v985, %v1004
    %1006 = vdwg.mxu0
    %1007 = vmatpush.xpose.msra.mxu0 0.0
    %1008 = vmatpush.xpose.msra.mxu0 0.0
    %1009 = vmatpush.xpose.msra.mxu0 0.0
    %1010 = vmatpush.xpose.msra.mxu0 0.0
    %1011 = vmatpush.xpose.msra.mxu0 0.0
    %1012 = vmatpush.xpose.msra.mxu0 0.0
    %1013 = vmatpush.xpose.msra.mxu0 0.0
    %1014 = vmatpush.xpose.msra.mxu0 0.0
    %1015 = vmatpush.xpose.msra.mxu0 0.0
    %1016 = vmatpush.xpose.msra.mxu0 0.0
    %1017 = vmatpush.xpose.msra.mxu0 0.0
    %1018 = vmatpush.xpose.msra.mxu0 0.0
    %1019 = vmatpush.xpose.msra.mxu0 0.0
    %1020 = vmatpush.xpose.msra.mxu0 0.0
    %1021 = vmatpush.xpose.msra.mxu0 0.0
    %1022 = vmatpush.xpose.msra.mxu0 %v857
    %1023 = vmatmul.f32.gmra.mxu0 %v817
    %v1024 = vpop.f32.mrf.mxu0
    %v1025 = vadd.f32 %v1005, %v1024
    %1026 = vdwg.mxu0
    %1027 = vmatpush.xpose.msra.mxu0 0.0
    %1028 = vmatpush.xpose.msra.mxu0 0.0
    %1029 = vmatpush.xpose.msra.mxu0 0.0
    %1030 = vmatpush.xpose.msra.mxu0 0.0
    %1031 = vmatpush.xpose.msra.mxu0 0.0
    %1032 = vmatpush.xpose.msra.mxu0 0.0
    %1033 = vmatpush.xpose.msra.mxu0 0.0
    %1034 = vmatpush.xpose.msra.mxu0 0.0
    %1035 = vmatpush.xpose.msra.mxu0 0.0
    %1036 = vmatpush.xpose.msra.mxu0 0.0
    %1037 = vmatpush.xpose.msra.mxu0 0.0
    %1038 = vmatpush.xpose.msra.mxu0 0.0
    %1039 = vmatpush.xpose.msra.mxu0 0.0
    %1040 = vmatpush.xpose.msra.mxu0 0.0
    %1041 = vmatpush.xpose.msra.mxu0 0.0
    %1042 = vmatpush.xpose.msra.mxu0 %v858
    %1043 = vmatmul.f32.gmra.mxu0 %v818
    %v1044 = vpop.f32.mrf.mxu0
    %v1045 = vadd.f32 %v1025, %v1044
    %1046 = vdwg.mxu0
    %1047 = vmatpush.xpose.msra.mxu0 0.0
    %1048 = vmatpush.xpose.msra.mxu0 0.0
    %1049 = vmatpush.xpose.msra.mxu0 0.0
    %1050 = vmatpush.xpose.msra.mxu0 0.0
    %1051 = vmatpush.xpose.msra.mxu0 0.0
    %1052 = vmatpush.xpose.msra.mxu0 0.0
    %1053 = vmatpush.xpose.msra.mxu0 0.0
    %1054 = vmatpush.xpose.msra.mxu0 0.0
    %1055 = vmatpush.xpose.msra.mxu0 0.0
    %1056 = vmatpush.xpose.msra.mxu0 0.0
    %1057 = vmatpush.xpose.msra.mxu0 0.0
    %1058 = vmatpush.xpose.msra.mxu0 0.0
    %1059 = vmatpush.xpose.msra.mxu0 0.0
    %1060 = vmatpush.xpose.msra.mxu0 0.0
    %1061 = vmatpush.xpose.msra.mxu0 0.0
    %1062 = vmatpush.xpose.msra.mxu0 %v863
    %1063 = vmatmul.f32.gmra.mxu0 %v819
    %v1064 = vpop.f32.mrf.mxu0
    %v1065 = vadd.f32 %v1045, %v1064
    %1066 = vdwg.mxu0
    %1067 = vmatpush.xpose.msra.mxu0 0.0
    %1068 = vmatpush.xpose.msra.mxu0 0.0
    %1069 = vmatpush.xpose.msra.mxu0 0.0
    %1070 = vmatpush.xpose.msra.mxu0 0.0
    %1071 = vmatpush.xpose.msra.mxu0 0.0
    %1072 = vmatpush.xpose.msra.mxu0 0.0
    %1073 = vmatpush.xpose.msra.mxu0 0.0
    %1074 = vmatpush.xpose.msra.mxu0 0.0
    %1075 = vmatpush.xpose.msra.mxu0 0.0
    %1076 = vmatpush.xpose.msra.mxu0 0.0
    %1077 = vmatpush.xpose.msra.mxu0 0.0
    %1078 = vmatpush.xpose.msra.mxu0 0.0
    %1079 = vmatpush.xpose.msra.mxu0 0.0
    %1080 = vmatpush.xpose.msra.mxu0 0.0
    %1081 = vmatpush.xpose.msra.mxu0 0.0
    %1082 = vmatpush.xpose.msra.mxu0 %v864
    %1083 = vmatmul.f32.gmra.mxu0 %v820
    %v1084 = vpop.f32.mrf.mxu0
    %v1085 = vadd.f32 %v1065, %v1084
    %1086 = vdwg.mxu0
    %1087 = vmatpush.xpose.msra.mxu0 0.0
    %1088 = vmatpush.xpose.msra.mxu0 0.0
    %1089 = vmatpush.xpose.msra.mxu0 0.0
    %1090 = vmatpush.xpose.msra.mxu0 0.0
    %1091 = vmatpush.xpose.msra.mxu0 0.0
    %1092 = vmatpush.xpose.msra.mxu0 0.0
    %1093 = vmatpush.xpose.msra.mxu0 0.0
    %1094 = vmatpush.xpose.msra.mxu0 0.0
    %1095 = vmatpush.xpose.msra.mxu0 0.0
    %1096 = vmatpush.xpose.msra.mxu0 0.0
    %1097 = vmatpush.xpose.msra.mxu0 0.0
    %1098 = vmatpush.xpose.msra.mxu0 0.0
    %1099 = vmatpush.xpose.msra.mxu0 0.0
    %1100 = vmatpush.xpose.msra.mxu0 0.0
    %1101 = vmatpush.xpose.msra.mxu0 0.0
    %1102 = vmatpush.xpose.msra.mxu0 %v865
    %1103 = vmatmul.f32.gmra.mxu0 %v821
    %v1104 = vpop.f32.mrf.mxu0
    %v1105 = vadd.f32 %v1085, %v1104
    %1106 = vdwg.mxu0
    %1107 = vmatpush.xpose.msra.mxu0 0.0
    %1108 = vmatpush.xpose.msra.mxu0 0.0
    %1109 = vmatpush.xpose.msra.mxu0 0.0
    %1110 = vmatpush.xpose.msra.mxu0 0.0
    %1111 = vmatpush.xpose.msra.mxu0 0.0
    %1112 = vmatpush.xpose.msra.mxu0 0.0
    %1113 = vmatpush.xpose.msra.mxu0 0.0
    %1114 = vmatpush.xpose.msra.mxu0 0.0
    %1115 = vmatpush.xpose.msra.mxu0 0.0
    %1116 = vmatpush.xpose.msra.mxu0 0.0
    %1117 = vmatpush.xpose.msra.mxu0 0.0
    %1118 = vmatpush.xpose.msra.mxu0 0.0
    %1119 = vmatpush.xpose.msra.mxu0 0.0
    %1120 = vmatpush.xpose.msra.mxu0 0.0
    %1121 = vmatpush.xpose.msra.mxu0 0.0
    %1122 = vmatpush.xpose.msra.mxu0 %v866
    %1123 = vmatmul.f32.gmra.mxu0 %v822
    %v1124 = vpop.f32.mrf.mxu0
    %v1125 = vadd.f32 %v1105, %v1124
    %1126 = vdwg.mxu0
    %1127 = vmatpush.xpose.msra.mxu0 0.0
    %1128 = vmatpush.xpose.msra.mxu0 0.0
    %1129 = vmatpush.xpose.msra.mxu0 0.0
    %1130 = vmatpush.xpose.msra.mxu0 0.0
    %1131 = vmatpush.xpose.msra.mxu0 0.0
    %1132 = vmatpush.xpose.msra.mxu0 0.0
    %1133 = vmatpush.xpose.msra.mxu0 0.0
    %1134 = vmatpush.xpose.msra.mxu0 0.0
    %1135 = vmatpush.xpose.msra.mxu0 0.0
    %1136 = vmatpush.xpose.msra.mxu0 0.0
    %1137 = vmatpush.xpose.msra.mxu0 0.0
    %1138 = vmatpush.xpose.msra.mxu0 0.0
    %1139 = vmatpush.xpose.msra.mxu0 0.0
    %1140 = vmatpush.xpose.msra.mxu0 0.0
    %1141 = vmatpush.xpose.msra.mxu0 0.0
    %1142 = vmatpush.xpose.msra.mxu0 %v867
    %1143 = vmatmul.f32.gmra.mxu0 %v823
    %v1144 = vpop.f32.mrf.mxu0
    %v1145 = vadd.f32 %v1125, %v1144
    %1146 = vdwg.mxu0
    %1147 = vmatpush.xpose.msra.mxu0 0.0
    %1148 = vmatpush.xpose.msra.mxu0 0.0
    %1149 = vmatpush.xpose.msra.mxu0 0.0
    %1150 = vmatpush.xpose.msra.mxu0 0.0
    %1151 = vmatpush.xpose.msra.mxu0 0.0
    %1152 = vmatpush.xpose.msra.mxu0 0.0
    %1153 = vmatpush.xpose.msra.mxu0 0.0
    %1154 = vmatpush.xpose.msra.mxu0 0.0
    %1155 = vmatpush.xpose.msra.mxu0 0.0
    %1156 = vmatpush.xpose.msra.mxu0 0.0
    %1157 = vmatpush.xpose.msra.mxu0 0.0
    %1158 = vmatpush.xpose.msra.mxu0 0.0
    %1159 = vmatpush.xpose.msra.mxu0 0.0
    %1160 = vmatpush.xpose.msra.mxu0 0.0
    %1161 = vmatpush.xpose.msra.mxu0 0.0
    %1162 = vmatpush.xpose.msra.mxu0 %v868
    %1163 = vmatmul.f32.gmra.mxu0 %v824
    %v1164 = vpop.f32.mrf.mxu0
    %v1165 = vadd.f32 %v1145, %v1164
    %1166 = vdwg.mxu0
    %1167 = vmatpush.xpose.msra.mxu0 0.0
    %1168 = vmatpush.xpose.msra.mxu0 0.0
    %1169 = vmatpush.xpose.msra.mxu0 0.0
    %1170 = vmatpush.xpose.msra.mxu0 0.0
    %1171 = vmatpush.xpose.msra.mxu0 0.0
    %1172 = vmatpush.xpose.msra.mxu0 0.0
    %1173 = vmatpush.xpose.msra.mxu0 0.0
    %1174 = vmatpush.xpose.msra.mxu0 0.0
    %1175 = vmatpush.xpose.msra.mxu0 0.0
    %1176 = vmatpush.xpose.msra.mxu0 0.0
    %1177 = vmatpush.xpose.msra.mxu0 0.0
    %1178 = vmatpush.xpose.msra.mxu0 0.0
    %1179 = vmatpush.xpose.msra.mxu0 0.0
    %1180 = vmatpush.xpose.msra.mxu0 0.0
    %1181 = vmatpush.xpose.msra.mxu0 0.0
    %1182 = vmatpush.xpose.msra.mxu0 %v869
    %1183 = vmatmul.f32.gmra.mxu0 %v825
    %v1184 = vpop.f32.mrf.mxu0
    %v1185 = vadd.f32 %v1165, %v1184
    %1186 = vdwg.mxu0
    %1187 = vmatpush.xpose.msra.mxu0 0.0
    %1188 = vmatpush.xpose.msra.mxu0 0.0
    %1189 = vmatpush.xpose.msra.mxu0 0.0
    %1190 = vmatpush.xpose.msra.mxu0 0.0
    %1191 = vmatpush.xpose.msra.mxu0 0.0
    %1192 = vmatpush.xpose.msra.mxu0 0.0
    %1193 = vmatpush.xpose.msra.mxu0 0.0
    %1194 = vmatpush.xpose.msra.mxu0 0.0
    %1195 = vmatpush.xpose.msra.mxu0 0.0
    %1196 = vmatpush.xpose.msra.mxu0 0.0
    %1197 = vmatpush.xpose.msra.mxu0 0.0
    %1198 = vmatpush.xpose.msra.mxu0 0.0
    %1199 = vmatpush.xpose.msra.mxu0 0.0
    %1200 = vmatpush.xpose.msra.mxu0 0.0
    %1201 = vmatpush.xpose.msra.mxu0 0.0
    %1202 = vmatpush.xpose.msra.mxu0 %v870
    %1203 = vmatmul.f32.gmra.mxu0 %v826
    %v1204 = vpop.f32.mrf.mxu0
    %v1205 = vadd.f32 %v1185, %v1204
    %1206 = vdwg.mxu0
    %v1207 = vadd.f32 %v376, %v1205
    %v1208 = vsel %vm208, %v1207, 0.0
    %1209 = vadd.xlane.f32.xlu0 %v1208
    %v1210 = vpop.xlane.xlu0 %1209
    %v1211 = vmul.f32 %v1210, %v353
    %v1212 = vsub.f32 %v1207, %v1211
    %v1213 = vmul.f32 %v1212, %v1212
    %v1214 = vsel %vm208, %v1213, 0.0
    %1215 = vadd.xlane.f32.xlu0 %v1214
    %v1216 = vpop.xlane.xlu0 %1215
    %v1217 = vmul.f32 %v1216, %v353
    %v1218 = vadd.f32 %v1217, 1e-05
    %v1219 = vrsqrt.pop %v1218
    %v1220 = vmul.f32 %v1219, %v1218
    %v1221 = vmul.f32 %v1220, %v1219
    %v1222 = vmul.f32 0.5, %v1221
    %v1223 = vsub.f32 1.5, %v1222
    %v1224 = vmul.f32 %v1219, %v1223
    %vm1225 = vweird.f32 %v1218
    %vm1226 = vweird.f32 %v1219
    %vm1227 = vmor %vm1225, %vm1226
    %v1228 = vsel %vm1227, %v1219, %v1224
    %v1229 = vmul.f32 %v1212, %v1228
    %v1230 = vperm.slane %v201, 7
    %v1231 = vmul.f32 %v1229, %v1230
    %v1232 = vperm.slane %v202, 0
    %v1233 = vadd.f32 %v1231, %v1232
    %s1234 = scalar_lea.vmem [#allocation13], 4
    %v1235 = vld [vmem:[%s1234] sm:$0xf]
    %v1236 = vperm.slane %v202, 2
    %v1238 = vsel %vm208, %v1233, 0
    %v1241 = vsel %vm212, %v1235, 0
    %1243 = vmatpush.msra.mxu0 0.0
    %1244 = vmatpush.msra.mxu0 0.0
    %1245 = vmatpush.msra.mxu0 0.0
    %1246 = vmatpush.msra.mxu0 0.0
    %1247 = vmatpush.msra.mxu0 0.0
    %1248 = vmatpush.msra.mxu0 0.0
    %1249 = vmatpush.msra.mxu0 0.0
    %1250 = vmatpush.msra.mxu0 0.0
    %1251 = vmatpush.msra.mxu0 0.0
    %1252 = vmatpush.msra.mxu0 0.0
    %1253 = vmatpush.msra.mxu0 0.0
    %1254 = vmatpush.msra.mxu0 0.0
    %1255 = vmatpush.msra.mxu0 0.0
    %1256 = vmatpush.msra.mxu0 0.0
    %1257 = vmatpush.msra.mxu0 0.0
    %1258 = vmatpush.msra.mxu0 %v1241
    %1259 = vmatmul.f32.gmra.mxu0 %v1238
    %v1260 = vpop.f32.mrf.mxu0
    %v1261 = vadd.f32 %v1236, %v1260
    %1262 = vdwg.mxu0
    %1264 = vrot.lane.b32.xlu0 %v1261, 124
    %v1265 = vpop.permute.xlu0 %1264
    %v1266 = vsel %vm208, %v1261, 0
    %v1268 = vsel %vm208, %v1265, 0
    %1270 = vmatpush.xpose.msra.mxu0 0.0
    %1271 = vmatpush.xpose.msra.mxu0 0.0
    %1272 = vmatpush.xpose.msra.mxu0 0.0
    %1273 = vmatpush.xpose.msra.mxu0 0.0
    %1274 = vmatpush.xpose.msra.mxu0 0.0
    %1275 = vmatpush.xpose.msra.mxu0 0.0
    %1276 = vmatpush.xpose.msra.mxu0 0.0
    %1277 = vmatpush.xpose.msra.mxu0 0.0
    %1278 = vmatpush.xpose.msra.mxu0 0.0
    %1279 = vmatpush.xpose.msra.mxu0 0.0
    %1280 = vmatpush.xpose.msra.mxu0 0.0
    %1281 = vmatpush.xpose.msra.mxu0 0.0
    %1282 = vmatpush.xpose.msra.mxu0 0.0
    %1283 = vmatpush.xpose.msra.mxu0 0.0
    %1284 = vmatpush.xpose.msra.mxu0 0.0
    %1285 = vmatpush.xpose.msra.mxu0 %v1268
    %1286 = vmatmul.f32.gmra.mxu0 %v1266
    %v1287 = vpop.f32.mrf.mxu0
    %v1288 = vadd.f32 0.0, %v1287
    %1289 = vdwg.mxu0
    %v1290 = vmul.f32 %v1288, 0.5
    %v1291 = vsel %vm264, %v1290, -inf
    %1292 = vmax.xlane.f32.xlu0 %v1291
    %v1293 = vpop.xlane.xlu0 %1292
    %v1294 = vsub.f32 %v1290, %v1293
    %v1295 = vmul.f32 %v1294, 1.442695
    %v1296 = vpow.pop %v1295
    %v1297 = vsel %vm264, %v1296, 0.0
    %1298 = vadd.xlane.f32.xlu0 %v1297
    %v1299 = vpop.xlane.xlu0 %1298
    %v1300 = vrcp.pop %v1299
    %v1301 = vmul.f32 %v1299, %v1300
    %v1302 = vsub.f32 1.0, %v1301
    %v1303 = vmul.f32 %v1300, %v1302
    %v1304 = vadd.f32 %v1300, %v1303
    %vm1305 = vweird.f32 %v1299
    %vm1306 = vweird.f32 %v1300
    %vm1307 = vmor %vm1305, %vm1306
    %v1308 = vsel %vm1307, %v1300, %v1304
    %v1309 = vand.u32 2147483647, %v1299
    %vm1310 = vcmp.eq.f32.partialorder %v1309, 8.507059e+37
    %v1311 = vand.u32 %v1299, 2147483648
    %v1312 = vor.u32 1.1754944e-38, %v1311
    %v1313 = vsel %vm1310, %v1312, %v1308
    %v1314 = vmul.f32 %v1296, %v1313
    %1315 = vrot.lane.b32.xlu0 %v1261, 120
    %v1316 = vpop.permute.xlu0 %1315
    %v1319 = vsel %vm264, %v1314, 0
    %1321 = vmatpush.msra.mxu0 0.0
    %1322 = vmatpush.msra.mxu0 0.0
    %1323 = vmatpush.msra.mxu0 0.0
    %1324 = vmatpush.msra.mxu0 0.0
    %1325 = vmatpush.msra.mxu0 0.0
    %1326 = vmatpush.msra.mxu0 0.0
    %1327 = vmatpush.msra.mxu0 0.0
    %1328 = vmatpush.msra.mxu0 0.0
    %1329 = vmatpush.msra.mxu0 0.0
    %1330 = vmatpush.msra.mxu0 0.0
    %1331 = vmatpush.msra.mxu0 0.0
    %1332 = vmatpush.msra.mxu0 0.0
    %1333 = vmatpush.msra.mxu0 0.0
    %1334 = vmatpush.msra.mxu0 0.0
    %1335 = vmatpush.msra.mxu0 0.0
    %1336 = vmatpush.msra.mxu0 %v1316
    %1337 = vmatmul.f32.gmra.mxu0 %v1319
    %v1338 = vpop.f32.mrf.mxu0
    %v1339 = vadd.f32 0.0, %v1338
    %1340 = vdwg.mxu0
    %s1341 = scalar_lea.vmem [#allocation14], 4
    %v1342 = vld [vmem:[%s1341] sm:$0xf]
    %v1343 = vperm.slane %v202, 3
    %v1345 = vsel %vm208, %v1339, 0
    %v1348 = vsel %vm212, %v1342, 0
    %1350 = vmatpush.msra.mxu0 0.0
    %1351 = vmatpush.msra.mxu0 0.0
    %1352 = vmatpush.msra.mxu0 0.0
    %1353 = vmatpush.msra.mxu0 0.0
    %1354 = vmatpush.msra.mxu0 0.0
    %1355 = vmatpush.msra.mxu0 0.0
    %1356 = vmatpush.msra.mxu0 0.0
    %1357 = vmatpush.msra.mxu0 0.0
    %1358 = vmatpush.msra.mxu0 0.0
    %1359 = vmatpush.msra.mxu0 0.0
    %1360 = vmatpush.msra.mxu0 0.0
    %1361 = vmatpush.msra.mxu0 0.0
    %1362 = vmatpush.msra.mxu0 0.0
    %1363 = vmatpush.msra.mxu0 0.0
    %1364 = vmatpush.msra.mxu0 0.0
    %1365 = vmatpush.msra.mxu0 %v1348
    %1366 = vmatmul.f32.gmra.mxu0 %v1345
    %v1367 = vpop.f32.mrf.mxu0
    %v1368 = vadd.f32 %v1343, %v1367
    %1369 = vdwg.mxu0
    %v1370 = vadd.f32 %v1233, %v1368
    %v1371 = vsel %vm208, %v1370, 0.0
    %1372 = vadd.xlane.f32.xlu0 %v1371
    %v1373 = vpop.xlane.xlu0 %1372
    %v1374 = vmul.f32 %v1373, %v353
    %v1375 = vsub.f32 %v1370, %v1374
    %v1376 = vmul.f32 %v1375, %v1375
    %v1377 = vsel %vm208, %v1376, 0.0
    %1378 = vadd.xlane.f32.xlu0 %v1377
    %v1379 = vpop.xlane.xlu0 %1378
    %v1380 = vmul.f32 %v1379, %v353
    %v1381 = vadd.f32 %v1380, 1e-05
    %v1382 = vrsqrt.pop %v1381
    %v1383 = vmul.f32 %v1382, %v1381
    %v1384 = vmul.f32 %v1383, %v1382
    %v1385 = vmul.f32 0.5, %v1384
    %v1386 = vsub.f32 1.5, %v1385
    %v1387 = vmul.f32 %v1382, %v1386
    %vm1388 = vweird.f32 %v1381
    %vm1389 = vweird.f32 %v1382
    %vm1390 = vmor %vm1388, %vm1389
    %v1391 = vsel %vm1390, %v1382, %v1387
    %v1392 = vmul.f32 %v1375, %v1391
    %v1393 = vperm.slane %v202, 4
    %v1394 = vmul.f32 %v1392, %v1393
    %v1395 = vperm.slane %v202, 5
    %v1396 = vadd.f32 %v1394, %v1395
    %s1397 = scalar_lea.vmem [#allocation17], 64
    %v1398 = vld [vmem:[%s1397] sm:$0xff]
    %v1399 = vld [vmem:[%s1397 + $0x8] sm:$0xff]
    %v1400 = vld [vmem:[%s1397 + $0x10] sm:$0xff]
    %v1401 = vld [vmem:[%s1397 + $0x18] sm:$0xff]
    %v1402 = vld [vmem:[%s1397 + $0x20] sm:$0xff]
    %v1403 = vld [vmem:[%s1397 + $0x28] sm:$0xff]
    %v1404 = vld [vmem:[%s1397 + $0x30] sm:$0xff]
    %v1405 = vld [vmem:[%s1397 + $0x38] sm:$0xff]
    %s1406 = scalar_lea.vmem [#allocation16], 16
    %v1407 = vld [vmem:[%s1406] sm:$0xff]
    %v1408 = vld [vmem:[%s1406 + $0x8] sm:$0xff]
    %v1411 = vperm.slane %v1407, 0
    %v1412 = vperm.slane %v1407, 1
    %v1413 = vperm.slane %v1407, 2
    %v1414 = vperm.slane %v1407, 3
    %v1415 = vperm.slane %v1407, 4
    %v1416 = vperm.slane %v1407, 5
    %v1417 = vperm.slane %v1407, 6
    %v1418 = vperm.slane %v1407, 7
    %v1419 = vperm.slane %v1408, 0
    %v1420 = vperm.slane %v1408, 1
    %v1421 = vperm.slane %v1408, 2
    %v1422 = vperm.slane %v1408, 3
    %v1423 = vperm.slane %v1408, 4
    %v1424 = vperm.slane %v1408, 5
    %v1425 = vperm.slane %v1408, 6
    %v1426 = vperm.slane %v1408, 7
    %1451 = vst [vmem:[#allocation1] ss:$2 sm:$0xff] %v1398
    %s1452 = scalar_lea.vmem [#allocation1], 16
    %1453 = vst [vmem:[%s1452] ss:$2 sm:$0xff] %v1399
    %s1454 = scalar_lea.vmem [#allocation1], 32
    %1455 = vst [vmem:[%s1454] ss:$2 sm:$0xff] %v1400
    %s1456 = scalar_lea.vmem [#allocation1], 48
    %1457 = vst [vmem:[%s1456] ss:$2 sm:$0xff] %v1401
    %v1458 = vld.sshfl [vmem:[#allocation1] sm:$0xff pattern:$0x75316420]
    %v1459 = vld.sshfl [vmem:[#allocation1 + $0x8] sm:$0xff pattern:$0x75316420]
    %v1460 = vld.sshfl [vmem:[#allocation1 + $0x10] sm:$0xff pattern:$0x75316420]
    %v1461 = vld.sshfl [vmem:[#allocation1 + $0x18] sm:$0xff pattern:$0x75316420]
    %v1462 = vld.sshfl [vmem:[#allocation1 + $0x20] sm:$0xff pattern:$0x75316420]
    %v1463 = vld.sshfl [vmem:[#allocation1 + $0x28] sm:$0xff pattern:$0x75316420]
    %v1464 = vld.sshfl [vmem:[#allocation1 + $0x30] sm:$0xff pattern:$0x75316420]
    %v1465 = vld.sshfl [vmem:[#allocation1 + $0x38] sm:$0xff pattern:$0x75316420]
    %1466 = vst [vmem:[#allocation1] ss:$2 sm:$0xff] %v1402
    %1467 = vst [vmem:[%s1452] ss:$2 sm:$0xff] %v1403
    %1468 = vst [vmem:[%s1454] ss:$2 sm:$0xff] %v1404
    %1469 = vst [vmem:[%s1456] ss:$2 sm:$0xff] %v1405
    %v1470 = vld.sshfl [vmem:[#allocation1] sm:$0xff pattern:$0x75316420]
    %v1471 = vld.sshfl [vmem:[#allocation1 + $0x8] sm:$0xff pattern:$0x75316420]
    %v1472 = vld.sshfl [vmem:[#allocation1 + $0x10] sm:$0xff pattern:$0x75316420]
    %v1473 = vld.sshfl [vmem:[#allocation1 + $0x18] sm:$0xff pattern:$0x75316420]
    %v1474 = vld.sshfl [vmem:[#allocation1 + $0x20] sm:$0xff pattern:$0x75316420]
    %v1475 = vld.sshfl [vmem:[#allocation1 + $0x28] sm:$0xff pattern:$0x75316420]
    %v1476 = vld.sshfl [vmem:[#allocation1 + $0x30] sm:$0xff pattern:$0x75316420]
    %v1477 = vld.sshfl [vmem:[#allocation1 + $0x38] sm:$0xff pattern:$0x75316420]
    %v1479 = vsel %vm208, %v1396, 0
    %v1481 = vsel %vm212, %v1458, 0
    %v1483 = vsel %vm212, %v1459, 0
    %v1485 = vsel %vm212, %v1460, 0
    %v1487 = vsel %vm212, %v1461, 0
    %v1489 = vsel %vm212, %v1462, 0
    %v1491 = vsel %vm212, %v1463, 0
    %v1493 = vsel %vm212, %v1464, 0
    %v1495 = vsel %vm212, %v1465, 0
    %v1497 = vsel %vm212, %v1470, 0
    %v1499 = vsel %vm212, %v1471, 0
    %v1501 = vsel %vm212, %v1472, 0
    %v1503 = vsel %vm212, %v1473, 0
    %v1505 = vsel %vm212, %v1474, 0
    %v1507 = vsel %vm212, %v1475, 0
    %v1509 = vsel %vm212, %v1476, 0
    %v1511 = vsel %vm212, %v1477, 0
    %1513 = vmatpush.msra.mxu0 0.0
    %1514 = vmatpush.msra.mxu0 0.0
    %1515 = vmatpush.msra.mxu0 0.0
    %1516 = vmatpush.msra.mxu0 0.0
    %1517 = vmatpush.msra.mxu0 0.0
    %1518 = vmatpush.msra.mxu0 0.0
    %1519 = vmatpush.msra.mxu0 0.0
    %1520 = vmatpush.msra.mxu0 0.0
    %1521 = vmatpush.msra.mxu0 0.0
    %1522 = vmatpush.msra.mxu0 0.0
    %1523 = vmatpush.msra.mxu0 0.0
    %1524 = vmatpush.msra.mxu0 0.0
    %1525 = vmatpush.msra.mxu0 0.0
    %1526 = vmatpush.msra.mxu0 0.0
    %1527 = vmatpush.msra.mxu0 0.0
    %1528 = vmatpush.msra.mxu0 %v1481
    %1529 = vmatmul.f32.gmra.mxu0 %v1479
    %v1530 = vpop.f32.mrf.mxu0
    %v1531 = vadd.f32 %v1411, %v1530
    %1532 = vdwg.mxu0
    %1533 = vmatpush.msra.mxu0 0.0
    %1534 = vmatpush.msra.mxu0 0.0
    %1535 = vmatpush.msra.mxu0 0.0
    %1536 = vmatpush.msra.mxu0 0.0
    %1537 = vmatpush.msra.mxu0 0.0
    %1538 = vmatpush.msra.mxu0 0.0
    %1539 = vmatpush.msra.mxu0 0.0
    %1540 = vmatpush.msra.mxu0 0.0
    %1541 = vmatpush.msra.mxu0 0.0
    %1542 = vmatpush.msra.mxu0 0.0
    %1543 = vmatpush.msra.mxu0 0.0
    %1544 = vmatpush.msra.mxu0 0.0
    %1545 = vmatpush.msra.mxu0 0.0
    %1546 = vmatpush.msra.mxu0 0.0
    %1547 = vmatpush.msra.mxu0 0.0
    %1548 = vmatpush.msra.mxu0 %v1483
    %1549 = vmatmul.f32.gmra.mxu0 %v1479
    %v1550 = vpop.f32.mrf.mxu0
    %v1551 = vadd.f32 %v1412, %v1550
    %1552 = vdwg.mxu0
    %1553 = vmatpush.msra.mxu0 0.0
    %1554 = vmatpush.msra.mxu0 0.0
    %1555 = vmatpush.msra.mxu0 0.0
    %1556 = vmatpush.msra.mxu0 0.0
    %1557 = vmatpush.msra.mxu0 0.0
    %1558 = vmatpush.msra.mxu0 0.0
    %1559 = vmatpush.msra.mxu0 0.0
    %1560 = vmatpush.msra.mxu0 0.0
    %1561 = vmatpush.msra.mxu0 0.0
    %1562 = vmatpush.msra.mxu0 0.0
    %1563 = vmatpush.msra.mxu0 0.0
    %1564 = vmatpush.msra.mxu0 0.0
    %1565 = vmatpush.msra.mxu0 0.0
    %1566 = vmatpush.msra.mxu0 0.0
    %1567 = vmatpush.msra.mxu0 0.0
    %1568 = vmatpush.msra.mxu0 %v1485
    %1569 = vmatmul.f32.gmra.mxu0 %v1479
    %v1570 = vpop.f32.mrf.mxu0
    %v1571 = vadd.f32 %v1413, %v1570
    %1572 = vdwg.mxu0
    %1573 = vmatpush.msra.mxu0 0.0
    %1574 = vmatpush.msra.mxu0 0.0
    %1575 = vmatpush.msra.mxu0 0.0
    %1576 = vmatpush.msra.mxu0 0.0
    %1577 = vmatpush.msra.mxu0 0.0
    %1578 = vmatpush.msra.mxu0 0.0
    %1579 = vmatpush.msra.mxu0 0.0
    %1580 = vmatpush.msra.mxu0 0.0
    %1581 = vmatpush.msra.mxu0 0.0
    %1582 = vmatpush.msra.mxu0 0.0
    %1583 = vmatpush.msra.mxu0 0.0
    %1584 = vmatpush.msra.mxu0 0.0
    %1585 = vmatpush.msra.mxu0 0.0
    %1586 = vmatpush.msra.mxu0 0.0
    %1587 = vmatpush.msra.mxu0 0.0
    %1588 = vmatpush.msra.mxu0 %v1487
    %1589 = vmatmul.f32.gmra.mxu0 %v1479
    %v1590 = vpop.f32.mrf.mxu0
    %v1591 = vadd.f32 %v1414, %v1590
    %1592 = vdwg.mxu0
    %1593 = vmatpush.msra.mxu0 0.0
    %1594 = vmatpush.msra.mxu0 0.0
    %1595 = vmatpush.msra.mxu0 0.0
    %1596 = vmatpush.msra.mxu0 0.0
    %1597 = vmatpush.msra.mxu0 0.0
    %1598 = vmatpush.msra.mxu0 0.0
    %1599 = vmatpush.msra.mxu0 0.0
    %1600 = vmatpush.msra.mxu0 0.0
    %1601 = vmatpush.msra.mxu0 0.0
    %1602 = vmatpush.msra.mxu0 0.0
    %1603 = vmatpush.msra.mxu0 0.0
    %1604 = vmatpush.msra.mxu0 0.0
    %1605 = vmatpush.msra.mxu0 0.0
    %1606 = vmatpush.msra.mxu0 0.0
    %1607 = vmatpush.msra.mxu0 0.0
    %1608 = vmatpush.msra.mxu0 %v1489
    %1609 = vmatmul.f32.gmra.mxu0 %v1479
    %v1610 = vpop.f32.mrf.mxu0
    %v1611 = vadd.f32 %v1415, %v1610
    %1612 = vdwg.mxu0
    %1613 = vmatpush.msra.mxu0 0.0
    %1614 = vmatpush.msra.mxu0 0.0
    %1615 = vmatpush.msra.mxu0 0.0
    %1616 = vmatpush.msra.mxu0 0.0
    %1617 = vmatpush.msra.mxu0 0.0
    %1618 = vmatpush.msra.mxu0 0.0
    %1619 = vmatpush.msra.mxu0 0.0
    %1620 = vmatpush.msra.mxu0 0.0
    %1621 = vmatpush.msra.mxu0 0.0
    %1622 = vmatpush.msra.mxu0 0.0
    %1623 = vmatpush.msra.mxu0 0.0
    %1624 = vmatpush.msra.mxu0 0.0
    %1625 = vmatpush.msra.mxu0 0.0
    %1626 = vmatpush.msra.mxu0 0.0
    %1627 = vmatpush.msra.mxu0 0.0
    %1628 = vmatpush.msra.mxu0 %v1491
    %1629 = vmatmul.f32.gmra.mxu0 %v1479
    %v1630 = vpop.f32.mrf.mxu0
    %v1631 = vadd.f32 %v1416, %v1630
    %1632 = vdwg.mxu0
    %1633 = vmatpush.msra.mxu0 0.0
    %1634 = vmatpush.msra.mxu0 0.0
    %1635 = vmatpush.msra.mxu0 0.0
    %1636 = vmatpush.msra.mxu0 0.0
    %1637 = vmatpush.msra.mxu0 0.0
    %1638 = vmatpush.msra.mxu0 0.0
    %1639 = vmatpush.msra.mxu0 0.0
    %1640 = vmatpush.msra.mxu0 0.0
    %1641 = vmatpush.msra.mxu0 0.0
    %1642 = vmatpush.msra.mxu0 0.0
    %1643 = vmatpush.msra.mxu0 0.0
    %1644 = vmatpush.msra.mxu0 0.0
    %1645 = vmatpush.msra.mxu0 0.0
    %1646 = vmatpush.msra.mxu0 0.0
    %1647 = vmatpush.msra.mxu0 0.0
    %1648 = vmatpush.msra.mxu0 %v1493
    %1649 = vmatmul.f32.gmra.mxu0 %v1479
    %v1650 = vpop.f32.mrf.mxu0
    %v1651 = vadd.f32 %v1417, %v1650
    %1652 = vdwg.mxu0
    %1653 = vmatpush.msra.mxu0 0.0
    %1654 = vmatpush.msra.mxu0 0.0
    %1655 = vmatpush.msra.mxu0 0.0
    %1656 = vmatpush.msra.mxu0 0.0
    %1657 = vmatpush.msra.mxu0 0.0
    %1658 = vmatpush.msra.mxu0 0.0
    %1659 = vmatpush.msra.mxu0 0.0
    %1660 = vmatpush.msra.mxu0 0.0
    %1661 = vmatpush.msra.mxu0 0.0
    %1662 = vmatpush.msra.mxu0 0.0
    %1663 = vmatpush.msra.mxu0 0.0
    %1664 = vmatpush.msra.mxu0 0.0
    %1665 = vmatpush.msra.mxu0 0.0
    %1666 = vmatpush.msra.mxu0 0.0
    %1667 = vmatpush.msra.mxu0 0.0
    %1668 = vmatpush.msra.mxu0 %v1495
    %1669 = vmatmul.f32.gmra.mxu0 %v1479
    %v1670 = vpop.f32.mrf.mxu0
    %v1671 = vadd.f32 %v1418, %v1670
    %1672 = vdwg.mxu0
    %1673 = vmatpush.msra.mxu0 0.0
    %1674 = vmatpush.msra.mxu0 0.0
    %1675 = vmatpush.msra.mxu0 0.0
    %1676 = vmatpush.msra.mxu0 0.0
    %1677 = vmatpush.msra.mxu0 0.0
    %1678 = vmatpush.msra.mxu0 0.0
    %1679 = vmatpush.msra.mxu0 0.0
    %1680 = vmatpush.msra.mxu0 0.0
    %1681 = vmatpush.msra.mxu0 0.0
    %1682 = vmatpush.msra.mxu0 0.0
    %1683 = vmatpush.msra.mxu0 0.0
    %1684 = vmatpush.msra.mxu0 0.0
    %1685 = vmatpush.msra.mxu0 0.0
    %1686 = vmatpush.msra.mxu0 0.0
    %1687 = vmatpush.msra.mxu0 0.0
    %1688 = vmatpush.msra.mxu0 %v1497
    %1689 = vmatmul.f32.gmra.mxu0 %v1479
    %v1690 = vpop.f32.mrf.mxu0
    %v1691 = vadd.f32 %v1419, %v1690
    %1692 = vdwg.mxu0
    %1693 = vmatpush.msra.mxu0 0.0
    %1694 = vmatpush.msra.mxu0 0.0
    %1695 = vmatpush.msra.mxu0 0.0
    %1696 = vmatpush.msra.mxu0 0.0
    %1697 = vmatpush.msra.mxu0 0.0
    %1698 = vmatpush.msra.mxu0 0.0
    %1699 = vmatpush.msra.mxu0 0.0
    %1700 = vmatpush.msra.mxu0 0.0
    %1701 = vmatpush.msra.mxu0 0.0
    %1702 = vmatpush.msra.mxu0 0.0
    %1703 = vmatpush.msra.mxu0 0.0
    %1704 = vmatpush.msra.mxu0 0.0
    %1705 = vmatpush.msra.mxu0 0.0
    %1706 = vmatpush.msra.mxu0 0.0
    %1707 = vmatpush.msra.mxu0 0.0
    %1708 = vmatpush.msra.mxu0 %v1499
    %1709 = vmatmul.f32.gmra.mxu0 %v1479
    %v1710 = vpop.f32.mrf.mxu0
    %v1711 = vadd.f32 %v1420, %v1710
    %1712 = vdwg.mxu0
    %1713 = vmatpush.msra.mxu0 0.0
    %1714 = vmatpush.msra.mxu0 0.0
    %1715 = vmatpush.msra.mxu0 0.0
    %1716 = vmatpush.msra.mxu0 0.0
    %1717 = vmatpush.msra.mxu0 0.0
    %1718 = vmatpush.msra.mxu0 0.0
    %1719 = vmatpush.msra.mxu0 0.0
    %1720 = vmatpush.msra.mxu0 0.0
    %1721 = vmatpush.msra.mxu0 0.0
    %1722 = vmatpush.msra.mxu0 0.0
    %1723 = vmatpush.msra.mxu0 0.0
    %1724 = vmatpush.msra.mxu0 0.0
    %1725 = vmatpush.msra.mxu0 0.0
    %1726 = vmatpush.msra.mxu0 0.0
    %1727 = vmatpush.msra.mxu0 0.0
    %1728 = vmatpush.msra.mxu0 %v1501
    %1729 = vmatmul.f32.gmra.mxu0 %v1479
    %v1730 = vpop.f32.mrf.mxu0
    %v1731 = vadd.f32 %v1421, %v1730
    %1732 = vdwg.mxu0
    %1733 = vmatpush.msra.mxu0 0.0
    %1734 = vmatpush.msra.mxu0 0.0
    %1735 = vmatpush.msra.mxu0 0.0
    %1736 = vmatpush.msra.mxu0 0.0
    %1737 = vmatpush.msra.mxu0 0.0
    %1738 = vmatpush.msra.mxu0 0.0
    %1739 = vmatpush.msra.mxu0 0.0
    %1740 = vmatpush.msra.mxu0 0.0
    %1741 = vmatpush.msra.mxu0 0.0
    %1742 = vmatpush.msra.mxu0 0.0
    %1743 = vmatpush.msra.mxu0 0.0
    %1744 = vmatpush.msra.mxu0 0.0
    %1745 = vmatpush.msra.mxu0 0.0
    %1746 = vmatpush.msra.mxu0 0.0
    %1747 = vmatpush.msra.mxu0 0.0
    %1748 = vmatpush.msra.mxu0 %v1503
    %1749 = vmatmul.f32.gmra.mxu0 %v1479
    %v1750 = vpop.f32.mrf.mxu0
    %v1751 = vadd.f32 %v1422, %v1750
    %1752 = vdwg.mxu0
    %1753 = vmatpush.msra.mxu0 0.0
    %1754 = vmatpush.msra.mxu0 0.0
    %1755 = vmatpush.msra.mxu0 0.0
    %1756 = vmatpush.msra.mxu0 0.0
    %1757 = vmatpush.msra.mxu0 0.0
    %1758 = vmatpush.msra.mxu0 0.0
    %1759 = vmatpush.msra.mxu0 0.0
    %1760 = vmatpush.msra.mxu0 0.0
    %1761 = vmatpush.msra.mxu0 0.0
    %1762 = vmatpush.msra.mxu0 0.0
    %1763 = vmatpush.msra.mxu0 0.0
    %1764 = vmatpush.msra.mxu0 0.0
    %1765 = vmatpush.msra.mxu0 0.0
    %1766 = vmatpush.msra.mxu0 0.0
    %1767 = vmatpush.msra.mxu0 0.0
    %1768 = vmatpush.msra.mxu0 %v1505
    %1769 = vmatmul.f32.gmra.mxu0 %v1479
    %v1770 = vpop.f32.mrf.mxu0
    %v1771 = vadd.f32 %v1423, %v1770
    %1772 = vdwg.mxu0
    %1773 = vmatpush.msra.mxu0 0.0
    %1774 = vmatpush.msra.mxu0 0.0
    %1775 = vmatpush.msra.mxu0 0.0
    %1776 = vmatpush.msra.mxu0 0.0
    %1777 = vmatpush.msra.mxu0 0.0
    %1778 = vmatpush.msra.mxu0 0.0
    %1779 = vmatpush.msra.mxu0 0.0
    %1780 = vmatpush.msra.mxu0 0.0
    %1781 = vmatpush.msra.mxu0 0.0
    %1782 = vmatpush.msra.mxu0 0.0
    %1783 = vmatpush.msra.mxu0 0.0
    %1784 = vmatpush.msra.mxu0 0.0
    %1785 = vmatpush.msra.mxu0 0.0
    %1786 = vmatpush.msra.mxu0 0.0
    %1787 = vmatpush.msra.mxu0 0.0
    %1788 = vmatpush.msra.mxu0 %v1507
    %1789 = vmatmul.f32.gmra.mxu0 %v1479
    %v1790 = vpop.f32.mrf.mxu0
    %v1791 = vadd.f32 %v1424, %v1790
    %1792 = vdwg.mxu0
    %1793 = vmatpush.msra.mxu0 0.0
    %1794 = vmatpush.msra.mxu0 0.0
    %1795 = vmatpush.msra.mxu0 0.0
    %1796 = vmatpush.msra.mxu0 0.0
    %1797 = vmatpush.msra.mxu0 0.0
    %1798 = vmatpush.msra.mxu0 0.0
    %1799 = vmatpush.msra.mxu0 0.0
    %1800 = vmatpush.msra.mxu0 0.0
    %1801 = vmatpush.msra.mxu0 0.0
    %1802 = vmatpush.msra.mxu0 0.0
    %1803 = vmatpush.msra.mxu0 0.0
    %1804 = vmatpush.msra.mxu0 0.0
    %1805 = vmatpush.msra.mxu0 0.0
    %1806 = vmatpush.msra.mxu0 0.0
    %1807 = vmatpush.msra.mxu0 0.0
    %1808 = vmatpush.msra.mxu0 %v1509
    %1809 = vmatmul.f32.gmra.mxu0 %v1479
    %v1810 = vpop.f32.mrf.mxu0
    %v1811 = vadd.f32 %v1425, %v1810
    %1812 = vdwg.mxu0
    %1813 = vmatpush.msra.mxu0 0.0
    %1814 = vmatpush.msra.mxu0 0.0
    %1815 = vmatpush.msra.mxu0 0.0
    %1816 = vmatpush.msra.mxu0 0.0
    %1817 = vmatpush.msra.mxu0 0.0
    %1818 = vmatpush.msra.mxu0 0.0
    %1819 = vmatpush.msra.mxu0 0.0
    %1820 = vmatpush.msra.mxu0 0.0
    %1821 = vmatpush.msra.mxu0 0.0
    %1822 = vmatpush.msra.mxu0 0.0
    %1823 = vmatpush.msra.mxu0 0.0
    %1824 = vmatpush.msra.mxu0 0.0
    %1825 = vmatpush.msra.mxu0 0.0
    %1826 = vmatpush.msra.mxu0 0.0
    %1827 = vmatpush.msra.mxu0 0.0
    %1828 = vmatpush.msra.mxu0 %v1511
    %1829 = vmatmul.f32.gmra.mxu0 %v1479
    %v1830 = vpop.f32.mrf.mxu0
    %v1831 = vadd.f32 %v1426, %v1830
    %1832 = vdwg.mxu0
    %v1833 = vmax.f32 %v1531, 0.0
    %v1834 = vmax.f32 %v1551, 0.0
    %v1835 = vmax.f32 %v1571, 0.0
    %v1836 = vmax.f32 %v1591, 0.0
    %v1837 = vmax.f32 %v1611, 0.0
    %v1838 = vmax.f32 %v1631, 0.0
    %v1839 = vmax.f32 %v1651, 0.0
    %v1840 = vmax.f32 %v1671, 0.0
    %v1841 = vmax.f32 %v1691, 0.0
    %v1842 = vmax.f32 %v1711, 0.0
    %v1843 = vmax.f32 %v1731, 0.0
    %v1844 = vmax.f32 %v1751, 0.0
    %v1845 = vmax.f32 %v1771, 0.0
    %v1846 = vmax.f32 %v1791, 0.0
    %v1847 = vmax.f32 %v1811, 0.0
    %v1848 = vmax.f32 %v1831, 0.0
    %s1849 = scalar_lea.vmem [#allocation19], 64
    %v1850 = vld [vmem:[%s1849] sm:$0xff]
    %v1851 = vld [vmem:[%s1849 + $0x8] sm:$0xff]
    %v1852 = vld [vmem:[%s1849 + $0x10] sm:$0xff]
    %v1853 = vld [vmem:[%s1849 + $0x18] sm:$0xff]
    %v1854 = vld [vmem:[%s1849 + $0x20] sm:$0xff]
    %v1855 = vld [vmem:[%s1849 + $0x28] sm:$0xff]
    %v1856 = vld [vmem:[%s1849 + $0x30] sm:$0xff]
    %v1857 = vld [vmem:[%s1849 + $0x38] sm:$0xff]
    %v1858 = vperm.slane %v203, 0
    %1867 = vst [vmem:[#allocation1] ss:$2 sm:$0xff] %v1850
    %s1868 = scalar_lea.vmem [#allocation1], 16
    %1869 = vst [vmem:[%s1868] ss:$2 sm:$0xff] %v1851
    %s1870 = scalar_lea.vmem [#allocation1], 32
    %1871 = vst [vmem:[%s1870] ss:$2 sm:$0xff] %v1852
    %s1872 = scalar_lea.vmem [#allocation1], 48
    %1873 = vst [vmem:[%s1872] ss:$2 sm:$0xff] %v1853
    %v1874 = vld.sshfl [vmem:[#allocation1] sm:$0xff pattern:$0x75316420]
    %v1875 = vld.sshfl [vmem:[#allocation1 + $0x8] sm:$0xff pattern:$0x75316420]
    %v1876 = vld.sshfl [vmem:[#allocation1 + $0x10] sm:$0xff pattern:$0x75316420]
    %v1877 = vld.sshfl [vmem:[#allocation1 + $0x18] sm:$0xff pattern:$0x75316420]
    %v1878 = vld.sshfl [vmem:[#allocation1 + $0x20] sm:$0xff pattern:$0x75316420]
    %v1879 = vld.sshfl [vmem:[#allocation1 + $0x28] sm:$0xff pattern:$0x75316420]
    %v1880 = vld.sshfl [vmem:[#allocation1 + $0x30] sm:$0xff pattern:$0x75316420]
    %v1881 = vld.sshfl [vmem:[#allocation1 + $0x38] sm:$0xff pattern:$0x75316420]
    %1882 = vst [vmem:[#allocation1] ss:$2 sm:$0xff] %v1854
    %1883 = vst [vmem:[%s1868] ss:$2 sm:$0xff] %v1855
    %1884 = vst [vmem:[%s1870] ss:$2 sm:$0xff] %v1856
    %1885 = vst [vmem:[%s1872] ss:$2 sm:$0xff] %v1857
    %v1886 = vld.sshfl [vmem:[#allocation1] sm:$0xff pattern:$0x75316420]
    %v1887 = vld.sshfl [vmem:[#allocation1 + $0x8] sm:$0xff pattern:$0x75316420]
    %v1888 = vld.sshfl [vmem:[#allocation1 + $0x10] sm:$0xff pattern:$0x75316420]
    %v1889 = vld.sshfl [vmem:[#allocation1 + $0x18] sm:$0xff pattern:$0x75316420]
    %v1890 = vld.sshfl [vmem:[#allocation1 + $0x20] sm:$0xff pattern:$0x75316420]
    %v1891 = vld.sshfl [vmem:[#allocation1 + $0x28] sm:$0xff pattern:$0x75316420]
    %v1892 = vld.sshfl [vmem:[#allocation1 + $0x30] sm:$0xff pattern:$0x75316420]
    %v1893 = vld.sshfl [vmem:[#allocation1 + $0x38] sm:$0xff pattern:$0x75316420]
    %1910 = vmatpush.xpose.msra.mxu0 0.0
    %1911 = vmatpush.xpose.msra.mxu0 0.0
    %1912 = vmatpush.xpose.msra.mxu0 0.0
    %1913 = vmatpush.xpose.msra.mxu0 0.0
    %1914 = vmatpush.xpose.msra.mxu0 0.0
    %1915 = vmatpush.xpose.msra.mxu0 0.0
    %1916 = vmatpush.xpose.msra.mxu0 0.0
    %1917 = vmatpush.xpose.msra.mxu0 0.0
    %1918 = vmatpush.xpose.msra.mxu0 0.0
    %1919 = vmatpush.xpose.msra.mxu0 0.0
    %1920 = vmatpush.xpose.msra.mxu0 0.0
    %1921 = vmatpush.xpose.msra.mxu0 0.0
    %1922 = vmatpush.xpose.msra.mxu0 0.0
    %1923 = vmatpush.xpose.msra.mxu0 0.0
    %1924 = vmatpush.xpose.msra.mxu0 0.0
    %1925 = vmatpush.xpose.msra.mxu0 %v1874
    %1926 = vmatmul.f32.gmra.mxu0 %v1833
    %v1927 = vpop.f32.mrf.mxu0
    %v1928 = vadd.f32 %v1858, %v1927
    %1929 = vdwg.mxu0
    %1930 = vmatpush.xpose.msra.mxu0 0.0
    %1931 = vmatpush.xpose.msra.mxu0 0.0
    %1932 = vmatpush.xpose.msra.mxu0 0.0
    %1933 = vmatpush.xpose.msra.mxu0 0.0
    %1934 = vmatpush.xpose.msra.mxu0 0.0
    %1935 = vmatpush.xpose.msra.mxu0 0.0
    %1936 = vmatpush.xpose.msra.mxu0 0.0
    %1937 = vmatpush.xpose.msra.mxu0 0.0
    %1938 = vmatpush.xpose.msra.mxu0 0.0
    %1939 = vmatpush.xpose.msra.mxu0 0.0
    %1940 = vmatpush.xpose.msra.mxu0 0.0
    %1941 = vmatpush.xpose.msra.mxu0 0.0
    %1942 = vmatpush.xpose.msra.mxu0 0.0
    %1943 = vmatpush.xpose.msra.mxu0 0.0
    %1944 = vmatpush.xpose.msra.mxu0 0.0
    %1945 = vmatpush.xpose.msra.mxu0 %v1875
    %1946 = vmatmul.f32.gmra.mxu0 %v1834
    %v1947 = vpop.f32.mrf.mxu0
    %v1948 = vadd.f32 %v1928, %v1947
    %1949 = vdwg.mxu0
    %1950 = vmatpush.xpose.msra.mxu0 0.0
    %1951 = vmatpush.xpose.msra.mxu0 0.0
    %1952 = vmatpush.xpose.msra.mxu0 0.0
    %1953 = vmatpush.xpose.msra.mxu0 0.0
    %1954 = vmatpush.xpose.msra.mxu0 0.0
    %1955 = vmatpush.xpose.msra.mxu0 0.0
    %1956 = vmatpush.xpose.msra.mxu0 0.0
    %1957 = vmatpush.xpose.msra.mxu0 0.0
    %1958 = vmatpush.xpose.msra.mxu0 0.0
    %1959 = vmatpush.xpose.msra.mxu0 0.0
    %1960 = vmatpush.xpose.msra.mxu0 0.0
    %1961 = vmatpush.xpose.msra.mxu0 0.0
    %1962 = vmatpush.xpose.msra.mxu0 0.0
    %1963 = vmatpush.xpose.msra.mxu0 0.0
    %1964 = vmatpush.xpose.msra.mxu0 0.0
    %1965 = vmatpush.xpose.msra.mxu0 %v1876
    %1966 = vmatmul.f32.gmra.mxu0 %v1835
    %v1967 = vpop.f32.mrf.mxu0
    %v1968 = vadd.f32 %v1948, %v1967
    %1969 = vdwg.mxu0
    %1970 = vmatpush.xpose.msra.mxu0 0.0
    %1971 = vmatpush.xpose.msra.mxu0 0.0
    %1972 = vmatpush.xpose.msra.mxu0 0.0
    %1973 = vmatpush.xpose.msra.mxu0 0.0
    %1974 = vmatpush.xpose.msra.mxu0 0.0
    %1975 = vmatpush.xpose.msra.mxu0 0.0
    %1976 = vmatpush.xpose.msra.mxu0 0.0
    %1977 = vmatpush.xpose.msra.mxu0 0.0
    %1978 = vmatpush.xpose.msra.mxu0 0.0
    %1979 = vmatpush.xpose.msra.mxu0 0.0
    %1980 = vmatpush.xpose.msra.mxu0 0.0
    %1981 = vmatpush.xpose.msra.mxu0 0.0
    %1982 = vmatpush.xpose.msra.mxu0 0.0
    %1983 = vmatpush.xpose.msra.mxu0 0.0
    %1984 = vmatpush.xpose.msra.mxu0 0.0
    %1985 = vmatpush.xpose.msra.mxu0 %v1877
    %1986 = vmatmul.f32.gmra.mxu0 %v1836
    %v1987 = vpop.f32.mrf.mxu0
    %v1988 = vadd.f32 %v1968, %v1987
    %1989 = vdwg.mxu0
    %1990 = vmatpush.xpose.msra.mxu0 0.0
    %1991 = vmatpush.xpose.msra.mxu0 0.0
    %1992 = vmatpush.xpose.msra.mxu0 0.0
    %1993 = vmatpush.xpose.msra.mxu0 0.0
    %1994 = vmatpush.xpose.msra.mxu0 0.0
    %1995 = vmatpush.xpose.msra.mxu0 0.0
    %1996 = vmatpush.xpose.msra.mxu0 0.0
    %1997 = vmatpush.xpose.msra.mxu0 0.0
    %1998 = vmatpush.xpose.msra.mxu0 0.0
    %1999 = vmatpush.xpose.msra.mxu0 0.0
    %2000 = vmatpush.xpose.msra.mxu0 0.0
    %2001 = vmatpush.xpose.msra.mxu0 0.0
    %2002 = vmatpush.xpose.msra.mxu0 0.0
    %2003 = vmatpush.xpose.msra.mxu0 0.0
    %2004 = vmatpush.xpose.msra.mxu0 0.0
    %2005 = vmatpush.xpose.msra.mxu0 %v1878
    %2006 = vmatmul.f32.gmra.mxu0 %v1837
    %v2007 = vpop.f32.mrf.mxu0
    %v2008 = vadd.f32 %v1988, %v2007
    %2009 = vdwg.mxu0
    %2010 = vmatpush.xpose.msra.mxu0 0.0
    %2011 = vmatpush.xpose.msra.mxu0 0.0
    %2012 = vmatpush.xpose.msra.mxu0 0.0
    %2013 = vmatpush.xpose.msra.mxu0 0.0
    %2014 = vmatpush.xpose.msra.mxu0 0.0
    %2015 = vmatpush.xpose.msra.mxu0 0.0
    %2016 = vmatpush.xpose.msra.mxu0 0.0
    %2017 = vmatpush.xpose.msra.mxu0 0.0
    %2018 = vmatpush.xpose.msra.mxu0 0.0
    %2019 = vmatpush.xpose.msra.mxu0 0.0
    %2020 = vmatpush.xpose.msra.mxu0 0.0
    %2021 = vmatpush.xpose.msra.mxu0 0.0
    %2022 = vmatpush.xpose.msra.mxu0 0.0
    %2023 = vmatpush.xpose.msra.mxu0 0.0
    %2024 = vmatpush.xpose.msra.mxu0 0.0
    %2025 = vmatpush.xpose.msra.mxu0 %v1879
    %2026 = vmatmul.f32.gmra.mxu0 %v1838
    %v2027 = vpop.f32.mrf.mxu0
    %v2028 = vadd.f32 %v2008, %v2027
    %2029 = vdwg.mxu0
    %2030 = vmatpush.xpose.msra.mxu0 0.0
    %2031 = vmatpush.xpose.msra.mxu0 0.0
    %2032 = vmatpush.xpose.msra.mxu0 0.0
    %2033 = vmatpush.xpose.msra.mxu0 0.0
    %2034 = vmatpush.xpose.msra.mxu0 0.0
    %2035 = vmatpush.xpose.msra.mxu0 0.0
    %2036 = vmatpush.xpose.msra.mxu0 0.0
    %2037 = vmatpush.xpose.msra.mxu0 0.0
    %2038 = vmatpush.xpose.msra.mxu0 0.0
    %2039 = vmatpush.xpose.msra.mxu0 0.0
    %2040 = vmatpush.xpose.msra.mxu0 0.0
    %2041 = vmatpush.xpose.msra.mxu0 0.0
    %2042 = vmatpush.xpose.msra.mxu0 0.0
    %2043 = vmatpush.xpose.msra.mxu0 0.0
    %2044 = vmatpush.xpose.msra.mxu0 0.0
    %2045 = vmatpush.xpose.msra.mxu0 %v1880
    %2046 = vmatmul.f32.gmra.mxu0 %v1839
    %v2047 = vpop.f32.mrf.mxu0
    %v2048 = vadd.f32 %v2028, %v2047
    %2049 = vdwg.mxu0
    %2050 = vmatpush.xpose.msra.mxu0 0.0
    %2051 = vmatpush.xpose.msra.mxu0 0.0
    %2052 = vmatpush.xpose.msra.mxu0 0.0
    %2053 = vmatpush.xpose.msra.mxu0 0.0
    %2054 = vmatpush.xpose.msra.mxu0 0.0
    %2055 = vmatpush.xpose.msra.mxu0 0.0
    %2056 = vmatpush.xpose.msra.mxu0 0.0
    %2057 = vmatpush.xpose.msra.mxu0 0.0
    %2058 = vmatpush.xpose.msra.mxu0 0.0
    %2059 = vmatpush.xpose.msra.mxu0 0.0
    %2060 = vmatpush.xpose.msra.mxu0 0.0
    %2061 = vmatpush.xpose.msra.mxu0 0.0
    %2062 = vmatpush.xpose.msra.mxu0 0.0
    %2063 = vmatpush.xpose.msra.mxu0 0.0
    %2064 = vmatpush.xpose.msra.mxu0 0.0
    %2065 = vmatpush.xpose.msra.mxu0 %v1881
    %2066 = vmatmul.f32.gmra.mxu0 %v1840
    %v2067 = vpop.f32.mrf.mxu0
    %v2068 = vadd.f32 %v2048, %v2067
    %2069 = vdwg.mxu0
    %2070 = vmatpush.xpose.msra.mxu0 0.0
    %2071 = vmatpush.xpose.msra.mxu0 0.0
    %2072 = vmatpush.xpose.msra.mxu0 0.0
    %2073 = vmatpush.xpose.msra.mxu0 0.0
    %2074 = vmatpush.xpose.msra.mxu0 0.0
    %2075 = vmatpush.xpose.msra.mxu0 0.0
    %2076 = vmatpush.xpose.msra.mxu0 0.0
    %2077 = vmatpush.xpose.msra.mxu0 0.0
    %2078 = vmatpush.xpose.msra.mxu0 0.0
    %2079 = vmatpush.xpose.msra.mxu0 0.0
    %2080 = vmatpush.xpose.msra.mxu0 0.0
    %2081 = vmatpush.xpose.msra.mxu0 0.0
    %2082 = vmatpush.xpose.msra.mxu0 0.0
    %2083 = vmatpush.xpose.msra.mxu0 0.0
    %2084 = vmatpush.xpose.msra.mxu0 0.0
    %2085 = vmatpush.xpose.msra.mxu0 %v1886
    %2086 = vmatmul.f32.gmra.mxu0 %v1841
    %v2087 = vpop.f32.mrf.mxu0
    %v2088 = vadd.f32 %v2068, %v2087
    %2089 = vdwg.mxu0
    %2090 = vmatpush.xpose.msra.mxu0 0.0
    %2091 = vmatpush.xpose.msra.mxu0 0.0
    %2092 = vmatpush.xpose.msra.mxu0 0.0
    %2093 = vmatpush.xpose.msra.mxu0 0.0
    %2094 = vmatpush.xpose.msra.mxu0 0.0
    %2095 = vmatpush.xpose.msra.mxu0 0.0
    %2096 = vmatpush.xpose.msra.mxu0 0.0
    %2097 = vmatpush.xpose.msra.mxu0 0.0
    %2098 = vmatpush.xpose.msra.mxu0 0.0
    %2099 = vmatpush.xpose.msra.mxu0 0.0
    %2100 = vmatpush.xpose.msra.mxu0 0.0
    %2101 = vmatpush.xpose.msra.mxu0 0.0
    %2102 = vmatpush.xpose.msra.mxu0 0.0
    %2103 = vmatpush.xpose.msra.mxu0 0.0
    %2104 = vmatpush.xpose.msra.mxu0 0.0
    %2105 = vmatpush.xpose.msra.mxu0 %v1887
    %2106 = vmatmul.f32.gmra.mxu0 %v1842
    %v2107 = vpop.f32.mrf.mxu0
    %v2108 = vadd.f32 %v2088, %v2107
    %2109 = vdwg.mxu0
    %2110 = vmatpush.xpose.msra.mxu0 0.0
    %2111 = vmatpush.xpose.msra.mxu0 0.0
    %2112 = vmatpush.xpose.msra.mxu0 0.0
    %2113 = vmatpush.xpose.msra.mxu0 0.0
    %2114 = vmatpush.xpose.msra.mxu0 0.0
    %2115 = vmatpush.xpose.msra.mxu0 0.0
    %2116 = vmatpush.xpose.msra.mxu0 0.0
    %2117 = vmatpush.xpose.msra.mxu0 0.0
    %2118 = vmatpush.xpose.msra.mxu0 0.0
    %2119 = vmatpush.xpose.msra.mxu0 0.0
    %2120 = vmatpush.xpose.msra.mxu0 0.0
    %2121 = vmatpush.xpose.msra.mxu0 0.0
    %2122 = vmatpush.xpose.msra.mxu0 0.0
    %2123 = vmatpush.xpose.msra.mxu0 0.0
    %2124 = vmatpush.xpose.msra.mxu0 0.0
    %2125 = vmatpush.xpose.msra.mxu0 %v1888
    %2126 = vmatmul.f32.gmra.mxu0 %v1843
    %v2127 = vpop.f32.mrf.mxu0
    %v2128 = vadd.f32 %v2108, %v2127
    %2129 = vdwg.mxu0
    %2130 = vmatpush.xpose.msra.mxu0 0.0
    %2131 = vmatpush.xpose.msra.mxu0 0.0
    %2132 = vmatpush.xpose.msra.mxu0 0.0
    %2133 = vmatpush.xpose.msra.mxu0 0.0
    %2134 = vmatpush.xpose.msra.mxu0 0.0
    %2135 = vmatpush.xpose.msra.mxu0 0.0
    %2136 = vmatpush.xpose.msra.mxu0 0.0
    %2137 = vmatpush.xpose.msra.mxu0 0.0
    %2138 = vmatpush.xpose.msra.mxu0 0.0
    %2139 = vmatpush.xpose.msra.mxu0 0.0
    %2140 = vmatpush.xpose.msra.mxu0 0.0
    %2141 = vmatpush.xpose.msra.mxu0 0.0
    %2142 = vmatpush.xpose.msra.mxu0 0.0
    %2143 = vmatpush.xpose.msra.mxu0 0.0
    %2144 = vmatpush.xpose.msra.mxu0 0.0
    %2145 = vmatpush.xpose.msra.mxu0 %v1889
    %2146 = vmatmul.f32.gmra.mxu0 %v1844
    %v2147 = vpop.f32.mrf.mxu0
    %v2148 = vadd.f32 %v2128, %v2147
    %2149 = vdwg.mxu0
    %2150 = vmatpush.xpose.msra.mxu0 0.0
    %2151 = vmatpush.xpose.msra.mxu0 0.0
    %2152 = vmatpush.xpose.msra.mxu0 0.0
    %2153 = vmatpush.xpose.msra.mxu0 0.0
    %2154 = vmatpush.xpose.msra.mxu0 0.0
    %2155 = vmatpush.xpose.msra.mxu0 0.0
    %2156 = vmatpush.xpose.msra.mxu0 0.0
    %2157 = vmatpush.xpose.msra.mxu0 0.0
    %2158 = vmatpush.xpose.msra.mxu0 0.0
    %2159 = vmatpush.xpose.msra.mxu0 0.0
    %2160 = vmatpush.xpose.msra.mxu0 0.0
    %2161 = vmatpush.xpose.msra.mxu0 0.0
    %2162 = vmatpush.xpose.msra.mxu0 0.0
    %2163 = vmatpush.xpose.msra.mxu0 0.0
    %2164 = vmatpush.xpose.msra.mxu0 0.0
    %2165 = vmatpush.xpose.msra.mxu0 %v1890
    %2166 = vmatmul.f32.gmra.mxu0 %v1845
    %v2167 = vpop.f32.mrf.mxu0
    %v2168 = vadd.f32 %v2148, %v2167
    %2169 = vdwg.mxu0
    %2170 = vmatpush.xpose.msra.mxu0 0.0
    %2171 = vmatpush.xpose.msra.mxu0 0.0
    %2172 = vmatpush.xpose.msra.mxu0 0.0
    %2173 = vmatpush.xpose.msra.mxu0 0.0
    %2174 = vmatpush.xpose.msra.mxu0 0.0
    %2175 = vmatpush.xpose.msra.mxu0 0.0
    %2176 = vmatpush.xpose.msra.mxu0 0.0
    %2177 = vmatpush.xpose.msra.mxu0 0.0
    %2178 = vmatpush.xpose.msra.mxu0 0.0
    %2179 = vmatpush.xpose.msra.mxu0 0.0
    %2180 = vmatpush.xpose.msra.mxu0 0.0
    %2181 = vmatpush.xpose.msra.mxu0 0.0
    %2182 = vmatpush.xpose.msra.mxu0 0.0
    %2183 = vmatpush.xpose.msra.mxu0 0.0
    %2184 = vmatpush.xpose.msra.mxu0 0.0
    %2185 = vmatpush.xpose.msra.mxu0 %v1891
    %2186 = vmatmul.f32.gmra.mxu0 %v1846
    %v2187 = vpop.f32.mrf.mxu0
    %v2188 = vadd.f32 %v2168, %v2187
    %2189 = vdwg.mxu0
    %2190 = vmatpush.xpose.msra.mxu0 0.0
    %2191 = vmatpush.xpose.msra.mxu0 0.0
    %2192 = vmatpush.xpose.msra.mxu0 0.0
    %2193 = vmatpush.xpose.msra.mxu0 0.0
    %2194 = vmatpush.xpose.msra.mxu0 0.0
    %2195 = vmatpush.xpose.msra.mxu0 0.0
    %2196 = vmatpush.xpose.msra.mxu0 0.0
    %2197 = vmatpush.xpose.msra.mxu0 0.0
    %2198 = vmatpush.xpose.msra.mxu0 0.0
    %2199 = vmatpush.xpose.msra.mxu0 0.0
    %2200 = vmatpush.xpose.msra.mxu0 0.0
    %2201 = vmatpush.xpose.msra.mxu0 0.0
    %2202 = vmatpush.xpose.msra.mxu0 0.0
    %2203 = vmatpush.xpose.msra.mxu0 0.0
    %2204 = vmatpush.xpose.msra.mxu0 0.0
    %2205 = vmatpush.xpose.msra.mxu0 %v1892
    %2206 = vmatmul.f32.gmra.mxu0 %v1847
    %v2207 = vpop.f32.mrf.mxu0
    %v2208 = vadd.f32 %v2188, %v2207
    %2209 = vdwg.mxu0
    %2210 = vmatpush.xpose.msra.mxu0 0.0
    %2211 = vmatpush.xpose.msra.mxu0 0.0
    %2212 = vmatpush.xpose.msra.mxu0 0.0
    %2213 = vmatpush.xpose.msra.mxu0 0.0
    %2214 = vmatpush.xpose.msra.mxu0 0.0
    %2215 = vmatpush.xpose.msra.mxu0 0.0
    %2216 = vmatpush.xpose.msra.mxu0 0.0
    %2217 = vmatpush.xpose.msra.mxu0 0.0
    %2218 = vmatpush.xpose.msra.mxu0 0.0
    %2219 = vmatpush.xpose.msra.mxu0 0.0
    %2220 = vmatpush.xpose.msra.mxu0 0.0
    %2221 = vmatpush.xpose.msra.mxu0 0.0
    %2222 = vmatpush.xpose.msra.mxu0 0.0
    %2223 = vmatpush.xpose.msra.mxu0 0.0
    %2224 = vmatpush.xpose.msra.mxu0 0.0
    %2225 = vmatpush.xpose.msra.mxu0 %v1893
    %2226 = vmatmul.f32.gmra.mxu0 %v1848
    %v2227 = vpop.f32.mrf.mxu0
    %v2228 = vadd.f32 %v2208, %v2227
    %2229 = vdwg.mxu0
    %v2230 = vadd.f32 %v1396, %v2228
    %v2231 = vsel %vm208, %v2230, 0.0
    %2232 = vadd.xlane.f32.xlu0 %v2231
    %v2233 = vpop.xlane.xlu0 %2232
    %v2234 = vmul.f32 %v2233, %v353
    %v2235 = vsub.f32 %v2230, %v2234
    %v2236 = vmul.f32 %v2235, %v2235
    %v2237 = vsel %vm208, %v2236, 0.0
    %2238 = vadd.xlane.f32.xlu0 %v2237
    %v2239 = vpop.xlane.xlu0 %2238
    %v2240 = vmul.f32 %v2239, %v353
    %v2241 = vadd.f32 %v2240, 1e-05
    %v2242 = vrsqrt.pop %v2241
    %v2243 = vmul.f32 %v2242, %v2241
    %v2244 = vmul.f32 %v2243, %v2242
    %v2245 = vmul.f32 0.5, %v2244
    %v2246 = vsub.f32 1.5, %v2245
    %v2247 = vmul.f32 %v2242, %v2246
    %vm2248 = vweird.f32 %v2241
    %vm2249 = vweird.f32 %v2242
    %vm2250 = vmor %vm2248, %vm2249
    %v2251 = vsel %vm2250, %v2242, %v2247
    %v2252 = vmul.f32 %v2235, %v2251
    %v2253 = vperm.slane %v202, 6
    %v2254 = vmul.f32 %v2252, %v2253
    %v2255 = vperm.slane %v202, 7
    %v2256 = vadd.f32 %v2254, %v2255
    %v2257 = vld [vmem:[#allocation10] sm:$0xff]
    %v2258 = vld [vmem:[#allocation5] sm:$0xff]
    %v2259 = vld [vmem:[#allocation5 + $0x8] sm:$0xff]
    %v2260 = vld [vmem:[#allocation5 + $0x10] sm:$0xff]
    %v2261 = vld [vmem:[#allocation5 + $0x18] sm:$0xff]
    %v2262 = vld [vmem:[#allocation8] sm:$0xff]
    %v2264 = vperm.slane %v2262, 0
    %v2265 = vperm.slane %v2262, 1
    %v2266 = vperm.slane %v2262, 2
    %v2267 = vperm.slane %v2262, 3
    %v2268 = vperm.slane %v2262, 4
    %v2269 = vperm.slane %v2262, 5
    %v2270 = vperm.slane %v2262, 6
    %v2271 = vperm.slane %v2262, 7
    %v2281 = vrot.slane %v200, 3
    %2286 = vst [vmem:[#allocation1] ss:$2 sm:$0xff] %v2258
    %s2287 = scalar_lea.vmem [#allocation1], 16
    %2288 = vst [vmem:[%s2287] ss:$2 sm:$0xff] %v2259
    %s2289 = scalar_lea.vmem [#allocation1], 32
    %2290 = vst [vmem:[%s2289] ss:$2 sm:$0xff] %v2260
    %s2291 = scalar_lea.vmem [#allocation1], 48
    %2292 = vst [vmem:[%s2291] ss:$2 sm:$0xff] %v2261
    %v2293 = vld.sshfl [vmem:[#allocation1] sm:$0xff pattern:$0x75316420]
    %v2294 = vld.sshfl [vmem:[#allocation1 + $0x8] sm:$0xff pattern:$0x75316420]
    %v2295 = vld.sshfl [vmem:[#allocation1 + $0x10] sm:$0xff pattern:$0x75316420]
    %v2296 = vld.sshfl [vmem:[#allocation1 + $0x18] sm:$0xff pattern:$0x75316420]
    %v2297 = vld.sshfl [vmem:[#allocation1 + $0x20] sm:$0xff pattern:$0x75316420]
    %v2298 = vld.sshfl [vmem:[#allocation1 + $0x28] sm:$0xff pattern:$0x75316420]
    %v2299 = vld.sshfl [vmem:[#allocation1 + $0x30] sm:$0xff pattern:$0x75316420]
    %v2300 = vld.sshfl [vmem:[#allocation1 + $0x38] sm:$0xff pattern:$0x75316420]
    %v2301 = vsel %vm208, %v2281, 0
    %v2303 = vsel %vm212, %v2293, 0
    %v2305 = vsel %vm212, %v2294, 0
    %v2307 = vsel %vm212, %v2295, 0
    %v2309 = vsel %vm212, %v2296, 0
    %v2311 = vsel %vm212, %v2297, 0
    %v2313 = vsel %vm212, %v2298, 0
    %v2315 = vsel %vm212, %v2299, 0
    %v2317 = vsel %vm212, %v2300, 0
    %2319 = vmatpush.msra.mxu0 0.0
    %2320 = vmatpush.msra.mxu0 0.0
    %2321 = vmatpush.msra.mxu0 0.0
    %2322 = vmatpush.msra.mxu0 0.0
    %2323 = vmatpush.msra.mxu0 0.0
    %2324 = vmatpush.msra.mxu0 0.0
    %2325 = vmatpush.msra.mxu0 0.0
    %2326 = vmatpush.msra.mxu0 0.0
    %2327 = vmatpush.msra.mxu0 0.0
    %2328 = vmatpush.msra.mxu0 0.0
    %2329 = vmatpush.msra.mxu0 0.0
    %2330 = vmatpush.msra.mxu0 0.0
    %2331 = vmatpush.msra.mxu0 0.0
    %2332 = vmatpush.msra.mxu0 0.0
    %2333 = vmatpush.msra.mxu0 0.0
    %2334 = vmatpush.msra.mxu0 %v2303
    %2335 = vmatmul.f32.gmra.mxu0 %v2301
    %v2336 = vpop.f32.mrf.mxu0
    %v2337 = vadd.f32 %v2264, %v2336
    %2338 = vdwg.mxu0
    %2339 = vmatpush.msra.mxu0 0.0
    %2340 = vmatpush.msra.mxu0 0.0
    %2341 = vmatpush.msra.mxu0 0.0
    %2342 = vmatpush.msra.mxu0 0.0
    %2343 = vmatpush.msra.mxu0 0.0
    %2344 = vmatpush.msra.mxu0 0.0
    %2345 = vmatpush.msra.mxu0 0.0
    %2346 = vmatpush.msra.mxu0 0.0
    %2347 = vmatpush.msra.mxu0 0.0
    %2348 = vmatpush.msra.mxu0 0.0
    %2349 = vmatpush.msra.mxu0 0.0
    %2350 = vmatpush.msra.mxu0 0.0
    %2351 = vmatpush.msra.mxu0 0.0
    %2352 = vmatpush.msra.mxu0 0.0
    %2353 = vmatpush.msra.mxu0 0.0
    %2354 = vmatpush.msra.mxu0 %v2305
    %2355 = vmatmul.f32.gmra.mxu0 %v2301
    %v2356 = vpop.f32.mrf.mxu0
    %v2357 = vadd.f32 %v2265, %v2356
    %2358 = vdwg.mxu0
    %2359 = vmatpush.msra.mxu0 0.0
    %2360 = vmatpush.msra.mxu0 0.0
    %2361 = vmatpush.msra.mxu0 0.0
    %2362 = vmatpush.msra.mxu0 0.0
    %2363 = vmatpush.msra.mxu0 0.0
    %2364 = vmatpush.msra.mxu0 0.0
    %2365 = vmatpush.msra.mxu0 0.0
    %2366 = vmatpush.msra.mxu0 0.0
    %2367 = vmatpush.msra.mxu0 0.0
    %2368 = vmatpush.msra.mxu0 0.0
    %2369 = vmatpush.msra.mxu0 0.0
    %2370 = vmatpush.msra.mxu0 0.0
    %2371 = vmatpush.msra.mxu0 0.0
    %2372 = vmatpush.msra.mxu0 0.0
    %2373 = vmatpush.msra.mxu0 0.0
    %2374 = vmatpush.msra.mxu0 %v2307
    %2375 = vmatmul.f32.gmra.mxu0 %v2301
    %v2376 = vpop.f32.mrf.mxu0
    %v2377 = vadd.f32 %v2266, %v2376
    %2378 = vdwg.mxu0
    %2379 = vmatpush.msra.mxu0 0.0
    %2380 = vmatpush.msra.mxu0 0.0
    %2381 = vmatpush.msra.mxu0 0.0
    %2382 = vmatpush.msra.mxu0 0.0
    %2383 = vmatpush.msra.mxu0 0.0
    %2384 = vmatpush.msra.mxu0 0.0
    %2385 = vmatpush.msra.mxu0 0.0
    %2386 = vmatpush.msra.mxu0 0.0
    %2387 = vmatpush.msra.mxu0 0.0
    %2388 = vmatpush.msra.mxu0 0.0
    %2389 = vmatpush.msra.mxu0 0.0
    %2390 = vmatpush.msra.mxu0 0.0
    %2391 = vmatpush.msra.mxu0 0.0
    %2392 = vmatpush.msra.mxu0 0.0
    %2393 = vmatpush.msra.mxu0 0.0
    %2394 = vmatpush.msra.mxu0 %v2309
    %2395 = vmatmul.f32.gmra.mxu0 %v2301
    %v2396 = vpop.f32.mrf.mxu0
    %v2397 = vadd.f32 %v2267, %v2396
    %2398 = vdwg.mxu0
    %2399 = vmatpush.msra.mxu0 0.0
    %2400 = vmatpush.msra.mxu0 0.0
    %2401 = vmatpush.msra.mxu0 0.0
    %2402 = vmatpush.msra.mxu0 0.0
    %2403 = vmatpush.msra.mxu0 0.0
    %2404 = vmatpush.msra.mxu0 0.0
    %2405 = vmatpush.msra.mxu0 0.0
    %2406 = vmatpush.msra.mxu0 0.0
    %2407 = vmatpush.msra.mxu0 0.0
    %2408 = vmatpush.msra.mxu0 0.0
    %2409 = vmatpush.msra.mxu0 0.0
    %2410 = vmatpush.msra.mxu0 0.0
    %2411 = vmatpush.msra.mxu0 0.0
    %2412 = vmatpush.msra.mxu0 0.0
    %2413 = vmatpush.msra.mxu0 0.0
    %2414 = vmatpush.msra.mxu0 %v2311
    %2415 = vmatmul.f32.gmra.mxu0 %v2301
    %v2416 = vpop.f32.mrf.mxu0
    %v2417 = vadd.f32 %v2268, %v2416
    %2418 = vdwg.mxu0
    %2419 = vmatpush.msra.mxu0 0.0
    %2420 = vmatpush.msra.mxu0 0.0
    %2421 = vmatpush.msra.mxu0 0.0
    %2422 = vmatpush.msra.mxu0 0.0
    %2423 = vmatpush.msra.mxu0 0.0
    %2424 = vmatpush.msra.mxu0 0.0
    %2425 = vmatpush.msra.mxu0 0.0
    %2426 = vmatpush.msra.mxu0 0.0
    %2427 = vmatpush.msra.mxu0 0.0
    %2428 = vmatpush.msra.mxu0 0.0
    %2429 = vmatpush.msra.mxu0 0.0
    %2430 = vmatpush.msra.mxu0 0.0
    %2431 = vmatpush.msra.mxu0 0.0
    %2432 = vmatpush.msra.mxu0 0.0
    %2433 = vmatpush.msra.mxu0 0.0
    %2434 = vmatpush.msra.mxu0 %v2313
    %2435 = vmatmul.f32.gmra.mxu0 %v2301
    %v2436 = vpop.f32.mrf.mxu0
    %v2437 = vadd.f32 %v2269, %v2436
    %2438 = vdwg.mxu0
    %2439 = vmatpush.msra.mxu0 0.0
    %2440 = vmatpush.msra.mxu0 0.0
    %2441 = vmatpush.msra.mxu0 0.0
    %2442 = vmatpush.msra.mxu0 0.0
    %2443 = vmatpush.msra.mxu0 0.0
    %2444 = vmatpush.msra.mxu0 0.0
    %2445 = vmatpush.msra.mxu0 0.0
    %2446 = vmatpush.msra.mxu0 0.0
    %2447 = vmatpush.msra.mxu0 0.0
    %2448 = vmatpush.msra.mxu0 0.0
    %2449 = vmatpush.msra.mxu0 0.0
    %2450 = vmatpush.msra.mxu0 0.0
    %2451 = vmatpush.msra.mxu0 0.0
    %2452 = vmatpush.msra.mxu0 0.0
    %2453 = vmatpush.msra.mxu0 0.0
    %2454 = vmatpush.msra.mxu0 %v2315
    %2455 = vmatmul.f32.gmra.mxu0 %v2301
    %v2456 = vpop.f32.mrf.mxu0
    %v2457 = vadd.f32 %v2270, %v2456
    %2458 = vdwg.mxu0
    %2459 = vmatpush.msra.mxu0 0.0
    %2460 = vmatpush.msra.mxu0 0.0
    %2461 = vmatpush.msra.mxu0 0.0
    %2462 = vmatpush.msra.mxu0 0.0
    %2463 = vmatpush.msra.mxu0 0.0
    %2464 = vmatpush.msra.mxu0 0.0
    %2465 = vmatpush.msra.mxu0 0.0
    %2466 = vmatpush.msra.mxu0 0.0
    %2467 = vmatpush.msra.mxu0 0.0
    %2468 = vmatpush.msra.mxu0 0.0
    %2469 = vmatpush.msra.mxu0 0.0
    %2470 = vmatpush.msra.mxu0 0.0
    %2471 = vmatpush.msra.mxu0 0.0
    %2472 = vmatpush.msra.mxu0 0.0
    %2473 = vmatpush.msra.mxu0 0.0
    %2474 = vmatpush.msra.mxu0 %v2317
    %2475 = vmatmul.f32.gmra.mxu0 %v2301
    %v2476 = vpop.f32.mrf.mxu0
    %v2477 = vadd.f32 %v2271, %v2476
    %2478 = vdwg.mxu0
    %v2479 = vxor.u32 %v2337, 2147483648
    %v2480 = vxor.u32 %v2357, 2147483648
    %v2481 = vmul.f32 %v2479, 1.442695
    %v2482 = vpow.pop %v2481
    %v2483 = vmul.f32 %v2480, 1.442695
    %v2484 = vpow.pop %v2483
    %v2485 = vadd.f32 %v2482, 1.0
    %v2486 = vadd.f32 %v2484, 1.0
    %v2487 = vrcp.pop %v2485
    %v2488 = vmul.f32 %v2485, %v2487
    %v2489 = vsub.f32 1.0, %v2488
    %v2490 = vmul.f32 %v2487, %v2489
    %v2491 = vadd.f32 %v2487, %v2490
    %vm2492 = vweird.f32 %v2485
    %vm2493 = vweird.f32 %v2487
    %vm2494 = vmor %vm2492, %vm2493
    %v2495 = vsel %vm2494, %v2487, %v2491
    %v2496 = vand.u32 2147483647, %v2485
    %vm2497 = vcmp.eq.f32.partialorder %v2496, 8.507059e+37
    %v2498 = vand.u32 %v2485, 2147483648
    %v2499 = vor.u32 1.1754944e-38, %v2498
    %v2500 = vsel %vm2497, %v2499, %v2495
    %v2501 = vmul.f32 1.0, %v2500
    %v2502 = vrcp.pop %v2486
    %v2503 = vmul.f32 %v2486, %v2502
    %v2504 = vsub.f32 1.0, %v2503
    %v2505 = vmul.f32 %v2502, %v2504
    %v2506 = vadd.f32 %v2502, %v2505
    %vm2507 = vweird.f32 %v2486
    %vm2508 = vweird.f32 %v2502
    %vm2509 = vmor %vm2507, %vm2508
    %v2510 = vsel %vm2509, %v2502, %v2506
    %v2511 = vand.u32 2147483647, %v2486
    %vm2512 = vcmp.eq.f32.partialorder %v2511, 8.507059e+37
    %v2513 = vand.u32 %v2486, 2147483648
    %v2514 = vor.u32 1.1754944e-38, %v2513
    %v2515 = vsel %vm2512, %v2514, %v2510
    %v2516 = vmul.f32 1.0, %v2515
    %v2517 = vxor.u32 %v2377, 2147483648
    %v2518 = vxor.u32 %v2397, 2147483648
    %v2519 = vmul.f32 %v2517, 1.442695
    %v2520 = vpow.pop %v2519
    %v2521 = vmul.f32 %v2518, 1.442695
    %v2522 = vpow.pop %v2521
    %v2523 = vadd.f32 %v2520, 1.0
    %v2524 = vadd.f32 %v2522, 1.0
    %v2525 = vrcp.pop %v2523
    %v2526 = vmul.f32 %v2523, %v2525
    %v2527 = vsub.f32 1.0, %v2526
    %v2528 = vmul.f32 %v2525, %v2527
    %v2529 = vadd.f32 %v2525, %v2528
    %vm2530 = vweird.f32 %v2523
    %vm2531 = vweird.f32 %v2525
    %vm2532 = vmor %vm2530, %vm2531
    %v2533 = vsel %vm2532, %v2525, %v2529
    %v2534 = vand.u32 2147483647, %v2523
    %vm2535 = vcmp.eq.f32.partialorder %v2534, 8.507059e+37
    %v2536 = vand.u32 %v2523, 2147483648
    %v2537 = vor.u32 1.1754944e-38, %v2536
    %v2538 = vsel %vm2535, %v2537, %v2533
    %v2539 = vmul.f32 1.0, %v2538
    %v2540 = vrcp.pop %v2524
    %v2541 = vmul.f32 %v2524, %v2540
    %v2542 = vsub.f32 1.0, %v2541
    %v2543 = vmul.f32 %v2540, %v2542
    %v2544 = vadd.f32 %v2540, %v2543
    %vm2545 = vweird.f32 %v2524
    %vm2546 = vweird.f32 %v2540
    %vm2547 = vmor %vm2545, %vm2546
    %v2548 = vsel %vm2547, %v2540, %v2544
    %v2549 = vand.u32 2147483647, %v2524
    %vm2550 = vcmp.eq.f32.partialorder %v2549, 8.507059e+37
    %v2551 = vand.u32 %v2524, 2147483648
    %v2552 = vor.u32 1.1754944e-38, %v2551
    %v2553 = vsel %vm2550, %v2552, %v2548
    %v2554 = vmul.f32 1.0, %v2553
    %v2555 = vtanh.pop %v2417
    %v2556 = vtanh.pop %v2437
    %v2557 = vxor.u32 %v2457, 2147483648
    %v2558 = vxor.u32 %v2477, 2147483648
    %v2559 = vmul.f32 %v2557, 1.442695
    %v2560 = vpow.pop %v2559
    %v2561 = vmul.f32 %v2558, 1.442695
    %v2562 = vpow.pop %v2561
    %v2563 = vadd.f32 %v2560, 1.0
    %v2564 = vadd.f32 %v2562, 1.0
    %v2565 = vrcp.pop %v2563
    %v2566 = vmul.f32 %v2563, %v2565
    %v2567 = vsub.f32 1.0, %v2566
    %v2568 = vmul.f32 %v2565, %v2567
    %v2569 = vadd.f32 %v2565, %v2568
    %vm2570 = vweird.f32 %v2563
    %vm2571 = vweird.f32 %v2565
    %vm2572 = vmor %vm2570, %vm2571
    %v2573 = vsel %vm2572, %v2565, %v2569
    %v2574 = vand.u32 2147483647, %v2563
    %vm2575 = vcmp.eq.f32.partialorder %v2574, 8.507059e+37
    %v2576 = vand.u32 %v2563, 2147483648
    %v2577 = vor.u32 1.1754944e-38, %v2576
    %v2578 = vsel %vm2575, %v2577, %v2573
    %v2579 = vmul.f32 1.0, %v2578
    %v2580 = vrcp.pop %v2564
    %v2581 = vmul.f32 %v2564, %v2580
    %v2582 = vsub.f32 1.0, %v2581
    %v2583 = vmul.f32 %v2580, %v2582
    %v2584 = vadd.f32 %v2580, %v2583
    %vm2585 = vweird.f32 %v2564
    %vm2586 = vweird.f32 %v2580
    %vm2587 = vmor %vm2585, %vm2586
    %v2588 = vsel %vm2587, %v2580, %v2584
    %v2589 = vand.u32 2147483647, %v2564
    %vm2590 = vcmp.eq.f32.partialorder %v2589, 8.507059e+37
    %v2591 = vand.u32 %v2564, 2147483648
    %v2592 = vor.u32 1.1754944e-38, %v2591
    %v2593 = vsel %vm2590, %v2592, %v2588
    %v2594 = vmul.f32 1.0, %v2593
    %v2595 = vmul.f32 %v2539, 0.0
    %v2596 = vmul.f32 %v2554, 0.0
    %v2597 = vmul.f32 %v2501, %v2555
    %v2598 = vmul.f32 %v2516, %v2556
    %v2599 = vadd.f32 %v2595, %v2597
    %v2600 = vadd.f32 %v2596, %v2598
    %v2601 = vtanh.pop %v2599
    %v2602 = vtanh.pop %v2600
    %v2603 = vmul.f32 %v2579, %v2601
    %v2604 = vmul.f32 %v2594, %v2602
    %s2605 = smul.u32 8, 32
    %s2606 = smul.u32 %s2605, 16
    %s2607 = sshll.u32 %s2606, 4
    %2608 = dma.done [#allocation4], %s2607
    %v2609 = vld [vmem:[#allocation2] sm:$0xff]
    %v2610 = vld [vmem:[#allocation2 + $0x8] sm:$0xff]
    %v2611 = vld [vmem:[#allocation2 + $0x10] sm:$0xff]
    %v2612 = vld [vmem:[#allocation2 + $0x18] sm:$0xff]
    %v2613 = vld [vmem:[#allocation2 + $0x20] sm:$0xff]
    %v2614 = vld [vmem:[#allocation2 + $0x28] sm:$0xff]
    %v2615 = vld [vmem:[#allocation2 + $0x30] sm:$0xff]
    %v2616 = vld [vmem:[#allocation2 + $0x38] sm:$0xff]
    %v2617 = vld [vmem:[#allocation2 + $0x40] sm:$0xff]
    %v2618 = vld [vmem:[#allocation2 + $0x48] sm:$0xff]
    %v2619 = vld [vmem:[#allocation2 + $0x50] sm:$0xff]
    %v2620 = vld [vmem:[#allocation2 + $0x58] sm:$0xff]
    %v2621 = vld [vmem:[#allocation2 + $0x60] sm:$0xff]
    %v2622 = vld [vmem:[#allocation2 + $0x68] sm:$0xff]
    %v2623 = vld [vmem:[#allocation2 + $0x70] sm:$0xff]
    %v2624 = vld [vmem:[#allocation2 + $0x78] sm:$0xff]
    %v2625 = vld [vmem:[#allocation2 + $0x80] sm:$0xff]
    %v2626 = vld [vmem:[#allocation2 + $0x88] sm:$0xff]
    %v2627 = vld [vmem:[#allocation2 + $0x90] sm:$0xff]
    %v2628 = vld [vmem:[#allocation2 + $0x98] sm:$0xff]
    %v2629 = vld [vmem:[#allocation2 + $0xa0] sm:$0xff]
    %v2630 = vld [vmem:[#allocation2 + $0xa8] sm:$0xff]
    %v2631 = vld [vmem:[#allocation2 + $0xb0] sm:$0xff]
    %v2632 = vld [vmem:[#allocation2 + $0xb8] sm:$0xff]
    %v2633 = vld [vmem:[#allocation2 + $0xc0] sm:$0xff]
    %v2634 = vld [vmem:[#allocation2 + $0xc8] sm:$0xff]
    %v2635 = vld [vmem:[#allocation2 + $0xd0] sm:$0xff]
    %v2636 = vld [vmem:[#allocation2 + $0xd8] sm:$0xff]
    %v2637 = vld [vmem:[#allocation2 + $0xe0] sm:$0xff]
    %v2638 = vld [vmem:[#allocation2 + $0xe8] sm:$0xff]
    %v2639 = vld [vmem:[#allocation2 + $0xf0] sm:$0xff]
    %v2640 = vld [vmem:[#allocation2 + $0xf8] sm:$0xff]
    %v2641 = vld [vmem:[#allocation2 + $0x100] sm:$0xff]
    %v2642 = vld [vmem:[#allocation2 + $0x108] sm:$0xff]
    %v2643 = vld [vmem:[#allocation2 + $0x110] sm:$0xff]
    %v2644 = vld [vmem:[#allocation2 + $0x118] sm:$0xff]
    %v2645 = vld [vmem:[#allocation2 + $0x120] sm:$0xff]
    %v2646 = vld [vmem:[#allocation2 + $0x128] sm:$0xff]
    %v2647 = vld [vmem:[#allocation2 + $0x130] sm:$0xff]
    %v2648 = vld [vmem:[#allocation2 + $0x138] sm:$0xff]
    %v2649 = vld [vmem:[#allocation2 + $0x140] sm:$0xff]
    %v2650 = vld [vmem:[#allocation2 + $0x148] sm:$0xff]
    %v2651 = vld [vmem:[#allocation2 + $0x150] sm:$0xff]
    %v2652 = vld [vmem:[#allocation2 + $0x158] sm:$0xff]
    %v2653 = vld [vmem:[#allocation2 + $0x160] sm:$0xff]
    %v2654 = vld [vmem:[#allocation2 + $0x168] sm:$0xff]
    %v2655 = vld [vmem:[#allocation2 + $0x170] sm:$0xff]
    %v2656 = vld [vmem:[#allocation2 + $0x178] sm:$0xff]
    %v2657 = vld [vmem:[#allocation2 + $0x180] sm:$0xff]
    %v2658 = vld [vmem:[#allocation2 + $0x188] sm:$0xff]
    %v2659 = vld [vmem:[#allocation2 + $0x190] sm:$0xff]
    %v2660 = vld [vmem:[#allocation2 + $0x198] sm:$0xff]
    %v2661 = vld [vmem:[#allocation2 + $0x1a0] sm:$0xff]
    %v2662 = vld [vmem:[#allocation2 + $0x1a8] sm:$0xff]
    %v2663 = vld [vmem:[#allocation2 + $0x1b0] sm:$0xff]
    %v2664 = vld [vmem:[#allocation2 + $0x1b8] sm:$0xff]
    %v2665 = vld [vmem:[#allocation2 + $0x1c0] sm:$0xff]
    %v2666 = vld [vmem:[#allocation2 + $0x1c8] sm:$0xff]
    %v2667 = vld [vmem:[#allocation2 + $0x1d0] sm:$0xff]
    %v2668 = vld [vmem:[#allocation2 + $0x1d8] sm:$0xff]
    %v2669 = vld [vmem:[#allocation2 + $0x1e0] sm:$0xff]
    %v2670 = vld [vmem:[#allocation2 + $0x1e8] sm:$0xff]
    %v2671 = vld [vmem:[#allocation2 + $0x1f0] sm:$0xff]
    %v2672 = vld [vmem:[#allocation2 + $0x1f8] sm:$0xff]
    %v2673 = vld [vmem:[#allocation2 + $0x200] sm:$0xff]
    %v2674 = vld [vmem:[#allocation2 + $0x208] sm:$0xff]
    %v2675 = vld [vmem:[#allocation2 + $0x210] sm:$0xff]
    %v2676 = vld [vmem:[#allocation2 + $0x218] sm:$0xff]
    %v2677 = vld [vmem:[#allocation2 + $0x220] sm:$0xff]
    %v2678 = vld [vmem:[#allocation2 + $0x228] sm:$0xff]
    %v2679 = vld [vmem:[#allocation2 + $0x230] sm:$0xff]
    %v2680 = vld [vmem:[#allocation2 + $0x238] sm:$0xff]
    %v2681 = vld [vmem:[#allocation2 + $0x240] sm:$0xff]
    %v2682 = vld [vmem:[#allocation2 + $0x248] sm:$0xff]
    %v2683 = vld [vmem:[#allocation2 + $0x250] sm:$0xff]
    %v2684 = vld [vmem:[#allocation2 + $0x258] sm:$0xff]
    %v2685 = vld [vmem:[#allocation2 + $0x260] sm:$0xff]
    %v2686 = vld [vmem:[#allocation2 + $0x268] sm:$0xff]
    %v2687 = vld [vmem:[#allocation2 + $0x270] sm:$0xff]
    %v2688 = vld [vmem:[#allocation2 + $0x278] sm:$0xff]
    %v2689 = vld [vmem:[#allocation2 + $0x280] sm:$0xff]
    %v2690 = vld [vmem:[#allocation2 + $0x288] sm:$0xff]
    %v2691 = vld [vmem:[#allocation2 + $0x290] sm:$0xff]
    %v2692 = vld [vmem:[#allocation2 + $0x298] sm:$0xff]
    %v2693 = vld [vmem:[#allocation2 + $0x2a0] sm:$0xff]
    %v2694 = vld [vmem:[#allocation2 + $0x2a8] sm:$0xff]
    %v2695 = vld [vmem:[#allocation2 + $0x2b0] sm:$0xff]
    %v2696 = vld [vmem:[#allocation2 + $0x2b8] sm:$0xff]
    %v2697 = vld [vmem:[#allocation2 + $0x2c0] sm:$0xff]
    %v2698 = vld [vmem:[#allocation2 + $0x2c8] sm:$0xff]
    %v2699 = vld [vmem:[#allocation2 + $0x2d0] sm:$0xff]
    %v2700 = vld [vmem:[#allocation2 + $0x2d8] sm:$0xff]
    %v2701 = vld [vmem:[#allocation2 + $0x2e0] sm:$0xff]
    %v2702 = vld [vmem:[#allocation2 + $0x2e8] sm:$0xff]
    %v2703 = vld [vmem:[#allocation2 + $0x2f0] sm:$0xff]
    %v2704 = vld [vmem:[#allocation2 + $0x2f8] sm:$0xff]
    %v2705 = vld [vmem:[#allocation2 + $0x300] sm:$0xff]
    %v2706 = vld [vmem:[#allocation2 + $0x308] sm:$0xff]
    %v2707 = vld [vmem:[#allocation2 + $0x310] sm:$0xff]
    %v2708 = vld [vmem:[#allocation2 + $0x318] sm:$0xff]
    %v2709 = vld [vmem:[#allocation2 + $0x320] sm:$0xff]
    %v2710 = vld [vmem:[#allocation2 + $0x328] sm:$0xff]
    %v2711 = vld [vmem:[#allocation2 + $0x330] sm:$0xff]
    %v2712 = vld [vmem:[#allocation2 + $0x338] sm:$0xff]
    %v2713 = vld [vmem:[#allocation2 + $0x340] sm:$0xff]
    %v2714 = vld [vmem:[#allocation2 + $0x348] sm:$0xff]
    %v2715 = vld [vmem:[#allocation2 + $0x350] sm:$0xff]
    %v2716 = vld [vmem:[#allocation2 + $0x358] sm:$0xff]
    %v2717 = vld [vmem:[#allocation2 + $0x360] sm:$0xff]
    %v2718 = vld [vmem:[#allocation2 + $0x368] sm:$0xff]
    %v2719 = vld [vmem:[#allocation2 + $0x370] sm:$0xff]
    %v2720 = vld [vmem:[#allocation2 + $0x378] sm:$0xff]
    %v2721 = vld [vmem:[#allocation2 + $0x380] sm:$0xff]
    %v2722 = vld [vmem:[#allocation2 + $0x388] sm:$0xff]
    %v2723 = vld [vmem:[#allocation2 + $0x390] sm:$0xff]
    %v2724 = vld [vmem:[#allocation2 + $0x398] sm:$0xff]
    %v2725 = vld [vmem:[#allocation2 + $0x3a0] sm:$0xff]
    %v2726 = vld [vmem:[#allocation2 + $0x3a8] sm:$0xff]
    %v2727 = vld [vmem:[#allocation2 + $0x3b0] sm:$0xff]
    %v2728 = vld [vmem:[#allocation2 + $0x3b8] sm:$0xff]
    %v2729 = vld [vmem:[#allocation2 + $0x3c0] sm:$0xff]
    %v2730 = vld [vmem:[#allocation2 + $0x3c8] sm:$0xff]
    %v2731 = vld [vmem:[#allocation2 + $0x3d0] sm:$0xff]
    %v2732 = vld [vmem:[#allocation2 + $0x3d8] sm:$0xff]
    %v2733 = vld [vmem:[#allocation2 + $0x3e0] sm:$0xff]
    %v2734 = vld [vmem:[#allocation2 + $0x3e8] sm:$0xff]
    %v2735 = vld [vmem:[#allocation2 + $0x3f0] sm:$0xff]
    %v2736 = vld [vmem:[#allocation2 + $0x3f8] sm:$0xff]
    %v2737 = vld [vmem:[#allocation2 + $0x400] sm:$0xff]
    %v2738 = vld [vmem:[#allocation2 + $0x408] sm:$0xff]
    %v2739 = vld [vmem:[#allocation2 + $0x410] sm:$0xff]
    %v2740 = vld [vmem:[#allocation2 + $0x418] sm:$0xff]
    %v2741 = vld [vmem:[#allocation2 + $0x420] sm:$0xff]
    %v2742 = vld [vmem:[#allocation2 + $0x428] sm:$0xff]
    %v2743 = vld [vmem:[#allocation2 + $0x430] sm:$0xff]
    %v2744 = vld [vmem:[#allocation2 + $0x438] sm:$0xff]
    %v2745 = vld [vmem:[#allocation2 + $0x440] sm:$0xff]
    %v2746 = vld [vmem:[#allocation2 + $0x448] sm:$0xff]
    %v2747 = vld [vmem:[#allocation2 + $0x450] sm:$0xff]
    %v2748 = vld [vmem:[#allocation2 + $0x458] sm:$0xff]
    %v2749 = vld [vmem:[#allocation2 + $0x460] sm:$0xff]
    %v2750 = vld [vmem:[#allocation2 + $0x468] sm:$0xff]
    %v2751 = vld [vmem:[#allocation2 + $0x470] sm:$0xff]
    %v2752 = vld [vmem:[#allocation2 + $0x478] sm:$0xff]
    %v2753 = vld [vmem:[#allocation2 + $0x480] sm:$0xff]
    %v2754 = vld [vmem:[#allocation2 + $0x488] sm:$0xff]
    %v2755 = vld [vmem:[#allocation2 + $0x490] sm:$0xff]
    %v2756 = vld [vmem:[#allocation2 + $0x498] sm:$0xff]
    %v2757 = vld [vmem:[#allocation2 + $0x4a0] sm:$0xff]
    %v2758 = vld [vmem:[#allocation2 + $0x4a8] sm:$0xff]
    %v2759 = vld [vmem:[#allocation2 + $0x4b0] sm:$0xff]
    %v2760 = vld [vmem:[#allocation2 + $0x4b8] sm:$0xff]
    %v2761 = vld [vmem:[#allocation2 + $0x4c0] sm:$0xff]
    %v2762 = vld [vmem:[#allocation2 + $0x4c8] sm:$0xff]
    %v2763 = vld [vmem:[#allocation2 + $0x4d0] sm:$0xff]
    %v2764 = vld [vmem:[#allocation2 + $0x4d8] sm:$0xff]
    %v2765 = vld [vmem:[#allocation2 + $0x4e0] sm:$0xff]
    %v2766 = vld [vmem:[#allocation2 + $0x4e8] sm:$0xff]
    %v2767 = vld [vmem:[#allocation2 + $0x4f0] sm:$0xff]
    %v2768 = vld [vmem:[#allocation2 + $0x4f8] sm:$0xff]
    %v2769 = vld [vmem:[#allocation2 + $0x500] sm:$0xff]
    %v2770 = vld [vmem:[#allocation2 + $0x508] sm:$0xff]
    %v2771 = vld [vmem:[#allocation2 + $0x510] sm:$0xff]
    %v2772 = vld [vmem:[#allocation2 + $0x518] sm:$0xff]
    %v2773 = vld [vmem:[#allocation2 + $0x520] sm:$0xff]
    %v2774 = vld [vmem:[#allocation2 + $0x528] sm:$0xff]
    %v2775 = vld [vmem:[#allocation2 + $0x530] sm:$0xff]
    %v2776 = vld [vmem:[#allocation2 + $0x538] sm:$0xff]
    %v2777 = vld [vmem:[#allocation2 + $0x540] sm:$0xff]
    %v2778 = vld [vmem:[#allocation2 + $0x548] sm:$0xff]
    %v2779 = vld [vmem:[#allocation2 + $0x550] sm:$0xff]
    %v2780 = vld [vmem:[#allocation2 + $0x558] sm:$0xff]
    %v2781 = vld [vmem:[#allocation2 + $0x560] sm:$0xff]
    %v2782 = vld [vmem:[#allocation2 + $0x568] sm:$0xff]
    %v2783 = vld [vmem:[#allocation2 + $0x570] sm:$0xff]
    %v2784 = vld [vmem:[#allocation2 + $0x578] sm:$0xff]
    %v2785 = vld [vmem:[#allocation2 + $0x580] sm:$0xff]
    %v2786 = vld [vmem:[#allocation2 + $0x588] sm:$0xff]
    %v2787 = vld [vmem:[#allocation2 + $0x590] sm:$0xff]
    %v2788 = vld [vmem:[#allocation2 + $0x598] sm:$0xff]
    %v2789 = vld [vmem:[#allocation2 + $0x5a0] sm:$0xff]
    %v2790 = vld [vmem:[#allocation2 + $0x5a8] sm:$0xff]
    %v2791 = vld [vmem:[#allocation2 + $0x5b0] sm:$0xff]
    %v2792 = vld [vmem:[#allocation2 + $0x5b8] sm:$0xff]
    %v2793 = vld [vmem:[#allocation2 + $0x5c0] sm:$0xff]
    %v2794 = vld [vmem:[#allocation2 + $0x5c8] sm:$0xff]
    %v2795 = vld [vmem:[#allocation2 + $0x5d0] sm:$0xff]
    %v2796 = vld [vmem:[#allocation2 + $0x5d8] sm:$0xff]
    %v2797 = vld [vmem:[#allocation2 + $0x5e0] sm:$0xff]
    %v2798 = vld [vmem:[#allocation2 + $0x5e8] sm:$0xff]
    %v2799 = vld [vmem:[#allocation2 + $0x5f0] sm:$0xff]
    %v2800 = vld [vmem:[#allocation2 + $0x5f8] sm:$0xff]
    %v2801 = vld [vmem:[#allocation2 + $0x600] sm:$0xff]
    %v2802 = vld [vmem:[#allocation2 + $0x608] sm:$0xff]
    %v2803 = vld [vmem:[#allocation2 + $0x610] sm:$0xff]
    %v2804 = vld [vmem:[#allocation2 + $0x618] sm:$0xff]
    %v2805 = vld [vmem:[#allocation2 + $0x620] sm:$0xff]
    %v2806 = vld [vmem:[#allocation2 + $0x628] sm:$0xff]
    %v2807 = vld [vmem:[#allocation2 + $0x630] sm:$0xff]
    %v2808 = vld [vmem:[#allocation2 + $0x638] sm:$0xff]
    %v2809 = vld [vmem:[#allocation2 + $0x640] sm:$0xff]
    %v2810 = vld [vmem:[#allocation2 + $0x648] sm:$0xff]
    %v2811 = vld [vmem:[#allocation2 + $0x650] sm:$0xff]
    %v2812 = vld [vmem:[#allocation2 + $0x658] sm:$0xff]
    %v2813 = vld [vmem:[#allocation2 + $0x660] sm:$0xff]
    %v2814 = vld [vmem:[#allocation2 + $0x668] sm:$0xff]
    %v2815 = vld [vmem:[#allocation2 + $0x670] sm:$0xff]
    %v2816 = vld [vmem:[#allocation2 + $0x678] sm:$0xff]
    %v2817 = vld [vmem:[#allocation2 + $0x680] sm:$0xff]
    %v2818 = vld [vmem:[#allocation2 + $0x688] sm:$0xff]
    %v2819 = vld [vmem:[#allocation2 + $0x690] sm:$0xff]
    %v2820 = vld [vmem:[#allocation2 + $0x698] sm:$0xff]
    %v2821 = vld [vmem:[#allocation2 + $0x6a0] sm:$0xff]
    %v2822 = vld [vmem:[#allocation2 + $0x6a8] sm:$0xff]
    %v2823 = vld [vmem:[#allocation2 + $0x6b0] sm:$0xff]
    %v2824 = vld [vmem:[#allocation2 + $0x6b8] sm:$0xff]
    %v2825 = vld [vmem:[#allocation2 + $0x6c0] sm:$0xff]
    %v2826 = vld [vmem:[#allocation2 + $0x6c8] sm:$0xff]
    %v2827 = vld [vmem:[#allocation2 + $0x6d0] sm:$0xff]
    %v2828 = vld [vmem:[#allocation2 + $0x6d8] sm:$0xff]
    %v2829 = vld [vmem:[#allocation2 + $0x6e0] sm:$0xff]
    %v2830 = vld [vmem:[#allocation2 + $0x6e8] sm:$0xff]
    %v2831 = vld [vmem:[#allocation2 + $0x6f0] sm:$0xff]
    %v2832 = vld [vmem:[#allocation2 + $0x6f8] sm:$0xff]
    %v2833 = vld [vmem:[#allocation2 + $0x700] sm:$0xff]
    %v2834 = vld [vmem:[#allocation2 + $0x708] sm:$0xff]
    %v2835 = vld [vmem:[#allocation2 + $0x710] sm:$0xff]
    %v2836 = vld [vmem:[#allocation2 + $0x718] sm:$0xff]
    %v2837 = vld [vmem:[#allocation2 + $0x720] sm:$0xff]
    %v2838 = vld [vmem:[#allocation2 + $0x728] sm:$0xff]
    %v2839 = vld [vmem:[#allocation2 + $0x730] sm:$0xff]
    %v2840 = vld [vmem:[#allocation2 + $0x738] sm:$0xff]
    %v2841 = vld [vmem:[#allocation2 + $0x740] sm:$0xff]
    %v2842 = vld [vmem:[#allocation2 + $0x748] sm:$0xff]
    %v2843 = vld [vmem:[#allocation2 + $0x750] sm:$0xff]
    %v2844 = vld [vmem:[#allocation2 + $0x758] sm:$0xff]
    %v2845 = vld [vmem:[#allocation2 + $0x760] sm:$0xff]
    %v2846 = vld [vmem:[#allocation2 + $0x768] sm:$0xff]
    %v2847 = vld [vmem:[#allocation2 + $0x770] sm:$0xff]
    %v2848 = vld [vmem:[#allocation2 + $0x778] sm:$0xff]
    %v2849 = vld [vmem:[#allocation2 + $0x780] sm:$0xff]
    %v2850 = vld [vmem:[#allocation2 + $0x788] sm:$0xff]
    %v2851 = vld [vmem:[#allocation2 + $0x790] sm:$0xff]
    %v2852 = vld [vmem:[#allocation2 + $0x798] sm:$0xff]
    %v2853 = vld [vmem:[#allocation2 + $0x7a0] sm:$0xff]
    %v2854 = vld [vmem:[#allocation2 + $0x7a8] sm:$0xff]
    %v2855 = vld [vmem:[#allocation2 + $0x7b0] sm:$0xff]
    %v2856 = vld [vmem:[#allocation2 + $0x7b8] sm:$0xff]
    %v2857 = vld [vmem:[#allocation2 + $0x7c0] sm:$0xff]
    %v2858 = vld [vmem:[#allocation2 + $0x7c8] sm:$0xff]
    %v2859 = vld [vmem:[#allocation2 + $0x7d0] sm:$0xff]
    %v2860 = vld [vmem:[#allocation2 + $0x7d8] sm:$0xff]
    %v2861 = vld [vmem:[#allocation2 + $0x7e0] sm:$0xff]
    %v2862 = vld [vmem:[#allocation2 + $0x7e8] sm:$0xff]
    %v2863 = vld [vmem:[#allocation2 + $0x7f0] sm:$0xff]
    %v2864 = vld [vmem:[#allocation2 + $0x7f8] sm:$0xff]
    %v2865 = vld [vmem:[#allocation2 + $0x800] sm:$0xff]
    %v2866 = vld [vmem:[#allocation2 + $0x808] sm:$0xff]
    %v2867 = vld [vmem:[#allocation2 + $0x810] sm:$0xff]
    %v2868 = vld [vmem:[#allocation2 + $0x818] sm:$0xff]
    %v2869 = vld [vmem:[#allocation2 + $0x820] sm:$0xff]
    %v2870 = vld [vmem:[#allocation2 + $0x828] sm:$0xff]
    %v2871 = vld [vmem:[#allocation2 + $0x830] sm:$0xff]
    %v2872 = vld [vmem:[#allocation2 + $0x838] sm:$0xff]
    %v2873 = vld [vmem:[#allocation2 + $0x840] sm:$0xff]
    %v2874 = vld [vmem:[#allocation2 + $0x848] sm:$0xff]
    %v2875 = vld [vmem:[#allocation2 + $0x850] sm:$0xff]
    %v2876 = vld [vmem:[#allocation2 + $0x858] sm:$0xff]
    %v2877 = vld [vmem:[#allocation2 + $0x860] sm:$0xff]
    %v2878 = vld [vmem:[#allocation2 + $0x868] sm:$0xff]
    %v2879 = vld [vmem:[#allocation2 + $0x870] sm:$0xff]
    %v2880 = vld [vmem:[#allocation2 + $0x878] sm:$0xff]
    %v2881 = vld [vmem:[#allocation2 + $0x880] sm:$0xff]
    %v2882 = vld [vmem:[#allocation2 + $0x888] sm:$0xff]
    %v2883 = vld [vmem:[#allocation2 + $0x890] sm:$0xff]
    %v2884 = vld [vmem:[#allocation2 + $0x898] sm:$0xff]
    %v2885 = vld [vmem:[#allocation2 + $0x8a0] sm:$0xff]
    %v2886 = vld [vmem:[#allocation2 + $0x8a8] sm:$0xff]
    %v2887 = vld [vmem:[#allocation2 + $0x8b0] sm:$0xff]
    %v2888 = vld [vmem:[#allocation2 + $0x8b8] sm:$0xff]
    %v2889 = vld [vmem:[#allocation2 + $0x8c0] sm:$0xff]
    %v2890 = vld [vmem:[#allocation2 + $0x8c8] sm:$0xff]
    %v2891 = vld [vmem:[#allocation2 + $0x8d0] sm:$0xff]
    %v2892 = vld [vmem:[#allocation2 + $0x8d8] sm:$0xff]
    %v2893 = vld [vmem:[#allocation2 + $0x8e0] sm:$0xff]
    %v2894 = vld [vmem:[#allocation2 + $0x8e8] sm:$0xff]
    %v2895 = vld [vmem:[#allocation2 + $0x8f0] sm:$0xff]
    %v2896 = vld [vmem:[#allocation2 + $0x8f8] sm:$0xff]
    %v2897 = vld [vmem:[#allocation2 + $0x900] sm:$0xff]
    %v2898 = vld [vmem:[#allocation2 + $0x908] sm:$0xff]
    %v2899 = vld [vmem:[#allocation2 + $0x910] sm:$0xff]
    %v2900 = vld [vmem:[#allocation2 + $0x918] sm:$0xff]
    %v2901 = vld [vmem:[#allocation2 + $0x920] sm:$0xff]
    %v2902 = vld [vmem:[#allocation2 + $0x928] sm:$0xff]
    %v2903 = vld [vmem:[#allocation2 + $0x930] sm:$0xff]
    %v2904 = vld [vmem:[#allocation2 + $0x938] sm:$0xff]
    %v2905 = vld [vmem:[#allocation2 + $0x940] sm:$0xff]
    %v2906 = vld [vmem:[#allocation2 + $0x948] sm:$0xff]
    %v2907 = vld [vmem:[#allocation2 + $0x950] sm:$0xff]
    %v2908 = vld [vmem:[#allocation2 + $0x958] sm:$0xff]
    %v2909 = vld [vmem:[#allocation2 + $0x960] sm:$0xff]
    %v2910 = vld [vmem:[#allocation2 + $0x968] sm:$0xff]
    %v2911 = vld [vmem:[#allocation2 + $0x970] sm:$0xff]
    %v2912 = vld [vmem:[#allocation2 + $0x978] sm:$0xff]
    %v2913 = vld [vmem:[#allocation2 + $0x980] sm:$0xff]
    %v2914 = vld [vmem:[#allocation2 + $0x988] sm:$0xff]
    %v2915 = vld [vmem:[#allocation2 + $0x990] sm:$0xff]
    %v2916 = vld [vmem:[#allocation2 + $0x998] sm:$0xff]
    %v2917 = vld [vmem:[#allocation2 + $0x9a0] sm:$0xff]
    %v2918 = vld [vmem:[#allocation2 + $0x9a8] sm:$0xff]
    %v2919 = vld [vmem:[#allocation2 + $0x9b0] sm:$0xff]
    %v2920 = vld [vmem:[#allocation2 + $0x9b8] sm:$0xff]
    %v2921 = vld [vmem:[#allocation2 + $0x9c0] sm:$0xff]
    %v2922 = vld [vmem:[#allocation2 + $0x9c8] sm:$0xff]
    %v2923 = vld [vmem:[#allocation2 + $0x9d0] sm:$0xff]
    %v2924 = vld [vmem:[#allocation2 + $0x9d8] sm:$0xff]
    %v2925 = vld [vmem:[#allocation2 + $0x9e0] sm:$0xff]
    %v2926 = vld [vmem:[#allocation2 + $0x9e8] sm:$0xff]
    %v2927 = vld [vmem:[#allocation2 + $0x9f0] sm:$0xff]
    %v2928 = vld [vmem:[#allocation2 + $0x9f8] sm:$0xff]
    %v2929 = vld [vmem:[#allocation2 + $0xa00] sm:$0xff]
    %v2930 = vld [vmem:[#allocation2 + $0xa08] sm:$0xff]
    %v2931 = vld [vmem:[#allocation2 + $0xa10] sm:$0xff]
    %v2932 = vld [vmem:[#allocation2 + $0xa18] sm:$0xff]
    %v2933 = vld [vmem:[#allocation2 + $0xa20] sm:$0xff]
    %v2934 = vld [vmem:[#allocation2 + $0xa28] sm:$0xff]
    %v2935 = vld [vmem:[#allocation2 + $0xa30] sm:$0xff]
    %v2936 = vld [vmem:[#allocation2 + $0xa38] sm:$0xff]
    %v2937 = vld [vmem:[#allocation2 + $0xa40] sm:$0xff]
    %v2938 = vld [vmem:[#allocation2 + $0xa48] sm:$0xff]
    %v2939 = vld [vmem:[#allocation2 + $0xa50] sm:$0xff]
    %v2940 = vld [vmem:[#allocation2 + $0xa58] sm:$0xff]
    %v2941 = vld [vmem:[#allocation2 + $0xa60] sm:$0xff]
    %v2942 = vld [vmem:[#allocation2 + $0xa68] sm:$0xff]
    %v2943 = vld [vmem:[#allocation2 + $0xa70] sm:$0xff]
    %v2944 = vld [vmem:[#allocation2 + $0xa78] sm:$0xff]
    %v2945 = vld [vmem:[#allocation2 + $0xa80] sm:$0xff]
    %v2946 = vld [vmem:[#allocation2 + $0xa88] sm:$0xff]
    %v2947 = vld [vmem:[#allocation2 + $0xa90] sm:$0xff]
    %v2948 = vld [vmem:[#allocation2 + $0xa98] sm:$0xff]
    %v2949 = vld [vmem:[#allocation2 + $0xaa0] sm:$0xff]
    %v2950 = vld [vmem:[#allocation2 + $0xaa8] sm:$0xff]
    %v2951 = vld [vmem:[#allocation2 + $0xab0] sm:$0xff]
    %v2952 = vld [vmem:[#allocation2 + $0xab8] sm:$0xff]
    %v2953 = vld [vmem:[#allocation2 + $0xac0] sm:$0xff]
    %v2954 = vld [vmem:[#allocation2 + $0xac8] sm:$0xff]
    %v2955 = vld [vmem:[#allocation2 + $0xad0] sm:$0xff]
    %v2956 = vld [vmem:[#allocation2 + $0xad8] sm:$0xff]
    %v2957 = vld [vmem:[#allocation2 + $0xae0] sm:$0xff]
    %v2958 = vld [vmem:[#allocation2 + $0xae8] sm:$0xff]
    %v2959 = vld [vmem:[#allocation2 + $0xaf0] sm:$0xff]
    %v2960 = vld [vmem:[#allocation2 + $0xaf8] sm:$0xff]
    %v2961 = vld [vmem:[#allocation2 + $0xb00] sm:$0xff]
    %v2962 = vld [vmem:[#allocation2 + $0xb08] sm:$0xff]
    %v2963 = vld [vmem:[#allocation2 + $0xb10] sm:$0xff]
    %v2964 = vld [vmem:[#allocation2 + $0xb18] sm:$0xff]
    %v2965 = vld [vmem:[#allocation2 + $0xb20] sm:$0xff]
    %v2966 = vld [vmem:[#allocation2 + $0xb28] sm:$0xff]
    %v2967 = vld [vmem:[#allocation2 + $0xb30] sm:$0xff]
    %v2968 = vld [vmem:[#allocation2 + $0xb38] sm:$0xff]
    %v2969 = vld [vmem:[#allocation2 + $0xb40] sm:$0xff]
    %v2970 = vld [vmem:[#allocation2 + $0xb48] sm:$0xff]
    %v2971 = vld [vmem:[#allocation2 + $0xb50] sm:$0xff]
    %v2972 = vld [vmem:[#allocation2 + $0xb58] sm:$0xff]
    %v2973 = vld [vmem:[#allocation2 + $0xb60] sm:$0xff]
    %v2974 = vld [vmem:[#allocation2 + $0xb68] sm:$0xff]
    %v2975 = vld [vmem:[#allocation2 + $0xb70] sm:$0xff]
    %v2976 = vld [vmem:[#allocation2 + $0xb78] sm:$0xff]
    %v2977 = vld [vmem:[#allocation2 + $0xb80] sm:$0xff]
    %v2978 = vld [vmem:[#allocation2 + $0xb88] sm:$0xff]
    %v2979 = vld [vmem:[#allocation2 + $0xb90] sm:$0xff]
    %v2980 = vld [vmem:[#allocation2 + $0xb98] sm:$0xff]
    %v2981 = vld [vmem:[#allocation2 + $0xba0] sm:$0xff]
    %v2982 = vld [vmem:[#allocation2 + $0xba8] sm:$0xff]
    %v2983 = vld [vmem:[#allocation2 + $0xbb0] sm:$0xff]
    %v2984 = vld [vmem:[#allocation2 + $0xbb8] sm:$0xff]
    %v2985 = vld [vmem:[#allocation2 + $0xbc0] sm:$0xff]
    %v2986 = vld [vmem:[#allocation2 + $0xbc8] sm:$0xff]
    %v2987 = vld [vmem:[#allocation2 + $0xbd0] sm:$0xff]
    %v2988 = vld [vmem:[#allocation2 + $0xbd8] sm:$0xff]
    %v2989 = vld [vmem:[#allocation2 + $0xbe0] sm:$0xff]
    %v2990 = vld [vmem:[#allocation2 + $0xbe8] sm:$0xff]
    %v2991 = vld [vmem:[#allocation2 + $0xbf0] sm:$0xff]
    %v2992 = vld [vmem:[#allocation2 + $0xbf8] sm:$0xff]
    %v2993 = vld [vmem:[#allocation2 + $0xc00] sm:$0xff]
    %v2994 = vld [vmem:[#allocation2 + $0xc08] sm:$0xff]
    %v2995 = vld [vmem:[#allocation2 + $0xc10] sm:$0xff]
    %v2996 = vld [vmem:[#allocation2 + $0xc18] sm:$0xff]
    %v2997 = vld [vmem:[#allocation2 + $0xc20] sm:$0xff]
    %v2998 = vld [vmem:[#allocation2 + $0xc28] sm:$0xff]
    %v2999 = vld [vmem:[#allocation2 + $0xc30] sm:$0xff]
    %v3000 = vld [vmem:[#allocation2 + $0xc38] sm:$0xff]
    %v3001 = vld [vmem:[#allocation2 + $0xc40] sm:$0xff]
    %v3002 = vld [vmem:[#allocation2 + $0xc48] sm:$0xff]
    %v3003 = vld [vmem:[#allocation2 + $0xc50] sm:$0xff]
    %v3004 = vld [vmem:[#allocation2 + $0xc58] sm:$0xff]
    %v3005 = vld [vmem:[#allocation2 + $0xc60] sm:$0xff]
    %v3006 = vld [vmem:[#allocation2 + $0xc68] sm:$0xff]
    %v3007 = vld [vmem:[#allocation2 + $0xc70] sm:$0xff]
    %v3008 = vld [vmem:[#allocation2 + $0xc78] sm:$0xff]
    %v3009 = vld [vmem:[#allocation2 + $0xc80] sm:$0xff]
    %v3010 = vld [vmem:[#allocation2 + $0xc88] sm:$0xff]
    %v3011 = vld [vmem:[#allocation2 + $0xc90] sm:$0xff]
    %v3012 = vld [vmem:[#allocation2 + $0xc98] sm:$0xff]
    %v3013 = vld [vmem:[#allocation2 + $0xca0] sm:$0xff]
    %v3014 = vld [vmem:[#allocation2 + $0xca8] sm:$0xff]
    %v3015 = vld [vmem:[#allocation2 + $0xcb0] sm:$0xff]
    %v3016 = vld [vmem:[#allocation2 + $0xcb8] sm:$0xff]
    %v3017 = vld [vmem:[#allocation2 + $0xcc0] sm:$0xff]
    %v3018 = vld [vmem:[#allocation2 + $0xcc8] sm:$0xff]
    %v3019 = vld [vmem:[#allocation2 + $0xcd0] sm:$0xff]
    %v3020 = vld [vmem:[#allocation2 + $0xcd8] sm:$0xff]
    %v3021 = vld [vmem:[#allocation2 + $0xce0] sm:$0xff]
    %v3022 = vld [vmem:[#allocation2 + $0xce8] sm:$0xff]
    %v3023 = vld [vmem:[#allocation2 + $0xcf0] sm:$0xff]
    %v3024 = vld [vmem:[#allocation2 + $0xcf8] sm:$0xff]
    %v3025 = vld [vmem:[#allocation2 + $0xd00] sm:$0xff]
    %v3026 = vld [vmem:[#allocation2 + $0xd08] sm:$0xff]
    %v3027 = vld [vmem:[#allocation2 + $0xd10] sm:$0xff]
    %v3028 = vld [vmem:[#allocation2 + $0xd18] sm:$0xff]
    %v3029 = vld [vmem:[#allocation2 + $0xd20] sm:$0xff]
    %v3030 = vld [vmem:[#allocation2 + $0xd28] sm:$0xff]
    %v3031 = vld [vmem:[#allocation2 + $0xd30] sm:$0xff]
    %v3032 = vld [vmem:[#allocation2 + $0xd38] sm:$0xff]
    %v3033 = vld [vmem:[#allocation2 + $0xd40] sm:$0xff]
    %v3034 = vld [vmem:[#allocation2 + $0xd48] sm:$0xff]
    %v3035 = vld [vmem:[#allocation2 + $0xd50] sm:$0xff]
    %v3036 = vld [vmem:[#allocation2 + $0xd58] sm:$0xff]
    %v3037 = vld [vmem:[#allocation2 + $0xd60] sm:$0xff]
    %v3038 = vld [vmem:[#allocation2 + $0xd68] sm:$0xff]
    %v3039 = vld [vmem:[#allocation2 + $0xd70] sm:$0xff]
    %v3040 = vld [vmem:[#allocation2 + $0xd78] sm:$0xff]
    %v3041 = vld [vmem:[#allocation2 + $0xd80] sm:$0xff]
    %v3042 = vld [vmem:[#allocation2 + $0xd88] sm:$0xff]
    %v3043 = vld [vmem:[#allocation2 + $0xd90] sm:$0xff]
    %v3044 = vld [vmem:[#allocation2 + $0xd98] sm:$0xff]
    %v3045 = vld [vmem:[#allocation2 + $0xda0] sm:$0xff]
    %v3046 = vld [vmem:[#allocation2 + $0xda8] sm:$0xff]
    %v3047 = vld [vmem:[#allocation2 + $0xdb0] sm:$0xff]
    %v3048 = vld [vmem:[#allocation2 + $0xdb8] sm:$0xff]
    %v3049 = vld [vmem:[#allocation2 + $0xdc0] sm:$0xff]
    %v3050 = vld [vmem:[#allocation2 + $0xdc8] sm:$0xff]
    %v3051 = vld [vmem:[#allocation2 + $0xdd0] sm:$0xff]
    %v3052 = vld [vmem:[#allocation2 + $0xdd8] sm:$0xff]
    %v3053 = vld [vmem:[#allocation2 + $0xde0] sm:$0xff]
    %v3054 = vld [vmem:[#allocation2 + $0xde8] sm:$0xff]
    %v3055 = vld [vmem:[#allocation2 + $0xdf0] sm:$0xff]
    %v3056 = vld [vmem:[#allocation2 + $0xdf8] sm:$0xff]
    %v3057 = vld [vmem:[#allocation2 + $0xe00] sm:$0xff]
    %v3058 = vld [vmem:[#allocation2 + $0xe08] sm:$0xff]
    %v3059 = vld [vmem:[#allocation2 + $0xe10] sm:$0xff]
    %v3060 = vld [vmem:[#allocation2 + $0xe18] sm:$0xff]
    %v3061 = vld [vmem:[#allocation2 + $0xe20] sm:$0xff]
    %v3062 = vld [vmem:[#allocation2 + $0xe28] sm:$0xff]
    %v3063 = vld [vmem:[#allocation2 + $0xe30] sm:$0xff]
    %v3064 = vld [vmem:[#allocation2 + $0xe38] sm:$0xff]
    %v3065 = vld [vmem:[#allocation2 + $0xe40] sm:$0xff]
    %v3066 = vld [vmem:[#allocation2 + $0xe48] sm:$0xff]
    %v3067 = vld [vmem:[#allocation2 + $0xe50] sm:$0xff]
    %v3068 = vld [vmem:[#allocation2 + $0xe58] sm:$0xff]
    %v3069 = vld [vmem:[#allocation2 + $0xe60] sm:$0xff]
    %v3070 = vld [vmem:[#allocation2 + $0xe68] sm:$0xff]
    %v3071 = vld [vmem:[#allocation2 + $0xe70] sm:$0xff]
    %v3072 = vld [vmem:[#allocation2 + $0xe78] sm:$0xff]
    %v3073 = vld [vmem:[#allocation2 + $0xe80] sm:$0xff]
    %v3074 = vld [vmem:[#allocation2 + $0xe88] sm:$0xff]
    %v3075 = vld [vmem:[#allocation2 + $0xe90] sm:$0xff]
    %v3076 = vld [vmem:[#allocation2 + $0xe98] sm:$0xff]
    %v3077 = vld [vmem:[#allocation2 + $0xea0] sm:$0xff]
    %v3078 = vld [vmem:[#allocation2 + $0xea8] sm:$0xff]
    %v3079 = vld [vmem:[#allocation2 + $0xeb0] sm:$0xff]
    %v3080 = vld [vmem:[#allocation2 + $0xeb8] sm:$0xff]
    %v3081 = vld [vmem:[#allocation2 + $0xec0] sm:$0xff]
    %v3082 = vld [vmem:[#allocation2 + $0xec8] sm:$0xff]
    %v3083 = vld [vmem:[#allocation2 + $0xed0] sm:$0xff]
    %v3084 = vld [vmem:[#allocation2 + $0xed8] sm:$0xff]
    %v3085 = vld [vmem:[#allocation2 + $0xee0] sm:$0xff]
    %v3086 = vld [vmem:[#allocation2 + $0xee8] sm:$0xff]
    %v3087 = vld [vmem:[#allocation2 + $0xef0] sm:$0xff]
    %v3088 = vld [vmem:[#allocation2 + $0xef8] sm:$0xff]
    %v3089 = vld [vmem:[#allocation2 + $0xf00] sm:$0xff]
    %v3090 = vld [vmem:[#allocation2 + $0xf08] sm:$0xff]
    %v3091 = vld [vmem:[#allocation2 + $0xf10] sm:$0xff]
    %v3092 = vld [vmem:[#allocation2 + $0xf18] sm:$0xff]
    %v3093 = vld [vmem:[#allocation2 + $0xf20] sm:$0xff]
    %v3094 = vld [vmem:[#allocation2 + $0xf28] sm:$0xff]
    %v3095 = vld [vmem:[#allocation2 + $0xf30] sm:$0xff]
    %v3096 = vld [vmem:[#allocation2 + $0xf38] sm:$0xff]
    %v3097 = vld [vmem:[#allocation2 + $0xf40] sm:$0xff]
    %v3098 = vld [vmem:[#allocation2 + $0xf48] sm:$0xff]
    %v3099 = vld [vmem:[#allocation2 + $0xf50] sm:$0xff]
    %v3100 = vld [vmem:[#allocation2 + $0xf58] sm:$0xff]
    %v3101 = vld [vmem:[#allocation2 + $0xf60] sm:$0xff]
    %v3102 = vld [vmem:[#allocation2 + $0xf68] sm:$0xff]
    %v3103 = vld [vmem:[#allocation2 + $0xf70] sm:$0xff]
    %v3104 = vld [vmem:[#allocation2 + $0xf78] sm:$0xff]
    %v3105 = vld [vmem:[#allocation2 + $0xf80] sm:$0xff]
    %v3106 = vld [vmem:[#allocation2 + $0xf88] sm:$0xff]
    %v3107 = vld [vmem:[#allocation2 + $0xf90] sm:$0xff]
    %v3108 = vld [vmem:[#allocation2 + $0xf98] sm:$0xff]
    %v3109 = vld [vmem:[#allocation2 + $0xfa0] sm:$0xff]
    %v3110 = vld [vmem:[#allocation2 + $0xfa8] sm:$0xff]
    %v3111 = vld [vmem:[#allocation2 + $0xfb0] sm:$0xff]
    %v3112 = vld [vmem:[#allocation2 + $0xfb8] sm:$0xff]
    %v3113 = vld [vmem:[#allocation2 + $0xfc0] sm:$0xff]
    %v3114 = vld [vmem:[#allocation2 + $0xfc8] sm:$0xff]
    %v3115 = vld [vmem:[#allocation2 + $0xfd0] sm:$0xff]
    %v3116 = vld [vmem:[#allocation2 + $0xfd8] sm:$0xff]
    %v3117 = vld [vmem:[#allocation2 + $0xfe0] sm:$0xff]
    %v3118 = vld [vmem:[#allocation2 + $0xfe8] sm:$0xff]
    %v3119 = vld [vmem:[#allocation2 + $0xff0] sm:$0xff]
    %v3120 = vld [vmem:[#allocation2 + $0xff8] sm:$0xff]
    %3121 = vmatpush.msra.mxu0 %v2849
    %3122 = vmatpush.msra.mxu0 %v2833
    %3123 = vmatpush.msra.mxu0 %v2817
    %3124 = vmatpush.msra.mxu0 %v2801
    %3125 = vmatpush.msra.mxu0 %v2785
    %3126 = vmatpush.msra.mxu0 %v2769
    %3127 = vmatpush.msra.mxu0 %v2753
    %3128 = vmatpush.msra.mxu0 %v2737
    %3129 = vmatpush.msra.mxu0 %v2721
    %3130 = vmatpush.msra.mxu0 %v2705
    %3131 = vmatpush.msra.mxu0 %v2689
    %3132 = vmatpush.msra.mxu0 %v2673
    %3133 = vmatpush.msra.mxu0 %v2657
    %3134 = vmatpush.msra.mxu0 %v2641
    %3135 = vmatpush.msra.mxu0 %v2625
    %3136 = vmatpush.msra.mxu0 %v2609
    %3137 = vmatmul.f32.gmra.mxu0 %v2603
    %v3138 = vpop.f32.mrf.mxu0
    %v3139 = vadd.f32 0.0, %v3138
    %3140 = vdwg.mxu0
    %3141 = vmatpush.msra.mxu0 %v3105
    %3142 = vmatpush.msra.mxu0 %v3089
    %3143 = vmatpush.msra.mxu0 %v3073
    %3144 = vmatpush.msra.mxu0 %v3057
    %3145 = vmatpush.msra.mxu0 %v3041
    %3146 = vmatpush.msra.mxu0 %v3025
    %3147 = vmatpush.msra.mxu0 %v3009
    %3148 = vmatpush.msra.mxu0 %v2993
    %3149 = vmatpush.msra.mxu0 %v2977
    %3150 = vmatpush.msra.mxu0 %v2961
    %3151 = vmatpush.msra.mxu0 %v2945
    %3152 = vmatpush.msra.mxu0 %v2929
    %3153 = vmatpush.msra.mxu0 %v2913
    %3154 = vmatpush.msra.mxu0 %v2897
    %3155 = vmatpush.msra.mxu0 %v2881
    %3156 = vmatpush.msra.mxu0 %v2865
    %3157 = vmatmul.f32.gmra.mxu0 %v2604
    %v3158 = vpop.f32.mrf.mxu0
    %v3159 = vadd.f32 %v3139, %v3158
    %3160 = vdwg.mxu0
    %3161 = vmatpush.msra.mxu0 %v2850
    %3162 = vmatpush.msra.mxu0 %v2834
    %3163 = vmatpush.msra.mxu0 %v2818
    %3164 = vmatpush.msra.mxu0 %v2802
    %3165 = vmatpush.msra.mxu0 %v2786
    %3166 = vmatpush.msra.mxu0 %v2770
    %3167 = vmatpush.msra.mxu0 %v2754
    %3168 = vmatpush.msra.mxu0 %v2738
    %3169 = vmatpush.msra.mxu0 %v2722
    %3170 = vmatpush.msra.mxu0 %v2706
    %3171 = vmatpush.msra.mxu0 %v2690
    %3172 = vmatpush.msra.mxu0 %v2674
    %3173 = vmatpush.msra.mxu0 %v2658
    %3174 = vmatpush.msra.mxu0 %v2642
    %3175 = vmatpush.msra.mxu0 %v2626
    %3176 = vmatpush.msra.mxu0 %v2610
    %3177 = vmatmul.f32.gmra.mxu0 %v2603
    %v3178 = vpop.f32.mrf.mxu0
    %v3179 = vadd.f32 0.0, %v3178
    %3180 = vdwg.mxu0
    %3181 = vmatpush.msra.mxu0 %v3106
    %3182 = vmatpush.msra.mxu0 %v3090
    %3183 = vmatpush.msra.mxu0 %v3074
    %3184 = vmatpush.msra.mxu0 %v3058
    %3185 = vmatpush.msra.mxu0 %v3042
    %3186 = vmatpush.msra.mxu0 %v3026
    %3187 = vmatpush.msra.mxu0 %v3010
    %3188 = vmatpush.msra.mxu0 %v2994
    %3189 = vmatpush.msra.mxu0 %v2978
    %3190 = vmatpush.msra.mxu0 %v2962
    %3191 = vmatpush.msra.mxu0 %v2946
    %3192 = vmatpush.msra.mxu0 %v2930
    %3193 = vmatpush.msra.mxu0 %v2914
    %3194 = vmatpush.msra.mxu0 %v2898
    %3195 = vmatpush.msra.mxu0 %v2882
    %3196 = vmatpush.msra.mxu0 %v2866
    %3197 = vmatmul.f32.gmra.mxu0 %v2604
    %v3198 = vpop.f32.mrf.mxu0
    %v3199 = vadd.f32 %v3179, %v3198
    %3200 = vdwg.mxu0
    %3201 = vmatpush.msra.mxu0 %v2851
    %3202 = vmatpush.msra.mxu0 %v2835
    %3203 = vmatpush.msra.mxu0 %v2819
    %3204 = vmatpush.msra.mxu0 %v2803
    %3205 = vmatpush.msra.mxu0 %v2787
    %3206 = vmatpush.msra.mxu0 %v2771
    %3207 = vmatpush.msra.mxu0 %v2755
    %3208 = vmatpush.msra.mxu0 %v2739
    %3209 = vmatpush.msra.mxu0 %v2723
    %3210 = vmatpush.msra.mxu0 %v2707
    %3211 = vmatpush.msra.mxu0 %v2691
    %3212 = vmatpush.msra.mxu0 %v2675
    %3213 = vmatpush.msra.mxu0 %v2659
    %3214 = vmatpush.msra.mxu0 %v2643
    %3215 = vmatpush.msra.mxu0 %v2627
    %3216 = vmatpush.msra.mxu0 %v2611
    %3217 = vmatmul.f32.gmra.mxu0 %v2603
    %v3218 = vpop.f32.mrf.mxu0
    %v3219 = vadd.f32 0.0, %v3218
    %3220 = vdwg.mxu0
    %3221 = vmatpush.msra.mxu0 %v3107
    %3222 = vmatpush.msra.mxu0 %v3091
    %3223 = vmatpush.msra.mxu0 %v3075
    %3224 = vmatpush.msra.mxu0 %v3059
    %3225 = vmatpush.msra.mxu0 %v3043
    %3226 = vmatpush.msra.mxu0 %v3027
    %3227 = vmatpush.msra.mxu0 %v3011
    %3228 = vmatpush.msra.mxu0 %v2995
    %3229 = vmatpush.msra.mxu0 %v2979
    %3230 = vmatpush.msra.mxu0 %v2963
    %3231 = vmatpush.msra.mxu0 %v2947
    %3232 = vmatpush.msra.mxu0 %v2931
    %3233 = vmatpush.msra.mxu0 %v2915
    %3234 = vmatpush.msra.mxu0 %v2899
    %3235 = vmatpush.msra.mxu0 %v2883
    %3236 = vmatpush.msra.mxu0 %v2867
    %3237 = vmatmul.f32.gmra.mxu0 %v2604
    %v3238 = vpop.f32.mrf.mxu0
    %v3239 = vadd.f32 %v3219, %v3238
    %3240 = vdwg.mxu0
    %3241 = vmatpush.msra.mxu0 %v2852
    %3242 = vmatpush.msra.mxu0 %v2836
    %3243 = vmatpush.msra.mxu0 %v2820
    %3244 = vmatpush.msra.mxu0 %v2804
    %3245 = vmatpush.msra.mxu0 %v2788
    %3246 = vmatpush.msra.mxu0 %v2772
    %3247 = vmatpush.msra.mxu0 %v2756
    %3248 = vmatpush.msra.mxu0 %v2740
    %3249 = vmatpush.msra.mxu0 %v2724
    %3250 = vmatpush.msra.mxu0 %v2708
    %3251 = vmatpush.msra.mxu0 %v2692
    %3252 = vmatpush.msra.mxu0 %v2676
    %3253 = vmatpush.msra.mxu0 %v2660
    %3254 = vmatpush.msra.mxu0 %v2644
    %3255 = vmatpush.msra.mxu0 %v2628
    %3256 = vmatpush.msra.mxu0 %v2612
    %3257 = vmatmul.f32.gmra.mxu0 %v2603
    %v3258 = vpop.f32.mrf.mxu0
    %v3259 = vadd.f32 0.0, %v3258
    %3260 = vdwg.mxu0
    %3261 = vmatpush.msra.mxu0 %v3108
    %3262 = vmatpush.msra.mxu0 %v3092
    %3263 = vmatpush.msra.mxu0 %v3076
    %3264 = vmatpush.msra.mxu0 %v3060
    %3265 = vmatpush.msra.mxu0 %v3044
    %3266 = vmatpush.msra.mxu0 %v3028
    %3267 = vmatpush.msra.mxu0 %v3012
    %3268 = vmatpush.msra.mxu0 %v2996
    %3269 = vmatpush.msra.mxu0 %v2980
    %3270 = vmatpush.msra.mxu0 %v2964
    %3271 = vmatpush.msra.mxu0 %v2948
    %3272 = vmatpush.msra.mxu0 %v2932
    %3273 = vmatpush.msra.mxu0 %v2916
    %3274 = vmatpush.msra.mxu0 %v2900
    %3275 = vmatpush.msra.mxu0 %v2884
    %3276 = vmatpush.msra.mxu0 %v2868
    %3277 = vmatmul.f32.gmra.mxu0 %v2604
    %v3278 = vpop.f32.mrf.mxu0
    %v3279 = vadd.f32 %v3259, %v3278
    %3280 = vdwg.mxu0
    %3281 = vmatpush.msra.mxu0 %v2853
    %3282 = vmatpush.msra.mxu0 %v2837
    %3283 = vmatpush.msra.mxu0 %v2821
    %3284 = vmatpush.msra.mxu0 %v2805
    %3285 = vmatpush.msra.mxu0 %v2789
    %3286 = vmatpush.msra.mxu0 %v2773
    %3287 = vmatpush.msra.mxu0 %v2757
    %3288 = vmatpush.msra.mxu0 %v2741
    %3289 = vmatpush.msra.mxu0 %v2725
    %3290 = vmatpush.msra.mxu0 %v2709
    %3291 = vmatpush.msra.mxu0 %v2693
    %3292 = vmatpush.msra.mxu0 %v2677
    %3293 = vmatpush.msra.mxu0 %v2661
    %3294 = vmatpush.msra.mxu0 %v2645
    %3295 = vmatpush.msra.mxu0 %v2629
    %3296 = vmatpush.msra.mxu0 %v2613
    %3297 = vmatmul.f32.gmra.mxu0 %v2603
    %v3298 = vpop.f32.mrf.mxu0
    %v3299 = vadd.f32 0.0, %v3298
    %3300 = vdwg.mxu0
    %3301 = vmatpush.msra.mxu0 %v3109
    %3302 = vmatpush.msra.mxu0 %v3093
    %3303 = vmatpush.msra.mxu0 %v3077
    %3304 = vmatpush.msra.mxu0 %v3061
    %3305 = vmatpush.msra.mxu0 %v3045
    %3306 = vmatpush.msra.mxu0 %v3029
    %3307 = vmatpush.msra.mxu0 %v3013
    %3308 = vmatpush.msra.mxu0 %v2997
    %3309 = vmatpush.msra.mxu0 %v2981
    %3310 = vmatpush.msra.mxu0 %v2965
    %3311 = vmatpush.msra.mxu0 %v2949
    %3312 = vmatpush.msra.mxu0 %v2933
    %3313 = vmatpush.msra.mxu0 %v2917
    %3314 = vmatpush.msra.mxu0 %v2901
    %3315 = vmatpush.msra.mxu0 %v2885
    %3316 = vmatpush.msra.mxu0 %v2869
    %3317 = vmatmul.f32.gmra.mxu0 %v2604
    %v3318 = vpop.f32.mrf.mxu0
    %v3319 = vadd.f32 %v3299, %v3318
    %3320 = vdwg.mxu0
    %3321 = vmatpush.msra.mxu0 %v2854
    %3322 = vmatpush.msra.mxu0 %v2838
    %3323 = vmatpush.msra.mxu0 %v2822
    %3324 = vmatpush.msra.mxu0 %v2806
    %3325 = vmatpush.msra.mxu0 %v2790
    %3326 = vmatpush.msra.mxu0 %v2774
    %3327 = vmatpush.msra.mxu0 %v2758
    %3328 = vmatpush.msra.mxu0 %v2742
    %3329 = vmatpush.msra.mxu0 %v2726
    %3330 = vmatpush.msra.mxu0 %v2710
    %3331 = vmatpush.msra.mxu0 %v2694
    %3332 = vmatpush.msra.mxu0 %v2678
    %3333 = vmatpush.msra.mxu0 %v2662
    %3334 = vmatpush.msra.mxu0 %v2646
    %3335 = vmatpush.msra.mxu0 %v2630
    %3336 = vmatpush.msra.mxu0 %v2614
    %3337 = vmatmul.f32.gmra.mxu0 %v2603
    %v3338 = vpop.f32.mrf.mxu0
    %v3339 = vadd.f32 0.0, %v3338
    %3340 = vdwg.mxu0
    %3341 = vmatpush.msra.mxu0 %v3110
    %3342 = vmatpush.msra.mxu0 %v3094
    %3343 = vmatpush.msra.mxu0 %v3078
    %3344 = vmatpush.msra.mxu0 %v3062
    %3345 = vmatpush.msra.mxu0 %v3046
    %3346 = vmatpush.msra.mxu0 %v3030
    %3347 = vmatpush.msra.mxu0 %v3014
    %3348 = vmatpush.msra.mxu0 %v2998
    %3349 = vmatpush.msra.mxu0 %v2982
    %3350 = vmatpush.msra.mxu0 %v2966
    %3351 = vmatpush.msra.mxu0 %v2950
    %3352 = vmatpush.msra.mxu0 %v2934
    %3353 = vmatpush.msra.mxu0 %v2918
    %3354 = vmatpush.msra.mxu0 %v2902
    %3355 = vmatpush.msra.mxu0 %v2886
    %3356 = vmatpush.msra.mxu0 %v2870
    %3357 = vmatmul.f32.gmra.mxu0 %v2604
    %v3358 = vpop.f32.mrf.mxu0
    %v3359 = vadd.f32 %v3339, %v3358
    %3360 = vdwg.mxu0
    %3361 = vmatpush.msra.mxu0 %v2855
    %3362 = vmatpush.msra.mxu0 %v2839
    %3363 = vmatpush.msra.mxu0 %v2823
    %3364 = vmatpush.msra.mxu0 %v2807
    %3365 = vmatpush.msra.mxu0 %v2791
    %3366 = vmatpush.msra.mxu0 %v2775
    %3367 = vmatpush.msra.mxu0 %v2759
    %3368 = vmatpush.msra.mxu0 %v2743
    %3369 = vmatpush.msra.mxu0 %v2727
    %3370 = vmatpush.msra.mxu0 %v2711
    %3371 = vmatpush.msra.mxu0 %v2695
    %3372 = vmatpush.msra.mxu0 %v2679
    %3373 = vmatpush.msra.mxu0 %v2663
    %3374 = vmatpush.msra.mxu0 %v2647
    %3375 = vmatpush.msra.mxu0 %v2631
    %3376 = vmatpush.msra.mxu0 %v2615
    %3377 = vmatmul.f32.gmra.mxu0 %v2603
    %v3378 = vpop.f32.mrf.mxu0
    %v3379 = vadd.f32 0.0, %v3378
    %3380 = vdwg.mxu0
    %3381 = vmatpush.msra.mxu0 %v3111
    %3382 = vmatpush.msra.mxu0 %v3095
    %3383 = vmatpush.msra.mxu0 %v3079
    %3384 = vmatpush.msra.mxu0 %v3063
    %3385 = vmatpush.msra.mxu0 %v3047
    %3386 = vmatpush.msra.mxu0 %v3031
    %3387 = vmatpush.msra.mxu0 %v3015
    %3388 = vmatpush.msra.mxu0 %v2999
    %3389 = vmatpush.msra.mxu0 %v2983
    %3390 = vmatpush.msra.mxu0 %v2967
    %3391 = vmatpush.msra.mxu0 %v2951
    %3392 = vmatpush.msra.mxu0 %v2935
    %3393 = vmatpush.msra.mxu0 %v2919
    %3394 = vmatpush.msra.mxu0 %v2903
    %3395 = vmatpush.msra.mxu0 %v2887
    %3396 = vmatpush.msra.mxu0 %v2871
    %3397 = vmatmul.f32.gmra.mxu0 %v2604
    %v3398 = vpop.f32.mrf.mxu0
    %v3399 = vadd.f32 %v3379, %v3398
    %3400 = vdwg.mxu0
    %3401 = vmatpush.msra.mxu0 %v2856
    %3402 = vmatpush.msra.mxu0 %v2840
    %3403 = vmatpush.msra.mxu0 %v2824
    %3404 = vmatpush.msra.mxu0 %v2808
    %3405 = vmatpush.msra.mxu0 %v2792
    %3406 = vmatpush.msra.mxu0 %v2776
    %3407 = vmatpush.msra.mxu0 %v2760
    %3408 = vmatpush.msra.mxu0 %v2744
    %3409 = vmatpush.msra.mxu0 %v2728
    %3410 = vmatpush.msra.mxu0 %v2712
    %3411 = vmatpush.msra.mxu0 %v2696
    %3412 = vmatpush.msra.mxu0 %v2680
    %3413 = vmatpush.msra.mxu0 %v2664
    %3414 = vmatpush.msra.mxu0 %v2648
    %3415 = vmatpush.msra.mxu0 %v2632
    %3416 = vmatpush.msra.mxu0 %v2616
    %3417 = vmatmul.f32.gmra.mxu0 %v2603
    %v3418 = vpop.f32.mrf.mxu0
    %v3419 = vadd.f32 0.0, %v3418
    %3420 = vdwg.mxu0
    %3421 = vmatpush.msra.mxu0 %v3112
    %3422 = vmatpush.msra.mxu0 %v3096
    %3423 = vmatpush.msra.mxu0 %v3080
    %3424 = vmatpush.msra.mxu0 %v3064
    %3425 = vmatpush.msra.mxu0 %v3048
    %3426 = vmatpush.msra.mxu0 %v3032
    %3427 = vmatpush.msra.mxu0 %v3016
    %3428 = vmatpush.msra.mxu0 %v3000
    %3429 = vmatpush.msra.mxu0 %v2984
    %3430 = vmatpush.msra.mxu0 %v2968
    %3431 = vmatpush.msra.mxu0 %v2952
    %3432 = vmatpush.msra.mxu0 %v2936
    %3433 = vmatpush.msra.mxu0 %v2920
    %3434 = vmatpush.msra.mxu0 %v2904
    %3435 = vmatpush.msra.mxu0 %v2888
    %3436 = vmatpush.msra.mxu0 %v2872
    %3437 = vmatmul.f32.gmra.mxu0 %v2604
    %v3438 = vpop.f32.mrf.mxu0
    %v3439 = vadd.f32 %v3419, %v3438
    %3440 = vdwg.mxu0
    %3441 = vmatpush.msra.mxu0 %v2857
    %3442 = vmatpush.msra.mxu0 %v2841
    %3443 = vmatpush.msra.mxu0 %v2825
    %3444 = vmatpush.msra.mxu0 %v2809
    %3445 = vmatpush.msra.mxu0 %v2793
    %3446 = vmatpush.msra.mxu0 %v2777
    %3447 = vmatpush.msra.mxu0 %v2761
    %3448 = vmatpush.msra.mxu0 %v2745
    %3449 = vmatpush.msra.mxu0 %v2729
    %3450 = vmatpush.msra.mxu0 %v2713
    %3451 = vmatpush.msra.mxu0 %v2697
    %3452 = vmatpush.msra.mxu0 %v2681
    %3453 = vmatpush.msra.mxu0 %v2665
    %3454 = vmatpush.msra.mxu0 %v2649
    %3455 = vmatpush.msra.mxu0 %v2633
    %3456 = vmatpush.msra.mxu0 %v2617
    %3457 = vmatmul.f32.gmra.mxu0 %v2603
    %v3458 = vpop.f32.mrf.mxu0
    %v3459 = vadd.f32 0.0, %v3458
    %3460 = vdwg.mxu0
    %3461 = vmatpush.msra.mxu0 %v3113
    %3462 = vmatpush.msra.mxu0 %v3097
    %3463 = vmatpush.msra.mxu0 %v3081
    %3464 = vmatpush.msra.mxu0 %v3065
    %3465 = vmatpush.msra.mxu0 %v3049
    %3466 = vmatpush.msra.mxu0 %v3033
    %3467 = vmatpush.msra.mxu0 %v3017
    %3468 = vmatpush.msra.mxu0 %v3001
    %3469 = vmatpush.msra.mxu0 %v2985
    %3470 = vmatpush.msra.mxu0 %v2969
    %3471 = vmatpush.msra.mxu0 %v2953
    %3472 = vmatpush.msra.mxu0 %v2937
    %3473 = vmatpush.msra.mxu0 %v2921
    %3474 = vmatpush.msra.mxu0 %v2905
    %3475 = vmatpush.msra.mxu0 %v2889
    %3476 = vmatpush.msra.mxu0 %v2873
    %3477 = vmatmul.f32.gmra.mxu0 %v2604
    %v3478 = vpop.f32.mrf.mxu0
    %v3479 = vadd.f32 %v3459, %v3478
    %3480 = vdwg.mxu0
    %3481 = vmatpush.msra.mxu0 %v2858
    %3482 = vmatpush.msra.mxu0 %v2842
    %3483 = vmatpush.msra.mxu0 %v2826
    %3484 = vmatpush.msra.mxu0 %v2810
    %3485 = vmatpush.msra.mxu0 %v2794
    %3486 = vmatpush.msra.mxu0 %v2778
    %3487 = vmatpush.msra.mxu0 %v2762
    %3488 = vmatpush.msra.mxu0 %v2746
    %3489 = vmatpush.msra.mxu0 %v2730
    %3490 = vmatpush.msra.mxu0 %v2714
    %3491 = vmatpush.msra.mxu0 %v2698
    %3492 = vmatpush.msra.mxu0 %v2682
    %3493 = vmatpush.msra.mxu0 %v2666
    %3494 = vmatpush.msra.mxu0 %v2650
    %3495 = vmatpush.msra.mxu0 %v2634
    %3496 = vmatpush.msra.mxu0 %v2618
    %3497 = vmatmul.f32.gmra.mxu0 %v2603
    %v3498 = vpop.f32.mrf.mxu0
    %v3499 = vadd.f32 0.0, %v3498
    %3500 = vdwg.mxu0
    %3501 = vmatpush.msra.mxu0 %v3114
    %3502 = vmatpush.msra.mxu0 %v3098
    %3503 = vmatpush.msra.mxu0 %v3082
    %3504 = vmatpush.msra.mxu0 %v3066
    %3505 = vmatpush.msra.mxu0 %v3050
    %3506 = vmatpush.msra.mxu0 %v3034
    %3507 = vmatpush.msra.mxu0 %v3018
    %3508 = vmatpush.msra.mxu0 %v3002
    %3509 = vmatpush.msra.mxu0 %v2986
    %3510 = vmatpush.msra.mxu0 %v2970
    %3511 = vmatpush.msra.mxu0 %v2954
    %3512 = vmatpush.msra.mxu0 %v2938
    %3513 = vmatpush.msra.mxu0 %v2922
    %3514 = vmatpush.msra.mxu0 %v2906
    %3515 = vmatpush.msra.mxu0 %v2890
    %3516 = vmatpush.msra.mxu0 %v2874
    %3517 = vmatmul.f32.gmra.mxu0 %v2604
    %v3518 = vpop.f32.mrf.mxu0
    %v3519 = vadd.f32 %v3499, %v3518
    %3520 = vdwg.mxu0
    %3521 = vmatpush.msra.mxu0 %v2859
    %3522 = vmatpush.msra.mxu0 %v2843
    %3523 = vmatpush.msra.mxu0 %v2827
    %3524 = vmatpush.msra.mxu0 %v2811
    %3525 = vmatpush.msra.mxu0 %v2795
    %3526 = vmatpush.msra.mxu0 %v2779
    %3527 = vmatpush.msra.mxu0 %v2763
    %3528 = vmatpush.msra.mxu0 %v2747
    %3529 = vmatpush.msra.mxu0 %v2731
    %3530 = vmatpush.msra.mxu0 %v2715
    %3531 = vmatpush.msra.mxu0 %v2699
    %3532 = vmatpush.msra.mxu0 %v2683
    %3533 = vmatpush.msra.mxu0 %v2667
    %3534 = vmatpush.msra.mxu0 %v2651
    %3535 = vmatpush.msra.mxu0 %v2635
    %3536 = vmatpush.msra.mxu0 %v2619
    %3537 = vmatmul.f32.gmra.mxu0 %v2603
    %v3538 = vpop.f32.mrf.mxu0
    %v3539 = vadd.f32 0.0, %v3538
    %3540 = vdwg.mxu0
    %3541 = vmatpush.msra.mxu0 %v3115
    %3542 = vmatpush.msra.mxu0 %v3099
    %3543 = vmatpush.msra.mxu0 %v3083
    %3544 = vmatpush.msra.mxu0 %v3067
    %3545 = vmatpush.msra.mxu0 %v3051
    %3546 = vmatpush.msra.mxu0 %v3035
    %3547 = vmatpush.msra.mxu0 %v3019
    %3548 = vmatpush.msra.mxu0 %v3003
    %3549 = vmatpush.msra.mxu0 %v2987
    %3550 = vmatpush.msra.mxu0 %v2971
    %3551 = vmatpush.msra.mxu0 %v2955
    %3552 = vmatpush.msra.mxu0 %v2939
    %3553 = vmatpush.msra.mxu0 %v2923
    %3554 = vmatpush.msra.mxu0 %v2907
    %3555 = vmatpush.msra.mxu0 %v2891
    %3556 = vmatpush.msra.mxu0 %v2875
    %3557 = vmatmul.f32.gmra.mxu0 %v2604
    %v3558 = vpop.f32.mrf.mxu0
    %v3559 = vadd.f32 %v3539, %v3558
    %3560 = vdwg.mxu0
    %3561 = vmatpush.msra.mxu0 %v2860
    %3562 = vmatpush.msra.mxu0 %v2844
    %3563 = vmatpush.msra.mxu0 %v2828
    %3564 = vmatpush.msra.mxu0 %v2812
    %3565 = vmatpush.msra.mxu0 %v2796
    %3566 = vmatpush.msra.mxu0 %v2780
    %3567 = vmatpush.msra.mxu0 %v2764
    %3568 = vmatpush.msra.mxu0 %v2748
    %3569 = vmatpush.msra.mxu0 %v2732
    %3570 = vmatpush.msra.mxu0 %v2716
    %3571 = vmatpush.msra.mxu0 %v2700
    %3572 = vmatpush.msra.mxu0 %v2684
    %3573 = vmatpush.msra.mxu0 %v2668
    %3574 = vmatpush.msra.mxu0 %v2652
    %3575 = vmatpush.msra.mxu0 %v2636
    %3576 = vmatpush.msra.mxu0 %v2620
    %3577 = vmatmul.f32.gmra.mxu0 %v2603
    %v3578 = vpop.f32.mrf.mxu0
    %v3579 = vadd.f32 0.0, %v3578
    %3580 = vdwg.mxu0
    %3581 = vmatpush.msra.mxu0 %v3116
    %3582 = vmatpush.msra.mxu0 %v3100
    %3583 = vmatpush.msra.mxu0 %v3084
    %3584 = vmatpush.msra.mxu0 %v3068
    %3585 = vmatpush.msra.mxu0 %v3052
    %3586 = vmatpush.msra.mxu0 %v3036
    %3587 = vmatpush.msra.mxu0 %v3020
    %3588 = vmatpush.msra.mxu0 %v3004
    %3589 = vmatpush.msra.mxu0 %v2988
    %3590 = vmatpush.msra.mxu0 %v2972
    %3591 = vmatpush.msra.mxu0 %v2956
    %3592 = vmatpush.msra.mxu0 %v2940
    %3593 = vmatpush.msra.mxu0 %v2924
    %3594 = vmatpush.msra.mxu0 %v2908
    %3595 = vmatpush.msra.mxu0 %v2892
    %3596 = vmatpush.msra.mxu0 %v2876
    %3597 = vmatmul.f32.gmra.mxu0 %v2604
    %v3598 = vpop.f32.mrf.mxu0
    %v3599 = vadd.f32 %v3579, %v3598
    %3600 = vdwg.mxu0
    %3601 = vmatpush.msra.mxu0 %v2861
    %3602 = vmatpush.msra.mxu0 %v2845
    %3603 = vmatpush.msra.mxu0 %v2829
    %3604 = vmatpush.msra.mxu0 %v2813
    %3605 = vmatpush.msra.mxu0 %v2797
    %3606 = vmatpush.msra.mxu0 %v2781
    %3607 = vmatpush.msra.mxu0 %v2765
    %3608 = vmatpush.msra.mxu0 %v2749
    %3609 = vmatpush.msra.mxu0 %v2733
    %3610 = vmatpush.msra.mxu0 %v2717
    %3611 = vmatpush.msra.mxu0 %v2701
    %3612 = vmatpush.msra.mxu0 %v2685
    %3613 = vmatpush.msra.mxu0 %v2669
    %3614 = vmatpush.msra.mxu0 %v2653
    %3615 = vmatpush.msra.mxu0 %v2637
    %3616 = vmatpush.msra.mxu0 %v2621
    %3617 = vmatmul.f32.gmra.mxu0 %v2603
    %v3618 = vpop.f32.mrf.mxu0
    %v3619 = vadd.f32 0.0, %v3618
    %3620 = vdwg.mxu0
    %3621 = vmatpush.msra.mxu0 %v3117
    %3622 = vmatpush.msra.mxu0 %v3101
    %3623 = vmatpush.msra.mxu0 %v3085
    %3624 = vmatpush.msra.mxu0 %v3069
    %3625 = vmatpush.msra.mxu0 %v3053
    %3626 = vmatpush.msra.mxu0 %v3037
    %3627 = vmatpush.msra.mxu0 %v3021
    %3628 = vmatpush.msra.mxu0 %v3005
    %3629 = vmatpush.msra.mxu0 %v2989
    %3630 = vmatpush.msra.mxu0 %v2973
    %3631 = vmatpush.msra.mxu0 %v2957
    %3632 = vmatpush.msra.mxu0 %v2941
    %3633 = vmatpush.msra.mxu0 %v2925
    %3634 = vmatpush.msra.mxu0 %v2909
    %3635 = vmatpush.msra.mxu0 %v2893
    %3636 = vmatpush.msra.mxu0 %v2877
    %3637 = vmatmul.f32.gmra.mxu0 %v2604
    %v3638 = vpop.f32.mrf.mxu0
    %v3639 = vadd.f32 %v3619, %v3638
    %3640 = vdwg.mxu0
    %3641 = vmatpush.msra.mxu0 %v2862
    %3642 = vmatpush.msra.mxu0 %v2846
    %3643 = vmatpush.msra.mxu0 %v2830
    %3644 = vmatpush.msra.mxu0 %v2814
    %3645 = vmatpush.msra.mxu0 %v2798
    %3646 = vmatpush.msra.mxu0 %v2782
    %3647 = vmatpush.msra.mxu0 %v2766
    %3648 = vmatpush.msra.mxu0 %v2750
    %3649 = vmatpush.msra.mxu0 %v2734
    %3650 = vmatpush.msra.mxu0 %v2718
    %3651 = vmatpush.msra.mxu0 %v2702
    %3652 = vmatpush.msra.mxu0 %v2686
    %3653 = vmatpush.msra.mxu0 %v2670
    %3654 = vmatpush.msra.mxu0 %v2654
    %3655 = vmatpush.msra.mxu0 %v2638
    %3656 = vmatpush.msra.mxu0 %v2622
    %3657 = vmatmul.f32.gmra.mxu0 %v2603
    %v3658 = vpop.f32.mrf.mxu0
    %v3659 = vadd.f32 0.0, %v3658
    %3660 = vdwg.mxu0
    %3661 = vmatpush.msra.mxu0 %v3118
    %3662 = vmatpush.msra.mxu0 %v3102
    %3663 = vmatpush.msra.mxu0 %v3086
    %3664 = vmatpush.msra.mxu0 %v3070
    %3665 = vmatpush.msra.mxu0 %v3054
    %3666 = vmatpush.msra.mxu0 %v3038
    %3667 = vmatpush.msra.mxu0 %v3022
    %3668 = vmatpush.msra.mxu0 %v3006
    %3669 = vmatpush.msra.mxu0 %v2990
    %3670 = vmatpush.msra.mxu0 %v2974
    %3671 = vmatpush.msra.mxu0 %v2958
    %3672 = vmatpush.msra.mxu0 %v2942
    %3673 = vmatpush.msra.mxu0 %v2926
    %3674 = vmatpush.msra.mxu0 %v2910
    %3675 = vmatpush.msra.mxu0 %v2894
    %3676 = vmatpush.msra.mxu0 %v2878
    %3677 = vmatmul.f32.gmra.mxu0 %v2604
    %v3678 = vpop.f32.mrf.mxu0
    %v3679 = vadd.f32 %v3659, %v3678
    %3680 = vdwg.mxu0
    %3681 = vmatpush.msra.mxu0 %v2863
    %3682 = vmatpush.msra.mxu0 %v2847
    %3683 = vmatpush.msra.mxu0 %v2831
    %3684 = vmatpush.msra.mxu0 %v2815
    %3685 = vmatpush.msra.mxu0 %v2799
    %3686 = vmatpush.msra.mxu0 %v2783
    %3687 = vmatpush.msra.mxu0 %v2767
    %3688 = vmatpush.msra.mxu0 %v2751
    %3689 = vmatpush.msra.mxu0 %v2735
    %3690 = vmatpush.msra.mxu0 %v2719
    %3691 = vmatpush.msra.mxu0 %v2703
    %3692 = vmatpush.msra.mxu0 %v2687
    %3693 = vmatpush.msra.mxu0 %v2671
    %3694 = vmatpush.msra.mxu0 %v2655
    %3695 = vmatpush.msra.mxu0 %v2639
    %3696 = vmatpush.msra.mxu0 %v2623
    %3697 = vmatmul.f32.gmra.mxu0 %v2603
    %v3698 = vpop.f32.mrf.mxu0
    %v3699 = vadd.f32 0.0, %v3698
    %3700 = vdwg.mxu0
    %3701 = vmatpush.msra.mxu0 %v3119
    %3702 = vmatpush.msra.mxu0 %v3103
    %3703 = vmatpush.msra.mxu0 %v3087
    %3704 = vmatpush.msra.mxu0 %v3071
    %3705 = vmatpush.msra.mxu0 %v3055
    %3706 = vmatpush.msra.mxu0 %v3039
    %3707 = vmatpush.msra.mxu0 %v3023
    %3708 = vmatpush.msra.mxu0 %v3007
    %3709 = vmatpush.msra.mxu0 %v2991
    %3710 = vmatpush.msra.mxu0 %v2975
    %3711 = vmatpush.msra.mxu0 %v2959
    %3712 = vmatpush.msra.mxu0 %v2943
    %3713 = vmatpush.msra.mxu0 %v2927
    %3714 = vmatpush.msra.mxu0 %v2911
    %3715 = vmatpush.msra.mxu0 %v2895
    %3716 = vmatpush.msra.mxu0 %v2879
    %3717 = vmatmul.f32.gmra.mxu0 %v2604
    %v3718 = vpop.f32.mrf.mxu0
    %v3719 = vadd.f32 %v3699, %v3718
    %3720 = vdwg.mxu0
    %3721 = vmatpush.msra.mxu0 %v2864
    %3722 = vmatpush.msra.mxu0 %v2848
    %3723 = vmatpush.msra.mxu0 %v2832
    %3724 = vmatpush.msra.mxu0 %v2816
    %3725 = vmatpush.msra.mxu0 %v2800
    %3726 = vmatpush.msra.mxu0 %v2784
    %3727 = vmatpush.msra.mxu0 %v2768
    %3728 = vmatpush.msra.mxu0 %v2752
    %3729 = vmatpush.msra.mxu0 %v2736
    %3730 = vmatpush.msra.mxu0 %v2720
    %3731 = vmatpush.msra.mxu0 %v2704
    %3732 = vmatpush.msra.mxu0 %v2688
    %3733 = vmatpush.msra.mxu0 %v2672
    %3734 = vmatpush.msra.mxu0 %v2656
    %3735 = vmatpush.msra.mxu0 %v2640
    %3736 = vmatpush.msra.mxu0 %v2624
    %3737 = vmatmul.f32.gmra.mxu0 %v2603
    %v3738 = vpop.f32.mrf.mxu0
    %v3739 = vadd.f32 0.0, %v3738
    %3740 = vdwg.mxu0
    %3741 = vmatpush.msra.mxu0 %v3120
    %3742 = vmatpush.msra.mxu0 %v3104
    %3743 = vmatpush.msra.mxu0 %v3088
    %3744 = vmatpush.msra.mxu0 %v3072
    %3745 = vmatpush.msra.mxu0 %v3056
    %3746 = vmatpush.msra.mxu0 %v3040
    %3747 = vmatpush.msra.mxu0 %v3024
    %3748 = vmatpush.msra.mxu0 %v3008
    %3749 = vmatpush.msra.mxu0 %v2992
    %3750 = vmatpush.msra.mxu0 %v2976
    %3751 = vmatpush.msra.mxu0 %v2960
    %3752 = vmatpush.msra.mxu0 %v2944
    %3753 = vmatpush.msra.mxu0 %v2928
    %3754 = vmatpush.msra.mxu0 %v2912
    %3755 = vmatpush.msra.mxu0 %v2896
    %3756 = vmatpush.msra.mxu0 %v2880
    %3757 = vmatmul.f32.gmra.mxu0 %v2604
    %v3758 = vpop.f32.mrf.mxu0
    %v3759 = vadd.f32 %v3739, %v3758
    %3760 = vdwg.mxu0
    %v3762 = vperm.slane %v2257, 0
    %v3763 = vperm.slane %v2257, 1
    %v3764 = vperm.slane %v2257, 2
    %v3765 = vperm.slane %v2257, 3
    %v3766 = vperm.slane %v2257, 4
    %v3767 = vperm.slane %v2257, 5
    %v3768 = vperm.slane %v2257, 6
    %v3769 = vperm.slane %v2257, 7
    %v3778 = vadd.f32 %v3479, %v3762
    %v3779 = vadd.f32 %v3519, %v3763
    %v3780 = vadd.f32 %v3559, %v3764
    %v3781 = vadd.f32 %v3599, %v3765
    %v3782 = vadd.f32 %v3639, %v3766
    %v3783 = vadd.f32 %v3679, %v3767
    %v3784 = vadd.f32 %v3719, %v3768
    %v3785 = vadd.f32 %v3759, %v3769
    %v3786 = vxor.u32 %v3778, 2147483648
    %v3787 = vxor.u32 %v3779, 2147483648
    %v3788 = vmul.f32 %v3786, 1.442695
    %v3789 = vpow.pop %v3788
    %v3790 = vmul.f32 %v3787, 1.442695
    %v3791 = vpow.pop %v3790
    %v3792 = vadd.f32 %v3789, 1.0
    %v3793 = vadd.f32 %v3791, 1.0
    %v3794 = vrcp.pop %v3792
    %v3795 = vmul.f32 %v3792, %v3794
    %v3796 = vsub.f32 1.0, %v3795
    %v3797 = vmul.f32 %v3794, %v3796
    %v3798 = vadd.f32 %v3794, %v3797
    %vm3799 = vweird.f32 %v3792
    %vm3800 = vweird.f32 %v3794
    %vm3801 = vmor %vm3799, %vm3800
    %v3802 = vsel %vm3801, %v3794, %v3798
    %v3803 = vand.u32 2147483647, %v3792
    %vm3804 = vcmp.eq.f32.partialorder %v3803, 8.507059e+37
    %v3805 = vand.u32 %v3792, 2147483648
    %v3806 = vor.u32 1.1754944e-38, %v3805
    %v3807 = vsel %vm3804, %v3806, %v3802
    %v3808 = vmul.f32 1.0, %v3807
    %v3809 = vrcp.pop %v3793
    %v3810 = vmul.f32 %v3793, %v3809
    %v3811 = vsub.f32 1.0, %v3810
    %v3812 = vmul.f32 %v3809, %v3811
    %v3813 = vadd.f32 %v3809, %v3812
    %vm3814 = vweird.f32 %v3793
    %vm3815 = vweird.f32 %v3809
    %vm3816 = vmor %vm3814, %vm3815
    %v3817 = vsel %vm3816, %v3809, %v3813
    %v3818 = vand.u32 2147483647, %v3793
    %vm3819 = vcmp.eq.f32.partialorder %v3818, 8.507059e+37
    %v3820 = vand.u32 %v3793, 2147483648
    %v3821 = vor.u32 1.1754944e-38, %v3820
    %v3822 = vsel %vm3819, %v3821, %v3817
    %v3823 = vmul.f32 1.0, %v3822
    %v3824 = vxor.u32 %v3780, 2147483648
    %v3825 = vxor.u32 %v3781, 2147483648
    %v3826 = vmul.f32 %v3824, 1.442695
    %v3827 = vpow.pop %v3826
    %v3828 = vmul.f32 %v3825, 1.442695
    %v3829 = vpow.pop %v3828
    %v3830 = vadd.f32 %v3827, 1.0
    %v3831 = vadd.f32 %v3829, 1.0
    %v3832 = vrcp.pop %v3830
    %v3833 = vmul.f32 %v3830, %v3832
    %v3834 = vsub.f32 1.0, %v3833
    %v3835 = vmul.f32 %v3832, %v3834
    %v3836 = vadd.f32 %v3832, %v3835
    %vm3837 = vweird.f32 %v3830
    %vm3838 = vweird.f32 %v3832
    %vm3839 = vmor %vm3837, %vm3838
    %v3840 = vsel %vm3839, %v3832, %v3836
    %v3841 = vand.u32 2147483647, %v3830
    %vm3842 = vcmp.eq.f32.partialorder %v3841, 8.507059e+37
    %v3843 = vand.u32 %v3830, 2147483648
    %v3844 = vor.u32 1.1754944e-38, %v3843
    %v3845 = vsel %vm3842, %v3844, %v3840
    %v3846 = vmul.f32 1.0, %v3845
    %v3847 = vrcp.pop %v3831
    %v3848 = vmul.f32 %v3831, %v3847
    %v3849 = vsub.f32 1.0, %v3848
    %v3850 = vmul.f32 %v3847, %v3849
    %v3851 = vadd.f32 %v3847, %v3850
    %vm3852 = vweird.f32 %v3831
    %vm3853 = vweird.f32 %v3847
    %vm3854 = vmor %vm3852, %vm3853
    %v3855 = vsel %vm3854, %v3847, %v3851
    %v3856 = vand.u32 2147483647, %v3831
    %vm3857 = vcmp.eq.f32.partialorder %v3856, 8.507059e+37
    %v3858 = vand.u32 %v3831, 2147483648
    %v3859 = vor.u32 1.1754944e-38, %v3858
    %v3860 = vsel %vm3857, %v3859, %v3855
    %v3861 = vmul.f32 1.0, %v3860
    %v3862 = vtanh.pop %v3782
    %v3863 = vtanh.pop %v3783
    %v3864 = vxor.u32 %v3784, 2147483648
    %v3865 = vxor.u32 %v3785, 2147483648
    %v3866 = vmul.f32 %v3864, 1.442695
    %v3867 = vpow.pop %v3866
    %v3868 = vmul.f32 %v3865, 1.442695
    %v3869 = vpow.pop %v3868
    %v3870 = vadd.f32 %v3867, 1.0
    %v3871 = vadd.f32 %v3869, 1.0
    %v3872 = vrcp.pop %v3870
    %v3873 = vmul.f32 %v3870, %v3872
    %v3874 = vsub.f32 1.0, %v3873
    %v3875 = vmul.f32 %v3872, %v3874
    %v3876 = vadd.f32 %v3872, %v3875
    %vm3877 = vweird.f32 %v3870
    %vm3878 = vweird.f32 %v3872
    %vm3879 = vmor %vm3877, %vm3878
    %v3880 = vsel %vm3879, %v3872, %v3876
    %v3881 = vand.u32 2147483647, %v3870
    %vm3882 = vcmp.eq.f32.partialorder %v3881, 8.507059e+37
    %v3883 = vand.u32 %v3870, 2147483648
    %v3884 = vor.u32 1.1754944e-38, %v3883
    %v3885 = vsel %vm3882, %v3884, %v3880
    %v3886 = vmul.f32 1.0, %v3885
    %v3887 = vrcp.pop %v3871
    %v3888 = vmul.f32 %v3871, %v3887
    %v3889 = vsub.f32 1.0, %v3888
    %v3890 = vmul.f32 %v3887, %v3889
    %v3891 = vadd.f32 %v3887, %v3890
    %vm3892 = vweird.f32 %v3871
    %vm3893 = vweird.f32 %v3887
    %vm3894 = vmor %vm3892, %vm3893
    %v3895 = vsel %vm3894, %v3887, %v3891
    %v3896 = vand.u32 2147483647, %v3871
    %vm3897 = vcmp.eq.f32.partialorder %v3896, 8.507059e+37
    %v3898 = vand.u32 %v3871, 2147483648
    %v3899 = vor.u32 1.1754944e-38, %v3898
    %v3900 = vsel %vm3897, %v3899, %v3895
    %v3901 = vmul.f32 1.0, %v3900
    %v3902 = vmul.f32 %v3846, 0.0
    %v3903 = vmul.f32 %v3861, 0.0
    %v3904 = vmul.f32 %v3808, %v3862
    %v3905 = vmul.f32 %v3823, %v3863
    %v3906 = vadd.f32 %v3902, %v3904
    %v3907 = vadd.f32 %v3903, %v3905
    %v3908 = vtanh.pop %v3906
    %v3909 = vtanh.pop %v3907
    %v3910 = vmul.f32 %v3886, %v3908
    %v3911 = vmul.f32 %v3901, %v3909
    %v3920 = vrot.slane %v2337, 1
    %v3921 = vrot.slane %v2357, 1
    %v3922 = vrot.slane %v2377, 1
    %v3923 = vrot.slane %v2397, 1
    %v3924 = vrot.slane %v2417, 1
    %v3925 = vrot.slane %v2437, 1
    %v3926 = vrot.slane %v2457, 1
    %v3927 = vrot.slane %v2477, 1
    %v3936 = vadd.f32 %v3159, %v3920
    %v3937 = vadd.f32 %v3199, %v3921
    %v3938 = vadd.f32 %v3239, %v3922
    %v3939 = vadd.f32 %v3279, %v3923
    %v3940 = vadd.f32 %v3319, %v3924
    %v3941 = vadd.f32 %v3359, %v3925
    %v3942 = vadd.f32 %v3399, %v3926
    %v3943 = vadd.f32 %v3439, %v3927
    %v3944 = vxor.u32 %v3936, 2147483648
    %v3945 = vxor.u32 %v3937, 2147483648
    %v3946 = vmul.f32 %v3944, 1.442695
    %v3947 = vpow.pop %v3946
    %v3948 = vmul.f32 %v3945, 1.442695
    %v3949 = vpow.pop %v3948
    %v3950 = vadd.f32 %v3947, 1.0
    %v3951 = vadd.f32 %v3949, 1.0
    %v3952 = vrcp.pop %v3950
    %v3953 = vmul.f32 %v3950, %v3952
    %v3954 = vsub.f32 1.0, %v3953
    %v3955 = vmul.f32 %v3952, %v3954
    %v3956 = vadd.f32 %v3952, %v3955
    %vm3957 = vweird.f32 %v3950
    %vm3958 = vweird.f32 %v3952
    %vm3959 = vmor %vm3957, %vm3958
    %v3960 = vsel %vm3959, %v3952, %v3956
    %v3961 = vand.u32 2147483647, %v3950
    %vm3962 = vcmp.eq.f32.partialorder %v3961, 8.507059e+37
    %v3963 = vand.u32 %v3950, 2147483648
    %v3964 = vor.u32 1.1754944e-38, %v3963
    %v3965 = vsel %vm3962, %v3964, %v3960
    %v3966 = vmul.f32 1.0, %v3965
    %v3967 = vrcp.pop %v3951
    %v3968 = vmul.f32 %v3951, %v3967
    %v3969 = vsub.f32 1.0, %v3968
    %v3970 = vmul.f32 %v3967, %v3969
    %v3971 = vadd.f32 %v3967, %v3970
    %vm3972 = vweird.f32 %v3951
    %vm3973 = vweird.f32 %v3967
    %vm3974 = vmor %vm3972, %vm3973
    %v3975 = vsel %vm3974, %v3967, %v3971
    %v3976 = vand.u32 2147483647, %v3951
    %vm3977 = vcmp.eq.f32.partialorder %v3976, 8.507059e+37
    %v3978 = vand.u32 %v3951, 2147483648
    %v3979 = vor.u32 1.1754944e-38, %v3978
    %v3980 = vsel %vm3977, %v3979, %v3975
    %v3981 = vmul.f32 1.0, %v3980
    %v3982 = vxor.u32 %v3938, 2147483648
    %v3983 = vxor.u32 %v3939, 2147483648
    %v3984 = vmul.f32 %v3982, 1.442695
    %v3985 = vpow.pop %v3984
    %v3986 = vmul.f32 %v3983, 1.442695
    %v3987 = vpow.pop %v3986
    %v3988 = vadd.f32 %v3985, 1.0
    %v3989 = vadd.f32 %v3987, 1.0
    %v3990 = vrcp.pop %v3988
    %v3991 = vmul.f32 %v3988, %v3990
    %v3992 = vsub.f32 1.0, %v3991
    %v3993 = vmul.f32 %v3990, %v3992
    %v3994 = vadd.f32 %v3990, %v3993
    %vm3995 = vweird.f32 %v3988
    %vm3996 = vweird.f32 %v3990
    %vm3997 = vmor %vm3995, %vm3996
    %v3998 = vsel %vm3997, %v3990, %v3994
    %v3999 = vand.u32 2147483647, %v3988
    %vm4000 = vcmp.eq.f32.partialorder %v3999, 8.507059e+37
    %v4001 = vand.u32 %v3988, 2147483648
    %v4002 = vor.u32 1.1754944e-38, %v4001
    %v4003 = vsel %vm4000, %v4002, %v3998
    %v4004 = vmul.f32 1.0, %v4003
    %v4005 = vrcp.pop %v3989
    %v4006 = vmul.f32 %v3989, %v4005
    %v4007 = vsub.f32 1.0, %v4006
    %v4008 = vmul.f32 %v4005, %v4007
    %v4009 = vadd.f32 %v4005, %v4008
    %vm4010 = vweird.f32 %v3989
    %vm4011 = vweird.f32 %v4005
    %vm4012 = vmor %vm4010, %vm4011
    %v4013 = vsel %vm4012, %v4005, %v4009
    %v4014 = vand.u32 2147483647, %v3989
    %vm4015 = vcmp.eq.f32.partialorder %v4014, 8.507059e+37
    %v4016 = vand.u32 %v3989, 2147483648
    %v4017 = vor.u32 1.1754944e-38, %v4016
    %v4018 = vsel %vm4015, %v4017, %v4013
    %v4019 = vmul.f32 1.0, %v4018
    %v4020 = vtanh.pop %v3940
    %v4021 = vtanh.pop %v3941
    %v4022 = vxor.u32 %v3942, 2147483648
    %v4023 = vxor.u32 %v3943, 2147483648
    %v4024 = vmul.f32 %v4022, 1.442695
    %v4025 = vpow.pop %v4024
    %v4026 = vmul.f32 %v4023, 1.442695
    %v4027 = vpow.pop %v4026
    %v4028 = vadd.f32 %v4025, 1.0
    %v4029 = vadd.f32 %v4027, 1.0
    %v4030 = vrcp.pop %v4028
    %v4031 = vmul.f32 %v4028, %v4030
    %v4032 = vsub.f32 1.0, %v4031
    %v4033 = vmul.f32 %v4030, %v4032
    %v4034 = vadd.f32 %v4030, %v4033
    %vm4035 = vweird.f32 %v4028
    %vm4036 = vweird.f32 %v4030
    %vm4037 = vmor %vm4035, %vm4036
    %v4038 = vsel %vm4037, %v4030, %v4034
    %v4039 = vand.u32 2147483647, %v4028
    %vm4040 = vcmp.eq.f32.partialorder %v4039, 8.507059e+37
    %v4041 = vand.u32 %v4028, 2147483648
    %v4042 = vor.u32 1.1754944e-38, %v4041
    %v4043 = vsel %vm4040, %v4042, %v4038
    %v4044 = vmul.f32 1.0, %v4043
    %v4045 = vrcp.pop %v4029
    %v4046 = vmul.f32 %v4029, %v4045
    %v4047 = vsub.f32 1.0, %v4046
    %v4048 = vmul.f32 %v4045, %v4047
    %v4049 = vadd.f32 %v4045, %v4048
    %vm4050 = vweird.f32 %v4029
    %vm4051 = vweird.f32 %v4045
    %vm4052 = vmor %vm4050, %vm4051
    %v4053 = vsel %vm4052, %v4045, %v4049
    %v4054 = vand.u32 2147483647, %v4029
    %vm4055 = vcmp.eq.f32.partialorder %v4054, 8.507059e+37
    %v4056 = vand.u32 %v4029, 2147483648
    %v4057 = vor.u32 1.1754944e-38, %v4056
    %v4058 = vsel %vm4055, %v4057, %v4053
    %v4059 = vmul.f32 1.0, %v4058
    %v4060 = vmul.f32 %v4004, %v2599
    %v4061 = vmul.f32 %v4019, %v2600
    %v4062 = vmul.f32 %v3966, %v4020
    %v4063 = vmul.f32 %v3981, %v4021
    %v4064 = vadd.f32 %v4060, %v4062
    %v4065 = vadd.f32 %v4061, %v4063
    %v4066 = vtanh.pop %v4064
    %v4067 = vtanh.pop %v4065
    %v4068 = vmul.f32 %v4044, %v4066
    %v4069 = vmul.f32 %v4059, %v4067
    %4070 = vmatpush.msra.mxu0 %v2849
    %4071 = vmatpush.msra.mxu0 %v2833
    %4072 = vmatpush.msra.mxu0 %v2817
    %4073 = vmatpush.msra.mxu0 %v2801
    %4074 = vmatpush.msra.mxu0 %v2785
    %4075 = vmatpush.msra.mxu0 %v2769
    %4076 = vmatpush.msra.mxu0 %v2753
    %4077 = vmatpush.msra.mxu0 %v2737
    %4078 = vmatpush.msra.mxu0 %v2721
    %4079 = vmatpush.msra.mxu0 %v2705
    %4080 = vmatpush.msra.mxu0 %v2689
    %4081 = vmatpush.msra.mxu0 %v2673
    %4082 = vmatpush.msra.mxu0 %v2657
    %4083 = vmatpush.msra.mxu0 %v2641
    %4084 = vmatpush.msra.mxu0 %v2625
    %4085 = vmatpush.msra.mxu0 %v2609
    %4086 = vmatmul.f32.gmra.mxu0 %v4068
    %v4087 = vpop.f32.mrf.mxu0
    %v4088 = vadd.f32 0.0, %v4087
    %4089 = vdwg.mxu0
    %4090 = vmatpush.msra.mxu0 %v3105
    %4091 = vmatpush.msra.mxu0 %v3089
    %4092 = vmatpush.msra.mxu0 %v3073
    %4093 = vmatpush.msra.mxu0 %v3057
    %4094 = vmatpush.msra.mxu0 %v3041
    %4095 = vmatpush.msra.mxu0 %v3025
    %4096 = vmatpush.msra.mxu0 %v3009
    %4097 = vmatpush.msra.mxu0 %v2993
    %4098 = vmatpush.msra.mxu0 %v2977
    %4099 = vmatpush.msra.mxu0 %v2961
    %4100 = vmatpush.msra.mxu0 %v2945
    %4101 = vmatpush.msra.mxu0 %v2929
    %4102 = vmatpush.msra.mxu0 %v2913
    %4103 = vmatpush.msra.mxu0 %v2897
    %4104 = vmatpush.msra.mxu0 %v2881
    %4105 = vmatpush.msra.mxu0 %v2865
    %4106 = vmatmul.f32.gmra.mxu0 %v4069
    %v4107 = vpop.f32.mrf.mxu0
    %v4108 = vadd.f32 %v4088, %v4107
    %4109 = vdwg.mxu0
    %4110 = vmatpush.msra.mxu0 %v2850
    %4111 = vmatpush.msra.mxu0 %v2834
    %4112 = vmatpush.msra.mxu0 %v2818
    %4113 = vmatpush.msra.mxu0 %v2802
    %4114 = vmatpush.msra.mxu0 %v2786
    %4115 = vmatpush.msra.mxu0 %v2770
    %4116 = vmatpush.msra.mxu0 %v2754
    %4117 = vmatpush.msra.mxu0 %v2738
    %4118 = vmatpush.msra.mxu0 %v2722
    %4119 = vmatpush.msra.mxu0 %v2706
    %4120 = vmatpush.msra.mxu0 %v2690
    %4121 = vmatpush.msra.mxu0 %v2674
    %4122 = vmatpush.msra.mxu0 %v2658
    %4123 = vmatpush.msra.mxu0 %v2642
    %4124 = vmatpush.msra.mxu0 %v2626
    %4125 = vmatpush.msra.mxu0 %v2610
    %4126 = vmatmul.f32.gmra.mxu0 %v4068
    %v4127 = vpop.f32.mrf.mxu0
    %v4128 = vadd.f32 0.0, %v4127
    %4129 = vdwg.mxu0
    %4130 = vmatpush.msra.mxu0 %v3106
    %4131 = vmatpush.msra.mxu0 %v3090
    %4132 = vmatpush.msra.mxu0 %v3074
    %4133 = vmatpush.msra.mxu0 %v3058
    %4134 = vmatpush.msra.mxu0 %v3042
    %4135 = vmatpush.msra.mxu0 %v3026
    %4136 = vmatpush.msra.mxu0 %v3010
    %4137 = vmatpush.msra.mxu0 %v2994
    %4138 = vmatpush.msra.mxu0 %v2978
    %4139 = vmatpush.msra.mxu0 %v2962
    %4140 = vmatpush.msra.mxu0 %v2946
    %4141 = vmatpush.msra.mxu0 %v2930
    %4142 = vmatpush.msra.mxu0 %v2914
    %4143 = vmatpush.msra.mxu0 %v2898
    %4144 = vmatpush.msra.mxu0 %v2882
    %4145 = vmatpush.msra.mxu0 %v2866
    %4146 = vmatmul.f32.gmra.mxu0 %v4069
    %v4147 = vpop.f32.mrf.mxu0
    %v4148 = vadd.f32 %v4128, %v4147
    %4149 = vdwg.mxu0
    %4150 = vmatpush.msra.mxu0 %v2851
    %4151 = vmatpush.msra.mxu0 %v2835
    %4152 = vmatpush.msra.mxu0 %v2819
    %4153 = vmatpush.msra.mxu0 %v2803
    %4154 = vmatpush.msra.mxu0 %v2787
    %4155 = vmatpush.msra.mxu0 %v2771
    %4156 = vmatpush.msra.mxu0 %v2755
    %4157 = vmatpush.msra.mxu0 %v2739
    %4158 = vmatpush.msra.mxu0 %v2723
    %4159 = vmatpush.msra.mxu0 %v2707
    %4160 = vmatpush.msra.mxu0 %v2691
    %4161 = vmatpush.msra.mxu0 %v2675
    %4162 = vmatpush.msra.mxu0 %v2659
    %4163 = vmatpush.msra.mxu0 %v2643
    %4164 = vmatpush.msra.mxu0 %v2627
    %4165 = vmatpush.msra.mxu0 %v2611
    %4166 = vmatmul.f32.gmra.mxu0 %v4068
    %v4167 = vpop.f32.mrf.mxu0
    %v4168 = vadd.f32 0.0, %v4167
    %4169 = vdwg.mxu0
    %4170 = vmatpush.msra.mxu0 %v3107
    %4171 = vmatpush.msra.mxu0 %v3091
    %4172 = vmatpush.msra.mxu0 %v3075
    %4173 = vmatpush.msra.mxu0 %v3059
    %4174 = vmatpush.msra.mxu0 %v3043
    %4175 = vmatpush.msra.mxu0 %v3027
    %4176 = vmatpush.msra.mxu0 %v3011
    %4177 = vmatpush.msra.mxu0 %v2995
    %4178 = vmatpush.msra.mxu0 %v2979
    %4179 = vmatpush.msra.mxu0 %v2963
    %4180 = vmatpush.msra.mxu0 %v2947
    %4181 = vmatpush.msra.mxu0 %v2931
    %4182 = vmatpush.msra.mxu0 %v2915
    %4183 = vmatpush.msra.mxu0 %v2899
    %4184 = vmatpush.msra.mxu0 %v2883
    %4185 = vmatpush.msra.mxu0 %v2867
    %4186 = vmatmul.f32.gmra.mxu0 %v4069
    %v4187 = vpop.f32.mrf.mxu0
    %v4188 = vadd.f32 %v4168, %v4187
    %4189 = vdwg.mxu0
    %4190 = vmatpush.msra.mxu0 %v2852
    %4191 = vmatpush.msra.mxu0 %v2836
    %4192 = vmatpush.msra.mxu0 %v2820
    %4193 = vmatpush.msra.mxu0 %v2804
    %4194 = vmatpush.msra.mxu0 %v2788
    %4195 = vmatpush.msra.mxu0 %v2772
    %4196 = vmatpush.msra.mxu0 %v2756
    %4197 = vmatpush.msra.mxu0 %v2740
    %4198 = vmatpush.msra.mxu0 %v2724
    %4199 = vmatpush.msra.mxu0 %v2708
    %4200 = vmatpush.msra.mxu0 %v2692
    %4201 = vmatpush.msra.mxu0 %v2676
    %4202 = vmatpush.msra.mxu0 %v2660
    %4203 = vmatpush.msra.mxu0 %v2644
    %4204 = vmatpush.msra.mxu0 %v2628
    %4205 = vmatpush.msra.mxu0 %v2612
    %4206 = vmatmul.f32.gmra.mxu0 %v4068
    %v4207 = vpop.f32.mrf.mxu0
    %v4208 = vadd.f32 0.0, %v4207
    %4209 = vdwg.mxu0
    %4210 = vmatpush.msra.mxu0 %v3108
    %4211 = vmatpush.msra.mxu0 %v3092
    %4212 = vmatpush.msra.mxu0 %v3076
    %4213 = vmatpush.msra.mxu0 %v3060
    %4214 = vmatpush.msra.mxu0 %v3044
    %4215 = vmatpush.msra.mxu0 %v3028
    %4216 = vmatpush.msra.mxu0 %v3012
    %4217 = vmatpush.msra.mxu0 %v2996
    %4218 = vmatpush.msra.mxu0 %v2980
    %4219 = vmatpush.msra.mxu0 %v2964
    %4220 = vmatpush.msra.mxu0 %v2948
    %4221 = vmatpush.msra.mxu0 %v2932
    %4222 = vmatpush.msra.mxu0 %v2916
    %4223 = vmatpush.msra.mxu0 %v2900
    %4224 = vmatpush.msra.mxu0 %v2884
    %4225 = vmatpush.msra.mxu0 %v2868
    %4226 = vmatmul.f32.gmra.mxu0 %v4069
    %v4227 = vpop.f32.mrf.mxu0
    %v4228 = vadd.f32 %v4208, %v4227
    %4229 = vdwg.mxu0
    %4230 = vmatpush.msra.mxu0 %v2853
    %4231 = vmatpush.msra.mxu0 %v2837
    %4232 = vmatpush.msra.mxu0 %v2821
    %4233 = vmatpush.msra.mxu0 %v2805
    %4234 = vmatpush.msra.mxu0 %v2789
    %4235 = vmatpush.msra.mxu0 %v2773
    %4236 = vmatpush.msra.mxu0 %v2757
    %4237 = vmatpush.msra.mxu0 %v2741
    %4238 = vmatpush.msra.mxu0 %v2725
    %4239 = vmatpush.msra.mxu0 %v2709
    %4240 = vmatpush.msra.mxu0 %v2693
    %4241 = vmatpush.msra.mxu0 %v2677
    %4242 = vmatpush.msra.mxu0 %v2661
    %4243 = vmatpush.msra.mxu0 %v2645
    %4244 = vmatpush.msra.mxu0 %v2629
    %4245 = vmatpush.msra.mxu0 %v2613
    %4246 = vmatmul.f32.gmra.mxu0 %v4068
    %v4247 = vpop.f32.mrf.mxu0
    %v4248 = vadd.f32 0.0, %v4247
    %4249 = vdwg.mxu0
    %4250 = vmatpush.msra.mxu0 %v3109
    %4251 = vmatpush.msra.mxu0 %v3093
    %4252 = vmatpush.msra.mxu0 %v3077
    %4253 = vmatpush.msra.mxu0 %v3061
    %4254 = vmatpush.msra.mxu0 %v3045
    %4255 = vmatpush.msra.mxu0 %v3029
    %4256 = vmatpush.msra.mxu0 %v3013
    %4257 = vmatpush.msra.mxu0 %v2997
    %4258 = vmatpush.msra.mxu0 %v2981
    %4259 = vmatpush.msra.mxu0 %v2965
    %4260 = vmatpush.msra.mxu0 %v2949
    %4261 = vmatpush.msra.mxu0 %v2933
    %4262 = vmatpush.msra.mxu0 %v2917
    %4263 = vmatpush.msra.mxu0 %v2901
    %4264 = vmatpush.msra.mxu0 %v2885
    %4265 = vmatpush.msra.mxu0 %v2869
    %4266 = vmatmul.f32.gmra.mxu0 %v4069
    %v4267 = vpop.f32.mrf.mxu0
    %v4268 = vadd.f32 %v4248, %v4267
    %4269 = vdwg.mxu0
    %4270 = vmatpush.msra.mxu0 %v2854
    %4271 = vmatpush.msra.mxu0 %v2838
    %4272 = vmatpush.msra.mxu0 %v2822
    %4273 = vmatpush.msra.mxu0 %v2806
    %4274 = vmatpush.msra.mxu0 %v2790
    %4275 = vmatpush.msra.mxu0 %v2774
    %4276 = vmatpush.msra.mxu0 %v2758
    %4277 = vmatpush.msra.mxu0 %v2742
    %4278 = vmatpush.msra.mxu0 %v2726
    %4279 = vmatpush.msra.mxu0 %v2710
    %4280 = vmatpush.msra.mxu0 %v2694
    %4281 = vmatpush.msra.mxu0 %v2678
    %4282 = vmatpush.msra.mxu0 %v2662
    %4283 = vmatpush.msra.mxu0 %v2646
    %4284 = vmatpush.msra.mxu0 %v2630
    %4285 = vmatpush.msra.mxu0 %v2614
    %4286 = vmatmul.f32.gmra.mxu0 %v4068
    %v4287 = vpop.f32.mrf.mxu0
    %v4288 = vadd.f32 0.0, %v4287
    %4289 = vdwg.mxu0
    %4290 = vmatpush.msra.mxu0 %v3110
    %4291 = vmatpush.msra.mxu0 %v3094
    %4292 = vmatpush.msra.mxu0 %v3078
    %4293 = vmatpush.msra.mxu0 %v3062
    %4294 = vmatpush.msra.mxu0 %v3046
    %4295 = vmatpush.msra.mxu0 %v3030
    %4296 = vmatpush.msra.mxu0 %v3014
    %4297 = vmatpush.msra.mxu0 %v2998
    %4298 = vmatpush.msra.mxu0 %v2982
    %4299 = vmatpush.msra.mxu0 %v2966
    %4300 = vmatpush.msra.mxu0 %v2950
    %4301 = vmatpush.msra.mxu0 %v2934
    %4302 = vmatpush.msra.mxu0 %v2918
    %4303 = vmatpush.msra.mxu0 %v2902
    %4304 = vmatpush.msra.mxu0 %v2886
    %4305 = vmatpush.msra.mxu0 %v2870
    %4306 = vmatmul.f32.gmra.mxu0 %v4069
    %v4307 = vpop.f32.mrf.mxu0
    %v4308 = vadd.f32 %v4288, %v4307
    %4309 = vdwg.mxu0
    %4310 = vmatpush.msra.mxu0 %v2855
    %4311 = vmatpush.msra.mxu0 %v2839
    %4312 = vmatpush.msra.mxu0 %v2823
    %4313 = vmatpush.msra.mxu0 %v2807
    %4314 = vmatpush.msra.mxu0 %v2791
    %4315 = vmatpush.msra.mxu0 %v2775
    %4316 = vmatpush.msra.mxu0 %v2759
    %4317 = vmatpush.msra.mxu0 %v2743
    %4318 = vmatpush.msra.mxu0 %v2727
    %4319 = vmatpush.msra.mxu0 %v2711
    %4320 = vmatpush.msra.mxu0 %v2695
    %4321 = vmatpush.msra.mxu0 %v2679
    %4322 = vmatpush.msra.mxu0 %v2663
    %4323 = vmatpush.msra.mxu0 %v2647
    %4324 = vmatpush.msra.mxu0 %v2631
    %4325 = vmatpush.msra.mxu0 %v2615
    %4326 = vmatmul.f32.gmra.mxu0 %v4068
    %v4327 = vpop.f32.mrf.mxu0
    %v4328 = vadd.f32 0.0, %v4327
    %4329 = vdwg.mxu0
    %4330 = vmatpush.msra.mxu0 %v3111
    %4331 = vmatpush.msra.mxu0 %v3095
    %4332 = vmatpush.msra.mxu0 %v3079
    %4333 = vmatpush.msra.mxu0 %v3063
    %4334 = vmatpush.msra.mxu0 %v3047
    %4335 = vmatpush.msra.mxu0 %v3031
    %4336 = vmatpush.msra.mxu0 %v3015
    %4337 = vmatpush.msra.mxu0 %v2999
    %4338 = vmatpush.msra.mxu0 %v2983
    %4339 = vmatpush.msra.mxu0 %v2967
    %4340 = vmatpush.msra.mxu0 %v2951
    %4341 = vmatpush.msra.mxu0 %v2935
    %4342 = vmatpush.msra.mxu0 %v2919
    %4343 = vmatpush.msra.mxu0 %v2903
    %4344 = vmatpush.msra.mxu0 %v2887
    %4345 = vmatpush.msra.mxu0 %v2871
    %4346 = vmatmul.f32.gmra.mxu0 %v4069
    %v4347 = vpop.f32.mrf.mxu0
    %v4348 = vadd.f32 %v4328, %v4347
    %4349 = vdwg.mxu0
    %4350 = vmatpush.msra.mxu0 %v2856
    %4351 = vmatpush.msra.mxu0 %v2840
    %4352 = vmatpush.msra.mxu0 %v2824
    %4353 = vmatpush.msra.mxu0 %v2808
    %4354 = vmatpush.msra.mxu0 %v2792
    %4355 = vmatpush.msra.mxu0 %v2776
    %4356 = vmatpush.msra.mxu0 %v2760
    %4357 = vmatpush.msra.mxu0 %v2744
    %4358 = vmatpush.msra.mxu0 %v2728
    %4359 = vmatpush.msra.mxu0 %v2712
    %4360 = vmatpush.msra.mxu0 %v2696
    %4361 = vmatpush.msra.mxu0 %v2680
    %4362 = vmatpush.msra.mxu0 %v2664
    %4363 = vmatpush.msra.mxu0 %v2648
    %4364 = vmatpush.msra.mxu0 %v2632
    %4365 = vmatpush.msra.mxu0 %v2616
    %4366 = vmatmul.f32.gmra.mxu0 %v4068
    %v4367 = vpop.f32.mrf.mxu0
    %v4368 = vadd.f32 0.0, %v4367
    %4369 = vdwg.mxu0
    %4370 = vmatpush.msra.mxu0 %v3112
    %4371 = vmatpush.msra.mxu0 %v3096
    %4372 = vmatpush.msra.mxu0 %v3080
    %4373 = vmatpush.msra.mxu0 %v3064
    %4374 = vmatpush.msra.mxu0 %v3048
    %4375 = vmatpush.msra.mxu0 %v3032
    %4376 = vmatpush.msra.mxu0 %v3016
    %4377 = vmatpush.msra.mxu0 %v3000
    %4378 = vmatpush.msra.mxu0 %v2984
    %4379 = vmatpush.msra.mxu0 %v2968
    %4380 = vmatpush.msra.mxu0 %v2952
    %4381 = vmatpush.msra.mxu0 %v2936
    %4382 = vmatpush.msra.mxu0 %v2920
    %4383 = vmatpush.msra.mxu0 %v2904
    %4384 = vmatpush.msra.mxu0 %v2888
    %4385 = vmatpush.msra.mxu0 %v2872
    %4386 = vmatmul.f32.gmra.mxu0 %v4069
    %v4387 = vpop.f32.mrf.mxu0
    %v4388 = vadd.f32 %v4368, %v4387
    %4389 = vdwg.mxu0
    %4390 = vmatpush.msra.mxu0 %v2857
    %4391 = vmatpush.msra.mxu0 %v2841
    %4392 = vmatpush.msra.mxu0 %v2825
    %4393 = vmatpush.msra.mxu0 %v2809
    %4394 = vmatpush.msra.mxu0 %v2793
    %4395 = vmatpush.msra.mxu0 %v2777
    %4396 = vmatpush.msra.mxu0 %v2761
    %4397 = vmatpush.msra.mxu0 %v2745
    %4398 = vmatpush.msra.mxu0 %v2729
    %4399 = vmatpush.msra.mxu0 %v2713
    %4400 = vmatpush.msra.mxu0 %v2697
    %4401 = vmatpush.msra.mxu0 %v2681
    %4402 = vmatpush.msra.mxu0 %v2665
    %4403 = vmatpush.msra.mxu0 %v2649
    %4404 = vmatpush.msra.mxu0 %v2633
    %4405 = vmatpush.msra.mxu0 %v2617
    %4406 = vmatmul.f32.gmra.mxu0 %v4068
    %v4407 = vpop.f32.mrf.mxu0
    %v4408 = vadd.f32 0.0, %v4407
    %4409 = vdwg.mxu0
    %4410 = vmatpush.msra.mxu0 %v3113
    %4411 = vmatpush.msra.mxu0 %v3097
    %4412 = vmatpush.msra.mxu0 %v3081
    %4413 = vmatpush.msra.mxu0 %v3065
    %4414 = vmatpush.msra.mxu0 %v3049
    %4415 = vmatpush.msra.mxu0 %v3033
    %4416 = vmatpush.msra.mxu0 %v3017
    %4417 = vmatpush.msra.mxu0 %v3001
    %4418 = vmatpush.msra.mxu0 %v2985
    %4419 = vmatpush.msra.mxu0 %v2969
    %4420 = vmatpush.msra.mxu0 %v2953
    %4421 = vmatpush.msra.mxu0 %v2937
    %4422 = vmatpush.msra.mxu0 %v2921
    %4423 = vmatpush.msra.mxu0 %v2905
    %4424 = vmatpush.msra.mxu0 %v2889
    %4425 = vmatpush.msra.mxu0 %v2873
    %4426 = vmatmul.f32.gmra.mxu0 %v4069
    %v4427 = vpop.f32.mrf.mxu0
    %v4428 = vadd.f32 %v4408, %v4427
    %4429 = vdwg.mxu0
    %4430 = vmatpush.msra.mxu0 %v2858
    %4431 = vmatpush.msra.mxu0 %v2842
    %4432 = vmatpush.msra.mxu0 %v2826
    %4433 = vmatpush.msra.mxu0 %v2810
    %4434 = vmatpush.msra.mxu0 %v2794
    %4435 = vmatpush.msra.mxu0 %v2778
    %4436 = vmatpush.msra.mxu0 %v2762
    %4437 = vmatpush.msra.mxu0 %v2746
    %4438 = vmatpush.msra.mxu0 %v2730
    %4439 = vmatpush.msra.mxu0 %v2714
    %4440 = vmatpush.msra.mxu0 %v2698
    %4441 = vmatpush.msra.mxu0 %v2682
    %4442 = vmatpush.msra.mxu0 %v2666
    %4443 = vmatpush.msra.mxu0 %v2650
    %4444 = vmatpush.msra.mxu0 %v2634
    %4445 = vmatpush.msra.mxu0 %v2618
    %4446 = vmatmul.f32.gmra.mxu0 %v4068
    %v4447 = vpop.f32.mrf.mxu0
    %v4448 = vadd.f32 0.0, %v4447
    %4449 = vdwg.mxu0
    %4450 = vmatpush.msra.mxu0 %v3114
    %4451 = vmatpush.msra.mxu0 %v3098
    %4452 = vmatpush.msra.mxu0 %v3082
    %4453 = vmatpush.msra.mxu0 %v3066
    %4454 = vmatpush.msra.mxu0 %v3050
    %4455 = vmatpush.msra.mxu0 %v3034
    %4456 = vmatpush.msra.mxu0 %v3018
    %4457 = vmatpush.msra.mxu0 %v3002
    %4458 = vmatpush.msra.mxu0 %v2986
    %4459 = vmatpush.msra.mxu0 %v2970
    %4460 = vmatpush.msra.mxu0 %v2954
    %4461 = vmatpush.msra.mxu0 %v2938
    %4462 = vmatpush.msra.mxu0 %v2922
    %4463 = vmatpush.msra.mxu0 %v2906
    %4464 = vmatpush.msra.mxu0 %v2890
    %4465 = vmatpush.msra.mxu0 %v2874
    %4466 = vmatmul.f32.gmra.mxu0 %v4069
    %v4467 = vpop.f32.mrf.mxu0
    %v4468 = vadd.f32 %v4448, %v4467
    %4469 = vdwg.mxu0
    %4470 = vmatpush.msra.mxu0 %v2859
    %4471 = vmatpush.msra.mxu0 %v2843
    %4472 = vmatpush.msra.mxu0 %v2827
    %4473 = vmatpush.msra.mxu0 %v2811
    %4474 = vmatpush.msra.mxu0 %v2795
    %4475 = vmatpush.msra.mxu0 %v2779
    %4476 = vmatpush.msra.mxu0 %v2763
    %4477 = vmatpush.msra.mxu0 %v2747
    %4478 = vmatpush.msra.mxu0 %v2731
    %4479 = vmatpush.msra.mxu0 %v2715
    %4480 = vmatpush.msra.mxu0 %v2699
    %4481 = vmatpush.msra.mxu0 %v2683
    %4482 = vmatpush.msra.mxu0 %v2667
    %4483 = vmatpush.msra.mxu0 %v2651
    %4484 = vmatpush.msra.mxu0 %v2635
    %4485 = vmatpush.msra.mxu0 %v2619
    %4486 = vmatmul.f32.gmra.mxu0 %v4068
    %v4487 = vpop.f32.mrf.mxu0
    %v4488 = vadd.f32 0.0, %v4487
    %4489 = vdwg.mxu0
    %4490 = vmatpush.msra.mxu0 %v3115
    %4491 = vmatpush.msra.mxu0 %v3099
    %4492 = vmatpush.msra.mxu0 %v3083
    %4493 = vmatpush.msra.mxu0 %v3067
    %4494 = vmatpush.msra.mxu0 %v3051
    %4495 = vmatpush.msra.mxu0 %v3035
    %4496 = vmatpush.msra.mxu0 %v3019
    %4497 = vmatpush.msra.mxu0 %v3003
    %4498 = vmatpush.msra.mxu0 %v2987
    %4499 = vmatpush.msra.mxu0 %v2971
    %4500 = vmatpush.msra.mxu0 %v2955
    %4501 = vmatpush.msra.mxu0 %v2939
    %4502 = vmatpush.msra.mxu0 %v2923
    %4503 = vmatpush.msra.mxu0 %v2907
    %4504 = vmatpush.msra.mxu0 %v2891
    %4505 = vmatpush.msra.mxu0 %v2875
    %4506 = vmatmul.f32.gmra.mxu0 %v4069
    %v4507 = vpop.f32.mrf.mxu0
    %v4508 = vadd.f32 %v4488, %v4507
    %4509 = vdwg.mxu0
    %4510 = vmatpush.msra.mxu0 %v2860
    %4511 = vmatpush.msra.mxu0 %v2844
    %4512 = vmatpush.msra.mxu0 %v2828
    %4513 = vmatpush.msra.mxu0 %v2812
    %4514 = vmatpush.msra.mxu0 %v2796
    %4515 = vmatpush.msra.mxu0 %v2780
    %4516 = vmatpush.msra.mxu0 %v2764
    %4517 = vmatpush.msra.mxu0 %v2748
    %4518 = vmatpush.msra.mxu0 %v2732
    %4519 = vmatpush.msra.mxu0 %v2716
    %4520 = vmatpush.msra.mxu0 %v2700
    %4521 = vmatpush.msra.mxu0 %v2684
    %4522 = vmatpush.msra.mxu0 %v2668
    %4523 = vmatpush.msra.mxu0 %v2652
    %4524 = vmatpush.msra.mxu0 %v2636
    %4525 = vmatpush.msra.mxu0 %v2620
    %4526 = vmatmul.f32.gmra.mxu0 %v4068
    %v4527 = vpop.f32.mrf.mxu0
    %v4528 = vadd.f32 0.0, %v4527
    %4529 = vdwg.mxu0
    %4530 = vmatpush.msra.mxu0 %v3116
    %4531 = vmatpush.msra.mxu0 %v3100
    %4532 = vmatpush.msra.mxu0 %v3084
    %4533 = vmatpush.msra.mxu0 %v3068
    %4534 = vmatpush.msra.mxu0 %v3052
    %4535 = vmatpush.msra.mxu0 %v3036
    %4536 = vmatpush.msra.mxu0 %v3020
    %4537 = vmatpush.msra.mxu0 %v3004
    %4538 = vmatpush.msra.mxu0 %v2988
    %4539 = vmatpush.msra.mxu0 %v2972
    %4540 = vmatpush.msra.mxu0 %v2956
    %4541 = vmatpush.msra.mxu0 %v2940
    %4542 = vmatpush.msra.mxu0 %v2924
    %4543 = vmatpush.msra.mxu0 %v2908
    %4544 = vmatpush.msra.mxu0 %v2892
    %4545 = vmatpush.msra.mxu0 %v2876
    %4546 = vmatmul.f32.gmra.mxu0 %v4069
    %v4547 = vpop.f32.mrf.mxu0
    %v4548 = vadd.f32 %v4528, %v4547
    %4549 = vdwg.mxu0
    %4550 = vmatpush.msra.mxu0 %v2861
    %4551 = vmatpush.msra.mxu0 %v2845
    %4552 = vmatpush.msra.mxu0 %v2829
    %4553 = vmatpush.msra.mxu0 %v2813
    %4554 = vmatpush.msra.mxu0 %v2797
    %4555 = vmatpush.msra.mxu0 %v2781
    %4556 = vmatpush.msra.mxu0 %v2765
    %4557 = vmatpush.msra.mxu0 %v2749
    %4558 = vmatpush.msra.mxu0 %v2733
    %4559 = vmatpush.msra.mxu0 %v2717
    %4560 = vmatpush.msra.mxu0 %v2701
    %4561 = vmatpush.msra.mxu0 %v2685
    %4562 = vmatpush.msra.mxu0 %v2669
    %4563 = vmatpush.msra.mxu0 %v2653
    %4564 = vmatpush.msra.mxu0 %v2637
    %4565 = vmatpush.msra.mxu0 %v2621
    %4566 = vmatmul.f32.gmra.mxu0 %v4068
    %v4567 = vpop.f32.mrf.mxu0
    %v4568 = vadd.f32 0.0, %v4567
    %4569 = vdwg.mxu0
    %4570 = vmatpush.msra.mxu0 %v3117
    %4571 = vmatpush.msra.mxu0 %v3101
    %4572 = vmatpush.msra.mxu0 %v3085
    %4573 = vmatpush.msra.mxu0 %v3069
    %4574 = vmatpush.msra.mxu0 %v3053
    %4575 = vmatpush.msra.mxu0 %v3037
    %4576 = vmatpush.msra.mxu0 %v3021
    %4577 = vmatpush.msra.mxu0 %v3005
    %4578 = vmatpush.msra.mxu0 %v2989
    %4579 = vmatpush.msra.mxu0 %v2973
    %4580 = vmatpush.msra.mxu0 %v2957
    %4581 = vmatpush.msra.mxu0 %v2941
    %4582 = vmatpush.msra.mxu0 %v2925
    %4583 = vmatpush.msra.mxu0 %v2909
    %4584 = vmatpush.msra.mxu0 %v2893
    %4585 = vmatpush.msra.mxu0 %v2877
    %4586 = vmatmul.f32.gmra.mxu0 %v4069
    %v4587 = vpop.f32.mrf.mxu0
    %v4588 = vadd.f32 %v4568, %v4587
    %4589 = vdwg.mxu0
    %4590 = vmatpush.msra.mxu0 %v2862
    %4591 = vmatpush.msra.mxu0 %v2846
    %4592 = vmatpush.msra.mxu0 %v2830
    %4593 = vmatpush.msra.mxu0 %v2814
    %4594 = vmatpush.msra.mxu0 %v2798
    %4595 = vmatpush.msra.mxu0 %v2782
    %4596 = vmatpush.msra.mxu0 %v2766
    %4597 = vmatpush.msra.mxu0 %v2750
    %4598 = vmatpush.msra.mxu0 %v2734
    %4599 = vmatpush.msra.mxu0 %v2718
    %4600 = vmatpush.msra.mxu0 %v2702
    %4601 = vmatpush.msra.mxu0 %v2686
    %4602 = vmatpush.msra.mxu0 %v2670
    %4603 = vmatpush.msra.mxu0 %v2654
    %4604 = vmatpush.msra.mxu0 %v2638
    %4605 = vmatpush.msra.mxu0 %v2622
    %4606 = vmatmul.f32.gmra.mxu0 %v4068
    %v4607 = vpop.f32.mrf.mxu0
    %v4608 = vadd.f32 0.0, %v4607
    %4609 = vdwg.mxu0
    %4610 = vmatpush.msra.mxu0 %v3118
    %4611 = vmatpush.msra.mxu0 %v3102
    %4612 = vmatpush.msra.mxu0 %v3086
    %4613 = vmatpush.msra.mxu0 %v3070
    %4614 = vmatpush.msra.mxu0 %v3054
    %4615 = vmatpush.msra.mxu0 %v3038
    %4616 = vmatpush.msra.mxu0 %v3022
    %4617 = vmatpush.msra.mxu0 %v3006
    %4618 = vmatpush.msra.mxu0 %v2990
    %4619 = vmatpush.msra.mxu0 %v2974
    %4620 = vmatpush.msra.mxu0 %v2958
    %4621 = vmatpush.msra.mxu0 %v2942
    %4622 = vmatpush.msra.mxu0 %v2926
    %4623 = vmatpush.msra.mxu0 %v2910
    %4624 = vmatpush.msra.mxu0 %v2894
    %4625 = vmatpush.msra.mxu0 %v2878
    %4626 = vmatmul.f32.gmra.mxu0 %v4069
    %v4627 = vpop.f32.mrf.mxu0
    %v4628 = vadd.f32 %v4608, %v4627
    %4629 = vdwg.mxu0
    %4630 = vmatpush.msra.mxu0 %v2863
    %4631 = vmatpush.msra.mxu0 %v2847
    %4632 = vmatpush.msra.mxu0 %v2831
    %4633 = vmatpush.msra.mxu0 %v2815
    %4634 = vmatpush.msra.mxu0 %v2799
    %4635 = vmatpush.msra.mxu0 %v2783
    %4636 = vmatpush.msra.mxu0 %v2767
    %4637 = vmatpush.msra.mxu0 %v2751
    %4638 = vmatpush.msra.mxu0 %v2735
    %4639 = vmatpush.msra.mxu0 %v2719
    %4640 = vmatpush.msra.mxu0 %v2703
    %4641 = vmatpush.msra.mxu0 %v2687
    %4642 = vmatpush.msra.mxu0 %v2671
    %4643 = vmatpush.msra.mxu0 %v2655
    %4644 = vmatpush.msra.mxu0 %v2639
    %4645 = vmatpush.msra.mxu0 %v2623
    %4646 = vmatmul.f32.gmra.mxu0 %v4068
    %v4647 = vpop.f32.mrf.mxu0
    %v4648 = vadd.f32 0.0, %v4647
    %4649 = vdwg.mxu0
    %4650 = vmatpush.msra.mxu0 %v3119
    %4651 = vmatpush.msra.mxu0 %v3103
    %4652 = vmatpush.msra.mxu0 %v3087
    %4653 = vmatpush.msra.mxu0 %v3071
    %4654 = vmatpush.msra.mxu0 %v3055
    %4655 = vmatpush.msra.mxu0 %v3039
    %4656 = vmatpush.msra.mxu0 %v3023
    %4657 = vmatpush.msra.mxu0 %v3007
    %4658 = vmatpush.msra.mxu0 %v2991
    %4659 = vmatpush.msra.mxu0 %v2975
    %4660 = vmatpush.msra.mxu0 %v2959
    %4661 = vmatpush.msra.mxu0 %v2943
    %4662 = vmatpush.msra.mxu0 %v2927
    %4663 = vmatpush.msra.mxu0 %v2911
    %4664 = vmatpush.msra.mxu0 %v2895
    %4665 = vmatpush.msra.mxu0 %v2879
    %4666 = vmatmul.f32.gmra.mxu0 %v4069
    %v4667 = vpop.f32.mrf.mxu0
    %v4668 = vadd.f32 %v4648, %v4667
    %4669 = vdwg.mxu0
    %4670 = vmatpush.msra.mxu0 %v2864
    %4671 = vmatpush.msra.mxu0 %v2848
    %4672 = vmatpush.msra.mxu0 %v2832
    %4673 = vmatpush.msra.mxu0 %v2816
    %4674 = vmatpush.msra.mxu0 %v2800
    %4675 = vmatpush.msra.mxu0 %v2784
    %4676 = vmatpush.msra.mxu0 %v2768
    %4677 = vmatpush.msra.mxu0 %v2752
    %4678 = vmatpush.msra.mxu0 %v2736
    %4679 = vmatpush.msra.mxu0 %v2720
    %4680 = vmatpush.msra.mxu0 %v2704
    %4681 = vmatpush.msra.mxu0 %v2688
    %4682 = vmatpush.msra.mxu0 %v2672
    %4683 = vmatpush.msra.mxu0 %v2656
    %4684 = vmatpush.msra.mxu0 %v2640
    %4685 = vmatpush.msra.mxu0 %v2624
    %4686 = vmatmul.f32.gmra.mxu0 %v4068
    %v4687 = vpop.f32.mrf.mxu0
    %v4688 = vadd.f32 0.0, %v4687
    %4689 = vdwg.mxu0
    %4690 = vmatpush.msra.mxu0 %v3120
    %4691 = vmatpush.msra.mxu0 %v3104
    %4692 = vmatpush.msra.mxu0 %v3088
    %4693 = vmatpush.msra.mxu0 %v3072
    %4694 = vmatpush.msra.mxu0 %v3056
    %4695 = vmatpush.msra.mxu0 %v3040
    %4696 = vmatpush.msra.mxu0 %v3024
    %4697 = vmatpush.msra.mxu0 %v3008
    %4698 = vmatpush.msra.mxu0 %v2992
    %4699 = vmatpush.msra.mxu0 %v2976
    %4700 = vmatpush.msra.mxu0 %v2960
    %4701 = vmatpush.msra.mxu0 %v2944
    %4702 = vmatpush.msra.mxu0 %v2928
    %4703 = vmatpush.msra.mxu0 %v2912
    %4704 = vmatpush.msra.mxu0 %v2896
    %4705 = vmatpush.msra.mxu0 %v2880
    %4706 = vmatmul.f32.gmra.mxu0 %v4069
    %v4707 = vpop.f32.mrf.mxu0
    %v4708 = vadd.f32 %v4688, %v4707
    %4709 = vdwg.mxu0
    %v4710 = vadd.f32 %v4428, %v3762
    %v4711 = vadd.f32 %v4468, %v3763
    %v4712 = vadd.f32 %v4508, %v3764
    %v4713 = vadd.f32 %v4548, %v3765
    %v4714 = vadd.f32 %v4588, %v3766
    %v4715 = vadd.f32 %v4628, %v3767
    %v4716 = vadd.f32 %v4668, %v3768
    %v4717 = vadd.f32 %v4708, %v3769
    %s4718 = smul.u32 %s2605, 8
    %s4719 = sshll.u32 %s4718, 4
    %4720 = dma.done %s186, %s4719
    %v4721 = vld [vmem:[#allocation3] sm:$0xff]
    %v4722 = vld [vmem:[#allocation3 + $0x8] sm:$0xff]
    %v4723 = vld [vmem:[#allocation3 + $0x10] sm:$0xff]
    %v4724 = vld [vmem:[#allocation3 + $0x18] sm:$0xff]
    %v4725 = vld [vmem:[#allocation3 + $0x20] sm:$0xff]
    %v4726 = vld [vmem:[#allocation3 + $0x28] sm:$0xff]
    %v4727 = vld [vmem:[#allocation3 + $0x30] sm:$0xff]
    %v4728 = vld [vmem:[#allocation3 + $0x38] sm:$0xff]
    %v4729 = vld [vmem:[#allocation3 + $0x40] sm:$0xff]
    %v4730 = vld [vmem:[#allocation3 + $0x48] sm:$0xff]
    %v4731 = vld [vmem:[#allocation3 + $0x50] sm:$0xff]
    %v4732 = vld [vmem:[#allocation3 + $0x58] sm:$0xff]
    %v4733 = vld [vmem:[#allocation3 + $0x60] sm:$0xff]
    %v4734 = vld [vmem:[#allocation3 + $0x68] sm:$0xff]
    %v4735 = vld [vmem:[#allocation3 + $0x70] sm:$0xff]
    %v4736 = vld [vmem:[#allocation3 + $0x78] sm:$0xff]
    %v4737 = vld [vmem:[#allocation3 + $0x80] sm:$0xff]
    %v4738 = vld [vmem:[#allocation3 + $0x88] sm:$0xff]
    %v4739 = vld [vmem:[#allocation3 + $0x90] sm:$0xff]
    %v4740 = vld [vmem:[#allocation3 + $0x98] sm:$0xff]
    %v4741 = vld [vmem:[#allocation3 + $0xa0] sm:$0xff]
    %v4742 = vld [vmem:[#allocation3 + $0xa8] sm:$0xff]
    %v4743 = vld [vmem:[#allocation3 + $0xb0] sm:$0xff]
    %v4744 = vld [vmem:[#allocation3 + $0xb8] sm:$0xff]
    %v4745 = vld [vmem:[#allocation3 + $0xc0] sm:$0xff]
    %v4746 = vld [vmem:[#allocation3 + $0xc8] sm:$0xff]
    %v4747 = vld [vmem:[#allocation3 + $0xd0] sm:$0xff]
    %v4748 = vld [vmem:[#allocation3 + $0xd8] sm:$0xff]
    %v4749 = vld [vmem:[#allocation3 + $0xe0] sm:$0xff]
    %v4750 = vld [vmem:[#allocation3 + $0xe8] sm:$0xff]
    %v4751 = vld [vmem:[#allocation3 + $0xf0] sm:$0xff]
    %v4752 = vld [vmem:[#allocation3 + $0xf8] sm:$0xff]
    %v4753 = vld [vmem:[#allocation3 + $0x100] sm:$0xff]
    %v4754 = vld [vmem:[#allocation3 + $0x108] sm:$0xff]
    %v4755 = vld [vmem:[#allocation3 + $0x110] sm:$0xff]
    %v4756 = vld [vmem:[#allocation3 + $0x118] sm:$0xff]
    %v4757 = vld [vmem:[#allocation3 + $0x120] sm:$0xff]
    %v4758 = vld [vmem:[#allocation3 + $0x128] sm:$0xff]
    %v4759 = vld [vmem:[#allocation3 + $0x130] sm:$0xff]
    %v4760 = vld [vmem:[#allocation3 + $0x138] sm:$0xff]
    %v4761 = vld [vmem:[#allocation3 + $0x140] sm:$0xff]
    %v4762 = vld [vmem:[#allocation3 + $0x148] sm:$0xff]
    %v4763 = vld [vmem:[#allocation3 + $0x150] sm:$0xff]
    %v4764 = vld [vmem:[#allocation3 + $0x158] sm:$0xff]
    %v4765 = vld [vmem:[#allocation3 + $0x160] sm:$0xff]
    %v4766 = vld [vmem:[#allocation3 + $0x168] sm:$0xff]
    %v4767 = vld [vmem:[#allocation3 + $0x170] sm:$0xff]
    %v4768 = vld [vmem:[#allocation3 + $0x178] sm:$0xff]
    %v4769 = vld [vmem:[#allocation3 + $0x180] sm:$0xff]
    %v4770 = vld [vmem:[#allocation3 + $0x188] sm:$0xff]
    %v4771 = vld [vmem:[#allocation3 + $0x190] sm:$0xff]
    %v4772 = vld [vmem:[#allocation3 + $0x198] sm:$0xff]
    %v4773 = vld [vmem:[#allocation3 + $0x1a0] sm:$0xff]
    %v4774 = vld [vmem:[#allocation3 + $0x1a8] sm:$0xff]
    %v4775 = vld [vmem:[#allocation3 + $0x1b0] sm:$0xff]
    %v4776 = vld [vmem:[#allocation3 + $0x1b8] sm:$0xff]
    %v4777 = vld [vmem:[#allocation3 + $0x1c0] sm:$0xff]
    %v4778 = vld [vmem:[#allocation3 + $0x1c8] sm:$0xff]
    %v4779 = vld [vmem:[#allocation3 + $0x1d0] sm:$0xff]
    %v4780 = vld [vmem:[#allocation3 + $0x1d8] sm:$0xff]
    %v4781 = vld [vmem:[#allocation3 + $0x1e0] sm:$0xff]
    %v4782 = vld [vmem:[#allocation3 + $0x1e8] sm:$0xff]
    %v4783 = vld [vmem:[#allocation3 + $0x1f0] sm:$0xff]
    %v4784 = vld [vmem:[#allocation3 + $0x1f8] sm:$0xff]
    %v4785 = vld [vmem:[#allocation3 + $0x200] sm:$0xff]
    %v4786 = vld [vmem:[#allocation3 + $0x208] sm:$0xff]
    %v4787 = vld [vmem:[#allocation3 + $0x210] sm:$0xff]
    %v4788 = vld [vmem:[#allocation3 + $0x218] sm:$0xff]
    %v4789 = vld [vmem:[#allocation3 + $0x220] sm:$0xff]
    %v4790 = vld [vmem:[#allocation3 + $0x228] sm:$0xff]
    %v4791 = vld [vmem:[#allocation3 + $0x230] sm:$0xff]
    %v4792 = vld [vmem:[#allocation3 + $0x238] sm:$0xff]
    %v4793 = vld [vmem:[#allocation3 + $0x240] sm:$0xff]
    %v4794 = vld [vmem:[#allocation3 + $0x248] sm:$0xff]
    %v4795 = vld [vmem:[#allocation3 + $0x250] sm:$0xff]
    %v4796 = vld [vmem:[#allocation3 + $0x258] sm:$0xff]
    %v4797 = vld [vmem:[#allocation3 + $0x260] sm:$0xff]
    %v4798 = vld [vmem:[#allocation3 + $0x268] sm:$0xff]
    %v4799 = vld [vmem:[#allocation3 + $0x270] sm:$0xff]
    %v4800 = vld [vmem:[#allocation3 + $0x278] sm:$0xff]
    %v4801 = vld [vmem:[#allocation3 + $0x280] sm:$0xff]
    %v4802 = vld [vmem:[#allocation3 + $0x288] sm:$0xff]
    %v4803 = vld [vmem:[#allocation3 + $0x290] sm:$0xff]
    %v4804 = vld [vmem:[#allocation3 + $0x298] sm:$0xff]
    %v4805 = vld [vmem:[#allocation3 + $0x2a0] sm:$0xff]
    %v4806 = vld [vmem:[#allocation3 + $0x2a8] sm:$0xff]
    %v4807 = vld [vmem:[#allocation3 + $0x2b0] sm:$0xff]
    %v4808 = vld [vmem:[#allocation3 + $0x2b8] sm:$0xff]
    %v4809 = vld [vmem:[#allocation3 + $0x2c0] sm:$0xff]
    %v4810 = vld [vmem:[#allocation3 + $0x2c8] sm:$0xff]
    %v4811 = vld [vmem:[#allocation3 + $0x2d0] sm:$0xff]
    %v4812 = vld [vmem:[#allocation3 + $0x2d8] sm:$0xff]
    %v4813 = vld [vmem:[#allocation3 + $0x2e0] sm:$0xff]
    %v4814 = vld [vmem:[#allocation3 + $0x2e8] sm:$0xff]
    %v4815 = vld [vmem:[#allocation3 + $0x2f0] sm:$0xff]
    %v4816 = vld [vmem:[#allocation3 + $0x2f8] sm:$0xff]
    %v4817 = vld [vmem:[#allocation3 + $0x300] sm:$0xff]
    %v4818 = vld [vmem:[#allocation3 + $0x308] sm:$0xff]
    %v4819 = vld [vmem:[#allocation3 + $0x310] sm:$0xff]
    %v4820 = vld [vmem:[#allocation3 + $0x318] sm:$0xff]
    %v4821 = vld [vmem:[#allocation3 + $0x320] sm:$0xff]
    %v4822 = vld [vmem:[#allocation3 + $0x328] sm:$0xff]
    %v4823 = vld [vmem:[#allocation3 + $0x330] sm:$0xff]
    %v4824 = vld [vmem:[#allocation3 + $0x338] sm:$0xff]
    %v4825 = vld [vmem:[#allocation3 + $0x340] sm:$0xff]
    %v4826 = vld [vmem:[#allocation3 + $0x348] sm:$0xff]
    %v4827 = vld [vmem:[#allocation3 + $0x350] sm:$0xff]
    %v4828 = vld [vmem:[#allocation3 + $0x358] sm:$0xff]
    %v4829 = vld [vmem:[#allocation3 + $0x360] sm:$0xff]
    %v4830 = vld [vmem:[#allocation3 + $0x368] sm:$0xff]
    %v4831 = vld [vmem:[#allocation3 + $0x370] sm:$0xff]
    %v4832 = vld [vmem:[#allocation3 + $0x378] sm:$0xff]
    %v4833 = vld [vmem:[#allocation3 + $0x380] sm:$0xff]
    %v4834 = vld [vmem:[#allocation3 + $0x388] sm:$0xff]
    %v4835 = vld [vmem:[#allocation3 + $0x390] sm:$0xff]
    %v4836 = vld [vmem:[#allocation3 + $0x398] sm:$0xff]
    %v4837 = vld [vmem:[#allocation3 + $0x3a0] sm:$0xff]
    %v4838 = vld [vmem:[#allocation3 + $0x3a8] sm:$0xff]
    %v4839 = vld [vmem:[#allocation3 + $0x3b0] sm:$0xff]
    %v4840 = vld [vmem:[#allocation3 + $0x3b8] sm:$0xff]
    %v4841 = vld [vmem:[#allocation3 + $0x3c0] sm:$0xff]
    %v4842 = vld [vmem:[#allocation3 + $0x3c8] sm:$0xff]
    %v4843 = vld [vmem:[#allocation3 + $0x3d0] sm:$0xff]
    %v4844 = vld [vmem:[#allocation3 + $0x3d8] sm:$0xff]
    %v4845 = vld [vmem:[#allocation3 + $0x3e0] sm:$0xff]
    %v4846 = vld [vmem:[#allocation3 + $0x3e8] sm:$0xff]
    %v4847 = vld [vmem:[#allocation3 + $0x3f0] sm:$0xff]
    %v4848 = vld [vmem:[#allocation3 + $0x3f8] sm:$0xff]
    %v4849 = vld [vmem:[#allocation3 + $0x400] sm:$0xff]
    %v4850 = vld [vmem:[#allocation3 + $0x408] sm:$0xff]
    %v4851 = vld [vmem:[#allocation3 + $0x410] sm:$0xff]
    %v4852 = vld [vmem:[#allocation3 + $0x418] sm:$0xff]
    %v4853 = vld [vmem:[#allocation3 + $0x420] sm:$0xff]
    %v4854 = vld [vmem:[#allocation3 + $0x428] sm:$0xff]
    %v4855 = vld [vmem:[#allocation3 + $0x430] sm:$0xff]
    %v4856 = vld [vmem:[#allocation3 + $0x438] sm:$0xff]
    %v4857 = vld [vmem:[#allocation3 + $0x440] sm:$0xff]
    %v4858 = vld [vmem:[#allocation3 + $0x448] sm:$0xff]
    %v4859 = vld [vmem:[#allocation3 + $0x450] sm:$0xff]
    %v4860 = vld [vmem:[#allocation3 + $0x458] sm:$0xff]
    %v4861 = vld [vmem:[#allocation3 + $0x460] sm:$0xff]
    %v4862 = vld [vmem:[#allocation3 + $0x468] sm:$0xff]
    %v4863 = vld [vmem:[#allocation3 + $0x470] sm:$0xff]
    %v4864 = vld [vmem:[#allocation3 + $0x478] sm:$0xff]
    %v4865 = vld [vmem:[#allocation3 + $0x480] sm:$0xff]
    %v4866 = vld [vmem:[#allocation3 + $0x488] sm:$0xff]
    %v4867 = vld [vmem:[#allocation3 + $0x490] sm:$0xff]
    %v4868 = vld [vmem:[#allocation3 + $0x498] sm:$0xff]
    %v4869 = vld [vmem:[#allocation3 + $0x4a0] sm:$0xff]
    %v4870 = vld [vmem:[#allocation3 + $0x4a8] sm:$0xff]
    %v4871 = vld [vmem:[#allocation3 + $0x4b0] sm:$0xff]
    %v4872 = vld [vmem:[#allocation3 + $0x4b8] sm:$0xff]
    %v4873 = vld [vmem:[#allocation3 + $0x4c0] sm:$0xff]
    %v4874 = vld [vmem:[#allocation3 + $0x4c8] sm:$0xff]
    %v4875 = vld [vmem:[#allocation3 + $0x4d0] sm:$0xff]
    %v4876 = vld [vmem:[#allocation3 + $0x4d8] sm:$0xff]
    %v4877 = vld [vmem:[#allocation3 + $0x4e0] sm:$0xff]
    %v4878 = vld [vmem:[#allocation3 + $0x4e8] sm:$0xff]
    %v4879 = vld [vmem:[#allocation3 + $0x4f0] sm:$0xff]
    %v4880 = vld [vmem:[#allocation3 + $0x4f8] sm:$0xff]
    %v4881 = vld [vmem:[#allocation3 + $0x500] sm:$0xff]
    %v4882 = vld [vmem:[#allocation3 + $0x508] sm:$0xff]
    %v4883 = vld [vmem:[#allocation3 + $0x510] sm:$0xff]
    %v4884 = vld [vmem:[#allocation3 + $0x518] sm:$0xff]
    %v4885 = vld [vmem:[#allocation3 + $0x520] sm:$0xff]
    %v4886 = vld [vmem:[#allocation3 + $0x528] sm:$0xff]
    %v4887 = vld [vmem:[#allocation3 + $0x530] sm:$0xff]
    %v4888 = vld [vmem:[#allocation3 + $0x538] sm:$0xff]
    %v4889 = vld [vmem:[#allocation3 + $0x540] sm:$0xff]
    %v4890 = vld [vmem:[#allocation3 + $0x548] sm:$0xff]
    %v4891 = vld [vmem:[#allocation3 + $0x550] sm:$0xff]
    %v4892 = vld [vmem:[#allocation3 + $0x558] sm:$0xff]
    %v4893 = vld [vmem:[#allocation3 + $0x560] sm:$0xff]
    %v4894 = vld [vmem:[#allocation3 + $0x568] sm:$0xff]
    %v4895 = vld [vmem:[#allocation3 + $0x570] sm:$0xff]
    %v4896 = vld [vmem:[#allocation3 + $0x578] sm:$0xff]
    %v4897 = vld [vmem:[#allocation3 + $0x580] sm:$0xff]
    %v4898 = vld [vmem:[#allocation3 + $0x588] sm:$0xff]
    %v4899 = vld [vmem:[#allocation3 + $0x590] sm:$0xff]
    %v4900 = vld [vmem:[#allocation3 + $0x598] sm:$0xff]
    %v4901 = vld [vmem:[#allocation3 + $0x5a0] sm:$0xff]
    %v4902 = vld [vmem:[#allocation3 + $0x5a8] sm:$0xff]
    %v4903 = vld [vmem:[#allocation3 + $0x5b0] sm:$0xff]
    %v4904 = vld [vmem:[#allocation3 + $0x5b8] sm:$0xff]
    %v4905 = vld [vmem:[#allocation3 + $0x5c0] sm:$0xff]
    %v4906 = vld [vmem:[#allocation3 + $0x5c8] sm:$0xff]
    %v4907 = vld [vmem:[#allocation3 + $0x5d0] sm:$0xff]
    %v4908 = vld [vmem:[#allocation3 + $0x5d8] sm:$0xff]
    %v4909 = vld [vmem:[#allocation3 + $0x5e0] sm:$0xff]
    %v4910 = vld [vmem:[#allocation3 + $0x5e8] sm:$0xff]
    %v4911 = vld [vmem:[#allocation3 + $0x5f0] sm:$0xff]
    %v4912 = vld [vmem:[#allocation3 + $0x5f8] sm:$0xff]
    %v4913 = vld [vmem:[#allocation3 + $0x600] sm:$0xff]
    %v4914 = vld [vmem:[#allocation3 + $0x608] sm:$0xff]
    %v4915 = vld [vmem:[#allocation3 + $0x610] sm:$0xff]
    %v4916 = vld [vmem:[#allocation3 + $0x618] sm:$0xff]
    %v4917 = vld [vmem:[#allocation3 + $0x620] sm:$0xff]
    %v4918 = vld [vmem:[#allocation3 + $0x628] sm:$0xff]
    %v4919 = vld [vmem:[#allocation3 + $0x630] sm:$0xff]
    %v4920 = vld [vmem:[#allocation3 + $0x638] sm:$0xff]
    %v4921 = vld [vmem:[#allocation3 + $0x640] sm:$0xff]
    %v4922 = vld [vmem:[#allocation3 + $0x648] sm:$0xff]
    %v4923 = vld [vmem:[#allocation3 + $0x650] sm:$0xff]
    %v4924 = vld [vmem:[#allocation3 + $0x658] sm:$0xff]
    %v4925 = vld [vmem:[#allocation3 + $0x660] sm:$0xff]
    %v4926 = vld [vmem:[#allocation3 + $0x668] sm:$0xff]
    %v4927 = vld [vmem:[#allocation3 + $0x670] sm:$0xff]
    %v4928 = vld [vmem:[#allocation3 + $0x678] sm:$0xff]
    %v4929 = vld [vmem:[#allocation3 + $0x680] sm:$0xff]
    %v4930 = vld [vmem:[#allocation3 + $0x688] sm:$0xff]
    %v4931 = vld [vmem:[#allocation3 + $0x690] sm:$0xff]
    %v4932 = vld [vmem:[#allocation3 + $0x698] sm:$0xff]
    %v4933 = vld [vmem:[#allocation3 + $0x6a0] sm:$0xff]
    %v4934 = vld [vmem:[#allocation3 + $0x6a8] sm:$0xff]
    %v4935 = vld [vmem:[#allocation3 + $0x6b0] sm:$0xff]
    %v4936 = vld [vmem:[#allocation3 + $0x6b8] sm:$0xff]
    %v4937 = vld [vmem:[#allocation3 + $0x6c0] sm:$0xff]
    %v4938 = vld [vmem:[#allocation3 + $0x6c8] sm:$0xff]
    %v4939 = vld [vmem:[#allocation3 + $0x6d0] sm:$0xff]
    %v4940 = vld [vmem:[#allocation3 + $0x6d8] sm:$0xff]
    %v4941 = vld [vmem:[#allocation3 + $0x6e0] sm:$0xff]
    %v4942 = vld [vmem:[#allocation3 + $0x6e8] sm:$0xff]
    %v4943 = vld [vmem:[#allocation3 + $0x6f0] sm:$0xff]
    %v4944 = vld [vmem:[#allocation3 + $0x6f8] sm:$0xff]
    %v4945 = vld [vmem:[#allocation3 + $0x700] sm:$0xff]
    %v4946 = vld [vmem:[#allocation3 + $0x708] sm:$0xff]
    %v4947 = vld [vmem:[#allocation3 + $0x710] sm:$0xff]
    %v4948 = vld [vmem:[#allocation3 + $0x718] sm:$0xff]
    %v4949 = vld [vmem:[#allocation3 + $0x720] sm:$0xff]
    %v4950 = vld [vmem:[#allocation3 + $0x728] sm:$0xff]
    %v4951 = vld [vmem:[#allocation3 + $0x730] sm:$0xff]
    %v4952 = vld [vmem:[#allocation3 + $0x738] sm:$0xff]
    %v4953 = vld [vmem:[#allocation3 + $0x740] sm:$0xff]
    %v4954 = vld [vmem:[#allocation3 + $0x748] sm:$0xff]
    %v4955 = vld [vmem:[#allocation3 + $0x750] sm:$0xff]
    %v4956 = vld [vmem:[#allocation3 + $0x758] sm:$0xff]
    %v4957 = vld [vmem:[#allocation3 + $0x760] sm:$0xff]
    %v4958 = vld [vmem:[#allocation3 + $0x768] sm:$0xff]
    %v4959 = vld [vmem:[#allocation3 + $0x770] sm:$0xff]
    %v4960 = vld [vmem:[#allocation3 + $0x778] sm:$0xff]
    %v4961 = vld [vmem:[#allocation3 + $0x780] sm:$0xff]
    %v4962 = vld [vmem:[#allocation3 + $0x788] sm:$0xff]
    %v4963 = vld [vmem:[#allocation3 + $0x790] sm:$0xff]
    %v4964 = vld [vmem:[#allocation3 + $0x798] sm:$0xff]
    %v4965 = vld [vmem:[#allocation3 + $0x7a0] sm:$0xff]
    %v4966 = vld [vmem:[#allocation3 + $0x7a8] sm:$0xff]
    %v4967 = vld [vmem:[#allocation3 + $0x7b0] sm:$0xff]
    %v4968 = vld [vmem:[#allocation3 + $0x7b8] sm:$0xff]
    %v4969 = vld [vmem:[#allocation3 + $0x7c0] sm:$0xff]
    %v4970 = vld [vmem:[#allocation3 + $0x7c8] sm:$0xff]
    %v4971 = vld [vmem:[#allocation3 + $0x7d0] sm:$0xff]
    %v4972 = vld [vmem:[#allocation3 + $0x7d8] sm:$0xff]
    %v4973 = vld [vmem:[#allocation3 + $0x7e0] sm:$0xff]
    %v4974 = vld [vmem:[#allocation3 + $0x7e8] sm:$0xff]
    %v4975 = vld [vmem:[#allocation3 + $0x7f0] sm:$0xff]
    %v4976 = vld [vmem:[#allocation3 + $0x7f8] sm:$0xff]
    %4977 = vmatpush.msra.mxu0 %v4841
    %4978 = vmatpush.msra.mxu0 %v4833
    %4979 = vmatpush.msra.mxu0 %v4825
    %4980 = vmatpush.msra.mxu0 %v4817
    %4981 = vmatpush.msra.mxu0 %v4809
    %4982 = vmatpush.msra.mxu0 %v4801
    %4983 = vmatpush.msra.mxu0 %v4793
    %4984 = vmatpush.msra.mxu0 %v4785
    %4985 = vmatpush.msra.mxu0 %v4777
    %4986 = vmatpush.msra.mxu0 %v4769
    %4987 = vmatpush.msra.mxu0 %v4761
    %4988 = vmatpush.msra.mxu0 %v4753
    %4989 = vmatpush.msra.mxu0 %v4745
    %4990 = vmatpush.msra.mxu0 %v4737
    %4991 = vmatpush.msra.mxu0 %v4729
    %4992 = vmatpush.msra.mxu0 %v4721
    %4993 = vmatmul.f32.gmra.mxu0 %v3910
    %v4994 = vpop.f32.mrf.mxu0
    %v4995 = vadd.f32 0.0, %v4994
    %4996 = vdwg.mxu0
    %4997 = vmatpush.msra.mxu0 %v4969
    %4998 = vmatpush.msra.mxu0 %v4961
    %4999 = vmatpush.msra.mxu0 %v4953
    %5000 = vmatpush.msra.mxu0 %v4945
    %5001 = vmatpush.msra.mxu0 %v4937
    %5002 = vmatpush.msra.mxu0 %v4929
    %5003 = vmatpush.msra.mxu0 %v4921
    %5004 = vmatpush.msra.mxu0 %v4913
    %5005 = vmatpush.msra.mxu0 %v4905
    %5006 = vmatpush.msra.mxu0 %v4897
    %5007 = vmatpush.msra.mxu0 %v4889
    %5008 = vmatpush.msra.mxu0 %v4881
    %5009 = vmatpush.msra.mxu0 %v4873
    %5010 = vmatpush.msra.mxu0 %v4865
    %5011 = vmatpush.msra.mxu0 %v4857
    %5012 = vmatpush.msra.mxu0 %v4849
    %5013 = vmatmul.f32.gmra.mxu0 %v3911
    %v5014 = vpop.f32.mrf.mxu0
    %v5015 = vadd.f32 %v4995, %v5014
    %5016 = vdwg.mxu0
    %5017 = vmatpush.msra.mxu0 %v4842
    %5018 = vmatpush.msra.mxu0 %v4834
    %5019 = vmatpush.msra.mxu0 %v4826
    %5020 = vmatpush.msra.mxu0 %v4818
    %5021 = vmatpush.msra.mxu0 %v4810
    %5022 = vmatpush.msra.mxu0 %v4802
    %5023 = vmatpush.msra.mxu0 %v4794
    %5024 = vmatpush.msra.mxu0 %v4786
    %5025 = vmatpush.msra.mxu0 %v4778
    %5026 = vmatpush.msra.mxu0 %v4770
    %5027 = vmatpush.msra.mxu0 %v4762
    %5028 = vmatpush.msra.mxu0 %v4754
    %5029 = vmatpush.msra.mxu0 %v4746
    %5030 = vmatpush.msra.mxu0 %v4738
    %5031 = vmatpush.msra.mxu0 %v4730
    %5032 = vmatpush.msra.mxu0 %v4722
    %5033 = vmatmul.f32.gmra.mxu0 %v3910
    %v5034 = vpop.f32.mrf.mxu0
    %v5035 = vadd.f32 0.0, %v5034
    %5036 = vdwg.mxu0
    %5037 = vmatpush.msra.mxu0 %v4970
    %5038 = vmatpush.msra.mxu0 %v4962
    %5039 = vmatpush.msra.mxu0 %v4954
    %5040 = vmatpush.msra.mxu0 %v4946
    %5041 = vmatpush.msra.mxu0 %v4938
    %5042 = vmatpush.msra.mxu0 %v4930
    %5043 = vmatpush.msra.mxu0 %v4922
    %5044 = vmatpush.msra.mxu0 %v4914
    %5045 = vmatpush.msra.mxu0 %v4906
    %5046 = vmatpush.msra.mxu0 %v4898
    %5047 = vmatpush.msra.mxu0 %v4890
    %5048 = vmatpush.msra.mxu0 %v4882
    %5049 = vmatpush.msra.mxu0 %v4874
    %5050 = vmatpush.msra.mxu0 %v4866
    %5051 = vmatpush.msra.mxu0 %v4858
    %5052 = vmatpush.msra.mxu0 %v4850
    %5053 = vmatmul.f32.gmra.mxu0 %v3911
    %v5054 = vpop.f32.mrf.mxu0
    %v5055 = vadd.f32 %v5035, %v5054
    %5056 = vdwg.mxu0
    %5057 = vmatpush.msra.mxu0 %v4843
    %5058 = vmatpush.msra.mxu0 %v4835
    %5059 = vmatpush.msra.mxu0 %v4827
    %5060 = vmatpush.msra.mxu0 %v4819
    %5061 = vmatpush.msra.mxu0 %v4811
    %5062 = vmatpush.msra.mxu0 %v4803
    %5063 = vmatpush.msra.mxu0 %v4795
    %5064 = vmatpush.msra.mxu0 %v4787
    %5065 = vmatpush.msra.mxu0 %v4779
    %5066 = vmatpush.msra.mxu0 %v4771
    %5067 = vmatpush.msra.mxu0 %v4763
    %5068 = vmatpush.msra.mxu0 %v4755
    %5069 = vmatpush.msra.mxu0 %v4747
    %5070 = vmatpush.msra.mxu0 %v4739
    %5071 = vmatpush.msra.mxu0 %v4731
    %5072 = vmatpush.msra.mxu0 %v4723
    %5073 = vmatmul.f32.gmra.mxu0 %v3910
    %v5074 = vpop.f32.mrf.mxu0
    %v5075 = vadd.f32 0.0, %v5074
    %5076 = vdwg.mxu0
    %5077 = vmatpush.msra.mxu0 %v4971
    %5078 = vmatpush.msra.mxu0 %v4963
    %5079 = vmatpush.msra.mxu0 %v4955
    %5080 = vmatpush.msra.mxu0 %v4947
    %5081 = vmatpush.msra.mxu0 %v4939
    %5082 = vmatpush.msra.mxu0 %v4931
    %5083 = vmatpush.msra.mxu0 %v4923
    %5084 = vmatpush.msra.mxu0 %v4915
    %5085 = vmatpush.msra.mxu0 %v4907
    %5086 = vmatpush.msra.mxu0 %v4899
    %5087 = vmatpush.msra.mxu0 %v4891
    %5088 = vmatpush.msra.mxu0 %v4883
    %5089 = vmatpush.msra.mxu0 %v4875
    %5090 = vmatpush.msra.mxu0 %v4867
    %5091 = vmatpush.msra.mxu0 %v4859
    %5092 = vmatpush.msra.mxu0 %v4851
    %5093 = vmatmul.f32.gmra.mxu0 %v3911
    %v5094 = vpop.f32.mrf.mxu0
    %v5095 = vadd.f32 %v5075, %v5094
    %5096 = vdwg.mxu0
    %5097 = vmatpush.msra.mxu0 %v4844
    %5098 = vmatpush.msra.mxu0 %v4836
    %5099 = vmatpush.msra.mxu0 %v4828
    %5100 = vmatpush.msra.mxu0 %v4820
    %5101 = vmatpush.msra.mxu0 %v4812
    %5102 = vmatpush.msra.mxu0 %v4804
    %5103 = vmatpush.msra.mxu0 %v4796
    %5104 = vmatpush.msra.mxu0 %v4788
    %5105 = vmatpush.msra.mxu0 %v4780
    %5106 = vmatpush.msra.mxu0 %v4772
    %5107 = vmatpush.msra.mxu0 %v4764
    %5108 = vmatpush.msra.mxu0 %v4756
    %5109 = vmatpush.msra.mxu0 %v4748
    %5110 = vmatpush.msra.mxu0 %v4740
    %5111 = vmatpush.msra.mxu0 %v4732
    %5112 = vmatpush.msra.mxu0 %v4724
    %5113 = vmatmul.f32.gmra.mxu0 %v3910
    %v5114 = vpop.f32.mrf.mxu0
    %v5115 = vadd.f32 0.0, %v5114
    %5116 = vdwg.mxu0
    %5117 = vmatpush.msra.mxu0 %v4972
    %5118 = vmatpush.msra.mxu0 %v4964
    %5119 = vmatpush.msra.mxu0 %v4956
    %5120 = vmatpush.msra.mxu0 %v4948
    %5121 = vmatpush.msra.mxu0 %v4940
    %5122 = vmatpush.msra.mxu0 %v4932
    %5123 = vmatpush.msra.mxu0 %v4924
    %5124 = vmatpush.msra.mxu0 %v4916
    %5125 = vmatpush.msra.mxu0 %v4908
    %5126 = vmatpush.msra.mxu0 %v4900
    %5127 = vmatpush.msra.mxu0 %v4892
    %5128 = vmatpush.msra.mxu0 %v4884
    %5129 = vmatpush.msra.mxu0 %v4876
    %5130 = vmatpush.msra.mxu0 %v4868
    %5131 = vmatpush.msra.mxu0 %v4860
    %5132 = vmatpush.msra.mxu0 %v4852
    %5133 = vmatmul.f32.gmra.mxu0 %v3911
    %v5134 = vpop.f32.mrf.mxu0
    %v5135 = vadd.f32 %v5115, %v5134
    %5136 = vdwg.mxu0
    %5137 = vmatpush.msra.mxu0 %v4845
    %5138 = vmatpush.msra.mxu0 %v4837
    %5139 = vmatpush.msra.mxu0 %v4829
    %5140 = vmatpush.msra.mxu0 %v4821
    %5141 = vmatpush.msra.mxu0 %v4813
    %5142 = vmatpush.msra.mxu0 %v4805
    %5143 = vmatpush.msra.mxu0 %v4797
    %5144 = vmatpush.msra.mxu0 %v4789
    %5145 = vmatpush.msra.mxu0 %v4781
    %5146 = vmatpush.msra.mxu0 %v4773
    %5147 = vmatpush.msra.mxu0 %v4765
    %5148 = vmatpush.msra.mxu0 %v4757
    %5149 = vmatpush.msra.mxu0 %v4749
    %5150 = vmatpush.msra.mxu0 %v4741
    %5151 = vmatpush.msra.mxu0 %v4733
    %5152 = vmatpush.msra.mxu0 %v4725
    %5153 = vmatmul.f32.gmra.mxu0 %v3910
    %v5154 = vpop.f32.mrf.mxu0
    %v5155 = vadd.f32 0.0, %v5154
    %5156 = vdwg.mxu0
    %5157 = vmatpush.msra.mxu0 %v4973
    %5158 = vmatpush.msra.mxu0 %v4965
    %5159 = vmatpush.msra.mxu0 %v4957
    %5160 = vmatpush.msra.mxu0 %v4949
    %5161 = vmatpush.msra.mxu0 %v4941
    %5162 = vmatpush.msra.mxu0 %v4933
    %5163 = vmatpush.msra.mxu0 %v4925
    %5164 = vmatpush.msra.mxu0 %v4917
    %5165 = vmatpush.msra.mxu0 %v4909
    %5166 = vmatpush.msra.mxu0 %v4901
    %5167 = vmatpush.msra.mxu0 %v4893
    %5168 = vmatpush.msra.mxu0 %v4885
    %5169 = vmatpush.msra.mxu0 %v4877
    %5170 = vmatpush.msra.mxu0 %v4869
    %5171 = vmatpush.msra.mxu0 %v4861
    %5172 = vmatpush.msra.mxu0 %v4853
    %5173 = vmatmul.f32.gmra.mxu0 %v3911
    %v5174 = vpop.f32.mrf.mxu0
    %v5175 = vadd.f32 %v5155, %v5174
    %5176 = vdwg.mxu0
    %5177 = vmatpush.msra.mxu0 %v4846
    %5178 = vmatpush.msra.mxu0 %v4838
    %5179 = vmatpush.msra.mxu0 %v4830
    %5180 = vmatpush.msra.mxu0 %v4822
    %5181 = vmatpush.msra.mxu0 %v4814
    %5182 = vmatpush.msra.mxu0 %v4806
    %5183 = vmatpush.msra.mxu0 %v4798
    %5184 = vmatpush.msra.mxu0 %v4790
    %5185 = vmatpush.msra.mxu0 %v4782
    %5186 = vmatpush.msra.mxu0 %v4774
    %5187 = vmatpush.msra.mxu0 %v4766
    %5188 = vmatpush.msra.mxu0 %v4758
    %5189 = vmatpush.msra.mxu0 %v4750
    %5190 = vmatpush.msra.mxu0 %v4742
    %5191 = vmatpush.msra.mxu0 %v4734
    %5192 = vmatpush.msra.mxu0 %v4726
    %5193 = vmatmul.f32.gmra.mxu0 %v3910
    %v5194 = vpop.f32.mrf.mxu0
    %v5195 = vadd.f32 0.0, %v5194
    %5196 = vdwg.mxu0
    %5197 = vmatpush.msra.mxu0 %v4974
    %5198 = vmatpush.msra.mxu0 %v4966
    %5199 = vmatpush.msra.mxu0 %v4958
    %5200 = vmatpush.msra.mxu0 %v4950
    %5201 = vmatpush.msra.mxu0 %v4942
    %5202 = vmatpush.msra.mxu0 %v4934
    %5203 = vmatpush.msra.mxu0 %v4926
    %5204 = vmatpush.msra.mxu0 %v4918
    %5205 = vmatpush.msra.mxu0 %v4910
    %5206 = vmatpush.msra.mxu0 %v4902
    %5207 = vmatpush.msra.mxu0 %v4894
    %5208 = vmatpush.msra.mxu0 %v4886
    %5209 = vmatpush.msra.mxu0 %v4878
    %5210 = vmatpush.msra.mxu0 %v4870
    %5211 = vmatpush.msra.mxu0 %v4862
    %5212 = vmatpush.msra.mxu0 %v4854
    %5213 = vmatmul.f32.gmra.mxu0 %v3911
    %v5214 = vpop.f32.mrf.mxu0
    %v5215 = vadd.f32 %v5195, %v5214
    %5216 = vdwg.mxu0
    %5217 = vmatpush.msra.mxu0 %v4847
    %5218 = vmatpush.msra.mxu0 %v4839
    %5219 = vmatpush.msra.mxu0 %v4831
    %5220 = vmatpush.msra.mxu0 %v4823
    %5221 = vmatpush.msra.mxu0 %v4815
    %5222 = vmatpush.msra.mxu0 %v4807
    %5223 = vmatpush.msra.mxu0 %v4799
    %5224 = vmatpush.msra.mxu0 %v4791
    %5225 = vmatpush.msra.mxu0 %v4783
    %5226 = vmatpush.msra.mxu0 %v4775
    %5227 = vmatpush.msra.mxu0 %v4767
    %5228 = vmatpush.msra.mxu0 %v4759
    %5229 = vmatpush.msra.mxu0 %v4751
    %5230 = vmatpush.msra.mxu0 %v4743
    %5231 = vmatpush.msra.mxu0 %v4735
    %5232 = vmatpush.msra.mxu0 %v4727
    %5233 = vmatmul.f32.gmra.mxu0 %v3910
    %v5234 = vpop.f32.mrf.mxu0
    %v5235 = vadd.f32 0.0, %v5234
    %5236 = vdwg.mxu0
    %5237 = vmatpush.msra.mxu0 %v4975
    %5238 = vmatpush.msra.mxu0 %v4967
    %5239 = vmatpush.msra.mxu0 %v4959
    %5240 = vmatpush.msra.mxu0 %v4951
    %5241 = vmatpush.msra.mxu0 %v4943
    %5242 = vmatpush.msra.mxu0 %v4935
    %5243 = vmatpush.msra.mxu0 %v4927
    %5244 = vmatpush.msra.mxu0 %v4919
    %5245 = vmatpush.msra.mxu0 %v4911
    %5246 = vmatpush.msra.mxu0 %v4903
    %5247 = vmatpush.msra.mxu0 %v4895
    %5248 = vmatpush.msra.mxu0 %v4887
    %5249 = vmatpush.msra.mxu0 %v4879
    %5250 = vmatpush.msra.mxu0 %v4871
    %5251 = vmatpush.msra.mxu0 %v4863
    %5252 = vmatpush.msra.mxu0 %v4855
    %5253 = vmatmul.f32.gmra.mxu0 %v3911
    %v5254 = vpop.f32.mrf.mxu0
    %v5255 = vadd.f32 %v5235, %v5254
    %5256 = vdwg.mxu0
    %5257 = vmatpush.msra.mxu0 %v4848
    %5258 = vmatpush.msra.mxu0 %v4840
    %5259 = vmatpush.msra.mxu0 %v4832
    %5260 = vmatpush.msra.mxu0 %v4824
    %5261 = vmatpush.msra.mxu0 %v4816
    %5262 = vmatpush.msra.mxu0 %v4808
    %5263 = vmatpush.msra.mxu0 %v4800
    %5264 = vmatpush.msra.mxu0 %v4792
    %5265 = vmatpush.msra.mxu0 %v4784
    %5266 = vmatpush.msra.mxu0 %v4776
    %5267 = vmatpush.msra.mxu0 %v4768
    %5268 = vmatpush.msra.mxu0 %v4760
    %5269 = vmatpush.msra.mxu0 %v4752
    %5270 = vmatpush.msra.mxu0 %v4744
    %5271 = vmatpush.msra.mxu0 %v4736
    %5272 = vmatpush.msra.mxu0 %v4728
    %5273 = vmatmul.f32.gmra.mxu0 %v3910
    %v5274 = vpop.f32.mrf.mxu0
    %v5275 = vadd.f32 0.0, %v5274
    %5276 = vdwg.mxu0
    %5277 = vmatpush.msra.mxu0 %v4976
    %5278 = vmatpush.msra.mxu0 %v4968
    %5279 = vmatpush.msra.mxu0 %v4960
    %5280 = vmatpush.msra.mxu0 %v4952
    %5281 = vmatpush.msra.mxu0 %v4944
    %5282 = vmatpush.msra.mxu0 %v4936
    %5283 = vmatpush.msra.mxu0 %v4928
    %5284 = vmatpush.msra.mxu0 %v4920
    %5285 = vmatpush.msra.mxu0 %v4912
    %5286 = vmatpush.msra.mxu0 %v4904
    %5287 = vmatpush.msra.mxu0 %v4896
    %5288 = vmatpush.msra.mxu0 %v4888
    %5289 = vmatpush.msra.mxu0 %v4880
    %5290 = vmatpush.msra.mxu0 %v4872
    %5291 = vmatpush.msra.mxu0 %v4864
    %5292 = vmatpush.msra.mxu0 %v4856
    %5293 = vmatmul.f32.gmra.mxu0 %v3911
    %v5294 = vpop.f32.mrf.mxu0
    %v5295 = vadd.f32 %v5275, %v5294
    %5296 = vdwg.mxu0
    %v5297 = vadd.f32 %v4710, %v5015
    %v5298 = vadd.f32 %v4711, %v5055
    %v5299 = vadd.f32 %v4712, %v5095
    %v5300 = vadd.f32 %v4713, %v5135
    %v5301 = vadd.f32 %v4714, %v5175
    %v5302 = vadd.f32 %v4715, %v5215
    %v5303 = vadd.f32 %v4716, %v5255
    %v5304 = vadd.f32 %v4717, %v5295
    %v5305 = vxor.u32 %v5297, 2147483648
    %v5306 = vxor.u32 %v5298, 2147483648
    %v5307 = vmul.f32 %v5305, 1.442695
    %v5308 = vpow.pop %v5307
    %v5309 = vmul.f32 %v5306, 1.442695
    %v5310 = vpow.pop %v5309
    %v5311 = vadd.f32 %v5308, 1.0
    %v5312 = vadd.f32 %v5310, 1.0
    %v5313 = vrcp.pop %v5311
    %v5314 = vmul.f32 %v5311, %v5313
    %v5315 = vsub.f32 1.0, %v5314
    %v5316 = vmul.f32 %v5313, %v5315
    %v5317 = vadd.f32 %v5313, %v5316
    %vm5318 = vweird.f32 %v5311
    %vm5319 = vweird.f32 %v5313
    %vm5320 = vmor %vm5318, %vm5319
    %v5321 = vsel %vm5320, %v5313, %v5317
    %v5322 = vand.u32 2147483647, %v5311
    %vm5323 = vcmp.eq.f32.partialorder %v5322, 8.507059e+37
    %v5324 = vand.u32 %v5311, 2147483648
    %v5325 = vor.u32 1.1754944e-38, %v5324
    %v5326 = vsel %vm5323, %v5325, %v5321
    %v5327 = vmul.f32 1.0, %v5326
    %v5328 = vrcp.pop %v5312
    %v5329 = vmul.f32 %v5312, %v5328
    %v5330 = vsub.f32 1.0, %v5329
    %v5331 = vmul.f32 %v5328, %v5330
    %v5332 = vadd.f32 %v5328, %v5331
    %vm5333 = vweird.f32 %v5312
    %vm5334 = vweird.f32 %v5328
    %vm5335 = vmor %vm5333, %vm5334
    %v5336 = vsel %vm5335, %v5328, %v5332
    %v5337 = vand.u32 2147483647, %v5312
    %vm5338 = vcmp.eq.f32.partialorder %v5337, 8.507059e+37
    %v5339 = vand.u32 %v5312, 2147483648
    %v5340 = vor.u32 1.1754944e-38, %v5339
    %v5341 = vsel %vm5338, %v5340, %v5336
    %v5342 = vmul.f32 1.0, %v5341
    %v5343 = vxor.u32 %v5299, 2147483648
    %v5344 = vxor.u32 %v5300, 2147483648
    %v5345 = vmul.f32 %v5343, 1.442695
    %v5346 = vpow.pop %v5345
    %v5347 = vmul.f32 %v5344, 1.442695
    %v5348 = vpow.pop %v5347
    %v5349 = vadd.f32 %v5346, 1.0
    %v5350 = vadd.f32 %v5348, 1.0
    %v5351 = vrcp.pop %v5349
    %v5352 = vmul.f32 %v5349, %v5351
    %v5353 = vsub.f32 1.0, %v5352
    %v5354 = vmul.f32 %v5351, %v5353
    %v5355 = vadd.f32 %v5351, %v5354
    %vm5356 = vweird.f32 %v5349
    %vm5357 = vweird.f32 %v5351
    %vm5358 = vmor %vm5356, %vm5357
    %v5359 = vsel %vm5358, %v5351, %v5355
    %v5360 = vand.u32 2147483647, %v5349
    %vm5361 = vcmp.eq.f32.partialorder %v5360, 8.507059e+37
    %v5362 = vand.u32 %v5349, 2147483648
    %v5363 = vor.u32 1.1754944e-38, %v5362
    %v5364 = vsel %vm5361, %v5363, %v5359
    %v5365 = vmul.f32 1.0, %v5364
    %v5366 = vrcp.pop %v5350
    %v5367 = vmul.f32 %v5350, %v5366
    %v5368 = vsub.f32 1.0, %v5367
    %v5369 = vmul.f32 %v5366, %v5368
    %v5370 = vadd.f32 %v5366, %v5369
    %vm5371 = vweird.f32 %v5350
    %vm5372 = vweird.f32 %v5366
    %vm5373 = vmor %vm5371, %vm5372
    %v5374 = vsel %vm5373, %v5366, %v5370
    %v5375 = vand.u32 2147483647, %v5350
    %vm5376 = vcmp.eq.f32.partialorder %v5375, 8.507059e+37
    %v5377 = vand.u32 %v5350, 2147483648
    %v5378 = vor.u32 1.1754944e-38, %v5377
    %v5379 = vsel %vm5376, %v5378, %v5374
    %v5380 = vmul.f32 1.0, %v5379
    %v5381 = vtanh.pop %v5301
    %v5382 = vtanh.pop %v5302
    %v5383 = vxor.u32 %v5303, 2147483648
    %v5384 = vxor.u32 %v5304, 2147483648
    %v5385 = vmul.f32 %v5383, 1.442695
    %v5386 = vpow.pop %v5385
    %v5387 = vmul.f32 %v5384, 1.442695
    %v5388 = vpow.pop %v5387
    %v5389 = vadd.f32 %v5386, 1.0
    %v5390 = vadd.f32 %v5388, 1.0
    %v5391 = vrcp.pop %v5389
    %v5392 = vmul.f32 %v5389, %v5391
    %v5393 = vsub.f32 1.0, %v5392
    %v5394 = vmul.f32 %v5391, %v5393
    %v5395 = vadd.f32 %v5391, %v5394
    %vm5396 = vweird.f32 %v5389
    %vm5397 = vweird.f32 %v5391
    %vm5398 = vmor %vm5396, %vm5397
    %v5399 = vsel %vm5398, %v5391, %v5395
    %v5400 = vand.u32 2147483647, %v5389
    %vm5401 = vcmp.eq.f32.partialorder %v5400, 8.507059e+37
    %v5402 = vand.u32 %v5389, 2147483648
    %v5403 = vor.u32 1.1754944e-38, %v5402
    %v5404 = vsel %vm5401, %v5403, %v5399
    %v5405 = vmul.f32 1.0, %v5404
    %v5406 = vrcp.pop %v5390
    %v5407 = vmul.f32 %v5390, %v5406
    %v5408 = vsub.f32 1.0, %v5407
    %v5409 = vmul.f32 %v5406, %v5408
    %v5410 = vadd.f32 %v5406, %v5409
    %vm5411 = vweird.f32 %v5390
    %vm5412 = vweird.f32 %v5406
    %vm5413 = vmor %vm5411, %vm5412
    %v5414 = vsel %vm5413, %v5406, %v5410
    %v5415 = vand.u32 2147483647, %v5390
    %vm5416 = vcmp.eq.f32.partialorder %v5415, 8.507059e+37
    %v5417 = vand.u32 %v5390, 2147483648
    %v5418 = vor.u32 1.1754944e-38, %v5417
    %v5419 = vsel %vm5416, %v5418, %v5414
    %v5420 = vmul.f32 1.0, %v5419
    %v5421 = vmul.f32 %v5365, %v3906
    %v5422 = vmul.f32 %v5380, %v3907
    %v5423 = vmul.f32 %v5327, %v5381
    %v5424 = vmul.f32 %v5342, %v5382
    %v5425 = vadd.f32 %v5421, %v5423
    %v5426 = vadd.f32 %v5422, %v5424
    %v5427 = vtanh.pop %v5425
    %v5428 = vtanh.pop %v5426
    %v5429 = vmul.f32 %v5405, %v5427
    %v5430 = vmul.f32 %v5420, %v5428
    %v5431 = vrot.slane %v2337, 2
    %v5432 = vrot.slane %v2357, 2
    %v5433 = vrot.slane %v2377, 2
    %v5434 = vrot.slane %v2397, 2
    %v5435 = vrot.slane %v2417, 2
    %v5436 = vrot.slane %v2437, 2
    %v5437 = vrot.slane %v2457, 2
    %v5438 = vrot.slane %v2477, 2
    %v5447 = vadd.f32 %v4108, %v5431
    %v5448 = vadd.f32 %v4148, %v5432
    %v5449 = vadd.f32 %v4188, %v5433
    %v5450 = vadd.f32 %v4228, %v5434
    %v5451 = vadd.f32 %v4268, %v5435
    %v5452 = vadd.f32 %v4308, %v5436
    %v5453 = vadd.f32 %v4348, %v5437
    %v5454 = vadd.f32 %v4388, %v5438
    %v5455 = vxor.u32 %v5447, 2147483648
    %v5456 = vxor.u32 %v5448, 2147483648
    %v5457 = vmul.f32 %v5455, 1.442695
    %v5458 = vpow.pop %v5457
    %v5459 = vmul.f32 %v5456, 1.442695
    %v5460 = vpow.pop %v5459
    %v5461 = vadd.f32 %v5458, 1.0
    %v5462 = vadd.f32 %v5460, 1.0
    %v5463 = vrcp.pop %v5461
    %v5464 = vmul.f32 %v5461, %v5463
    %v5465 = vsub.f32 1.0, %v5464
    %v5466 = vmul.f32 %v5463, %v5465
    %v5467 = vadd.f32 %v5463, %v5466
    %vm5468 = vweird.f32 %v5461
    %vm5469 = vweird.f32 %v5463
    %vm5470 = vmor %vm5468, %vm5469
    %v5471 = vsel %vm5470, %v5463, %v5467
    %v5472 = vand.u32 2147483647, %v5461
    %vm5473 = vcmp.eq.f32.partialorder %v5472, 8.507059e+37
    %v5474 = vand.u32 %v5461, 2147483648
    %v5475 = vor.u32 1.1754944e-38, %v5474
    %v5476 = vsel %vm5473, %v5475, %v5471
    %v5477 = vmul.f32 1.0, %v5476
    %v5478 = vrcp.pop %v5462
    %v5479 = vmul.f32 %v5462, %v5478
    %v5480 = vsub.f32 1.0, %v5479
    %v5481 = vmul.f32 %v5478, %v5480
    %v5482 = vadd.f32 %v5478, %v5481
    %vm5483 = vweird.f32 %v5462
    %vm5484 = vweird.f32 %v5478
    %vm5485 = vmor %vm5483, %vm5484
    %v5486 = vsel %vm5485, %v5478, %v5482
    %v5487 = vand.u32 2147483647, %v5462
    %vm5488 = vcmp.eq.f32.partialorder %v5487, 8.507059e+37
    %v5489 = vand.u32 %v5462, 2147483648
    %v5490 = vor.u32 1.1754944e-38, %v5489
    %v5491 = vsel %vm5488, %v5490, %v5486
    %v5492 = vmul.f32 1.0, %v5491
    %v5493 = vxor.u32 %v5449, 2147483648
    %v5494 = vxor.u32 %v5450, 2147483648
    %v5495 = vmul.f32 %v5493, 1.442695
    %v5496 = vpow.pop %v5495
    %v5497 = vmul.f32 %v5494, 1.442695
    %v5498 = vpow.pop %v5497
    %v5499 = vadd.f32 %v5496, 1.0
    %v5500 = vadd.f32 %v5498, 1.0
    %v5501 = vrcp.pop %v5499
    %v5502 = vmul.f32 %v5499, %v5501
    %v5503 = vsub.f32 1.0, %v5502
    %v5504 = vmul.f32 %v5501, %v5503
    %v5505 = vadd.f32 %v5501, %v5504
    %vm5506 = vweird.f32 %v5499
    %vm5507 = vweird.f32 %v5501
    %vm5508 = vmor %vm5506, %vm5507
    %v5509 = vsel %vm5508, %v5501, %v5505
    %v5510 = vand.u32 2147483647, %v5499
    %vm5511 = vcmp.eq.f32.partialorder %v5510, 8.507059e+37
    %v5512 = vand.u32 %v5499, 2147483648
    %v5513 = vor.u32 1.1754944e-38, %v5512
    %v5514 = vsel %vm5511, %v5513, %v5509
    %v5515 = vmul.f32 1.0, %v5514
    %v5516 = vrcp.pop %v5500
    %v5517 = vmul.f32 %v5500, %v5516
    %v5518 = vsub.f32 1.0, %v5517
    %v5519 = vmul.f32 %v5516, %v5518
    %v5520 = vadd.f32 %v5516, %v5519
    %vm5521 = vweird.f32 %v5500
    %vm5522 = vweird.f32 %v5516
    %vm5523 = vmor %vm5521, %vm5522
    %v5524 = vsel %vm5523, %v5516, %v5520
    %v5525 = vand.u32 2147483647, %v5500
    %vm5526 = vcmp.eq.f32.partialorder %v5525, 8.507059e+37
    %v5527 = vand.u32 %v5500, 2147483648
    %v5528 = vor.u32 1.1754944e-38, %v5527
    %v5529 = vsel %vm5526, %v5528, %v5524
    %v5530 = vmul.f32 1.0, %v5529
    %v5531 = vtanh.pop %v5451
    %v5532 = vtanh.pop %v5452
    %v5533 = vxor.u32 %v5453, 2147483648
    %v5534 = vxor.u32 %v5454, 2147483648
    %v5535 = vmul.f32 %v5533, 1.442695
    %v5536 = vpow.pop %v5535
    %v5537 = vmul.f32 %v5534, 1.442695
    %v5538 = vpow.pop %v5537
    %v5539 = vadd.f32 %v5536, 1.0
    %v5540 = vadd.f32 %v5538, 1.0
    %v5541 = vrcp.pop %v5539
    %v5542 = vmul.f32 %v5539, %v5541
    %v5543 = vsub.f32 1.0, %v5542
    %v5544 = vmul.f32 %v5541, %v5543
    %v5545 = vadd.f32 %v5541, %v5544
    %vm5546 = vweird.f32 %v5539
    %vm5547 = vweird.f32 %v5541
    %vm5548 = vmor %vm5546, %vm5547
    %v5549 = vsel %vm5548, %v5541, %v5545
    %v5550 = vand.u32 2147483647, %v5539
    %vm5551 = vcmp.eq.f32.partialorder %v5550, 8.507059e+37
    %v5552 = vand.u32 %v5539, 2147483648
    %v5553 = vor.u32 1.1754944e-38, %v5552
    %v5554 = vsel %vm5551, %v5553, %v5549
    %v5555 = vmul.f32 1.0, %v5554
    %v5556 = vrcp.pop %v5540
    %v5557 = vmul.f32 %v5540, %v5556
    %v5558 = vsub.f32 1.0, %v5557
    %v5559 = vmul.f32 %v5556, %v5558
    %v5560 = vadd.f32 %v5556, %v5559
    %vm5561 = vweird.f32 %v5540
    %vm5562 = vweird.f32 %v5556
    %vm5563 = vmor %vm5561, %vm5562
    %v5564 = vsel %vm5563, %v5556, %v5560
    %v5565 = vand.u32 2147483647, %v5540
    %vm5566 = vcmp.eq.f32.partialorder %v5565, 8.507059e+37
    %v5567 = vand.u32 %v5540, 2147483648
    %v5568 = vor.u32 1.1754944e-38, %v5567
    %v5569 = vsel %vm5566, %v5568, %v5564
    %v5570 = vmul.f32 1.0, %v5569
    %v5571 = vmul.f32 %v5515, %v4064
    %v5572 = vmul.f32 %v5530, %v4065
    %v5573 = vmul.f32 %v5477, %v5531
    %v5574 = vmul.f32 %v5492, %v5532
    %v5575 = vadd.f32 %v5571, %v5573
    %v5576 = vadd.f32 %v5572, %v5574
    %v5577 = vtanh.pop %v5575
    %v5578 = vtanh.pop %v5576
    %v5579 = vmul.f32 %v5555, %v5577
    %v5580 = vmul.f32 %v5570, %v5578
    %5581 = vmatpush.msra.mxu0 %v2849
    %5582 = vmatpush.msra.mxu0 %v2833
    %5583 = vmatpush.msra.mxu0 %v2817
    %5584 = vmatpush.msra.mxu0 %v2801
    %5585 = vmatpush.msra.mxu0 %v2785
    %5586 = vmatpush.msra.mxu0 %v2769
    %5587 = vmatpush.msra.mxu0 %v2753
    %5588 = vmatpush.msra.mxu0 %v2737
    %5589 = vmatpush.msra.mxu0 %v2721
    %5590 = vmatpush.msra.mxu0 %v2705
    %5591 = vmatpush.msra.mxu0 %v2689
    %5592 = vmatpush.msra.mxu0 %v2673
    %5593 = vmatpush.msra.mxu0 %v2657
    %5594 = vmatpush.msra.mxu0 %v2641
    %5595 = vmatpush.msra.mxu0 %v2625
    %5596 = vmatpush.msra.mxu0 %v2609
    %5597 = vmatmul.f32.gmra.mxu0 %v5579
    %v5598 = vpop.f32.mrf.mxu0
    %v5599 = vadd.f32 0.0, %v5598
    %5600 = vdwg.mxu0
    %5601 = vmatpush.msra.mxu0 %v3105
    %5602 = vmatpush.msra.mxu0 %v3089
    %5603 = vmatpush.msra.mxu0 %v3073
    %5604 = vmatpush.msra.mxu0 %v3057
    %5605 = vmatpush.msra.mxu0 %v3041
    %5606 = vmatpush.msra.mxu0 %v3025
    %5607 = vmatpush.msra.mxu0 %v3009
    %5608 = vmatpush.msra.mxu0 %v2993
    %5609 = vmatpush.msra.mxu0 %v2977
    %5610 = vmatpush.msra.mxu0 %v2961
    %5611 = vmatpush.msra.mxu0 %v2945
    %5612 = vmatpush.msra.mxu0 %v2929
    %5613 = vmatpush.msra.mxu0 %v2913
    %5614 = vmatpush.msra.mxu0 %v2897
    %5615 = vmatpush.msra.mxu0 %v2881
    %5616 = vmatpush.msra.mxu0 %v2865
    %5617 = vmatmul.f32.gmra.mxu0 %v5580
    %v5618 = vpop.f32.mrf.mxu0
    %v5619 = vadd.f32 %v5599, %v5618
    %5620 = vdwg.mxu0
    %5621 = vmatpush.msra.mxu0 %v2850
    %5622 = vmatpush.msra.mxu0 %v2834
    %5623 = vmatpush.msra.mxu0 %v2818
    %5624 = vmatpush.msra.mxu0 %v2802
    %5625 = vmatpush.msra.mxu0 %v2786
    %5626 = vmatpush.msra.mxu0 %v2770
    %5627 = vmatpush.msra.mxu0 %v2754
    %5628 = vmatpush.msra.mxu0 %v2738
    %5629 = vmatpush.msra.mxu0 %v2722
    %5630 = vmatpush.msra.mxu0 %v2706
    %5631 = vmatpush.msra.mxu0 %v2690
    %5632 = vmatpush.msra.mxu0 %v2674
    %5633 = vmatpush.msra.mxu0 %v2658
    %5634 = vmatpush.msra.mxu0 %v2642
    %5635 = vmatpush.msra.mxu0 %v2626
    %5636 = vmatpush.msra.mxu0 %v2610
    %5637 = vmatmul.f32.gmra.mxu0 %v5579
    %v5638 = vpop.f32.mrf.mxu0
    %v5639 = vadd.f32 0.0, %v5638
    %5640 = vdwg.mxu0
    %5641 = vmatpush.msra.mxu0 %v3106
    %5642 = vmatpush.msra.mxu0 %v3090
    %5643 = vmatpush.msra.mxu0 %v3074
    %5644 = vmatpush.msra.mxu0 %v3058
    %5645 = vmatpush.msra.mxu0 %v3042
    %5646 = vmatpush.msra.mxu0 %v3026
    %5647 = vmatpush.msra.mxu0 %v3010
    %5648 = vmatpush.msra.mxu0 %v2994
    %5649 = vmatpush.msra.mxu0 %v2978
    %5650 = vmatpush.msra.mxu0 %v2962
    %5651 = vmatpush.msra.mxu0 %v2946
    %5652 = vmatpush.msra.mxu0 %v2930
    %5653 = vmatpush.msra.mxu0 %v2914
    %5654 = vmatpush.msra.mxu0 %v2898
    %5655 = vmatpush.msra.mxu0 %v2882
    %5656 = vmatpush.msra.mxu0 %v2866
    %5657 = vmatmul.f32.gmra.mxu0 %v5580
    %v5658 = vpop.f32.mrf.mxu0
    %v5659 = vadd.f32 %v5639, %v5658
    %5660 = vdwg.mxu0
    %5661 = vmatpush.msra.mxu0 %v2851
    %5662 = vmatpush.msra.mxu0 %v2835
    %5663 = vmatpush.msra.mxu0 %v2819
    %5664 = vmatpush.msra.mxu0 %v2803
    %5665 = vmatpush.msra.mxu0 %v2787
    %5666 = vmatpush.msra.mxu0 %v2771
    %5667 = vmatpush.msra.mxu0 %v2755
    %5668 = vmatpush.msra.mxu0 %v2739
    %5669 = vmatpush.msra.mxu0 %v2723
    %5670 = vmatpush.msra.mxu0 %v2707
    %5671 = vmatpush.msra.mxu0 %v2691
    %5672 = vmatpush.msra.mxu0 %v2675
    %5673 = vmatpush.msra.mxu0 %v2659
    %5674 = vmatpush.msra.mxu0 %v2643
    %5675 = vmatpush.msra.mxu0 %v2627
    %5676 = vmatpush.msra.mxu0 %v2611
    %5677 = vmatmul.f32.gmra.mxu0 %v5579
    %v5678 = vpop.f32.mrf.mxu0
    %v5679 = vadd.f32 0.0, %v5678
    %5680 = vdwg.mxu0
    %5681 = vmatpush.msra.mxu0 %v3107
    %5682 = vmatpush.msra.mxu0 %v3091
    %5683 = vmatpush.msra.mxu0 %v3075
    %5684 = vmatpush.msra.mxu0 %v3059
    %5685 = vmatpush.msra.mxu0 %v3043
    %5686 = vmatpush.msra.mxu0 %v3027
    %5687 = vmatpush.msra.mxu0 %v3011
    %5688 = vmatpush.msra.mxu0 %v2995
    %5689 = vmatpush.msra.mxu0 %v2979
    %5690 = vmatpush.msra.mxu0 %v2963
    %5691 = vmatpush.msra.mxu0 %v2947
    %5692 = vmatpush.msra.mxu0 %v2931
    %5693 = vmatpush.msra.mxu0 %v2915
    %5694 = vmatpush.msra.mxu0 %v2899
    %5695 = vmatpush.msra.mxu0 %v2883
    %5696 = vmatpush.msra.mxu0 %v2867
    %5697 = vmatmul.f32.gmra.mxu0 %v5580
    %v5698 = vpop.f32.mrf.mxu0
    %v5699 = vadd.f32 %v5679, %v5698
    %5700 = vdwg.mxu0
    %5701 = vmatpush.msra.mxu0 %v2852
    %5702 = vmatpush.msra.mxu0 %v2836
    %5703 = vmatpush.msra.mxu0 %v2820
    %5704 = vmatpush.msra.mxu0 %v2804
    %5705 = vmatpush.msra.mxu0 %v2788
    %5706 = vmatpush.msra.mxu0 %v2772
    %5707 = vmatpush.msra.mxu0 %v2756
    %5708 = vmatpush.msra.mxu0 %v2740
    %5709 = vmatpush.msra.mxu0 %v2724
    %5710 = vmatpush.msra.mxu0 %v2708
    %5711 = vmatpush.msra.mxu0 %v2692
    %5712 = vmatpush.msra.mxu0 %v2676
    %5713 = vmatpush.msra.mxu0 %v2660
    %5714 = vmatpush.msra.mxu0 %v2644
    %5715 = vmatpush.msra.mxu0 %v2628
    %5716 = vmatpush.msra.mxu0 %v2612
    %5717 = vmatmul.f32.gmra.mxu0 %v5579
    %v5718 = vpop.f32.mrf.mxu0
    %v5719 = vadd.f32 0.0, %v5718
    %5720 = vdwg.mxu0
    %5721 = vmatpush.msra.mxu0 %v3108
    %5722 = vmatpush.msra.mxu0 %v3092
    %5723 = vmatpush.msra.mxu0 %v3076
    %5724 = vmatpush.msra.mxu0 %v3060
    %5725 = vmatpush.msra.mxu0 %v3044
    %5726 = vmatpush.msra.mxu0 %v3028
    %5727 = vmatpush.msra.mxu0 %v3012
    %5728 = vmatpush.msra.mxu0 %v2996
    %5729 = vmatpush.msra.mxu0 %v2980
    %5730 = vmatpush.msra.mxu0 %v2964
    %5731 = vmatpush.msra.mxu0 %v2948
    %5732 = vmatpush.msra.mxu0 %v2932
    %5733 = vmatpush.msra.mxu0 %v2916
    %5734 = vmatpush.msra.mxu0 %v2900
    %5735 = vmatpush.msra.mxu0 %v2884
    %5736 = vmatpush.msra.mxu0 %v2868
    %5737 = vmatmul.f32.gmra.mxu0 %v5580
    %v5738 = vpop.f32.mrf.mxu0
    %v5739 = vadd.f32 %v5719, %v5738
    %5740 = vdwg.mxu0
    %5741 = vmatpush.msra.mxu0 %v2853
    %5742 = vmatpush.msra.mxu0 %v2837
    %5743 = vmatpush.msra.mxu0 %v2821
    %5744 = vmatpush.msra.mxu0 %v2805
    %5745 = vmatpush.msra.mxu0 %v2789
    %5746 = vmatpush.msra.mxu0 %v2773
    %5747 = vmatpush.msra.mxu0 %v2757
    %5748 = vmatpush.msra.mxu0 %v2741
    %5749 = vmatpush.msra.mxu0 %v2725
    %5750 = vmatpush.msra.mxu0 %v2709
    %5751 = vmatpush.msra.mxu0 %v2693
    %5752 = vmatpush.msra.mxu0 %v2677
    %5753 = vmatpush.msra.mxu0 %v2661
    %5754 = vmatpush.msra.mxu0 %v2645
    %5755 = vmatpush.msra.mxu0 %v2629
    %5756 = vmatpush.msra.mxu0 %v2613
    %5757 = vmatmul.f32.gmra.mxu0 %v5579
    %v5758 = vpop.f32.mrf.mxu0
    %v5759 = vadd.f32 0.0, %v5758
    %5760 = vdwg.mxu0
    %5761 = vmatpush.msra.mxu0 %v3109
    %5762 = vmatpush.msra.mxu0 %v3093
    %5763 = vmatpush.msra.mxu0 %v3077
    %5764 = vmatpush.msra.mxu0 %v3061
    %5765 = vmatpush.msra.mxu0 %v3045
    %5766 = vmatpush.msra.mxu0 %v3029
    %5767 = vmatpush.msra.mxu0 %v3013
    %5768 = vmatpush.msra.mxu0 %v2997
    %5769 = vmatpush.msra.mxu0 %v2981
    %5770 = vmatpush.msra.mxu0 %v2965
    %5771 = vmatpush.msra.mxu0 %v2949
    %5772 = vmatpush.msra.mxu0 %v2933
    %5773 = vmatpush.msra.mxu0 %v2917
    %5774 = vmatpush.msra.mxu0 %v2901
    %5775 = vmatpush.msra.mxu0 %v2885
    %5776 = vmatpush.msra.mxu0 %v2869
    %5777 = vmatmul.f32.gmra.mxu0 %v5580
    %v5778 = vpop.f32.mrf.mxu0
    %v5779 = vadd.f32 %v5759, %v5778
    %5780 = vdwg.mxu0
    %5781 = vmatpush.msra.mxu0 %v2854
    %5782 = vmatpush.msra.mxu0 %v2838
    %5783 = vmatpush.msra.mxu0 %v2822
    %5784 = vmatpush.msra.mxu0 %v2806
    %5785 = vmatpush.msra.mxu0 %v2790
    %5786 = vmatpush.msra.mxu0 %v2774
    %5787 = vmatpush.msra.mxu0 %v2758
    %5788 = vmatpush.msra.mxu0 %v2742
    %5789 = vmatpush.msra.mxu0 %v2726
    %5790 = vmatpush.msra.mxu0 %v2710
    %5791 = vmatpush.msra.mxu0 %v2694
    %5792 = vmatpush.msra.mxu0 %v2678
    %5793 = vmatpush.msra.mxu0 %v2662
    %5794 = vmatpush.msra.mxu0 %v2646
    %5795 = vmatpush.msra.mxu0 %v2630
    %5796 = vmatpush.msra.mxu0 %v2614
    %5797 = vmatmul.f32.gmra.mxu0 %v5579
    %v5798 = vpop.f32.mrf.mxu0
    %v5799 = vadd.f32 0.0, %v5798
    %5800 = vdwg.mxu0
    %5801 = vmatpush.msra.mxu0 %v3110
    %5802 = vmatpush.msra.mxu0 %v3094
    %5803 = vmatpush.msra.mxu0 %v3078
    %5804 = vmatpush.msra.mxu0 %v3062
    %5805 = vmatpush.msra.mxu0 %v3046
    %5806 = vmatpush.msra.mxu0 %v3030
    %5807 = vmatpush.msra.mxu0 %v3014
    %5808 = vmatpush.msra.mxu0 %v2998
    %5809 = vmatpush.msra.mxu0 %v2982
    %5810 = vmatpush.msra.mxu0 %v2966
    %5811 = vmatpush.msra.mxu0 %v2950
    %5812 = vmatpush.msra.mxu0 %v2934
    %5813 = vmatpush.msra.mxu0 %v2918
    %5814 = vmatpush.msra.mxu0 %v2902
    %5815 = vmatpush.msra.mxu0 %v2886
    %5816 = vmatpush.msra.mxu0 %v2870
    %5817 = vmatmul.f32.gmra.mxu0 %v5580
    %v5818 = vpop.f32.mrf.mxu0
    %v5819 = vadd.f32 %v5799, %v5818
    %5820 = vdwg.mxu0
    %5821 = vmatpush.msra.mxu0 %v2855
    %5822 = vmatpush.msra.mxu0 %v2839
    %5823 = vmatpush.msra.mxu0 %v2823
    %5824 = vmatpush.msra.mxu0 %v2807
    %5825 = vmatpush.msra.mxu0 %v2791
    %5826 = vmatpush.msra.mxu0 %v2775
    %5827 = vmatpush.msra.mxu0 %v2759
    %5828 = vmatpush.msra.mxu0 %v2743
    %5829 = vmatpush.msra.mxu0 %v2727
    %5830 = vmatpush.msra.mxu0 %v2711
    %5831 = vmatpush.msra.mxu0 %v2695
    %5832 = vmatpush.msra.mxu0 %v2679
    %5833 = vmatpush.msra.mxu0 %v2663
    %5834 = vmatpush.msra.mxu0 %v2647
    %5835 = vmatpush.msra.mxu0 %v2631
    %5836 = vmatpush.msra.mxu0 %v2615
    %5837 = vmatmul.f32.gmra.mxu0 %v5579
    %v5838 = vpop.f32.mrf.mxu0
    %v5839 = vadd.f32 0.0, %v5838
    %5840 = vdwg.mxu0
    %5841 = vmatpush.msra.mxu0 %v3111
    %5842 = vmatpush.msra.mxu0 %v3095
    %5843 = vmatpush.msra.mxu0 %v3079
    %5844 = vmatpush.msra.mxu0 %v3063
    %5845 = vmatpush.msra.mxu0 %v3047
    %5846 = vmatpush.msra.mxu0 %v3031
    %5847 = vmatpush.msra.mxu0 %v3015
    %5848 = vmatpush.msra.mxu0 %v2999
    %5849 = vmatpush.msra.mxu0 %v2983
    %5850 = vmatpush.msra.mxu0 %v2967
    %5851 = vmatpush.msra.mxu0 %v2951
    %5852 = vmatpush.msra.mxu0 %v2935
    %5853 = vmatpush.msra.mxu0 %v2919
    %5854 = vmatpush.msra.mxu0 %v2903
    %5855 = vmatpush.msra.mxu0 %v2887
    %5856 = vmatpush.msra.mxu0 %v2871
    %5857 = vmatmul.f32.gmra.mxu0 %v5580
    %v5858 = vpop.f32.mrf.mxu0
    %v5859 = vadd.f32 %v5839, %v5858
    %5860 = vdwg.mxu0
    %5861 = vmatpush.msra.mxu0 %v2856
    %5862 = vmatpush.msra.mxu0 %v2840
    %5863 = vmatpush.msra.mxu0 %v2824
    %5864 = vmatpush.msra.mxu0 %v2808
    %5865 = vmatpush.msra.mxu0 %v2792
    %5866 = vmatpush.msra.mxu0 %v2776
    %5867 = vmatpush.msra.mxu0 %v2760
    %5868 = vmatpush.msra.mxu0 %v2744
    %5869 = vmatpush.msra.mxu0 %v2728
    %5870 = vmatpush.msra.mxu0 %v2712
    %5871 = vmatpush.msra.mxu0 %v2696
    %5872 = vmatpush.msra.mxu0 %v2680
    %5873 = vmatpush.msra.mxu0 %v2664
    %5874 = vmatpush.msra.mxu0 %v2648
    %5875 = vmatpush.msra.mxu0 %v2632
    %5876 = vmatpush.msra.mxu0 %v2616
    %5877 = vmatmul.f32.gmra.mxu0 %v5579
    %v5878 = vpop.f32.mrf.mxu0
    %v5879 = vadd.f32 0.0, %v5878
    %5880 = vdwg.mxu0
    %5881 = vmatpush.msra.mxu0 %v3112
    %5882 = vmatpush.msra.mxu0 %v3096
    %5883 = vmatpush.msra.mxu0 %v3080
    %5884 = vmatpush.msra.mxu0 %v3064
    %5885 = vmatpush.msra.mxu0 %v3048
    %5886 = vmatpush.msra.mxu0 %v3032
    %5887 = vmatpush.msra.mxu0 %v3016
    %5888 = vmatpush.msra.mxu0 %v3000
    %5889 = vmatpush.msra.mxu0 %v2984
    %5890 = vmatpush.msra.mxu0 %v2968
    %5891 = vmatpush.msra.mxu0 %v2952
    %5892 = vmatpush.msra.mxu0 %v2936
    %5893 = vmatpush.msra.mxu0 %v2920
    %5894 = vmatpush.msra.mxu0 %v2904
    %5895 = vmatpush.msra.mxu0 %v2888
    %5896 = vmatpush.msra.mxu0 %v2872
    %5897 = vmatmul.f32.gmra.mxu0 %v5580
    %v5898 = vpop.f32.mrf.mxu0
    %v5899 = vadd.f32 %v5879, %v5898
    %5900 = vdwg.mxu0
    %5901 = vmatpush.msra.mxu0 %v2857
    %5902 = vmatpush.msra.mxu0 %v2841
    %5903 = vmatpush.msra.mxu0 %v2825
    %5904 = vmatpush.msra.mxu0 %v2809
    %5905 = vmatpush.msra.mxu0 %v2793
    %5906 = vmatpush.msra.mxu0 %v2777
    %5907 = vmatpush.msra.mxu0 %v2761
    %5908 = vmatpush.msra.mxu0 %v2745
    %5909 = vmatpush.msra.mxu0 %v2729
    %5910 = vmatpush.msra.mxu0 %v2713
    %5911 = vmatpush.msra.mxu0 %v2697
    %5912 = vmatpush.msra.mxu0 %v2681
    %5913 = vmatpush.msra.mxu0 %v2665
    %5914 = vmatpush.msra.mxu0 %v2649
    %5915 = vmatpush.msra.mxu0 %v2633
    %5916 = vmatpush.msra.mxu0 %v2617
    %5917 = vmatmul.f32.gmra.mxu0 %v5579
    %v5918 = vpop.f32.mrf.mxu0
    %v5919 = vadd.f32 0.0, %v5918
    %5920 = vdwg.mxu0
    %5921 = vmatpush.msra.mxu0 %v3113
    %5922 = vmatpush.msra.mxu0 %v3097
    %5923 = vmatpush.msra.mxu0 %v3081
    %5924 = vmatpush.msra.mxu0 %v3065
    %5925 = vmatpush.msra.mxu0 %v3049
    %5926 = vmatpush.msra.mxu0 %v3033
    %5927 = vmatpush.msra.mxu0 %v3017
    %5928 = vmatpush.msra.mxu0 %v3001
    %5929 = vmatpush.msra.mxu0 %v2985
    %5930 = vmatpush.msra.mxu0 %v2969
    %5931 = vmatpush.msra.mxu0 %v2953
    %5932 = vmatpush.msra.mxu0 %v2937
    %5933 = vmatpush.msra.mxu0 %v2921
    %5934 = vmatpush.msra.mxu0 %v2905
    %5935 = vmatpush.msra.mxu0 %v2889
    %5936 = vmatpush.msra.mxu0 %v2873
    %5937 = vmatmul.f32.gmra.mxu0 %v5580
    %v5938 = vpop.f32.mrf.mxu0
    %v5939 = vadd.f32 %v5919, %v5938
    %5940 = vdwg.mxu0
    %5941 = vmatpush.msra.mxu0 %v2858
    %5942 = vmatpush.msra.mxu0 %v2842
    %5943 = vmatpush.msra.mxu0 %v2826
    %5944 = vmatpush.msra.mxu0 %v2810
    %5945 = vmatpush.msra.mxu0 %v2794
    %5946 = vmatpush.msra.mxu0 %v2778
    %5947 = vmatpush.msra.mxu0 %v2762
    %5948 = vmatpush.msra.mxu0 %v2746
    %5949 = vmatpush.msra.mxu0 %v2730
    %5950 = vmatpush.msra.mxu0 %v2714
    %5951 = vmatpush.msra.mxu0 %v2698
    %5952 = vmatpush.msra.mxu0 %v2682
    %5953 = vmatpush.msra.mxu0 %v2666
    %5954 = vmatpush.msra.mxu0 %v2650
    %5955 = vmatpush.msra.mxu0 %v2634
    %5956 = vmatpush.msra.mxu0 %v2618
    %5957 = vmatmul.f32.gmra.mxu0 %v5579
    %v5958 = vpop.f32.mrf.mxu0
    %v5959 = vadd.f32 0.0, %v5958
    %5960 = vdwg.mxu0
    %5961 = vmatpush.msra.mxu0 %v3114
    %5962 = vmatpush.msra.mxu0 %v3098
    %5963 = vmatpush.msra.mxu0 %v3082
    %5964 = vmatpush.msra.mxu0 %v3066
    %5965 = vmatpush.msra.mxu0 %v3050
    %5966 = vmatpush.msra.mxu0 %v3034
    %5967 = vmatpush.msra.mxu0 %v3018
    %5968 = vmatpush.msra.mxu0 %v3002
    %5969 = vmatpush.msra.mxu0 %v2986
    %5970 = vmatpush.msra.mxu0 %v2970
    %5971 = vmatpush.msra.mxu0 %v2954
    %5972 = vmatpush.msra.mxu0 %v2938
    %5973 = vmatpush.msra.mxu0 %v2922
    %5974 = vmatpush.msra.mxu0 %v2906
    %5975 = vmatpush.msra.mxu0 %v2890
    %5976 = vmatpush.msra.mxu0 %v2874
    %5977 = vmatmul.f32.gmra.mxu0 %v5580
    %v5978 = vpop.f32.mrf.mxu0
    %v5979 = vadd.f32 %v5959, %v5978
    %5980 = vdwg.mxu0
    %5981 = vmatpush.msra.mxu0 %v2859
    %5982 = vmatpush.msra.mxu0 %v2843
    %5983 = vmatpush.msra.mxu0 %v2827
    %5984 = vmatpush.msra.mxu0 %v2811
    %5985 = vmatpush.msra.mxu0 %v2795
    %5986 = vmatpush.msra.mxu0 %v2779
    %5987 = vmatpush.msra.mxu0 %v2763
    %5988 = vmatpush.msra.mxu0 %v2747
    %5989 = vmatpush.msra.mxu0 %v2731
    %5990 = vmatpush.msra.mxu0 %v2715
    %5991 = vmatpush.msra.mxu0 %v2699
    %5992 = vmatpush.msra.mxu0 %v2683
    %5993 = vmatpush.msra.mxu0 %v2667
    %5994 = vmatpush.msra.mxu0 %v2651
    %5995 = vmatpush.msra.mxu0 %v2635
    %5996 = vmatpush.msra.mxu0 %v2619
    %5997 = vmatmul.f32.gmra.mxu0 %v5579
    %v5998 = vpop.f32.mrf.mxu0
    %v5999 = vadd.f32 0.0, %v5998
    %6000 = vdwg.mxu0
    %6001 = vmatpush.msra.mxu0 %v3115
    %6002 = vmatpush.msra.mxu0 %v3099
    %6003 = vmatpush.msra.mxu0 %v3083
    %6004 = vmatpush.msra.mxu0 %v3067
    %6005 = vmatpush.msra.mxu0 %v3051
    %6006 = vmatpush.msra.mxu0 %v3035
    %6007 = vmatpush.msra.mxu0 %v3019
    %6008 = vmatpush.msra.mxu0 %v3003
    %6009 = vmatpush.msra.mxu0 %v2987
    %6010 = vmatpush.msra.mxu0 %v2971
    %6011 = vmatpush.msra.mxu0 %v2955
    %6012 = vmatpush.msra.mxu0 %v2939
    %6013 = vmatpush.msra.mxu0 %v2923
    %6014 = vmatpush.msra.mxu0 %v2907
    %6015 = vmatpush.msra.mxu0 %v2891
    %6016 = vmatpush.msra.mxu0 %v2875
    %6017 = vmatmul.f32.gmra.mxu0 %v5580
    %v6018 = vpop.f32.mrf.mxu0
    %v6019 = vadd.f32 %v5999, %v6018
    %6020 = vdwg.mxu0
    %6021 = vmatpush.msra.mxu0 %v2860
    %6022 = vmatpush.msra.mxu0 %v2844
    %6023 = vmatpush.msra.mxu0 %v2828
    %6024 = vmatpush.msra.mxu0 %v2812
    %6025 = vmatpush.msra.mxu0 %v2796
    %6026 = vmatpush.msra.mxu0 %v2780
    %6027 = vmatpush.msra.mxu0 %v2764
    %6028 = vmatpush.msra.mxu0 %v2748
    %6029 = vmatpush.msra.mxu0 %v2732
    %6030 = vmatpush.msra.mxu0 %v2716
    %6031 = vmatpush.msra.mxu0 %v2700
    %6032 = vmatpush.msra.mxu0 %v2684
    %6033 = vmatpush.msra.mxu0 %v2668
    %6034 = vmatpush.msra.mxu0 %v2652
    %6035 = vmatpush.msra.mxu0 %v2636
    %6036 = vmatpush.msra.mxu0 %v2620
    %6037 = vmatmul.f32.gmra.mxu0 %v5579
    %v6038 = vpop.f32.mrf.mxu0
    %v6039 = vadd.f32 0.0, %v6038
    %6040 = vdwg.mxu0
    %6041 = vmatpush.msra.mxu0 %v3116
    %6042 = vmatpush.msra.mxu0 %v3100
    %6043 = vmatpush.msra.mxu0 %v3084
    %6044 = vmatpush.msra.mxu0 %v3068
    %6045 = vmatpush.msra.mxu0 %v3052
    %6046 = vmatpush.msra.mxu0 %v3036
    %6047 = vmatpush.msra.mxu0 %v3020
    %6048 = vmatpush.msra.mxu0 %v3004
    %6049 = vmatpush.msra.mxu0 %v2988
    %6050 = vmatpush.msra.mxu0 %v2972
    %6051 = vmatpush.msra.mxu0 %v2956
    %6052 = vmatpush.msra.mxu0 %v2940
    %6053 = vmatpush.msra.mxu0 %v2924
    %6054 = vmatpush.msra.mxu0 %v2908
    %6055 = vmatpush.msra.mxu0 %v2892
    %6056 = vmatpush.msra.mxu0 %v2876
    %6057 = vmatmul.f32.gmra.mxu0 %v5580
    %v6058 = vpop.f32.mrf.mxu0
    %v6059 = vadd.f32 %v6039, %v6058
    %6060 = vdwg.mxu0
    %6061 = vmatpush.msra.mxu0 %v2861
    %6062 = vmatpush.msra.mxu0 %v2845
    %6063 = vmatpush.msra.mxu0 %v2829
    %6064 = vmatpush.msra.mxu0 %v2813
    %6065 = vmatpush.msra.mxu0 %v2797
    %6066 = vmatpush.msra.mxu0 %v2781
    %6067 = vmatpush.msra.mxu0 %v2765
    %6068 = vmatpush.msra.mxu0 %v2749
    %6069 = vmatpush.msra.mxu0 %v2733
    %6070 = vmatpush.msra.mxu0 %v2717
    %6071 = vmatpush.msra.mxu0 %v2701
    %6072 = vmatpush.msra.mxu0 %v2685
    %6073 = vmatpush.msra.mxu0 %v2669
    %6074 = vmatpush.msra.mxu0 %v2653
    %6075 = vmatpush.msra.mxu0 %v2637
    %6076 = vmatpush.msra.mxu0 %v2621
    %6077 = vmatmul.f32.gmra.mxu0 %v5579
    %v6078 = vpop.f32.mrf.mxu0
    %v6079 = vadd.f32 0.0, %v6078
    %6080 = vdwg.mxu0
    %6081 = vmatpush.msra.mxu0 %v3117
    %6082 = vmatpush.msra.mxu0 %v3101
    %6083 = vmatpush.msra.mxu0 %v3085
    %6084 = vmatpush.msra.mxu0 %v3069
    %6085 = vmatpush.msra.mxu0 %v3053
    %6086 = vmatpush.msra.mxu0 %v3037
    %6087 = vmatpush.msra.mxu0 %v3021
    %6088 = vmatpush.msra.mxu0 %v3005
    %6089 = vmatpush.msra.mxu0 %v2989
    %6090 = vmatpush.msra.mxu0 %v2973
    %6091 = vmatpush.msra.mxu0 %v2957
    %6092 = vmatpush.msra.mxu0 %v2941
    %6093 = vmatpush.msra.mxu0 %v2925
    %6094 = vmatpush.msra.mxu0 %v2909
    %6095 = vmatpush.msra.mxu0 %v2893
    %6096 = vmatpush.msra.mxu0 %v2877
    %6097 = vmatmul.f32.gmra.mxu0 %v5580
    %v6098 = vpop.f32.mrf.mxu0
    %v6099 = vadd.f32 %v6079, %v6098
    %6100 = vdwg.mxu0
    %6101 = vmatpush.msra.mxu0 %v2862
    %6102 = vmatpush.msra.mxu0 %v2846
    %6103 = vmatpush.msra.mxu0 %v2830
    %6104 = vmatpush.msra.mxu0 %v2814
    %6105 = vmatpush.msra.mxu0 %v2798
    %6106 = vmatpush.msra.mxu0 %v2782
    %6107 = vmatpush.msra.mxu0 %v2766
    %6108 = vmatpush.msra.mxu0 %v2750
    %6109 = vmatpush.msra.mxu0 %v2734
    %6110 = vmatpush.msra.mxu0 %v2718
    %6111 = vmatpush.msra.mxu0 %v2702
    %6112 = vmatpush.msra.mxu0 %v2686
    %6113 = vmatpush.msra.mxu0 %v2670
    %6114 = vmatpush.msra.mxu0 %v2654
    %6115 = vmatpush.msra.mxu0 %v2638
    %6116 = vmatpush.msra.mxu0 %v2622
    %6117 = vmatmul.f32.gmra.mxu0 %v5579
    %v6118 = vpop.f32.mrf.mxu0
    %v6119 = vadd.f32 0.0, %v6118
    %6120 = vdwg.mxu0
    %6121 = vmatpush.msra.mxu0 %v3118
    %6122 = vmatpush.msra.mxu0 %v3102
    %6123 = vmatpush.msra.mxu0 %v3086
    %6124 = vmatpush.msra.mxu0 %v3070
    %6125 = vmatpush.msra.mxu0 %v3054
    %6126 = vmatpush.msra.mxu0 %v3038
    %6127 = vmatpush.msra.mxu0 %v3022
    %6128 = vmatpush.msra.mxu0 %v3006
    %6129 = vmatpush.msra.mxu0 %v2990
    %6130 = vmatpush.msra.mxu0 %v2974
    %6131 = vmatpush.msra.mxu0 %v2958
    %6132 = vmatpush.msra.mxu0 %v2942
    %6133 = vmatpush.msra.mxu0 %v2926
    %6134 = vmatpush.msra.mxu0 %v2910
    %6135 = vmatpush.msra.mxu0 %v2894
    %6136 = vmatpush.msra.mxu0 %v2878
    %6137 = vmatmul.f32.gmra.mxu0 %v5580
    %v6138 = vpop.f32.mrf.mxu0
    %v6139 = vadd.f32 %v6119, %v6138
    %6140 = vdwg.mxu0
    %6141 = vmatpush.msra.mxu0 %v2863
    %6142 = vmatpush.msra.mxu0 %v2847
    %6143 = vmatpush.msra.mxu0 %v2831
    %6144 = vmatpush.msra.mxu0 %v2815
    %6145 = vmatpush.msra.mxu0 %v2799
    %6146 = vmatpush.msra.mxu0 %v2783
    %6147 = vmatpush.msra.mxu0 %v2767
    %6148 = vmatpush.msra.mxu0 %v2751
    %6149 = vmatpush.msra.mxu0 %v2735
    %6150 = vmatpush.msra.mxu0 %v2719
    %6151 = vmatpush.msra.mxu0 %v2703
    %6152 = vmatpush.msra.mxu0 %v2687
    %6153 = vmatpush.msra.mxu0 %v2671
    %6154 = vmatpush.msra.mxu0 %v2655
    %6155 = vmatpush.msra.mxu0 %v2639
    %6156 = vmatpush.msra.mxu0 %v2623
    %6157 = vmatmul.f32.gmra.mxu0 %v5579
    %v6158 = vpop.f32.mrf.mxu0
    %v6159 = vadd.f32 0.0, %v6158
    %6160 = vdwg.mxu0
    %6161 = vmatpush.msra.mxu0 %v3119
    %6162 = vmatpush.msra.mxu0 %v3103
    %6163 = vmatpush.msra.mxu0 %v3087
    %6164 = vmatpush.msra.mxu0 %v3071
    %6165 = vmatpush.msra.mxu0 %v3055
    %6166 = vmatpush.msra.mxu0 %v3039
    %6167 = vmatpush.msra.mxu0 %v3023
    %6168 = vmatpush.msra.mxu0 %v3007
    %6169 = vmatpush.msra.mxu0 %v2991
    %6170 = vmatpush.msra.mxu0 %v2975
    %6171 = vmatpush.msra.mxu0 %v2959
    %6172 = vmatpush.msra.mxu0 %v2943
    %6173 = vmatpush.msra.mxu0 %v2927
    %6174 = vmatpush.msra.mxu0 %v2911
    %6175 = vmatpush.msra.mxu0 %v2895
    %6176 = vmatpush.msra.mxu0 %v2879
    %6177 = vmatmul.f32.gmra.mxu0 %v5580
    %v6178 = vpop.f32.mrf.mxu0
    %v6179 = vadd.f32 %v6159, %v6178
    %6180 = vdwg.mxu0
    %6181 = vmatpush.msra.mxu0 %v2864
    %6182 = vmatpush.msra.mxu0 %v2848
    %6183 = vmatpush.msra.mxu0 %v2832
    %6184 = vmatpush.msra.mxu0 %v2816
    %6185 = vmatpush.msra.mxu0 %v2800
    %6186 = vmatpush.msra.mxu0 %v2784
    %6187 = vmatpush.msra.mxu0 %v2768
    %6188 = vmatpush.msra.mxu0 %v2752
    %6189 = vmatpush.msra.mxu0 %v2736
    %6190 = vmatpush.msra.mxu0 %v2720
    %6191 = vmatpush.msra.mxu0 %v2704
    %6192 = vmatpush.msra.mxu0 %v2688
    %6193 = vmatpush.msra.mxu0 %v2672
    %6194 = vmatpush.msra.mxu0 %v2656
    %6195 = vmatpush.msra.mxu0 %v2640
    %6196 = vmatpush.msra.mxu0 %v2624
    %6197 = vmatmul.f32.gmra.mxu0 %v5579
    %v6198 = vpop.f32.mrf.mxu0
    %v6199 = vadd.f32 0.0, %v6198
    %6200 = vdwg.mxu0
    %6201 = vmatpush.msra.mxu0 %v3120
    %6202 = vmatpush.msra.mxu0 %v3104
    %6203 = vmatpush.msra.mxu0 %v3088
    %6204 = vmatpush.msra.mxu0 %v3072
    %6205 = vmatpush.msra.mxu0 %v3056
    %6206 = vmatpush.msra.mxu0 %v3040
    %6207 = vmatpush.msra.mxu0 %v3024
    %6208 = vmatpush.msra.mxu0 %v3008
    %6209 = vmatpush.msra.mxu0 %v2992
    %6210 = vmatpush.msra.mxu0 %v2976
    %6211 = vmatpush.msra.mxu0 %v2960
    %6212 = vmatpush.msra.mxu0 %v2944
    %6213 = vmatpush.msra.mxu0 %v2928
    %6214 = vmatpush.msra.mxu0 %v2912
    %6215 = vmatpush.msra.mxu0 %v2896
    %6216 = vmatpush.msra.mxu0 %v2880
    %6217 = vmatmul.f32.gmra.mxu0 %v5580
    %v6218 = vpop.f32.mrf.mxu0
    %v6219 = vadd.f32 %v6199, %v6218
    %6220 = vdwg.mxu0
    %v6221 = vadd.f32 %v5939, %v3762
    %v6222 = vadd.f32 %v5979, %v3763
    %v6223 = vadd.f32 %v6019, %v3764
    %v6224 = vadd.f32 %v6059, %v3765
    %v6225 = vadd.f32 %v6099, %v3766
    %v6226 = vadd.f32 %v6139, %v3767
    %v6227 = vadd.f32 %v6179, %v3768
    %v6228 = vadd.f32 %v6219, %v3769
    %6229 = vmatpush.msra.mxu0 %v4841
    %6230 = vmatpush.msra.mxu0 %v4833
    %6231 = vmatpush.msra.mxu0 %v4825
    %6232 = vmatpush.msra.mxu0 %v4817
    %6233 = vmatpush.msra.mxu0 %v4809
    %6234 = vmatpush.msra.mxu0 %v4801
    %6235 = vmatpush.msra.mxu0 %v4793
    %6236 = vmatpush.msra.mxu0 %v4785
    %6237 = vmatpush.msra.mxu0 %v4777
    %6238 = vmatpush.msra.mxu0 %v4769
    %6239 = vmatpush.msra.mxu0 %v4761
    %6240 = vmatpush.msra.mxu0 %v4753
    %6241 = vmatpush.msra.mxu0 %v4745
    %6242 = vmatpush.msra.mxu0 %v4737
    %6243 = vmatpush.msra.mxu0 %v4729
    %6244 = vmatpush.msra.mxu0 %v4721
    %6245 = vmatmul.f32.gmra.mxu0 %v5429
    %v6246 = vpop.f32.mrf.mxu0
    %v6247 = vadd.f32 0.0, %v6246
    %6248 = vdwg.mxu0
    %6249 = vmatpush.msra.mxu0 %v4969
    %6250 = vmatpush.msra.mxu0 %v4961
    %6251 = vmatpush.msra.mxu0 %v4953
    %6252 = vmatpush.msra.mxu0 %v4945
    %6253 = vmatpush.msra.mxu0 %v4937
    %6254 = vmatpush.msra.mxu0 %v4929
    %6255 = vmatpush.msra.mxu0 %v4921
    %6256 = vmatpush.msra.mxu0 %v4913
    %6257 = vmatpush.msra.mxu0 %v4905
    %6258 = vmatpush.msra.mxu0 %v4897
    %6259 = vmatpush.msra.mxu0 %v4889
    %6260 = vmatpush.msra.mxu0 %v4881
    %6261 = vmatpush.msra.mxu0 %v4873
    %6262 = vmatpush.msra.mxu0 %v4865
    %6263 = vmatpush.msra.mxu0 %v4857
    %6264 = vmatpush.msra.mxu0 %v4849
    %6265 = vmatmul.f32.gmra.mxu0 %v5430
    %v6266 = vpop.f32.mrf.mxu0
    %v6267 = vadd.f32 %v6247, %v6266
    %6268 = vdwg.mxu0
    %6269 = vmatpush.msra.mxu0 %v4842
    %6270 = vmatpush.msra.mxu0 %v4834
    %6271 = vmatpush.msra.mxu0 %v4826
    %6272 = vmatpush.msra.mxu0 %v4818
    %6273 = vmatpush.msra.mxu0 %v4810
    %6274 = vmatpush.msra.mxu0 %v4802
    %6275 = vmatpush.msra.mxu0 %v4794
    %6276 = vmatpush.msra.mxu0 %v4786
    %6277 = vmatpush.msra.mxu0 %v4778
    %6278 = vmatpush.msra.mxu0 %v4770
    %6279 = vmatpush.msra.mxu0 %v4762
    %6280 = vmatpush.msra.mxu0 %v4754
    %6281 = vmatpush.msra.mxu0 %v4746
    %6282 = vmatpush.msra.mxu0 %v4738
    %6283 = vmatpush.msra.mxu0 %v4730
    %6284 = vmatpush.msra.mxu0 %v4722
    %6285 = vmatmul.f32.gmra.mxu0 %v5429
    %v6286 = vpop.f32.mrf.mxu0
    %v6287 = vadd.f32 0.0, %v6286
    %6288 = vdwg.mxu0
    %6289 = vmatpush.msra.mxu0 %v4970
    %6290 = vmatpush.msra.mxu0 %v4962
    %6291 = vmatpush.msra.mxu0 %v4954
    %6292 = vmatpush.msra.mxu0 %v4946
    %6293 = vmatpush.msra.mxu0 %v4938
    %6294 = vmatpush.msra.mxu0 %v4930
    %6295 = vmatpush.msra.mxu0 %v4922
    %6296 = vmatpush.msra.mxu0 %v4914
    %6297 = vmatpush.msra.mxu0 %v4906
    %6298 = vmatpush.msra.mxu0 %v4898
    %6299 = vmatpush.msra.mxu0 %v4890
    %6300 = vmatpush.msra.mxu0 %v4882
    %6301 = vmatpush.msra.mxu0 %v4874
    %6302 = vmatpush.msra.mxu0 %v4866
    %6303 = vmatpush.msra.mxu0 %v4858
    %6304 = vmatpush.msra.mxu0 %v4850
    %6305 = vmatmul.f32.gmra.mxu0 %v5430
    %v6306 = vpop.f32.mrf.mxu0
    %v6307 = vadd.f32 %v6287, %v6306
    %6308 = vdwg.mxu0
    %6309 = vmatpush.msra.mxu0 %v4843
    %6310 = vmatpush.msra.mxu0 %v4835
    %6311 = vmatpush.msra.mxu0 %v4827
    %6312 = vmatpush.msra.mxu0 %v4819
    %6313 = vmatpush.msra.mxu0 %v4811
    %6314 = vmatpush.msra.mxu0 %v4803
    %6315 = vmatpush.msra.mxu0 %v4795
    %6316 = vmatpush.msra.mxu0 %v4787
    %6317 = vmatpush.msra.mxu0 %v4779
    %6318 = vmatpush.msra.mxu0 %v4771
    %6319 = vmatpush.msra.mxu0 %v4763
    %6320 = vmatpush.msra.mxu0 %v4755
    %6321 = vmatpush.msra.mxu0 %v4747
    %6322 = vmatpush.msra.mxu0 %v4739
    %6323 = vmatpush.msra.mxu0 %v4731
    %6324 = vmatpush.msra.mxu0 %v4723
    %6325 = vmatmul.f32.gmra.mxu0 %v5429
    %v6326 = vpop.f32.mrf.mxu0
    %v6327 = vadd.f32 0.0, %v6326
    %6328 = vdwg.mxu0
    %6329 = vmatpush.msra.mxu0 %v4971
    %6330 = vmatpush.msra.mxu0 %v4963
    %6331 = vmatpush.msra.mxu0 %v4955
    %6332 = vmatpush.msra.mxu0 %v4947
    %6333 = vmatpush.msra.mxu0 %v4939
    %6334 = vmatpush.msra.mxu0 %v4931
    %6335 = vmatpush.msra.mxu0 %v4923
    %6336 = vmatpush.msra.mxu0 %v4915
    %6337 = vmatpush.msra.mxu0 %v4907
    %6338 = vmatpush.msra.mxu0 %v4899
    %6339 = vmatpush.msra.mxu0 %v4891
    %6340 = vmatpush.msra.mxu0 %v4883
    %6341 = vmatpush.msra.mxu0 %v4875
    %6342 = vmatpush.msra.mxu0 %v4867
    %6343 = vmatpush.msra.mxu0 %v4859
    %6344 = vmatpush.msra.mxu0 %v4851
    %6345 = vmatmul.f32.gmra.mxu0 %v5430
    %v6346 = vpop.f32.mrf.mxu0
    %v6347 = vadd.f32 %v6327, %v6346
    %6348 = vdwg.mxu0
    %6349 = vmatpush.msra.mxu0 %v4844
    %6350 = vmatpush.msra.mxu0 %v4836
    %6351 = vmatpush.msra.mxu0 %v4828
    %6352 = vmatpush.msra.mxu0 %v4820
    %6353 = vmatpush.msra.mxu0 %v4812
    %6354 = vmatpush.msra.mxu0 %v4804
    %6355 = vmatpush.msra.mxu0 %v4796
    %6356 = vmatpush.msra.mxu0 %v4788
    %6357 = vmatpush.msra.mxu0 %v4780
    %6358 = vmatpush.msra.mxu0 %v4772
    %6359 = vmatpush.msra.mxu0 %v4764
    %6360 = vmatpush.msra.mxu0 %v4756
    %6361 = vmatpush.msra.mxu0 %v4748
    %6362 = vmatpush.msra.mxu0 %v4740
    %6363 = vmatpush.msra.mxu0 %v4732
    %6364 = vmatpush.msra.mxu0 %v4724
    %6365 = vmatmul.f32.gmra.mxu0 %v5429
    %v6366 = vpop.f32.mrf.mxu0
    %v6367 = vadd.f32 0.0, %v6366
    %6368 = vdwg.mxu0
    %6369 = vmatpush.msra.mxu0 %v4972
    %6370 = vmatpush.msra.mxu0 %v4964
    %6371 = vmatpush.msra.mxu0 %v4956
    %6372 = vmatpush.msra.mxu0 %v4948
    %6373 = vmatpush.msra.mxu0 %v4940
    %6374 = vmatpush.msra.mxu0 %v4932
    %6375 = vmatpush.msra.mxu0 %v4924
    %6376 = vmatpush.msra.mxu0 %v4916
    %6377 = vmatpush.msra.mxu0 %v4908
    %6378 = vmatpush.msra.mxu0 %v4900
    %6379 = vmatpush.msra.mxu0 %v4892
    %6380 = vmatpush.msra.mxu0 %v4884
    %6381 = vmatpush.msra.mxu0 %v4876
    %6382 = vmatpush.msra.mxu0 %v4868
    %6383 = vmatpush.msra.mxu0 %v4860
    %6384 = vmatpush.msra.mxu0 %v4852
    %6385 = vmatmul.f32.gmra.mxu0 %v5430
    %v6386 = vpop.f32.mrf.mxu0
    %v6387 = vadd.f32 %v6367, %v6386
    %6388 = vdwg.mxu0
    %6389 = vmatpush.msra.mxu0 %v4845
    %6390 = vmatpush.msra.mxu0 %v4837
    %6391 = vmatpush.msra.mxu0 %v4829
    %6392 = vmatpush.msra.mxu0 %v4821
    %6393 = vmatpush.msra.mxu0 %v4813
    %6394 = vmatpush.msra.mxu0 %v4805
    %6395 = vmatpush.msra.mxu0 %v4797
    %6396 = vmatpush.msra.mxu0 %v4789
    %6397 = vmatpush.msra.mxu0 %v4781
    %6398 = vmatpush.msra.mxu0 %v4773
    %6399 = vmatpush.msra.mxu0 %v4765
    %6400 = vmatpush.msra.mxu0 %v4757
    %6401 = vmatpush.msra.mxu0 %v4749
    %6402 = vmatpush.msra.mxu0 %v4741
    %6403 = vmatpush.msra.mxu0 %v4733
    %6404 = vmatpush.msra.mxu0 %v4725
    %6405 = vmatmul.f32.gmra.mxu0 %v5429
    %v6406 = vpop.f32.mrf.mxu0
    %v6407 = vadd.f32 0.0, %v6406
    %6408 = vdwg.mxu0
    %6409 = vmatpush.msra.mxu0 %v4973
    %6410 = vmatpush.msra.mxu0 %v4965
    %6411 = vmatpush.msra.mxu0 %v4957
    %6412 = vmatpush.msra.mxu0 %v4949
    %6413 = vmatpush.msra.mxu0 %v4941
    %6414 = vmatpush.msra.mxu0 %v4933
    %6415 = vmatpush.msra.mxu0 %v4925
    %6416 = vmatpush.msra.mxu0 %v4917
    %6417 = vmatpush.msra.mxu0 %v4909
    %6418 = vmatpush.msra.mxu0 %v4901
    %6419 = vmatpush.msra.mxu0 %v4893
    %6420 = vmatpush.msra.mxu0 %v4885
    %6421 = vmatpush.msra.mxu0 %v4877
    %6422 = vmatpush.msra.mxu0 %v4869
    %6423 = vmatpush.msra.mxu0 %v4861
    %6424 = vmatpush.msra.mxu0 %v4853
    %6425 = vmatmul.f32.gmra.mxu0 %v5430
    %v6426 = vpop.f32.mrf.mxu0
    %v6427 = vadd.f32 %v6407, %v6426
    %6428 = vdwg.mxu0
    %6429 = vmatpush.msra.mxu0 %v4846
    %6430 = vmatpush.msra.mxu0 %v4838
    %6431 = vmatpush.msra.mxu0 %v4830
    %6432 = vmatpush.msra.mxu0 %v4822
    %6433 = vmatpush.msra.mxu0 %v4814
    %6434 = vmatpush.msra.mxu0 %v4806
    %6435 = vmatpush.msra.mxu0 %v4798
    %6436 = vmatpush.msra.mxu0 %v4790
    %6437 = vmatpush.msra.mxu0 %v4782
    %6438 = vmatpush.msra.mxu0 %v4774
    %6439 = vmatpush.msra.mxu0 %v4766
    %6440 = vmatpush.msra.mxu0 %v4758
    %6441 = vmatpush.msra.mxu0 %v4750
    %6442 = vmatpush.msra.mxu0 %v4742
    %6443 = vmatpush.msra.mxu0 %v4734
    %6444 = vmatpush.msra.mxu0 %v4726
    %6445 = vmatmul.f32.gmra.mxu0 %v5429
    %v6446 = vpop.f32.mrf.mxu0
    %v6447 = vadd.f32 0.0, %v6446
    %6448 = vdwg.mxu0
    %6449 = vmatpush.msra.mxu0 %v4974
    %6450 = vmatpush.msra.mxu0 %v4966
    %6451 = vmatpush.msra.mxu0 %v4958
    %6452 = vmatpush.msra.mxu0 %v4950
    %6453 = vmatpush.msra.mxu0 %v4942
    %6454 = vmatpush.msra.mxu0 %v4934
    %6455 = vmatpush.msra.mxu0 %v4926
    %6456 = vmatpush.msra.mxu0 %v4918
    %6457 = vmatpush.msra.mxu0 %v4910
    %6458 = vmatpush.msra.mxu0 %v4902
    %6459 = vmatpush.msra.mxu0 %v4894
    %6460 = vmatpush.msra.mxu0 %v4886
    %6461 = vmatpush.msra.mxu0 %v4878
    %6462 = vmatpush.msra.mxu0 %v4870
    %6463 = vmatpush.msra.mxu0 %v4862
    %6464 = vmatpush.msra.mxu0 %v4854
    %6465 = vmatmul.f32.gmra.mxu0 %v5430
    %v6466 = vpop.f32.mrf.mxu0
    %v6467 = vadd.f32 %v6447, %v6466
    %6468 = vdwg.mxu0
    %6469 = vmatpush.msra.mxu0 %v4847
    %6470 = vmatpush.msra.mxu0 %v4839
    %6471 = vmatpush.msra.mxu0 %v4831
    %6472 = vmatpush.msra.mxu0 %v4823
    %6473 = vmatpush.msra.mxu0 %v4815
    %6474 = vmatpush.msra.mxu0 %v4807
    %6475 = vmatpush.msra.mxu0 %v4799
    %6476 = vmatpush.msra.mxu0 %v4791
    %6477 = vmatpush.msra.mxu0 %v4783
    %6478 = vmatpush.msra.mxu0 %v4775
    %6479 = vmatpush.msra.mxu0 %v4767
    %6480 = vmatpush.msra.mxu0 %v4759
    %6481 = vmatpush.msra.mxu0 %v4751
    %6482 = vmatpush.msra.mxu0 %v4743
    %6483 = vmatpush.msra.mxu0 %v4735
    %6484 = vmatpush.msra.mxu0 %v4727
    %6485 = vmatmul.f32.gmra.mxu0 %v5429
    %v6486 = vpop.f32.mrf.mxu0
    %v6487 = vadd.f32 0.0, %v6486
    %6488 = vdwg.mxu0
    %6489 = vmatpush.msra.mxu0 %v4975
    %6490 = vmatpush.msra.mxu0 %v4967
    %6491 = vmatpush.msra.mxu0 %v4959
    %6492 = vmatpush.msra.mxu0 %v4951
    %6493 = vmatpush.msra.mxu0 %v4943
    %6494 = vmatpush.msra.mxu0 %v4935
    %6495 = vmatpush.msra.mxu0 %v4927
    %6496 = vmatpush.msra.mxu0 %v4919
    %6497 = vmatpush.msra.mxu0 %v4911
    %6498 = vmatpush.msra.mxu0 %v4903
    %6499 = vmatpush.msra.mxu0 %v4895
    %6500 = vmatpush.msra.mxu0 %v4887
    %6501 = vmatpush.msra.mxu0 %v4879
    %6502 = vmatpush.msra.mxu0 %v4871
    %6503 = vmatpush.msra.mxu0 %v4863
    %6504 = vmatpush.msra.mxu0 %v4855
    %6505 = vmatmul.f32.gmra.mxu0 %v5430
    %v6506 = vpop.f32.mrf.mxu0
    %v6507 = vadd.f32 %v6487, %v6506
    %6508 = vdwg.mxu0
    %6509 = vmatpush.msra.mxu0 %v4848
    %6510 = vmatpush.msra.mxu0 %v4840
    %6511 = vmatpush.msra.mxu0 %v4832
    %6512 = vmatpush.msra.mxu0 %v4824
    %6513 = vmatpush.msra.mxu0 %v4816
    %6514 = vmatpush.msra.mxu0 %v4808
    %6515 = vmatpush.msra.mxu0 %v4800
    %6516 = vmatpush.msra.mxu0 %v4792
    %6517 = vmatpush.msra.mxu0 %v4784
    %6518 = vmatpush.msra.mxu0 %v4776
    %6519 = vmatpush.msra.mxu0 %v4768
    %6520 = vmatpush.msra.mxu0 %v4760
    %6521 = vmatpush.msra.mxu0 %v4752
    %6522 = vmatpush.msra.mxu0 %v4744
    %6523 = vmatpush.msra.mxu0 %v4736
    %6524 = vmatpush.msra.mxu0 %v4728
    %6525 = vmatmul.f32.gmra.mxu0 %v5429
    %v6526 = vpop.f32.mrf.mxu0
    %v6527 = vadd.f32 0.0, %v6526
    %6528 = vdwg.mxu0
    %6529 = vmatpush.msra.mxu0 %v4976
    %6530 = vmatpush.msra.mxu0 %v4968
    %6531 = vmatpush.msra.mxu0 %v4960
    %6532 = vmatpush.msra.mxu0 %v4952
    %6533 = vmatpush.msra.mxu0 %v4944
    %6534 = vmatpush.msra.mxu0 %v4936
    %6535 = vmatpush.msra.mxu0 %v4928
    %6536 = vmatpush.msra.mxu0 %v4920
    %6537 = vmatpush.msra.mxu0 %v4912
    %6538 = vmatpush.msra.mxu0 %v4904
    %6539 = vmatpush.msra.mxu0 %v4896
    %6540 = vmatpush.msra.mxu0 %v4888
    %6541 = vmatpush.msra.mxu0 %v4880
    %6542 = vmatpush.msra.mxu0 %v4872
    %6543 = vmatpush.msra.mxu0 %v4864
    %6544 = vmatpush.msra.mxu0 %v4856
    %6545 = vmatmul.f32.gmra.mxu0 %v5430
    %v6546 = vpop.f32.mrf.mxu0
    %v6547 = vadd.f32 %v6527, %v6546
    %6548 = vdwg.mxu0
    %v6549 = vadd.f32 %v6221, %v6267
    %v6550 = vadd.f32 %v6222, %v6307
    %v6551 = vadd.f32 %v6223, %v6347
    %v6552 = vadd.f32 %v6224, %v6387
    %v6553 = vadd.f32 %v6225, %v6427
    %v6554 = vadd.f32 %v6226, %v6467
    %v6555 = vadd.f32 %v6227, %v6507
    %v6556 = vadd.f32 %v6228, %v6547
    %v6557 = vxor.u32 %v6549, 2147483648
    %v6558 = vxor.u32 %v6550, 2147483648
    %v6559 = vmul.f32 %v6557, 1.442695
    %v6560 = vpow.pop %v6559
    %v6561 = vmul.f32 %v6558, 1.442695
    %v6562 = vpow.pop %v6561
    %v6563 = vadd.f32 %v6560, 1.0
    %v6564 = vadd.f32 %v6562, 1.0
    %v6565 = vrcp.pop %v6563
    %v6566 = vmul.f32 %v6563, %v6565
    %v6567 = vsub.f32 1.0, %v6566
    %v6568 = vmul.f32 %v6565, %v6567
    %v6569 = vadd.f32 %v6565, %v6568
    %vm6570 = vweird.f32 %v6563
    %vm6571 = vweird.f32 %v6565
    %vm6572 = vmor %vm6570, %vm6571
    %v6573 = vsel %vm6572, %v6565, %v6569
    %v6574 = vand.u32 2147483647, %v6563
    %vm6575 = vcmp.eq.f32.partialorder %v6574, 8.507059e+37
    %v6576 = vand.u32 %v6563, 2147483648
    %v6577 = vor.u32 1.1754944e-38, %v6576
    %v6578 = vsel %vm6575, %v6577, %v6573
    %v6579 = vmul.f32 1.0, %v6578
    %v6580 = vrcp.pop %v6564
    %v6581 = vmul.f32 %v6564, %v6580
    %v6582 = vsub.f32 1.0, %v6581
    %v6583 = vmul.f32 %v6580, %v6582
    %v6584 = vadd.f32 %v6580, %v6583
    %vm6585 = vweird.f32 %v6564
    %vm6586 = vweird.f32 %v6580
    %vm6587 = vmor %vm6585, %vm6586
    %v6588 = vsel %vm6587, %v6580, %v6584
    %v6589 = vand.u32 2147483647, %v6564
    %vm6590 = vcmp.eq.f32.partialorder %v6589, 8.507059e+37
    %v6591 = vand.u32 %v6564, 2147483648
    %v6592 = vor.u32 1.1754944e-38, %v6591
    %v6593 = vsel %vm6590, %v6592, %v6588
    %v6594 = vmul.f32 1.0, %v6593
    %v6595 = vxor.u32 %v6551, 2147483648
    %v6596 = vxor.u32 %v6552, 2147483648
    %v6597 = vmul.f32 %v6595, 1.442695
    %v6598 = vpow.pop %v6597
    %v6599 = vmul.f32 %v6596, 1.442695
    %v6600 = vpow.pop %v6599
    %v6601 = vadd.f32 %v6598, 1.0
    %v6602 = vadd.f32 %v6600, 1.0
    %v6603 = vrcp.pop %v6601
    %v6604 = vmul.f32 %v6601, %v6603
    %v6605 = vsub.f32 1.0, %v6604
    %v6606 = vmul.f32 %v6603, %v6605
    %v6607 = vadd.f32 %v6603, %v6606
    %vm6608 = vweird.f32 %v6601
    %vm6609 = vweird.f32 %v6603
    %vm6610 = vmor %vm6608, %vm6609
    %v6611 = vsel %vm6610, %v6603, %v6607
    %v6612 = vand.u32 2147483647, %v6601
    %vm6613 = vcmp.eq.f32.partialorder %v6612, 8.507059e+37
    %v6614 = vand.u32 %v6601, 2147483648
    %v6615 = vor.u32 1.1754944e-38, %v6614
    %v6616 = vsel %vm6613, %v6615, %v6611
    %v6617 = vmul.f32 1.0, %v6616
    %v6618 = vrcp.pop %v6602
    %v6619 = vmul.f32 %v6602, %v6618
    %v6620 = vsub.f32 1.0, %v6619
    %v6621 = vmul.f32 %v6618, %v6620
    %v6622 = vadd.f32 %v6618, %v6621
    %vm6623 = vweird.f32 %v6602
    %vm6624 = vweird.f32 %v6618
    %vm6625 = vmor %vm6623, %vm6624
    %v6626 = vsel %vm6625, %v6618, %v6622
    %v6627 = vand.u32 2147483647, %v6602
    %vm6628 = vcmp.eq.f32.partialorder %v6627, 8.507059e+37
    %v6629 = vand.u32 %v6602, 2147483648
    %v6630 = vor.u32 1.1754944e-38, %v6629
    %v6631 = vsel %vm6628, %v6630, %v6626
    %v6632 = vmul.f32 1.0, %v6631
    %v6633 = vtanh.pop %v6553
    %v6634 = vtanh.pop %v6554
    %v6635 = vxor.u32 %v6555, 2147483648
    %v6636 = vxor.u32 %v6556, 2147483648
    %v6637 = vmul.f32 %v6635, 1.442695
    %v6638 = vpow.pop %v6637
    %v6639 = vmul.f32 %v6636, 1.442695
    %v6640 = vpow.pop %v6639
    %v6641 = vadd.f32 %v6638, 1.0
    %v6642 = vadd.f32 %v6640, 1.0
    %v6643 = vrcp.pop %v6641
    %v6644 = vmul.f32 %v6641, %v6643
    %v6645 = vsub.f32 1.0, %v6644
    %v6646 = vmul.f32 %v6643, %v6645
    %v6647 = vadd.f32 %v6643, %v6646
    %vm6648 = vweird.f32 %v6641
    %vm6649 = vweird.f32 %v6643
    %vm6650 = vmor %vm6648, %vm6649
    %v6651 = vsel %vm6650, %v6643, %v6647
    %v6652 = vand.u32 2147483647, %v6641
    %vm6653 = vcmp.eq.f32.partialorder %v6652, 8.507059e+37
    %v6654 = vand.u32 %v6641, 2147483648
    %v6655 = vor.u32 1.1754944e-38, %v6654
    %v6656 = vsel %vm6653, %v6655, %v6651
    %v6657 = vmul.f32 1.0, %v6656
    %v6658 = vrcp.pop %v6642
    %v6659 = vmul.f32 %v6642, %v6658
    %v6660 = vsub.f32 1.0, %v6659
    %v6661 = vmul.f32 %v6658, %v6660
    %v6662 = vadd.f32 %v6658, %v6661
    %vm6663 = vweird.f32 %v6642
    %vm6664 = vweird.f32 %v6658
    %vm6665 = vmor %vm6663, %vm6664
    %v6666 = vsel %vm6665, %v6658, %v6662
    %v6667 = vand.u32 2147483647, %v6642
    %vm6668 = vcmp.eq.f32.partialorder %v6667, 8.507059e+37
    %v6669 = vand.u32 %v6642, 2147483648
    %v6670 = vor.u32 1.1754944e-38, %v6669
    %v6671 = vsel %vm6668, %v6670, %v6666
    %v6672 = vmul.f32 1.0, %v6671
    %v6673 = vmul.f32 %v6617, %v5425
    %v6674 = vmul.f32 %v6632, %v5426
    %v6675 = vmul.f32 %v6579, %v6633
    %v6676 = vmul.f32 %v6594, %v6634
    %v6677 = vadd.f32 %v6673, %v6675
    %v6678 = vadd.f32 %v6674, %v6676
    %v6679 = vtanh.pop %v6677
    %v6680 = vtanh.pop %v6678
    %v6681 = vmul.f32 %v6657, %v6679
    %v6682 = vmul.f32 %v6672, %v6680
    %v6683 = vrot.slane %v2337, 3
    %v6684 = vrot.slane %v2357, 3
    %v6685 = vrot.slane %v2377, 3
    %v6686 = vrot.slane %v2397, 3
    %v6687 = vrot.slane %v2417, 3
    %v6688 = vrot.slane %v2437, 3
    %v6689 = vrot.slane %v2457, 3
    %v6690 = vrot.slane %v2477, 3
    %v6699 = vadd.f32 %v5619, %v6683
    %v6700 = vadd.f32 %v5659, %v6684
    %v6701 = vadd.f32 %v5699, %v6685
    %v6702 = vadd.f32 %v5739, %v6686
    %v6703 = vadd.f32 %v5779, %v6687
    %v6704 = vadd.f32 %v5819, %v6688
    %v6705 = vadd.f32 %v5859, %v6689
    %v6706 = vadd.f32 %v5899, %v6690
    %v6707 = vxor.u32 %v6699, 2147483648
    %v6708 = vxor.u32 %v6700, 2147483648
    %v6709 = vmul.f32 %v6707, 1.442695
    %v6710 = vpow.pop %v6709
    %v6711 = vmul.f32 %v6708, 1.442695
    %v6712 = vpow.pop %v6711
    %v6713 = vadd.f32 %v6710, 1.0
    %v6714 = vadd.f32 %v6712, 1.0
    %v6715 = vrcp.pop %v6713
    %v6716 = vmul.f32 %v6713, %v6715
    %v6717 = vsub.f32 1.0, %v6716
    %v6718 = vmul.f32 %v6715, %v6717
    %v6719 = vadd.f32 %v6715, %v6718
    %vm6720 = vweird.f32 %v6713
    %vm6721 = vweird.f32 %v6715
    %vm6722 = vmor %vm6720, %vm6721
    %v6723 = vsel %vm6722, %v6715, %v6719
    %v6724 = vand.u32 2147483647, %v6713
    %vm6725 = vcmp.eq.f32.partialorder %v6724, 8.507059e+37
    %v6726 = vand.u32 %v6713, 2147483648
    %v6727 = vor.u32 1.1754944e-38, %v6726
    %v6728 = vsel %vm6725, %v6727, %v6723
    %v6729 = vmul.f32 1.0, %v6728
    %v6730 = vrcp.pop %v6714
    %v6731 = vmul.f32 %v6714, %v6730
    %v6732 = vsub.f32 1.0, %v6731
    %v6733 = vmul.f32 %v6730, %v6732
    %v6734 = vadd.f32 %v6730, %v6733
    %vm6735 = vweird.f32 %v6714
    %vm6736 = vweird.f32 %v6730
    %vm6737 = vmor %vm6735, %vm6736
    %v6738 = vsel %vm6737, %v6730, %v6734
    %v6739 = vand.u32 2147483647, %v6714
    %vm6740 = vcmp.eq.f32.partialorder %v6739, 8.507059e+37
    %v6741 = vand.u32 %v6714, 2147483648
    %v6742 = vor.u32 1.1754944e-38, %v6741
    %v6743 = vsel %vm6740, %v6742, %v6738
    %v6744 = vmul.f32 1.0, %v6743
    %v6745 = vxor.u32 %v6701, 2147483648
    %v6746 = vxor.u32 %v6702, 2147483648
    %v6747 = vmul.f32 %v6745, 1.442695
    %v6748 = vpow.pop %v6747
    %v6749 = vmul.f32 %v6746, 1.442695
    %v6750 = vpow.pop %v6749
    %v6751 = vadd.f32 %v6748, 1.0
    %v6752 = vadd.f32 %v6750, 1.0
    %v6753 = vrcp.pop %v6751
    %v6754 = vmul.f32 %v6751, %v6753
    %v6755 = vsub.f32 1.0, %v6754
    %v6756 = vmul.f32 %v6753, %v6755
    %v6757 = vadd.f32 %v6753, %v6756
    %vm6758 = vweird.f32 %v6751
    %vm6759 = vweird.f32 %v6753
    %vm6760 = vmor %vm6758, %vm6759
    %v6761 = vsel %vm6760, %v6753, %v6757
    %v6762 = vand.u32 2147483647, %v6751
    %vm6763 = vcmp.eq.f32.partialorder %v6762, 8.507059e+37
    %v6764 = vand.u32 %v6751, 2147483648
    %v6765 = vor.u32 1.1754944e-38, %v6764
    %v6766 = vsel %vm6763, %v6765, %v6761
    %v6767 = vmul.f32 1.0, %v6766
    %v6768 = vrcp.pop %v6752
    %v6769 = vmul.f32 %v6752, %v6768
    %v6770 = vsub.f32 1.0, %v6769
    %v6771 = vmul.f32 %v6768, %v6770
    %v6772 = vadd.f32 %v6768, %v6771
    %vm6773 = vweird.f32 %v6752
    %vm6774 = vweird.f32 %v6768
    %vm6775 = vmor %vm6773, %vm6774
    %v6776 = vsel %vm6775, %v6768, %v6772
    %v6777 = vand.u32 2147483647, %v6752
    %vm6778 = vcmp.eq.f32.partialorder %v6777, 8.507059e+37
    %v6779 = vand.u32 %v6752, 2147483648
    %v6780 = vor.u32 1.1754944e-38, %v6779
    %v6781 = vsel %vm6778, %v6780, %v6776
    %v6782 = vmul.f32 1.0, %v6781
    %v6783 = vtanh.pop %v6703
    %v6784 = vtanh.pop %v6704
    %v6785 = vxor.u32 %v6705, 2147483648
    %v6786 = vxor.u32 %v6706, 2147483648
    %v6787 = vmul.f32 %v6785, 1.442695
    %v6788 = vpow.pop %v6787
    %v6789 = vmul.f32 %v6786, 1.442695
    %v6790 = vpow.pop %v6789
    %v6791 = vadd.f32 %v6788, 1.0
    %v6792 = vadd.f32 %v6790, 1.0
    %v6793 = vrcp.pop %v6791
    %v6794 = vmul.f32 %v6791, %v6793
    %v6795 = vsub.f32 1.0, %v6794
    %v6796 = vmul.f32 %v6793, %v6795
    %v6797 = vadd.f32 %v6793, %v6796
    %vm6798 = vweird.f32 %v6791
    %vm6799 = vweird.f32 %v6793
    %vm6800 = vmor %vm6798, %vm6799
    %v6801 = vsel %vm6800, %v6793, %v6797
    %v6802 = vand.u32 2147483647, %v6791
    %vm6803 = vcmp.eq.f32.partialorder %v6802, 8.507059e+37
    %v6804 = vand.u32 %v6791, 2147483648
    %v6805 = vor.u32 1.1754944e-38, %v6804
    %v6806 = vsel %vm6803, %v6805, %v6801
    %v6807 = vmul.f32 1.0, %v6806
    %v6808 = vrcp.pop %v6792
    %v6809 = vmul.f32 %v6792, %v6808
    %v6810 = vsub.f32 1.0, %v6809
    %v6811 = vmul.f32 %v6808, %v6810
    %v6812 = vadd.f32 %v6808, %v6811
    %vm6813 = vweird.f32 %v6792
    %vm6814 = vweird.f32 %v6808
    %vm6815 = vmor %vm6813, %vm6814
    %v6816 = vsel %vm6815, %v6808, %v6812
    %v6817 = vand.u32 2147483647, %v6792
    %vm6818 = vcmp.eq.f32.partialorder %v6817, 8.507059e+37
    %v6819 = vand.u32 %v6792, 2147483648
    %v6820 = vor.u32 1.1754944e-38, %v6819
    %v6821 = vsel %vm6818, %v6820, %v6816
    %v6822 = vmul.f32 1.0, %v6821
    %v6823 = vmul.f32 %v6767, %v5575
    %v6824 = vmul.f32 %v6782, %v5576
    %v6825 = vmul.f32 %v6729, %v6783
    %v6826 = vmul.f32 %v6744, %v6784
    %v6827 = vadd.f32 %v6823, %v6825
    %v6828 = vadd.f32 %v6824, %v6826
    %v6829 = vtanh.pop %v6827
    %v6830 = vtanh.pop %v6828
    %v6831 = vmul.f32 %v6807, %v6829
    %v6832 = vmul.f32 %v6822, %v6830
    %6833 = vmatpush.msra.mxu0 %v2849
    %6834 = vmatpush.msra.mxu0 %v2833
    %6835 = vmatpush.msra.mxu0 %v2817
    %6836 = vmatpush.msra.mxu0 %v2801
    %6837 = vmatpush.msra.mxu0 %v2785
    %6838 = vmatpush.msra.mxu0 %v2769
    %6839 = vmatpush.msra.mxu0 %v2753
    %6840 = vmatpush.msra.mxu0 %v2737
    %6841 = vmatpush.msra.mxu0 %v2721
    %6842 = vmatpush.msra.mxu0 %v2705
    %6843 = vmatpush.msra.mxu0 %v2689
    %6844 = vmatpush.msra.mxu0 %v2673
    %6845 = vmatpush.msra.mxu0 %v2657
    %6846 = vmatpush.msra.mxu0 %v2641
    %6847 = vmatpush.msra.mxu0 %v2625
    %6848 = vmatpush.msra.mxu0 %v2609
    %6849 = vmatmul.f32.gmra.mxu0 %v6831
    %v6850 = vpop.f32.mrf.mxu0
    %v6851 = vadd.f32 0.0, %v6850
    %6852 = vdwg.mxu0
    %6853 = vmatpush.msra.mxu0 %v3105
    %6854 = vmatpush.msra.mxu0 %v3089
    %6855 = vmatpush.msra.mxu0 %v3073
    %6856 = vmatpush.msra.mxu0 %v3057
    %6857 = vmatpush.msra.mxu0 %v3041
    %6858 = vmatpush.msra.mxu0 %v3025
    %6859 = vmatpush.msra.mxu0 %v3009
    %6860 = vmatpush.msra.mxu0 %v2993
    %6861 = vmatpush.msra.mxu0 %v2977
    %6862 = vmatpush.msra.mxu0 %v2961
    %6863 = vmatpush.msra.mxu0 %v2945
    %6864 = vmatpush.msra.mxu0 %v2929
    %6865 = vmatpush.msra.mxu0 %v2913
    %6866 = vmatpush.msra.mxu0 %v2897
    %6867 = vmatpush.msra.mxu0 %v2881
    %6868 = vmatpush.msra.mxu0 %v2865
    %6869 = vmatmul.f32.gmra.mxu0 %v6832
    %v6870 = vpop.f32.mrf.mxu0
    %v6871 = vadd.f32 %v6851, %v6870
    %6872 = vdwg.mxu0
    %6873 = vmatpush.msra.mxu0 %v2850
    %6874 = vmatpush.msra.mxu0 %v2834
    %6875 = vmatpush.msra.mxu0 %v2818
    %6876 = vmatpush.msra.mxu0 %v2802
    %6877 = vmatpush.msra.mxu0 %v2786
    %6878 = vmatpush.msra.mxu0 %v2770
    %6879 = vmatpush.msra.mxu0 %v2754
    %6880 = vmatpush.msra.mxu0 %v2738
    %6881 = vmatpush.msra.mxu0 %v2722
    %6882 = vmatpush.msra.mxu0 %v2706
    %6883 = vmatpush.msra.mxu0 %v2690
    %6884 = vmatpush.msra.mxu0 %v2674
    %6885 = vmatpush.msra.mxu0 %v2658
    %6886 = vmatpush.msra.mxu0 %v2642
    %6887 = vmatpush.msra.mxu0 %v2626
    %6888 = vmatpush.msra.mxu0 %v2610
    %6889 = vmatmul.f32.gmra.mxu0 %v6831
    %v6890 = vpop.f32.mrf.mxu0
    %v6891 = vadd.f32 0.0, %v6890
    %6892 = vdwg.mxu0
    %6893 = vmatpush.msra.mxu0 %v3106
    %6894 = vmatpush.msra.mxu0 %v3090
    %6895 = vmatpush.msra.mxu0 %v3074
    %6896 = vmatpush.msra.mxu0 %v3058
    %6897 = vmatpush.msra.mxu0 %v3042
    %6898 = vmatpush.msra.mxu0 %v3026
    %6899 = vmatpush.msra.mxu0 %v3010
    %6900 = vmatpush.msra.mxu0 %v2994
    %6901 = vmatpush.msra.mxu0 %v2978
    %6902 = vmatpush.msra.mxu0 %v2962
    %6903 = vmatpush.msra.mxu0 %v2946
    %6904 = vmatpush.msra.mxu0 %v2930
    %6905 = vmatpush.msra.mxu0 %v2914
    %6906 = vmatpush.msra.mxu0 %v2898
    %6907 = vmatpush.msra.mxu0 %v2882
    %6908 = vmatpush.msra.mxu0 %v2866
    %6909 = vmatmul.f32.gmra.mxu0 %v6832
    %v6910 = vpop.f32.mrf.mxu0
    %v6911 = vadd.f32 %v6891, %v6910
    %6912 = vdwg.mxu0
    %6913 = vmatpush.msra.mxu0 %v2851
    %6914 = vmatpush.msra.mxu0 %v2835
    %6915 = vmatpush.msra.mxu0 %v2819
    %6916 = vmatpush.msra.mxu0 %v2803
    %6917 = vmatpush.msra.mxu0 %v2787
    %6918 = vmatpush.msra.mxu0 %v2771
    %6919 = vmatpush.msra.mxu0 %v2755
    %6920 = vmatpush.msra.mxu0 %v2739
    %6921 = vmatpush.msra.mxu0 %v2723
    %6922 = vmatpush.msra.mxu0 %v2707
    %6923 = vmatpush.msra.mxu0 %v2691
    %6924 = vmatpush.msra.mxu0 %v2675
    %6925 = vmatpush.msra.mxu0 %v2659
    %6926 = vmatpush.msra.mxu0 %v2643
    %6927 = vmatpush.msra.mxu0 %v2627
    %6928 = vmatpush.msra.mxu0 %v2611
    %6929 = vmatmul.f32.gmra.mxu0 %v6831
    %v6930 = vpop.f32.mrf.mxu0
    %v6931 = vadd.f32 0.0, %v6930
    %6932 = vdwg.mxu0
    %6933 = vmatpush.msra.mxu0 %v3107
    %6934 = vmatpush.msra.mxu0 %v3091
    %6935 = vmatpush.msra.mxu0 %v3075
    %6936 = vmatpush.msra.mxu0 %v3059
    %6937 = vmatpush.msra.mxu0 %v3043
    %6938 = vmatpush.msra.mxu0 %v3027
    %6939 = vmatpush.msra.mxu0 %v3011
    %6940 = vmatpush.msra.mxu0 %v2995
    %6941 = vmatpush.msra.mxu0 %v2979
    %6942 = vmatpush.msra.mxu0 %v2963
    %6943 = vmatpush.msra.mxu0 %v2947
    %6944 = vmatpush.msra.mxu0 %v2931
    %6945 = vmatpush.msra.mxu0 %v2915
    %6946 = vmatpush.msra.mxu0 %v2899
    %6947 = vmatpush.msra.mxu0 %v2883
    %6948 = vmatpush.msra.mxu0 %v2867
    %6949 = vmatmul.f32.gmra.mxu0 %v6832
    %v6950 = vpop.f32.mrf.mxu0
    %v6951 = vadd.f32 %v6931, %v6950
    %6952 = vdwg.mxu0
    %6953 = vmatpush.msra.mxu0 %v2852
    %6954 = vmatpush.msra.mxu0 %v2836
    %6955 = vmatpush.msra.mxu0 %v2820
    %6956 = vmatpush.msra.mxu0 %v2804
    %6957 = vmatpush.msra.mxu0 %v2788
    %6958 = vmatpush.msra.mxu0 %v2772
    %6959 = vmatpush.msra.mxu0 %v2756
    %6960 = vmatpush.msra.mxu0 %v2740
    %6961 = vmatpush.msra.mxu0 %v2724
    %6962 = vmatpush.msra.mxu0 %v2708
    %6963 = vmatpush.msra.mxu0 %v2692
    %6964 = vmatpush.msra.mxu0 %v2676
    %6965 = vmatpush.msra.mxu0 %v2660
    %6966 = vmatpush.msra.mxu0 %v2644
    %6967 = vmatpush.msra.mxu0 %v2628
    %6968 = vmatpush.msra.mxu0 %v2612
    %6969 = vmatmul.f32.gmra.mxu0 %v6831
    %v6970 = vpop.f32.mrf.mxu0
    %v6971 = vadd.f32 0.0, %v6970
    %6972 = vdwg.mxu0
    %6973 = vmatpush.msra.mxu0 %v3108
    %6974 = vmatpush.msra.mxu0 %v3092
    %6975 = vmatpush.msra.mxu0 %v3076
    %6976 = vmatpush.msra.mxu0 %v3060
    %6977 = vmatpush.msra.mxu0 %v3044
    %6978 = vmatpush.msra.mxu0 %v3028
    %6979 = vmatpush.msra.mxu0 %v3012
    %6980 = vmatpush.msra.mxu0 %v2996
    %6981 = vmatpush.msra.mxu0 %v2980
    %6982 = vmatpush.msra.mxu0 %v2964
    %6983 = vmatpush.msra.mxu0 %v2948
    %6984 = vmatpush.msra.mxu0 %v2932
    %6985 = vmatpush.msra.mxu0 %v2916
    %6986 = vmatpush.msra.mxu0 %v2900
    %6987 = vmatpush.msra.mxu0 %v2884
    %6988 = vmatpush.msra.mxu0 %v2868
    %6989 = vmatmul.f32.gmra.mxu0 %v6832
    %v6990 = vpop.f32.mrf.mxu0
    %v6991 = vadd.f32 %v6971, %v6990
    %6992 = vdwg.mxu0
    %6993 = vmatpush.msra.mxu0 %v2853
    %6994 = vmatpush.msra.mxu0 %v2837
    %6995 = vmatpush.msra.mxu0 %v2821
    %6996 = vmatpush.msra.mxu0 %v2805
    %6997 = vmatpush.msra.mxu0 %v2789
    %6998 = vmatpush.msra.mxu0 %v2773
    %6999 = vmatpush.msra.mxu0 %v2757
    %7000 = vmatpush.msra.mxu0 %v2741
    %7001 = vmatpush.msra.mxu0 %v2725
    %7002 = vmatpush.msra.mxu0 %v2709
    %7003 = vmatpush.msra.mxu0 %v2693
    %7004 = vmatpush.msra.mxu0 %v2677
    %7005 = vmatpush.msra.mxu0 %v2661
    %7006 = vmatpush.msra.mxu0 %v2645
    %7007 = vmatpush.msra.mxu0 %v2629
    %7008 = vmatpush.msra.mxu0 %v2613
    %7009 = vmatmul.f32.gmra.mxu0 %v6831
    %v7010 = vpop.f32.mrf.mxu0
    %v7011 = vadd.f32 0.0, %v7010
    %7012 = vdwg.mxu0
    %7013 = vmatpush.msra.mxu0 %v3109
    %7014 = vmatpush.msra.mxu0 %v3093
    %7015 = vmatpush.msra.mxu0 %v3077
    %7016 = vmatpush.msra.mxu0 %v3061
    %7017 = vmatpush.msra.mxu0 %v3045
    %7018 = vmatpush.msra.mxu0 %v3029
    %7019 = vmatpush.msra.mxu0 %v3013
    %7020 = vmatpush.msra.mxu0 %v2997
    %7021 = vmatpush.msra.mxu0 %v2981
    %7022 = vmatpush.msra.mxu0 %v2965
    %7023 = vmatpush.msra.mxu0 %v2949
    %7024 = vmatpush.msra.mxu0 %v2933
    %7025 = vmatpush.msra.mxu0 %v2917
    %7026 = vmatpush.msra.mxu0 %v2901
    %7027 = vmatpush.msra.mxu0 %v2885
    %7028 = vmatpush.msra.mxu0 %v2869
    %7029 = vmatmul.f32.gmra.mxu0 %v6832
    %v7030 = vpop.f32.mrf.mxu0
    %v7031 = vadd.f32 %v7011, %v7030
    %7032 = vdwg.mxu0
    %7033 = vmatpush.msra.mxu0 %v2854
    %7034 = vmatpush.msra.mxu0 %v2838
    %7035 = vmatpush.msra.mxu0 %v2822
    %7036 = vmatpush.msra.mxu0 %v2806
    %7037 = vmatpush.msra.mxu0 %v2790
    %7038 = vmatpush.msra.mxu0 %v2774
    %7039 = vmatpush.msra.mxu0 %v2758
    %7040 = vmatpush.msra.mxu0 %v2742
    %7041 = vmatpush.msra.mxu0 %v2726
    %7042 = vmatpush.msra.mxu0 %v2710
    %7043 = vmatpush.msra.mxu0 %v2694
    %7044 = vmatpush.msra.mxu0 %v2678
    %7045 = vmatpush.msra.mxu0 %v2662
    %7046 = vmatpush.msra.mxu0 %v2646
    %7047 = vmatpush.msra.mxu0 %v2630
    %7048 = vmatpush.msra.mxu0 %v2614
    %7049 = vmatmul.f32.gmra.mxu0 %v6831
    %v7050 = vpop.f32.mrf.mxu0
    %v7051 = vadd.f32 0.0, %v7050
    %7052 = vdwg.mxu0
    %7053 = vmatpush.msra.mxu0 %v3110
    %7054 = vmatpush.msra.mxu0 %v3094
    %7055 = vmatpush.msra.mxu0 %v3078
    %7056 = vmatpush.msra.mxu0 %v3062
    %7057 = vmatpush.msra.mxu0 %v3046
    %7058 = vmatpush.msra.mxu0 %v3030
    %7059 = vmatpush.msra.mxu0 %v3014
    %7060 = vmatpush.msra.mxu0 %v2998
    %7061 = vmatpush.msra.mxu0 %v2982
    %7062 = vmatpush.msra.mxu0 %v2966
    %7063 = vmatpush.msra.mxu0 %v2950
    %7064 = vmatpush.msra.mxu0 %v2934
    %7065 = vmatpush.msra.mxu0 %v2918
    %7066 = vmatpush.msra.mxu0 %v2902
    %7067 = vmatpush.msra.mxu0 %v2886
    %7068 = vmatpush.msra.mxu0 %v2870
    %7069 = vmatmul.f32.gmra.mxu0 %v6832
    %v7070 = vpop.f32.mrf.mxu0
    %v7071 = vadd.f32 %v7051, %v7070
    %7072 = vdwg.mxu0
    %7073 = vmatpush.msra.mxu0 %v2855
    %7074 = vmatpush.msra.mxu0 %v2839
    %7075 = vmatpush.msra.mxu0 %v2823
    %7076 = vmatpush.msra.mxu0 %v2807
    %7077 = vmatpush.msra.mxu0 %v2791
    %7078 = vmatpush.msra.mxu0 %v2775
    %7079 = vmatpush.msra.mxu0 %v2759
    %7080 = vmatpush.msra.mxu0 %v2743
    %7081 = vmatpush.msra.mxu0 %v2727
    %7082 = vmatpush.msra.mxu0 %v2711
    %7083 = vmatpush.msra.mxu0 %v2695
    %7084 = vmatpush.msra.mxu0 %v2679
    %7085 = vmatpush.msra.mxu0 %v2663
    %7086 = vmatpush.msra.mxu0 %v2647
    %7087 = vmatpush.msra.mxu0 %v2631
    %7088 = vmatpush.msra.mxu0 %v2615
    %7089 = vmatmul.f32.gmra.mxu0 %v6831
    %v7090 = vpop.f32.mrf.mxu0
    %v7091 = vadd.f32 0.0, %v7090
    %7092 = vdwg.mxu0
    %7093 = vmatpush.msra.mxu0 %v3111
    %7094 = vmatpush.msra.mxu0 %v3095
    %7095 = vmatpush.msra.mxu0 %v3079
    %7096 = vmatpush.msra.mxu0 %v3063
    %7097 = vmatpush.msra.mxu0 %v3047
    %7098 = vmatpush.msra.mxu0 %v3031
    %7099 = vmatpush.msra.mxu0 %v3015
    %7100 = vmatpush.msra.mxu0 %v2999
    %7101 = vmatpush.msra.mxu0 %v2983
    %7102 = vmatpush.msra.mxu0 %v2967
    %7103 = vmatpush.msra.mxu0 %v2951
    %7104 = vmatpush.msra.mxu0 %v2935
    %7105 = vmatpush.msra.mxu0 %v2919
    %7106 = vmatpush.msra.mxu0 %v2903
    %7107 = vmatpush.msra.mxu0 %v2887
    %7108 = vmatpush.msra.mxu0 %v2871
    %7109 = vmatmul.f32.gmra.mxu0 %v6832
    %v7110 = vpop.f32.mrf.mxu0
    %v7111 = vadd.f32 %v7091, %v7110
    %7112 = vdwg.mxu0
    %7113 = vmatpush.msra.mxu0 %v2856
    %7114 = vmatpush.msra.mxu0 %v2840
    %7115 = vmatpush.msra.mxu0 %v2824
    %7116 = vmatpush.msra.mxu0 %v2808
    %7117 = vmatpush.msra.mxu0 %v2792
    %7118 = vmatpush.msra.mxu0 %v2776
    %7119 = vmatpush.msra.mxu0 %v2760
    %7120 = vmatpush.msra.mxu0 %v2744
    %7121 = vmatpush.msra.mxu0 %v2728
    %7122 = vmatpush.msra.mxu0 %v2712
    %7123 = vmatpush.msra.mxu0 %v2696
    %7124 = vmatpush.msra.mxu0 %v2680
    %7125 = vmatpush.msra.mxu0 %v2664
    %7126 = vmatpush.msra.mxu0 %v2648
    %7127 = vmatpush.msra.mxu0 %v2632
    %7128 = vmatpush.msra.mxu0 %v2616
    %7129 = vmatmul.f32.gmra.mxu0 %v6831
    %v7130 = vpop.f32.mrf.mxu0
    %v7131 = vadd.f32 0.0, %v7130
    %7132 = vdwg.mxu0
    %7133 = vmatpush.msra.mxu0 %v3112
    %7134 = vmatpush.msra.mxu0 %v3096
    %7135 = vmatpush.msra.mxu0 %v3080
    %7136 = vmatpush.msra.mxu0 %v3064
    %7137 = vmatpush.msra.mxu0 %v3048
    %7138 = vmatpush.msra.mxu0 %v3032
    %7139 = vmatpush.msra.mxu0 %v3016
    %7140 = vmatpush.msra.mxu0 %v3000
    %7141 = vmatpush.msra.mxu0 %v2984
    %7142 = vmatpush.msra.mxu0 %v2968
    %7143 = vmatpush.msra.mxu0 %v2952
    %7144 = vmatpush.msra.mxu0 %v2936
    %7145 = vmatpush.msra.mxu0 %v2920
    %7146 = vmatpush.msra.mxu0 %v2904
    %7147 = vmatpush.msra.mxu0 %v2888
    %7148 = vmatpush.msra.mxu0 %v2872
    %7149 = vmatmul.f32.gmra.mxu0 %v6832
    %v7150 = vpop.f32.mrf.mxu0
    %v7151 = vadd.f32 %v7131, %v7150
    %7152 = vdwg.mxu0
    %7153 = vmatpush.msra.mxu0 %v2857
    %7154 = vmatpush.msra.mxu0 %v2841
    %7155 = vmatpush.msra.mxu0 %v2825
    %7156 = vmatpush.msra.mxu0 %v2809
    %7157 = vmatpush.msra.mxu0 %v2793
    %7158 = vmatpush.msra.mxu0 %v2777
    %7159 = vmatpush.msra.mxu0 %v2761
    %7160 = vmatpush.msra.mxu0 %v2745
    %7161 = vmatpush.msra.mxu0 %v2729
    %7162 = vmatpush.msra.mxu0 %v2713
    %7163 = vmatpush.msra.mxu0 %v2697
    %7164 = vmatpush.msra.mxu0 %v2681
    %7165 = vmatpush.msra.mxu0 %v2665
    %7166 = vmatpush.msra.mxu0 %v2649
    %7167 = vmatpush.msra.mxu0 %v2633
    %7168 = vmatpush.msra.mxu0 %v2617
    %7169 = vmatmul.f32.gmra.mxu0 %v6831
    %v7170 = vpop.f32.mrf.mxu0
    %v7171 = vadd.f32 0.0, %v7170
    %7172 = vdwg.mxu0
    %7173 = vmatpush.msra.mxu0 %v3113
    %7174 = vmatpush.msra.mxu0 %v3097
    %7175 = vmatpush.msra.mxu0 %v3081
    %7176 = vmatpush.msra.mxu0 %v3065
    %7177 = vmatpush.msra.mxu0 %v3049
    %7178 = vmatpush.msra.mxu0 %v3033
    %7179 = vmatpush.msra.mxu0 %v3017
    %7180 = vmatpush.msra.mxu0 %v3001
    %7181 = vmatpush.msra.mxu0 %v2985
    %7182 = vmatpush.msra.mxu0 %v2969
    %7183 = vmatpush.msra.mxu0 %v2953
    %7184 = vmatpush.msra.mxu0 %v2937
    %7185 = vmatpush.msra.mxu0 %v2921
    %7186 = vmatpush.msra.mxu0 %v2905
    %7187 = vmatpush.msra.mxu0 %v2889
    %7188 = vmatpush.msra.mxu0 %v2873
    %7189 = vmatmul.f32.gmra.mxu0 %v6832
    %v7190 = vpop.f32.mrf.mxu0
    %v7191 = vadd.f32 %v7171, %v7190
    %7192 = vdwg.mxu0
    %7193 = vmatpush.msra.mxu0 %v2858
    %7194 = vmatpush.msra.mxu0 %v2842
    %7195 = vmatpush.msra.mxu0 %v2826
    %7196 = vmatpush.msra.mxu0 %v2810
    %7197 = vmatpush.msra.mxu0 %v2794
    %7198 = vmatpush.msra.mxu0 %v2778
    %7199 = vmatpush.msra.mxu0 %v2762
    %7200 = vmatpush.msra.mxu0 %v2746
    %7201 = vmatpush.msra.mxu0 %v2730
    %7202 = vmatpush.msra.mxu0 %v2714
    %7203 = vmatpush.msra.mxu0 %v2698
    %7204 = vmatpush.msra.mxu0 %v2682
    %7205 = vmatpush.msra.mxu0 %v2666
    %7206 = vmatpush.msra.mxu0 %v2650
    %7207 = vmatpush.msra.mxu0 %v2634
    %7208 = vmatpush.msra.mxu0 %v2618
    %7209 = vmatmul.f32.gmra.mxu0 %v6831
    %v7210 = vpop.f32.mrf.mxu0
    %v7211 = vadd.f32 0.0, %v7210
    %7212 = vdwg.mxu0
    %7213 = vmatpush.msra.mxu0 %v3114
    %7214 = vmatpush.msra.mxu0 %v3098
    %7215 = vmatpush.msra.mxu0 %v3082
    %7216 = vmatpush.msra.mxu0 %v3066
    %7217 = vmatpush.msra.mxu0 %v3050
    %7218 = vmatpush.msra.mxu0 %v3034
    %7219 = vmatpush.msra.mxu0 %v3018
    %7220 = vmatpush.msra.mxu0 %v3002
    %7221 = vmatpush.msra.mxu0 %v2986
    %7222 = vmatpush.msra.mxu0 %v2970
    %7223 = vmatpush.msra.mxu0 %v2954
    %7224 = vmatpush.msra.mxu0 %v2938
    %7225 = vmatpush.msra.mxu0 %v2922
    %7226 = vmatpush.msra.mxu0 %v2906
    %7227 = vmatpush.msra.mxu0 %v2890
    %7228 = vmatpush.msra.mxu0 %v2874
    %7229 = vmatmul.f32.gmra.mxu0 %v6832
    %v7230 = vpop.f32.mrf.mxu0
    %v7231 = vadd.f32 %v7211, %v7230
    %7232 = vdwg.mxu0
    %7233 = vmatpush.msra.mxu0 %v2859
    %7234 = vmatpush.msra.mxu0 %v2843
    %7235 = vmatpush.msra.mxu0 %v2827
    %7236 = vmatpush.msra.mxu0 %v2811
    %7237 = vmatpush.msra.mxu0 %v2795
    %7238 = vmatpush.msra.mxu0 %v2779
    %7239 = vmatpush.msra.mxu0 %v2763
    %7240 = vmatpush.msra.mxu0 %v2747
    %7241 = vmatpush.msra.mxu0 %v2731
    %7242 = vmatpush.msra.mxu0 %v2715
    %7243 = vmatpush.msra.mxu0 %v2699
    %7244 = vmatpush.msra.mxu0 %v2683
    %7245 = vmatpush.msra.mxu0 %v2667
    %7246 = vmatpush.msra.mxu0 %v2651
    %7247 = vmatpush.msra.mxu0 %v2635
    %7248 = vmatpush.msra.mxu0 %v2619
    %7249 = vmatmul.f32.gmra.mxu0 %v6831
    %v7250 = vpop.f32.mrf.mxu0
    %v7251 = vadd.f32 0.0, %v7250
    %7252 = vdwg.mxu0
    %7253 = vmatpush.msra.mxu0 %v3115
    %7254 = vmatpush.msra.mxu0 %v3099
    %7255 = vmatpush.msra.mxu0 %v3083
    %7256 = vmatpush.msra.mxu0 %v3067
    %7257 = vmatpush.msra.mxu0 %v3051
    %7258 = vmatpush.msra.mxu0 %v3035
    %7259 = vmatpush.msra.mxu0 %v3019
    %7260 = vmatpush.msra.mxu0 %v3003
    %7261 = vmatpush.msra.mxu0 %v2987
    %7262 = vmatpush.msra.mxu0 %v2971
    %7263 = vmatpush.msra.mxu0 %v2955
    %7264 = vmatpush.msra.mxu0 %v2939
    %7265 = vmatpush.msra.mxu0 %v2923
    %7266 = vmatpush.msra.mxu0 %v2907
    %7267 = vmatpush.msra.mxu0 %v2891
    %7268 = vmatpush.msra.mxu0 %v2875
    %7269 = vmatmul.f32.gmra.mxu0 %v6832
    %v7270 = vpop.f32.mrf.mxu0
    %v7271 = vadd.f32 %v7251, %v7270
    %7272 = vdwg.mxu0
    %7273 = vmatpush.msra.mxu0 %v2860
    %7274 = vmatpush.msra.mxu0 %v2844
    %7275 = vmatpush.msra.mxu0 %v2828
    %7276 = vmatpush.msra.mxu0 %v2812
    %7277 = vmatpush.msra.mxu0 %v2796
    %7278 = vmatpush.msra.mxu0 %v2780
    %7279 = vmatpush.msra.mxu0 %v2764
    %7280 = vmatpush.msra.mxu0 %v2748
    %7281 = vmatpush.msra.mxu0 %v2732
    %7282 = vmatpush.msra.mxu0 %v2716
    %7283 = vmatpush.msra.mxu0 %v2700
    %7284 = vmatpush.msra.mxu0 %v2684
    %7285 = vmatpush.msra.mxu0 %v2668
    %7286 = vmatpush.msra.mxu0 %v2652
    %7287 = vmatpush.msra.mxu0 %v2636
    %7288 = vmatpush.msra.mxu0 %v2620
    %7289 = vmatmul.f32.gmra.mxu0 %v6831
    %v7290 = vpop.f32.mrf.mxu0
    %v7291 = vadd.f32 0.0, %v7290
    %7292 = vdwg.mxu0
    %7293 = vmatpush.msra.mxu0 %v3116
    %7294 = vmatpush.msra.mxu0 %v3100
    %7295 = vmatpush.msra.mxu0 %v3084
    %7296 = vmatpush.msra.mxu0 %v3068
    %7297 = vmatpush.msra.mxu0 %v3052
    %7298 = vmatpush.msra.mxu0 %v3036
    %7299 = vmatpush.msra.mxu0 %v3020
    %7300 = vmatpush.msra.mxu0 %v3004
    %7301 = vmatpush.msra.mxu0 %v2988
    %7302 = vmatpush.msra.mxu0 %v2972
    %7303 = vmatpush.msra.mxu0 %v2956
    %7304 = vmatpush.msra.mxu0 %v2940
    %7305 = vmatpush.msra.mxu0 %v2924
    %7306 = vmatpush.msra.mxu0 %v2908
    %7307 = vmatpush.msra.mxu0 %v2892
    %7308 = vmatpush.msra.mxu0 %v2876
    %7309 = vmatmul.f32.gmra.mxu0 %v6832
    %v7310 = vpop.f32.mrf.mxu0
    %v7311 = vadd.f32 %v7291, %v7310
    %7312 = vdwg.mxu0
    %7313 = vmatpush.msra.mxu0 %v2861
    %7314 = vmatpush.msra.mxu0 %v2845
    %7315 = vmatpush.msra.mxu0 %v2829
    %7316 = vmatpush.msra.mxu0 %v2813
    %7317 = vmatpush.msra.mxu0 %v2797
    %7318 = vmatpush.msra.mxu0 %v2781
    %7319 = vmatpush.msra.mxu0 %v2765
    %7320 = vmatpush.msra.mxu0 %v2749
    %7321 = vmatpush.msra.mxu0 %v2733
    %7322 = vmatpush.msra.mxu0 %v2717
    %7323 = vmatpush.msra.mxu0 %v2701
    %7324 = vmatpush.msra.mxu0 %v2685
    %7325 = vmatpush.msra.mxu0 %v2669
    %7326 = vmatpush.msra.mxu0 %v2653
    %7327 = vmatpush.msra.mxu0 %v2637
    %7328 = vmatpush.msra.mxu0 %v2621
    %7329 = vmatmul.f32.gmra.mxu0 %v6831
    %v7330 = vpop.f32.mrf.mxu0
    %v7331 = vadd.f32 0.0, %v7330
    %7332 = vdwg.mxu0
    %7333 = vmatpush.msra.mxu0 %v3117
    %7334 = vmatpush.msra.mxu0 %v3101
    %7335 = vmatpush.msra.mxu0 %v3085
    %7336 = vmatpush.msra.mxu0 %v3069
    %7337 = vmatpush.msra.mxu0 %v3053
    %7338 = vmatpush.msra.mxu0 %v3037
    %7339 = vmatpush.msra.mxu0 %v3021
    %7340 = vmatpush.msra.mxu0 %v3005
    %7341 = vmatpush.msra.mxu0 %v2989
    %7342 = vmatpush.msra.mxu0 %v2973
    %7343 = vmatpush.msra.mxu0 %v2957
    %7344 = vmatpush.msra.mxu0 %v2941
    %7345 = vmatpush.msra.mxu0 %v2925
    %7346 = vmatpush.msra.mxu0 %v2909
    %7347 = vmatpush.msra.mxu0 %v2893
    %7348 = vmatpush.msra.mxu0 %v2877
    %7349 = vmatmul.f32.gmra.mxu0 %v6832
    %v7350 = vpop.f32.mrf.mxu0
    %v7351 = vadd.f32 %v7331, %v7350
    %7352 = vdwg.mxu0
    %7353 = vmatpush.msra.mxu0 %v2862
    %7354 = vmatpush.msra.mxu0 %v2846
    %7355 = vmatpush.msra.mxu0 %v2830
    %7356 = vmatpush.msra.mxu0 %v2814
    %7357 = vmatpush.msra.mxu0 %v2798
    %7358 = vmatpush.msra.mxu0 %v2782
    %7359 = vmatpush.msra.mxu0 %v2766
    %7360 = vmatpush.msra.mxu0 %v2750
    %7361 = vmatpush.msra.mxu0 %v2734
    %7362 = vmatpush.msra.mxu0 %v2718
    %7363 = vmatpush.msra.mxu0 %v2702
    %7364 = vmatpush.msra.mxu0 %v2686
    %7365 = vmatpush.msra.mxu0 %v2670
    %7366 = vmatpush.msra.mxu0 %v2654
    %7367 = vmatpush.msra.mxu0 %v2638
    %7368 = vmatpush.msra.mxu0 %v2622
    %7369 = vmatmul.f32.gmra.mxu0 %v6831
    %v7370 = vpop.f32.mrf.mxu0
    %v7371 = vadd.f32 0.0, %v7370
    %7372 = vdwg.mxu0
    %7373 = vmatpush.msra.mxu0 %v3118
    %7374 = vmatpush.msra.mxu0 %v3102
    %7375 = vmatpush.msra.mxu0 %v3086
    %7376 = vmatpush.msra.mxu0 %v3070
    %7377 = vmatpush.msra.mxu0 %v3054
    %7378 = vmatpush.msra.mxu0 %v3038
    %7379 = vmatpush.msra.mxu0 %v3022
    %7380 = vmatpush.msra.mxu0 %v3006
    %7381 = vmatpush.msra.mxu0 %v2990
    %7382 = vmatpush.msra.mxu0 %v2974
    %7383 = vmatpush.msra.mxu0 %v2958
    %7384 = vmatpush.msra.mxu0 %v2942
    %7385 = vmatpush.msra.mxu0 %v2926
    %7386 = vmatpush.msra.mxu0 %v2910
    %7387 = vmatpush.msra.mxu0 %v2894
    %7388 = vmatpush.msra.mxu0 %v2878
    %7389 = vmatmul.f32.gmra.mxu0 %v6832
    %v7390 = vpop.f32.mrf.mxu0
    %v7391 = vadd.f32 %v7371, %v7390
    %7392 = vdwg.mxu0
    %7393 = vmatpush.msra.mxu0 %v2863
    %7394 = vmatpush.msra.mxu0 %v2847
    %7395 = vmatpush.msra.mxu0 %v2831
    %7396 = vmatpush.msra.mxu0 %v2815
    %7397 = vmatpush.msra.mxu0 %v2799
    %7398 = vmatpush.msra.mxu0 %v2783
    %7399 = vmatpush.msra.mxu0 %v2767
    %7400 = vmatpush.msra.mxu0 %v2751
    %7401 = vmatpush.msra.mxu0 %v2735
    %7402 = vmatpush.msra.mxu0 %v2719
    %7403 = vmatpush.msra.mxu0 %v2703
    %7404 = vmatpush.msra.mxu0 %v2687
    %7405 = vmatpush.msra.mxu0 %v2671
    %7406 = vmatpush.msra.mxu0 %v2655
    %7407 = vmatpush.msra.mxu0 %v2639
    %7408 = vmatpush.msra.mxu0 %v2623
    %7409 = vmatmul.f32.gmra.mxu0 %v6831
    %v7410 = vpop.f32.mrf.mxu0
    %v7411 = vadd.f32 0.0, %v7410
    %7412 = vdwg.mxu0
    %7413 = vmatpush.msra.mxu0 %v3119
    %7414 = vmatpush.msra.mxu0 %v3103
    %7415 = vmatpush.msra.mxu0 %v3087
    %7416 = vmatpush.msra.mxu0 %v3071
    %7417 = vmatpush.msra.mxu0 %v3055
    %7418 = vmatpush.msra.mxu0 %v3039
    %7419 = vmatpush.msra.mxu0 %v3023
    %7420 = vmatpush.msra.mxu0 %v3007
    %7421 = vmatpush.msra.mxu0 %v2991
    %7422 = vmatpush.msra.mxu0 %v2975
    %7423 = vmatpush.msra.mxu0 %v2959
    %7424 = vmatpush.msra.mxu0 %v2943
    %7425 = vmatpush.msra.mxu0 %v2927
    %7426 = vmatpush.msra.mxu0 %v2911
    %7427 = vmatpush.msra.mxu0 %v2895
    %7428 = vmatpush.msra.mxu0 %v2879
    %7429 = vmatmul.f32.gmra.mxu0 %v6832
    %v7430 = vpop.f32.mrf.mxu0
    %v7431 = vadd.f32 %v7411, %v7430
    %7432 = vdwg.mxu0
    %7433 = vmatpush.msra.mxu0 %v2864
    %7434 = vmatpush.msra.mxu0 %v2848
    %7435 = vmatpush.msra.mxu0 %v2832
    %7436 = vmatpush.msra.mxu0 %v2816
    %7437 = vmatpush.msra.mxu0 %v2800
    %7438 = vmatpush.msra.mxu0 %v2784
    %7439 = vmatpush.msra.mxu0 %v2768
    %7440 = vmatpush.msra.mxu0 %v2752
    %7441 = vmatpush.msra.mxu0 %v2736
    %7442 = vmatpush.msra.mxu0 %v2720
    %7443 = vmatpush.msra.mxu0 %v2704
    %7444 = vmatpush.msra.mxu0 %v2688
    %7445 = vmatpush.msra.mxu0 %v2672
    %7446 = vmatpush.msra.mxu0 %v2656
    %7447 = vmatpush.msra.mxu0 %v2640
    %7448 = vmatpush.msra.mxu0 %v2624
    %7449 = vmatmul.f32.gmra.mxu0 %v6831
    %v7450 = vpop.f32.mrf.mxu0
    %v7451 = vadd.f32 0.0, %v7450
    %7452 = vdwg.mxu0
    %7453 = vmatpush.msra.mxu0 %v3120
    %7454 = vmatpush.msra.mxu0 %v3104
    %7455 = vmatpush.msra.mxu0 %v3088
    %7456 = vmatpush.msra.mxu0 %v3072
    %7457 = vmatpush.msra.mxu0 %v3056
    %7458 = vmatpush.msra.mxu0 %v3040
    %7459 = vmatpush.msra.mxu0 %v3024
    %7460 = vmatpush.msra.mxu0 %v3008
    %7461 = vmatpush.msra.mxu0 %v2992
    %7462 = vmatpush.msra.mxu0 %v2976
    %7463 = vmatpush.msra.mxu0 %v2960
    %7464 = vmatpush.msra.mxu0 %v2944
    %7465 = vmatpush.msra.mxu0 %v2928
    %7466 = vmatpush.msra.mxu0 %v2912
    %7467 = vmatpush.msra.mxu0 %v2896
    %7468 = vmatpush.msra.mxu0 %v2880
    %7469 = vmatmul.f32.gmra.mxu0 %v6832
    %v7470 = vpop.f32.mrf.mxu0
    %v7471 = vadd.f32 %v7451, %v7470
    %7472 = vdwg.mxu0
    %v7473 = vadd.f32 %v7191, %v3762
    %v7474 = vadd.f32 %v7231, %v3763
    %v7475 = vadd.f32 %v7271, %v3764
    %v7476 = vadd.f32 %v7311, %v3765
    %v7477 = vadd.f32 %v7351, %v3766
    %v7478 = vadd.f32 %v7391, %v3767
    %v7479 = vadd.f32 %v7431, %v3768
    %v7480 = vadd.f32 %v7471, %v3769
    %7481 = vmatpush.msra.mxu0 %v4841
    %7482 = vmatpush.msra.mxu0 %v4833
    %7483 = vmatpush.msra.mxu0 %v4825
    %7484 = vmatpush.msra.mxu0 %v4817
    %7485 = vmatpush.msra.mxu0 %v4809
    %7486 = vmatpush.msra.mxu0 %v4801
    %7487 = vmatpush.msra.mxu0 %v4793
    %7488 = vmatpush.msra.mxu0 %v4785
    %7489 = vmatpush.msra.mxu0 %v4777
    %7490 = vmatpush.msra.mxu0 %v4769
    %7491 = vmatpush.msra.mxu0 %v4761
    %7492 = vmatpush.msra.mxu0 %v4753
    %7493 = vmatpush.msra.mxu0 %v4745
    %7494 = vmatpush.msra.mxu0 %v4737
    %7495 = vmatpush.msra.mxu0 %v4729
    %7496 = vmatpush.msra.mxu0 %v4721
    %7497 = vmatmul.f32.gmra.mxu0 %v6681
    %v7498 = vpop.f32.mrf.mxu0
    %v7499 = vadd.f32 0.0, %v7498
    %7500 = vdwg.mxu0
    %7501 = vmatpush.msra.mxu0 %v4969
    %7502 = vmatpush.msra.mxu0 %v4961
    %7503 = vmatpush.msra.mxu0 %v4953
    %7504 = vmatpush.msra.mxu0 %v4945
    %7505 = vmatpush.msra.mxu0 %v4937
    %7506 = vmatpush.msra.mxu0 %v4929
    %7507 = vmatpush.msra.mxu0 %v4921
    %7508 = vmatpush.msra.mxu0 %v4913
    %7509 = vmatpush.msra.mxu0 %v4905
    %7510 = vmatpush.msra.mxu0 %v4897
    %7511 = vmatpush.msra.mxu0 %v4889
    %7512 = vmatpush.msra.mxu0 %v4881
    %7513 = vmatpush.msra.mxu0 %v4873
    %7514 = vmatpush.msra.mxu0 %v4865
    %7515 = vmatpush.msra.mxu0 %v4857
    %7516 = vmatpush.msra.mxu0 %v4849
    %7517 = vmatmul.f32.gmra.mxu0 %v6682
    %v7518 = vpop.f32.mrf.mxu0
    %v7519 = vadd.f32 %v7499, %v7518
    %7520 = vdwg.mxu0
    %7521 = vmatpush.msra.mxu0 %v4842
    %7522 = vmatpush.msra.mxu0 %v4834
    %7523 = vmatpush.msra.mxu0 %v4826
    %7524 = vmatpush.msra.mxu0 %v4818
    %7525 = vmatpush.msra.mxu0 %v4810
    %7526 = vmatpush.msra.mxu0 %v4802
    %7527 = vmatpush.msra.mxu0 %v4794
    %7528 = vmatpush.msra.mxu0 %v4786
    %7529 = vmatpush.msra.mxu0 %v4778
    %7530 = vmatpush.msra.mxu0 %v4770
    %7531 = vmatpush.msra.mxu0 %v4762
    %7532 = vmatpush.msra.mxu0 %v4754
    %7533 = vmatpush.msra.mxu0 %v4746
    %7534 = vmatpush.msra.mxu0 %v4738
    %7535 = vmatpush.msra.mxu0 %v4730
    %7536 = vmatpush.msra.mxu0 %v4722
    %7537 = vmatmul.f32.gmra.mxu0 %v6681
    %v7538 = vpop.f32.mrf.mxu0
    %v7539 = vadd.f32 0.0, %v7538
    %7540 = vdwg.mxu0
    %7541 = vmatpush.msra.mxu0 %v4970
    %7542 = vmatpush.msra.mxu0 %v4962
    %7543 = vmatpush.msra.mxu0 %v4954
    %7544 = vmatpush.msra.mxu0 %v4946
    %7545 = vmatpush.msra.mxu0 %v4938
    %7546 = vmatpush.msra.mxu0 %v4930
    %7547 = vmatpush.msra.mxu0 %v4922
    %7548 = vmatpush.msra.mxu0 %v4914
    %7549 = vmatpush.msra.mxu0 %v4906
    %7550 = vmatpush.msra.mxu0 %v4898
    %7551 = vmatpush.msra.mxu0 %v4890
    %7552 = vmatpush.msra.mxu0 %v4882
    %7553 = vmatpush.msra.mxu0 %v4874
    %7554 = vmatpush.msra.mxu0 %v4866
    %7555 = vmatpush.msra.mxu0 %v4858
    %7556 = vmatpush.msra.mxu0 %v4850
    %7557 = vmatmul.f32.gmra.mxu0 %v6682
    %v7558 = vpop.f32.mrf.mxu0
    %v7559 = vadd.f32 %v7539, %v7558
    %7560 = vdwg.mxu0
    %7561 = vmatpush.msra.mxu0 %v4843
    %7562 = vmatpush.msra.mxu0 %v4835
    %7563 = vmatpush.msra.mxu0 %v4827
    %7564 = vmatpush.msra.mxu0 %v4819
    %7565 = vmatpush.msra.mxu0 %v4811
    %7566 = vmatpush.msra.mxu0 %v4803
    %7567 = vmatpush.msra.mxu0 %v4795
    %7568 = vmatpush.msra.mxu0 %v4787
    %7569 = vmatpush.msra.mxu0 %v4779
    %7570 = vmatpush.msra.mxu0 %v4771
    %7571 = vmatpush.msra.mxu0 %v4763
    %7572 = vmatpush.msra.mxu0 %v4755
    %7573 = vmatpush.msra.mxu0 %v4747
    %7574 = vmatpush.msra.mxu0 %v4739
    %7575 = vmatpush.msra.mxu0 %v4731
    %7576 = vmatpush.msra.mxu0 %v4723
    %7577 = vmatmul.f32.gmra.mxu0 %v6681
    %v7578 = vpop.f32.mrf.mxu0
    %v7579 = vadd.f32 0.0, %v7578
    %7580 = vdwg.mxu0
    %7581 = vmatpush.msra.mxu0 %v4971
    %7582 = vmatpush.msra.mxu0 %v4963
    %7583 = vmatpush.msra.mxu0 %v4955
    %7584 = vmatpush.msra.mxu0 %v4947
    %7585 = vmatpush.msra.mxu0 %v4939
    %7586 = vmatpush.msra.mxu0 %v4931
    %7587 = vmatpush.msra.mxu0 %v4923
    %7588 = vmatpush.msra.mxu0 %v4915
    %7589 = vmatpush.msra.mxu0 %v4907
    %7590 = vmatpush.msra.mxu0 %v4899
    %7591 = vmatpush.msra.mxu0 %v4891
    %7592 = vmatpush.msra.mxu0 %v4883
    %7593 = vmatpush.msra.mxu0 %v4875
    %7594 = vmatpush.msra.mxu0 %v4867
    %7595 = vmatpush.msra.mxu0 %v4859
    %7596 = vmatpush.msra.mxu0 %v4851
    %7597 = vmatmul.f32.gmra.mxu0 %v6682
    %v7598 = vpop.f32.mrf.mxu0
    %v7599 = vadd.f32 %v7579, %v7598
    %7600 = vdwg.mxu0
    %7601 = vmatpush.msra.mxu0 %v4844
    %7602 = vmatpush.msra.mxu0 %v4836
    %7603 = vmatpush.msra.mxu0 %v4828
    %7604 = vmatpush.msra.mxu0 %v4820
    %7605 = vmatpush.msra.mxu0 %v4812
    %7606 = vmatpush.msra.mxu0 %v4804
    %7607 = vmatpush.msra.mxu0 %v4796
    %7608 = vmatpush.msra.mxu0 %v4788
    %7609 = vmatpush.msra.mxu0 %v4780
    %7610 = vmatpush.msra.mxu0 %v4772
    %7611 = vmatpush.msra.mxu0 %v4764
    %7612 = vmatpush.msra.mxu0 %v4756
    %7613 = vmatpush.msra.mxu0 %v4748
    %7614 = vmatpush.msra.mxu0 %v4740
    %7615 = vmatpush.msra.mxu0 %v4732
    %7616 = vmatpush.msra.mxu0 %v4724
    %7617 = vmatmul.f32.gmra.mxu0 %v6681
    %v7618 = vpop.f32.mrf.mxu0
    %v7619 = vadd.f32 0.0, %v7618
    %7620 = vdwg.mxu0
    %7621 = vmatpush.msra.mxu0 %v4972
    %7622 = vmatpush.msra.mxu0 %v4964
    %7623 = vmatpush.msra.mxu0 %v4956
    %7624 = vmatpush.msra.mxu0 %v4948
    %7625 = vmatpush.msra.mxu0 %v4940
    %7626 = vmatpush.msra.mxu0 %v4932
    %7627 = vmatpush.msra.mxu0 %v4924
    %7628 = vmatpush.msra.mxu0 %v4916
    %7629 = vmatpush.msra.mxu0 %v4908
    %7630 = vmatpush.msra.mxu0 %v4900
    %7631 = vmatpush.msra.mxu0 %v4892
    %7632 = vmatpush.msra.mxu0 %v4884
    %7633 = vmatpush.msra.mxu0 %v4876
    %7634 = vmatpush.msra.mxu0 %v4868
    %7635 = vmatpush.msra.mxu0 %v4860
    %7636 = vmatpush.msra.mxu0 %v4852
    %7637 = vmatmul.f32.gmra.mxu0 %v6682
    %v7638 = vpop.f32.mrf.mxu0
    %v7639 = vadd.f32 %v7619, %v7638
    %7640 = vdwg.mxu0
    %7641 = vmatpush.msra.mxu0 %v4845
    %7642 = vmatpush.msra.mxu0 %v4837
    %7643 = vmatpush.msra.mxu0 %v4829
    %7644 = vmatpush.msra.mxu0 %v4821
    %7645 = vmatpush.msra.mxu0 %v4813
    %7646 = vmatpush.msra.mxu0 %v4805
    %7647 = vmatpush.msra.mxu0 %v4797
    %7648 = vmatpush.msra.mxu0 %v4789
    %7649 = vmatpush.msra.mxu0 %v4781
    %7650 = vmatpush.msra.mxu0 %v4773
    %7651 = vmatpush.msra.mxu0 %v4765
    %7652 = vmatpush.msra.mxu0 %v4757
    %7653 = vmatpush.msra.mxu0 %v4749
    %7654 = vmatpush.msra.mxu0 %v4741
    %7655 = vmatpush.msra.mxu0 %v4733
    %7656 = vmatpush.msra.mxu0 %v4725
    %7657 = vmatmul.f32.gmra.mxu0 %v6681
    %v7658 = vpop.f32.mrf.mxu0
    %v7659 = vadd.f32 0.0, %v7658
    %7660 = vdwg.mxu0
    %7661 = vmatpush.msra.mxu0 %v4973
    %7662 = vmatpush.msra.mxu0 %v4965
    %7663 = vmatpush.msra.mxu0 %v4957
    %7664 = vmatpush.msra.mxu0 %v4949
    %7665 = vmatpush.msra.mxu0 %v4941
    %7666 = vmatpush.msra.mxu0 %v4933
    %7667 = vmatpush.msra.mxu0 %v4925
    %7668 = vmatpush.msra.mxu0 %v4917
    %7669 = vmatpush.msra.mxu0 %v4909
    %7670 = vmatpush.msra.mxu0 %v4901
    %7671 = vmatpush.msra.mxu0 %v4893
    %7672 = vmatpush.msra.mxu0 %v4885
    %7673 = vmatpush.msra.mxu0 %v4877
    %7674 = vmatpush.msra.mxu0 %v4869
    %7675 = vmatpush.msra.mxu0 %v4861
    %7676 = vmatpush.msra.mxu0 %v4853
    %7677 = vmatmul.f32.gmra.mxu0 %v6682
    %v7678 = vpop.f32.mrf.mxu0
    %v7679 = vadd.f32 %v7659, %v7678
    %7680 = vdwg.mxu0
    %7681 = vmatpush.msra.mxu0 %v4846
    %7682 = vmatpush.msra.mxu0 %v4838
    %7683 = vmatpush.msra.mxu0 %v4830
    %7684 = vmatpush.msra.mxu0 %v4822
    %7685 = vmatpush.msra.mxu0 %v4814
    %7686 = vmatpush.msra.mxu0 %v4806
    %7687 = vmatpush.msra.mxu0 %v4798
    %7688 = vmatpush.msra.mxu0 %v4790
    %7689 = vmatpush.msra.mxu0 %v4782
    %7690 = vmatpush.msra.mxu0 %v4774
    %7691 = vmatpush.msra.mxu0 %v4766
    %7692 = vmatpush.msra.mxu0 %v4758
    %7693 = vmatpush.msra.mxu0 %v4750
    %7694 = vmatpush.msra.mxu0 %v4742
    %7695 = vmatpush.msra.mxu0 %v4734
    %7696 = vmatpush.msra.mxu0 %v4726
    %7697 = vmatmul.f32.gmra.mxu0 %v6681
    %v7698 = vpop.f32.mrf.mxu0
    %v7699 = vadd.f32 0.0, %v7698
    %7700 = vdwg.mxu0
    %7701 = vmatpush.msra.mxu0 %v4974
    %7702 = vmatpush.msra.mxu0 %v4966
    %7703 = vmatpush.msra.mxu0 %v4958
    %7704 = vmatpush.msra.mxu0 %v4950
    %7705 = vmatpush.msra.mxu0 %v4942
    %7706 = vmatpush.msra.mxu0 %v4934
    %7707 = vmatpush.msra.mxu0 %v4926
    %7708 = vmatpush.msra.mxu0 %v4918
    %7709 = vmatpush.msra.mxu0 %v4910
    %7710 = vmatpush.msra.mxu0 %v4902
    %7711 = vmatpush.msra.mxu0 %v4894
    %7712 = vmatpush.msra.mxu0 %v4886
    %7713 = vmatpush.msra.mxu0 %v4878
    %7714 = vmatpush.msra.mxu0 %v4870
    %7715 = vmatpush.msra.mxu0 %v4862
    %7716 = vmatpush.msra.mxu0 %v4854
    %7717 = vmatmul.f32.gmra.mxu0 %v6682
    %v7718 = vpop.f32.mrf.mxu0
    %v7719 = vadd.f32 %v7699, %v7718
    %7720 = vdwg.mxu0
    %7721 = vmatpush.msra.mxu0 %v4847
    %7722 = vmatpush.msra.mxu0 %v4839
    %7723 = vmatpush.msra.mxu0 %v4831
    %7724 = vmatpush.msra.mxu0 %v4823
    %7725 = vmatpush.msra.mxu0 %v4815
    %7726 = vmatpush.msra.mxu0 %v4807
    %7727 = vmatpush.msra.mxu0 %v4799
    %7728 = vmatpush.msra.mxu0 %v4791
    %7729 = vmatpush.msra.mxu0 %v4783
    %7730 = vmatpush.msra.mxu0 %v4775
    %7731 = vmatpush.msra.mxu0 %v4767
    %7732 = vmatpush.msra.mxu0 %v4759
    %7733 = vmatpush.msra.mxu0 %v4751
    %7734 = vmatpush.msra.mxu0 %v4743
    %7735 = vmatpush.msra.mxu0 %v4735
    %7736 = vmatpush.msra.mxu0 %v4727
    %7737 = vmatmul.f32.gmra.mxu0 %v6681
    %v7738 = vpop.f32.mrf.mxu0
    %v7739 = vadd.f32 0.0, %v7738
    %7740 = vdwg.mxu0
    %7741 = vmatpush.msra.mxu0 %v4975
    %7742 = vmatpush.msra.mxu0 %v4967
    %7743 = vmatpush.msra.mxu0 %v4959
    %7744 = vmatpush.msra.mxu0 %v4951
    %7745 = vmatpush.msra.mxu0 %v4943
    %7746 = vmatpush.msra.mxu0 %v4935
    %7747 = vmatpush.msra.mxu0 %v4927
    %7748 = vmatpush.msra.mxu0 %v4919
    %7749 = vmatpush.msra.mxu0 %v4911
    %7750 = vmatpush.msra.mxu0 %v4903
    %7751 = vmatpush.msra.mxu0 %v4895
    %7752 = vmatpush.msra.mxu0 %v4887
    %7753 = vmatpush.msra.mxu0 %v4879
    %7754 = vmatpush.msra.mxu0 %v4871
    %7755 = vmatpush.msra.mxu0 %v4863
    %7756 = vmatpush.msra.mxu0 %v4855
    %7757 = vmatmul.f32.gmra.mxu0 %v6682
    %v7758 = vpop.f32.mrf.mxu0
    %v7759 = vadd.f32 %v7739, %v7758
    %7760 = vdwg.mxu0
    %7761 = vmatpush.msra.mxu0 %v4848
    %7762 = vmatpush.msra.mxu0 %v4840
    %7763 = vmatpush.msra.mxu0 %v4832
    %7764 = vmatpush.msra.mxu0 %v4824
    %7765 = vmatpush.msra.mxu0 %v4816
    %7766 = vmatpush.msra.mxu0 %v4808
    %7767 = vmatpush.msra.mxu0 %v4800
    %7768 = vmatpush.msra.mxu0 %v4792
    %7769 = vmatpush.msra.mxu0 %v4784
    %7770 = vmatpush.msra.mxu0 %v4776
    %7771 = vmatpush.msra.mxu0 %v4768
    %7772 = vmatpush.msra.mxu0 %v4760
    %7773 = vmatpush.msra.mxu0 %v4752
    %7774 = vmatpush.msra.mxu0 %v4744
    %7775 = vmatpush.msra.mxu0 %v4736
    %7776 = vmatpush.msra.mxu0 %v4728
    %7777 = vmatmul.f32.gmra.mxu0 %v6681
    %v7778 = vpop.f32.mrf.mxu0
    %v7779 = vadd.f32 0.0, %v7778
    %7780 = vdwg.mxu0
    %7781 = vmatpush.msra.mxu0 %v4976
    %7782 = vmatpush.msra.mxu0 %v4968
    %7783 = vmatpush.msra.mxu0 %v4960
    %7784 = vmatpush.msra.mxu0 %v4952
    %7785 = vmatpush.msra.mxu0 %v4944
    %7786 = vmatpush.msra.mxu0 %v4936
    %7787 = vmatpush.msra.mxu0 %v4928
    %7788 = vmatpush.msra.mxu0 %v4920
    %7789 = vmatpush.msra.mxu0 %v4912
    %7790 = vmatpush.msra.mxu0 %v4904
    %7791 = vmatpush.msra.mxu0 %v4896
    %7792 = vmatpush.msra.mxu0 %v4888
    %7793 = vmatpush.msra.mxu0 %v4880
    %7794 = vmatpush.msra.mxu0 %v4872
    %7795 = vmatpush.msra.mxu0 %v4864
    %7796 = vmatpush.msra.mxu0 %v4856
    %7797 = vmatmul.f32.gmra.mxu0 %v6682
    %v7798 = vpop.f32.mrf.mxu0
    %v7799 = vadd.f32 %v7779, %v7798
    %7800 = vdwg.mxu0
    %v7801 = vadd.f32 %v7473, %v7519
    %v7802 = vadd.f32 %v7474, %v7559
    %v7803 = vadd.f32 %v7475, %v7599
    %v7804 = vadd.f32 %v7476, %v7639
    %v7805 = vadd.f32 %v7477, %v7679
    %v7806 = vadd.f32 %v7478, %v7719
    %v7807 = vadd.f32 %v7479, %v7759
    %v7808 = vadd.f32 %v7480, %v7799
    %v7809 = vxor.u32 %v7801, 2147483648
    %v7810 = vxor.u32 %v7802, 2147483648
    %v7811 = vmul.f32 %v7809, 1.442695
    %v7812 = vpow.pop %v7811
    %v7813 = vmul.f32 %v7810, 1.442695
    %v7814 = vpow.pop %v7813
    %v7815 = vadd.f32 %v7812, 1.0
    %v7816 = vadd.f32 %v7814, 1.0
    %v7817 = vrcp.pop %v7815
    %v7818 = vmul.f32 %v7815, %v7817
    %v7819 = vsub.f32 1.0, %v7818
    %v7820 = vmul.f32 %v7817, %v7819
    %v7821 = vadd.f32 %v7817, %v7820
    %vm7822 = vweird.f32 %v7815
    %vm7823 = vweird.f32 %v7817
    %vm7824 = vmor %vm7822, %vm7823
    %v7825 = vsel %vm7824, %v7817, %v7821
    %v7826 = vand.u32 2147483647, %v7815
    %vm7827 = vcmp.eq.f32.partialorder %v7826, 8.507059e+37
    %v7828 = vand.u32 %v7815, 2147483648
    %v7829 = vor.u32 1.1754944e-38, %v7828
    %v7830 = vsel %vm7827, %v7829, %v7825
    %v7831 = vmul.f32 1.0, %v7830
    %v7832 = vrcp.pop %v7816
    %v7833 = vmul.f32 %v7816, %v7832
    %v7834 = vsub.f32 1.0, %v7833
    %v7835 = vmul.f32 %v7832, %v7834
    %v7836 = vadd.f32 %v7832, %v7835
    %vm7837 = vweird.f32 %v7816
    %vm7838 = vweird.f32 %v7832
    %vm7839 = vmor %vm7837, %vm7838
    %v7840 = vsel %vm7839, %v7832, %v7836
    %v7841 = vand.u32 2147483647, %v7816
    %vm7842 = vcmp.eq.f32.partialorder %v7841, 8.507059e+37
    %v7843 = vand.u32 %v7816, 2147483648
    %v7844 = vor.u32 1.1754944e-38, %v7843
    %v7845 = vsel %vm7842, %v7844, %v7840
    %v7846 = vmul.f32 1.0, %v7845
    %v7847 = vxor.u32 %v7803, 2147483648
    %v7848 = vxor.u32 %v7804, 2147483648
    %v7849 = vmul.f32 %v7847, 1.442695
    %v7850 = vpow.pop %v7849
    %v7851 = vmul.f32 %v7848, 1.442695
    %v7852 = vpow.pop %v7851
    %v7853 = vadd.f32 %v7850, 1.0
    %v7854 = vadd.f32 %v7852, 1.0
    %v7855 = vrcp.pop %v7853
    %v7856 = vmul.f32 %v7853, %v7855
    %v7857 = vsub.f32 1.0, %v7856
    %v7858 = vmul.f32 %v7855, %v7857
    %v7859 = vadd.f32 %v7855, %v7858
    %vm7860 = vweird.f32 %v7853
    %vm7861 = vweird.f32 %v7855
    %vm7862 = vmor %vm7860, %vm7861
    %v7863 = vsel %vm7862, %v7855, %v7859
    %v7864 = vand.u32 2147483647, %v7853
    %vm7865 = vcmp.eq.f32.partialorder %v7864, 8.507059e+37
    %v7866 = vand.u32 %v7853, 2147483648
    %v7867 = vor.u32 1.1754944e-38, %v7866
    %v7868 = vsel %vm7865, %v7867, %v7863
    %v7869 = vmul.f32 1.0, %v7868
    %v7870 = vrcp.pop %v7854
    %v7871 = vmul.f32 %v7854, %v7870
    %v7872 = vsub.f32 1.0, %v7871
    %v7873 = vmul.f32 %v7870, %v7872
    %v7874 = vadd.f32 %v7870, %v7873
    %vm7875 = vweird.f32 %v7854
    %vm7876 = vweird.f32 %v7870
    %vm7877 = vmor %vm7875, %vm7876
    %v7878 = vsel %vm7877, %v7870, %v7874
    %v7879 = vand.u32 2147483647, %v7854
    %vm7880 = vcmp.eq.f32.partialorder %v7879, 8.507059e+37
    %v7881 = vand.u32 %v7854, 2147483648
    %v7882 = vor.u32 1.1754944e-38, %v7881
    %v7883 = vsel %vm7880, %v7882, %v7878
    %v7884 = vmul.f32 1.0, %v7883
    %v7885 = vtanh.pop %v7805
    %v7886 = vtanh.pop %v7806
    %v7887 = vxor.u32 %v7807, 2147483648
    %v7888 = vxor.u32 %v7808, 2147483648
    %v7889 = vmul.f32 %v7887, 1.442695
    %v7890 = vpow.pop %v7889
    %v7891 = vmul.f32 %v7888, 1.442695
    %v7892 = vpow.pop %v7891
    %v7893 = vadd.f32 %v7890, 1.0
    %v7894 = vadd.f32 %v7892, 1.0
    %v7895 = vrcp.pop %v7893
    %v7896 = vmul.f32 %v7893, %v7895
    %v7897 = vsub.f32 1.0, %v7896
    %v7898 = vmul.f32 %v7895, %v7897
    %v7899 = vadd.f32 %v7895, %v7898
    %vm7900 = vweird.f32 %v7893
    %vm7901 = vweird.f32 %v7895
    %vm7902 = vmor %vm7900, %vm7901
    %v7903 = vsel %vm7902, %v7895, %v7899
    %v7904 = vand.u32 2147483647, %v7893
    %vm7905 = vcmp.eq.f32.partialorder %v7904, 8.507059e+37
    %v7906 = vand.u32 %v7893, 2147483648
    %v7907 = vor.u32 1.1754944e-38, %v7906
    %v7908 = vsel %vm7905, %v7907, %v7903
    %v7909 = vmul.f32 1.0, %v7908
    %v7910 = vrcp.pop %v7894
    %v7911 = vmul.f32 %v7894, %v7910
    %v7912 = vsub.f32 1.0, %v7911
    %v7913 = vmul.f32 %v7910, %v7912
    %v7914 = vadd.f32 %v7910, %v7913
    %vm7915 = vweird.f32 %v7894
    %vm7916 = vweird.f32 %v7910
    %vm7917 = vmor %vm7915, %vm7916
    %v7918 = vsel %vm7917, %v7910, %v7914
    %v7919 = vand.u32 2147483647, %v7894
    %vm7920 = vcmp.eq.f32.partialorder %v7919, 8.507059e+37
    %v7921 = vand.u32 %v7894, 2147483648
    %v7922 = vor.u32 1.1754944e-38, %v7921
    %v7923 = vsel %vm7920, %v7922, %v7918
    %v7924 = vmul.f32 1.0, %v7923
    %v7925 = vmul.f32 %v7869, %v6677
    %v7926 = vmul.f32 %v7884, %v6678
    %v7927 = vmul.f32 %v7831, %v7885
    %v7928 = vmul.f32 %v7846, %v7886
    %v7929 = vadd.f32 %v7925, %v7927
    %v7930 = vadd.f32 %v7926, %v7928
    %v7931 = vtanh.pop %v7929
    %v7932 = vtanh.pop %v7930
    %v7933 = vmul.f32 %v7909, %v7931
    %v7934 = vmul.f32 %v7924, %v7932
    %v7935 = vrot.slane %v2337, 4
    %v7936 = vrot.slane %v2357, 4
    %v7937 = vrot.slane %v2377, 4
    %v7938 = vrot.slane %v2397, 4
    %v7939 = vrot.slane %v2417, 4
    %v7940 = vrot.slane %v2437, 4
    %v7941 = vrot.slane %v2457, 4
    %v7942 = vrot.slane %v2477, 4
    %v7951 = vadd.f32 %v6871, %v7935
    %v7952 = vadd.f32 %v6911, %v7936
    %v7953 = vadd.f32 %v6951, %v7937
    %v7954 = vadd.f32 %v6991, %v7938
    %v7955 = vadd.f32 %v7031, %v7939
    %v7956 = vadd.f32 %v7071, %v7940
    %v7957 = vadd.f32 %v7111, %v7941
    %v7958 = vadd.f32 %v7151, %v7942
    %v7959 = vxor.u32 %v7951, 2147483648
    %v7960 = vxor.u32 %v7952, 2147483648
    %v7961 = vmul.f32 %v7959, 1.442695
    %v7962 = vpow.pop %v7961
    %v7963 = vmul.f32 %v7960, 1.442695
    %v7964 = vpow.pop %v7963
    %v7965 = vadd.f32 %v7962, 1.0
    %v7966 = vadd.f32 %v7964, 1.0
    %v7967 = vrcp.pop %v7965
    %v7968 = vmul.f32 %v7965, %v7967
    %v7969 = vsub.f32 1.0, %v7968
    %v7970 = vmul.f32 %v7967, %v7969
    %v7971 = vadd.f32 %v7967, %v7970
    %vm7972 = vweird.f32 %v7965
    %vm7973 = vweird.f32 %v7967
    %vm7974 = vmor %vm7972, %vm7973
    %v7975 = vsel %vm7974, %v7967, %v7971
    %v7976 = vand.u32 2147483647, %v7965
    %vm7977 = vcmp.eq.f32.partialorder %v7976, 8.507059e+37
    %v7978 = vand.u32 %v7965, 2147483648
    %v7979 = vor.u32 1.1754944e-38, %v7978
    %v7980 = vsel %vm7977, %v7979, %v7975
    %v7981 = vmul.f32 1.0, %v7980
    %v7982 = vrcp.pop %v7966
    %v7983 = vmul.f32 %v7966, %v7982
    %v7984 = vsub.f32 1.0, %v7983
    %v7985 = vmul.f32 %v7982, %v7984
    %v7986 = vadd.f32 %v7982, %v7985
    %vm7987 = vweird.f32 %v7966
    %vm7988 = vweird.f32 %v7982
    %vm7989 = vmor %vm7987, %vm7988
    %v7990 = vsel %vm7989, %v7982, %v7986
    %v7991 = vand.u32 2147483647, %v7966
    %vm7992 = vcmp.eq.f32.partialorder %v7991, 8.507059e+37
    %v7993 = vand.u32 %v7966, 2147483648
    %v7994 = vor.u32 1.1754944e-38, %v7993
    %v7995 = vsel %vm7992, %v7994, %v7990
    %v7996 = vmul.f32 1.0, %v7995
    %v7997 = vxor.u32 %v7953, 2147483648
    %v7998 = vxor.u32 %v7954, 2147483648
    %v7999 = vmul.f32 %v7997, 1.442695
    %v8000 = vpow.pop %v7999
    %v8001 = vmul.f32 %v7998, 1.442695
    %v8002 = vpow.pop %v8001
    %v8003 = vadd.f32 %v8000, 1.0
    %v8004 = vadd.f32 %v8002, 1.0
    %v8005 = vrcp.pop %v8003
    %v8006 = vmul.f32 %v8003, %v8005
    %v8007 = vsub.f32 1.0, %v8006
    %v8008 = vmul.f32 %v8005, %v8007
    %v8009 = vadd.f32 %v8005, %v8008
    %vm8010 = vweird.f32 %v8003
    %vm8011 = vweird.f32 %v8005
    %vm8012 = vmor %vm8010, %vm8011
    %v8013 = vsel %vm8012, %v8005, %v8009
    %v8014 = vand.u32 2147483647, %v8003
    %vm8015 = vcmp.eq.f32.partialorder %v8014, 8.507059e+37
    %v8016 = vand.u32 %v8003, 2147483648
    %v8017 = vor.u32 1.1754944e-38, %v8016
    %v8018 = vsel %vm8015, %v8017, %v8013
    %v8019 = vmul.f32 1.0, %v8018
    %v8020 = vrcp.pop %v8004
    %v8021 = vmul.f32 %v8004, %v8020
    %v8022 = vsub.f32 1.0, %v8021
    %v8023 = vmul.f32 %v8020, %v8022
    %v8024 = vadd.f32 %v8020, %v8023
    %vm8025 = vweird.f32 %v8004
    %vm8026 = vweird.f32 %v8020
    %vm8027 = vmor %vm8025, %vm8026
    %v8028 = vsel %vm8027, %v8020, %v8024
    %v8029 = vand.u32 2147483647, %v8004
    %vm8030 = vcmp.eq.f32.partialorder %v8029, 8.507059e+37
    %v8031 = vand.u32 %v8004, 2147483648
    %v8032 = vor.u32 1.1754944e-38, %v8031
    %v8033 = vsel %vm8030, %v8032, %v8028
    %v8034 = vmul.f32 1.0, %v8033
    %v8035 = vtanh.pop %v7955
    %v8036 = vtanh.pop %v7956
    %v8037 = vxor.u32 %v7957, 2147483648
    %v8038 = vxor.u32 %v7958, 2147483648
    %v8039 = vmul.f32 %v8037, 1.442695
    %v8040 = vpow.pop %v8039
    %v8041 = vmul.f32 %v8038, 1.442695
    %v8042 = vpow.pop %v8041
    %v8043 = vadd.f32 %v8040, 1.0
    %v8044 = vadd.f32 %v8042, 1.0
    %v8045 = vrcp.pop %v8043
    %v8046 = vmul.f32 %v8043, %v8045
    %v8047 = vsub.f32 1.0, %v8046
    %v8048 = vmul.f32 %v8045, %v8047
    %v8049 = vadd.f32 %v8045, %v8048
    %vm8050 = vweird.f32 %v8043
    %vm8051 = vweird.f32 %v8045
    %vm8052 = vmor %vm8050, %vm8051
    %v8053 = vsel %vm8052, %v8045, %v8049
    %v8054 = vand.u32 2147483647, %v8043
    %vm8055 = vcmp.eq.f32.partialorder %v8054, 8.507059e+37
    %v8056 = vand.u32 %v8043, 2147483648
    %v8057 = vor.u32 1.1754944e-38, %v8056
    %v8058 = vsel %vm8055, %v8057, %v8053
    %v8059 = vmul.f32 1.0, %v8058
    %v8060 = vrcp.pop %v8044
    %v8061 = vmul.f32 %v8044, %v8060
    %v8062 = vsub.f32 1.0, %v8061
    %v8063 = vmul.f32 %v8060, %v8062
    %v8064 = vadd.f32 %v8060, %v8063
    %vm8065 = vweird.f32 %v8044
    %vm8066 = vweird.f32 %v8060
    %vm8067 = vmor %vm8065, %vm8066
    %v8068 = vsel %vm8067, %v8060, %v8064
    %v8069 = vand.u32 2147483647, %v8044
    %vm8070 = vcmp.eq.f32.partialorder %v8069, 8.507059e+37
    %v8071 = vand.u32 %v8044, 2147483648
    %v8072 = vor.u32 1.1754944e-38, %v8071
    %v8073 = vsel %vm8070, %v8072, %v8068
    %v8074 = vmul.f32 1.0, %v8073
    %v8075 = vmul.f32 %v8019, %v6827
    %v8076 = vmul.f32 %v8034, %v6828
    %v8077 = vmul.f32 %v7981, %v8035
    %v8078 = vmul.f32 %v7996, %v8036
    %v8079 = vadd.f32 %v8075, %v8077
    %v8080 = vadd.f32 %v8076, %v8078
    %v8081 = vtanh.pop %v8079
    %v8082 = vtanh.pop %v8080
    %v8083 = vmul.f32 %v8059, %v8081
    %v8084 = vmul.f32 %v8074, %v8082
    %8085 = vmatpush.msra.mxu0 %v2857
    %8086 = vmatpush.msra.mxu0 %v2841
    %8087 = vmatpush.msra.mxu0 %v2825
    %8088 = vmatpush.msra.mxu0 %v2809
    %8089 = vmatpush.msra.mxu0 %v2793
    %8090 = vmatpush.msra.mxu0 %v2777
    %8091 = vmatpush.msra.mxu0 %v2761
    %8092 = vmatpush.msra.mxu0 %v2745
    %8093 = vmatpush.msra.mxu0 %v2729
    %8094 = vmatpush.msra.mxu0 %v2713
    %8095 = vmatpush.msra.mxu0 %v2697
    %8096 = vmatpush.msra.mxu0 %v2681
    %8097 = vmatpush.msra.mxu0 %v2665
    %8098 = vmatpush.msra.mxu0 %v2649
    %8099 = vmatpush.msra.mxu0 %v2633
    %8100 = vmatpush.msra.mxu0 %v2617
    %8101 = vmatmul.f32.gmra.mxu0 %v8083
    %v8102 = vpop.f32.mrf.mxu0
    %v8103 = vadd.f32 0.0, %v8102
    %8104 = vdwg.mxu0
    %8105 = vmatpush.msra.mxu0 %v3113
    %8106 = vmatpush.msra.mxu0 %v3097
    %8107 = vmatpush.msra.mxu0 %v3081
    %8108 = vmatpush.msra.mxu0 %v3065
    %8109 = vmatpush.msra.mxu0 %v3049
    %8110 = vmatpush.msra.mxu0 %v3033
    %8111 = vmatpush.msra.mxu0 %v3017
    %8112 = vmatpush.msra.mxu0 %v3001
    %8113 = vmatpush.msra.mxu0 %v2985
    %8114 = vmatpush.msra.mxu0 %v2969
    %8115 = vmatpush.msra.mxu0 %v2953
    %8116 = vmatpush.msra.mxu0 %v2937
    %8117 = vmatpush.msra.mxu0 %v2921
    %8118 = vmatpush.msra.mxu0 %v2905
    %8119 = vmatpush.msra.mxu0 %v2889
    %8120 = vmatpush.msra.mxu0 %v2873
    %8121 = vmatmul.f32.gmra.mxu0 %v8084
    %v8122 = vpop.f32.mrf.mxu0
    %v8123 = vadd.f32 %v8103, %v8122
    %8124 = vdwg.mxu0
    %8125 = vmatpush.msra.mxu0 %v2858
    %8126 = vmatpush.msra.mxu0 %v2842
    %8127 = vmatpush.msra.mxu0 %v2826
    %8128 = vmatpush.msra.mxu0 %v2810
    %8129 = vmatpush.msra.mxu0 %v2794
    %8130 = vmatpush.msra.mxu0 %v2778
    %8131 = vmatpush.msra.mxu0 %v2762
    %8132 = vmatpush.msra.mxu0 %v2746
    %8133 = vmatpush.msra.mxu0 %v2730
    %8134 = vmatpush.msra.mxu0 %v2714
    %8135 = vmatpush.msra.mxu0 %v2698
    %8136 = vmatpush.msra.mxu0 %v2682
    %8137 = vmatpush.msra.mxu0 %v2666
    %8138 = vmatpush.msra.mxu0 %v2650
    %8139 = vmatpush.msra.mxu0 %v2634
    %8140 = vmatpush.msra.mxu0 %v2618
    %8141 = vmatmul.f32.gmra.mxu0 %v8083
    %v8142 = vpop.f32.mrf.mxu0
    %v8143 = vadd.f32 0.0, %v8142
    %8144 = vdwg.mxu0
    %8145 = vmatpush.msra.mxu0 %v3114
    %8146 = vmatpush.msra.mxu0 %v3098
    %8147 = vmatpush.msra.mxu0 %v3082
    %8148 = vmatpush.msra.mxu0 %v3066
    %8149 = vmatpush.msra.mxu0 %v3050
    %8150 = vmatpush.msra.mxu0 %v3034
    %8151 = vmatpush.msra.mxu0 %v3018
    %8152 = vmatpush.msra.mxu0 %v3002
    %8153 = vmatpush.msra.mxu0 %v2986
    %8154 = vmatpush.msra.mxu0 %v2970
    %8155 = vmatpush.msra.mxu0 %v2954
    %8156 = vmatpush.msra.mxu0 %v2938
    %8157 = vmatpush.msra.mxu0 %v2922
    %8158 = vmatpush.msra.mxu0 %v2906
    %8159 = vmatpush.msra.mxu0 %v2890
    %8160 = vmatpush.msra.mxu0 %v2874
    %8161 = vmatmul.f32.gmra.mxu0 %v8084
    %v8162 = vpop.f32.mrf.mxu0
    %v8163 = vadd.f32 %v8143, %v8162
    %8164 = vdwg.mxu0
    %8165 = vmatpush.msra.mxu0 %v2859
    %8166 = vmatpush.msra.mxu0 %v2843
    %8167 = vmatpush.msra.mxu0 %v2827
    %8168 = vmatpush.msra.mxu0 %v2811
    %8169 = vmatpush.msra.mxu0 %v2795
    %8170 = vmatpush.msra.mxu0 %v2779
    %8171 = vmatpush.msra.mxu0 %v2763
    %8172 = vmatpush.msra.mxu0 %v2747
    %8173 = vmatpush.msra.mxu0 %v2731
    %8174 = vmatpush.msra.mxu0 %v2715
    %8175 = vmatpush.msra.mxu0 %v2699
    %8176 = vmatpush.msra.mxu0 %v2683
    %8177 = vmatpush.msra.mxu0 %v2667
    %8178 = vmatpush.msra.mxu0 %v2651
    %8179 = vmatpush.msra.mxu0 %v2635
    %8180 = vmatpush.msra.mxu0 %v2619
    %8181 = vmatmul.f32.gmra.mxu0 %v8083
    %v8182 = vpop.f32.mrf.mxu0
    %v8183 = vadd.f32 0.0, %v8182
    %8184 = vdwg.mxu0
    %8185 = vmatpush.msra.mxu0 %v3115
    %8186 = vmatpush.msra.mxu0 %v3099
    %8187 = vmatpush.msra.mxu0 %v3083
    %8188 = vmatpush.msra.mxu0 %v3067
    %8189 = vmatpush.msra.mxu0 %v3051
    %8190 = vmatpush.msra.mxu0 %v3035
    %8191 = vmatpush.msra.mxu0 %v3019
    %8192 = vmatpush.msra.mxu0 %v3003
    %8193 = vmatpush.msra.mxu0 %v2987
    %8194 = vmatpush.msra.mxu0 %v2971
    %8195 = vmatpush.msra.mxu0 %v2955
    %8196 = vmatpush.msra.mxu0 %v2939
    %8197 = vmatpush.msra.mxu0 %v2923
    %8198 = vmatpush.msra.mxu0 %v2907
    %8199 = vmatpush.msra.mxu0 %v2891
    %8200 = vmatpush.msra.mxu0 %v2875
    %8201 = vmatmul.f32.gmra.mxu0 %v8084
    %v8202 = vpop.f32.mrf.mxu0
    %v8203 = vadd.f32 %v8183, %v8202
    %8204 = vdwg.mxu0
    %8205 = vmatpush.msra.mxu0 %v2860
    %8206 = vmatpush.msra.mxu0 %v2844
    %8207 = vmatpush.msra.mxu0 %v2828
    %8208 = vmatpush.msra.mxu0 %v2812
    %8209 = vmatpush.msra.mxu0 %v2796
    %8210 = vmatpush.msra.mxu0 %v2780
    %8211 = vmatpush.msra.mxu0 %v2764
    %8212 = vmatpush.msra.mxu0 %v2748
    %8213 = vmatpush.msra.mxu0 %v2732
    %8214 = vmatpush.msra.mxu0 %v2716
    %8215 = vmatpush.msra.mxu0 %v2700
    %8216 = vmatpush.msra.mxu0 %v2684
    %8217 = vmatpush.msra.mxu0 %v2668
    %8218 = vmatpush.msra.mxu0 %v2652
    %8219 = vmatpush.msra.mxu0 %v2636
    %8220 = vmatpush.msra.mxu0 %v2620
    %8221 = vmatmul.f32.gmra.mxu0 %v8083
    %v8222 = vpop.f32.mrf.mxu0
    %v8223 = vadd.f32 0.0, %v8222
    %8224 = vdwg.mxu0
    %8225 = vmatpush.msra.mxu0 %v3116
    %8226 = vmatpush.msra.mxu0 %v3100
    %8227 = vmatpush.msra.mxu0 %v3084
    %8228 = vmatpush.msra.mxu0 %v3068
    %8229 = vmatpush.msra.mxu0 %v3052
    %8230 = vmatpush.msra.mxu0 %v3036
    %8231 = vmatpush.msra.mxu0 %v3020
    %8232 = vmatpush.msra.mxu0 %v3004
    %8233 = vmatpush.msra.mxu0 %v2988
    %8234 = vmatpush.msra.mxu0 %v2972
    %8235 = vmatpush.msra.mxu0 %v2956
    %8236 = vmatpush.msra.mxu0 %v2940
    %8237 = vmatpush.msra.mxu0 %v2924
    %8238 = vmatpush.msra.mxu0 %v2908
    %8239 = vmatpush.msra.mxu0 %v2892
    %8240 = vmatpush.msra.mxu0 %v2876
    %8241 = vmatmul.f32.gmra.mxu0 %v8084
    %v8242 = vpop.f32.mrf.mxu0
    %v8243 = vadd.f32 %v8223, %v8242
    %8244 = vdwg.mxu0
    %8245 = vmatpush.msra.mxu0 %v2861
    %8246 = vmatpush.msra.mxu0 %v2845
    %8247 = vmatpush.msra.mxu0 %v2829
    %8248 = vmatpush.msra.mxu0 %v2813
    %8249 = vmatpush.msra.mxu0 %v2797
    %8250 = vmatpush.msra.mxu0 %v2781
    %8251 = vmatpush.msra.mxu0 %v2765
    %8252 = vmatpush.msra.mxu0 %v2749
    %8253 = vmatpush.msra.mxu0 %v2733
    %8254 = vmatpush.msra.mxu0 %v2717
    %8255 = vmatpush.msra.mxu0 %v2701
    %8256 = vmatpush.msra.mxu0 %v2685
    %8257 = vmatpush.msra.mxu0 %v2669
    %8258 = vmatpush.msra.mxu0 %v2653
    %8259 = vmatpush.msra.mxu0 %v2637
    %8260 = vmatpush.msra.mxu0 %v2621
    %8261 = vmatmul.f32.gmra.mxu0 %v8083
    %v8262 = vpop.f32.mrf.mxu0
    %v8263 = vadd.f32 0.0, %v8262
    %8264 = vdwg.mxu0
    %8265 = vmatpush.msra.mxu0 %v3117
    %8266 = vmatpush.msra.mxu0 %v3101
    %8267 = vmatpush.msra.mxu0 %v3085
    %8268 = vmatpush.msra.mxu0 %v3069
    %8269 = vmatpush.msra.mxu0 %v3053
    %8270 = vmatpush.msra.mxu0 %v3037
    %8271 = vmatpush.msra.mxu0 %v3021
    %8272 = vmatpush.msra.mxu0 %v3005
    %8273 = vmatpush.msra.mxu0 %v2989
    %8274 = vmatpush.msra.mxu0 %v2973
    %8275 = vmatpush.msra.mxu0 %v2957
    %8276 = vmatpush.msra.mxu0 %v2941
    %8277 = vmatpush.msra.mxu0 %v2925
    %8278 = vmatpush.msra.mxu0 %v2909
    %8279 = vmatpush.msra.mxu0 %v2893
    %8280 = vmatpush.msra.mxu0 %v2877
    %8281 = vmatmul.f32.gmra.mxu0 %v8084
    %v8282 = vpop.f32.mrf.mxu0
    %v8283 = vadd.f32 %v8263, %v8282
    %8284 = vdwg.mxu0
    %8285 = vmatpush.msra.mxu0 %v2862
    %8286 = vmatpush.msra.mxu0 %v2846
    %8287 = vmatpush.msra.mxu0 %v2830
    %8288 = vmatpush.msra.mxu0 %v2814
    %8289 = vmatpush.msra.mxu0 %v2798
    %8290 = vmatpush.msra.mxu0 %v2782
    %8291 = vmatpush.msra.mxu0 %v2766
    %8292 = vmatpush.msra.mxu0 %v2750
    %8293 = vmatpush.msra.mxu0 %v2734
    %8294 = vmatpush.msra.mxu0 %v2718
    %8295 = vmatpush.msra.mxu0 %v2702
    %8296 = vmatpush.msra.mxu0 %v2686
    %8297 = vmatpush.msra.mxu0 %v2670
    %8298 = vmatpush.msra.mxu0 %v2654
    %8299 = vmatpush.msra.mxu0 %v2638
    %8300 = vmatpush.msra.mxu0 %v2622
    %8301 = vmatmul.f32.gmra.mxu0 %v8083
    %v8302 = vpop.f32.mrf.mxu0
    %v8303 = vadd.f32 0.0, %v8302
    %8304 = vdwg.mxu0
    %8305 = vmatpush.msra.mxu0 %v3118
    %8306 = vmatpush.msra.mxu0 %v3102
    %8307 = vmatpush.msra.mxu0 %v3086
    %8308 = vmatpush.msra.mxu0 %v3070
    %8309 = vmatpush.msra.mxu0 %v3054
    %8310 = vmatpush.msra.mxu0 %v3038
    %8311 = vmatpush.msra.mxu0 %v3022
    %8312 = vmatpush.msra.mxu0 %v3006
    %8313 = vmatpush.msra.mxu0 %v2990
    %8314 = vmatpush.msra.mxu0 %v2974
    %8315 = vmatpush.msra.mxu0 %v2958
    %8316 = vmatpush.msra.mxu0 %v2942
    %8317 = vmatpush.msra.mxu0 %v2926
    %8318 = vmatpush.msra.mxu0 %v2910
    %8319 = vmatpush.msra.mxu0 %v2894
    %8320 = vmatpush.msra.mxu0 %v2878
    %8321 = vmatmul.f32.gmra.mxu0 %v8084
    %v8322 = vpop.f32.mrf.mxu0
    %v8323 = vadd.f32 %v8303, %v8322
    %8324 = vdwg.mxu0
    %8325 = vmatpush.msra.mxu0 %v2863
    %8326 = vmatpush.msra.mxu0 %v2847
    %8327 = vmatpush.msra.mxu0 %v2831
    %8328 = vmatpush.msra.mxu0 %v2815
    %8329 = vmatpush.msra.mxu0 %v2799
    %8330 = vmatpush.msra.mxu0 %v2783
    %8331 = vmatpush.msra.mxu0 %v2767
    %8332 = vmatpush.msra.mxu0 %v2751
    %8333 = vmatpush.msra.mxu0 %v2735
    %8334 = vmatpush.msra.mxu0 %v2719
    %8335 = vmatpush.msra.mxu0 %v2703
    %8336 = vmatpush.msra.mxu0 %v2687
    %8337 = vmatpush.msra.mxu0 %v2671
    %8338 = vmatpush.msra.mxu0 %v2655
    %8339 = vmatpush.msra.mxu0 %v2639
    %8340 = vmatpush.msra.mxu0 %v2623
    %8341 = vmatmul.f32.gmra.mxu0 %v8083
    %v8342 = vpop.f32.mrf.mxu0
    %v8343 = vadd.f32 0.0, %v8342
    %8344 = vdwg.mxu0
    %8345 = vmatpush.msra.mxu0 %v3119
    %8346 = vmatpush.msra.mxu0 %v3103
    %8347 = vmatpush.msra.mxu0 %v3087
    %8348 = vmatpush.msra.mxu0 %v3071
    %8349 = vmatpush.msra.mxu0 %v3055
    %8350 = vmatpush.msra.mxu0 %v3039
    %8351 = vmatpush.msra.mxu0 %v3023
    %8352 = vmatpush.msra.mxu0 %v3007
    %8353 = vmatpush.msra.mxu0 %v2991
    %8354 = vmatpush.msra.mxu0 %v2975
    %8355 = vmatpush.msra.mxu0 %v2959
    %8356 = vmatpush.msra.mxu0 %v2943
    %8357 = vmatpush.msra.mxu0 %v2927
    %8358 = vmatpush.msra.mxu0 %v2911
    %8359 = vmatpush.msra.mxu0 %v2895
    %8360 = vmatpush.msra.mxu0 %v2879
    %8361 = vmatmul.f32.gmra.mxu0 %v8084
    %v8362 = vpop.f32.mrf.mxu0
    %v8363 = vadd.f32 %v8343, %v8362
    %8364 = vdwg.mxu0
    %8365 = vmatpush.msra.mxu0 %v2864
    %8366 = vmatpush.msra.mxu0 %v2848
    %8367 = vmatpush.msra.mxu0 %v2832
    %8368 = vmatpush.msra.mxu0 %v2816
    %8369 = vmatpush.msra.mxu0 %v2800
    %8370 = vmatpush.msra.mxu0 %v2784
    %8371 = vmatpush.msra.mxu0 %v2768
    %8372 = vmatpush.msra.mxu0 %v2752
    %8373 = vmatpush.msra.mxu0 %v2736
    %8374 = vmatpush.msra.mxu0 %v2720
    %8375 = vmatpush.msra.mxu0 %v2704
    %8376 = vmatpush.msra.mxu0 %v2688
    %8377 = vmatpush.msra.mxu0 %v2672
    %8378 = vmatpush.msra.mxu0 %v2656
    %8379 = vmatpush.msra.mxu0 %v2640
    %8380 = vmatpush.msra.mxu0 %v2624
    %8381 = vmatmul.f32.gmra.mxu0 %v8083
    %v8382 = vpop.f32.mrf.mxu0
    %v8383 = vadd.f32 0.0, %v8382
    %8384 = vdwg.mxu0
    %8385 = vmatpush.msra.mxu0 %v3120
    %8386 = vmatpush.msra.mxu0 %v3104
    %8387 = vmatpush.msra.mxu0 %v3088
    %8388 = vmatpush.msra.mxu0 %v3072
    %8389 = vmatpush.msra.mxu0 %v3056
    %8390 = vmatpush.msra.mxu0 %v3040
    %8391 = vmatpush.msra.mxu0 %v3024
    %8392 = vmatpush.msra.mxu0 %v3008
    %8393 = vmatpush.msra.mxu0 %v2992
    %8394 = vmatpush.msra.mxu0 %v2976
    %8395 = vmatpush.msra.mxu0 %v2960
    %8396 = vmatpush.msra.mxu0 %v2944
    %8397 = vmatpush.msra.mxu0 %v2928
    %8398 = vmatpush.msra.mxu0 %v2912
    %8399 = vmatpush.msra.mxu0 %v2896
    %8400 = vmatpush.msra.mxu0 %v2880
    %8401 = vmatmul.f32.gmra.mxu0 %v8084
    %v8402 = vpop.f32.mrf.mxu0
    %v8403 = vadd.f32 %v8383, %v8402
    %8404 = vdwg.mxu0
    %v8405 = vadd.f32 %v8123, %v3762
    %v8406 = vadd.f32 %v8163, %v3763
    %v8407 = vadd.f32 %v8203, %v3764
    %v8408 = vadd.f32 %v8243, %v3765
    %v8409 = vadd.f32 %v8283, %v3766
    %v8410 = vadd.f32 %v8323, %v3767
    %v8411 = vadd.f32 %v8363, %v3768
    %v8412 = vadd.f32 %v8403, %v3769
    %8413 = vmatpush.msra.mxu0 %v4841
    %8414 = vmatpush.msra.mxu0 %v4833
    %8415 = vmatpush.msra.mxu0 %v4825
    %8416 = vmatpush.msra.mxu0 %v4817
    %8417 = vmatpush.msra.mxu0 %v4809
    %8418 = vmatpush.msra.mxu0 %v4801
    %8419 = vmatpush.msra.mxu0 %v4793
    %8420 = vmatpush.msra.mxu0 %v4785
    %8421 = vmatpush.msra.mxu0 %v4777
    %8422 = vmatpush.msra.mxu0 %v4769
    %8423 = vmatpush.msra.mxu0 %v4761
    %8424 = vmatpush.msra.mxu0 %v4753
    %8425 = vmatpush.msra.mxu0 %v4745
    %8426 = vmatpush.msra.mxu0 %v4737
    %8427 = vmatpush.msra.mxu0 %v4729
    %8428 = vmatpush.msra.mxu0 %v4721
    %8429 = vmatmul.f32.gmra.mxu0 %v7933
    %v8430 = vpop.f32.mrf.mxu0
    %v8431 = vadd.f32 0.0, %v8430
    %8432 = vdwg.mxu0
    %8433 = vmatpush.msra.mxu0 %v4969
    %8434 = vmatpush.msra.mxu0 %v4961
    %8435 = vmatpush.msra.mxu0 %v4953
    %8436 = vmatpush.msra.mxu0 %v4945
    %8437 = vmatpush.msra.mxu0 %v4937
    %8438 = vmatpush.msra.mxu0 %v4929
    %8439 = vmatpush.msra.mxu0 %v4921
    %8440 = vmatpush.msra.mxu0 %v4913
    %8441 = vmatpush.msra.mxu0 %v4905
    %8442 = vmatpush.msra.mxu0 %v4897
    %8443 = vmatpush.msra.mxu0 %v4889
    %8444 = vmatpush.msra.mxu0 %v4881
    %8445 = vmatpush.msra.mxu0 %v4873
    %8446 = vmatpush.msra.mxu0 %v4865
    %8447 = vmatpush.msra.mxu0 %v4857
    %8448 = vmatpush.msra.mxu0 %v4849
    %8449 = vmatmul.f32.gmra.mxu0 %v7934
    %v8450 = vpop.f32.mrf.mxu0
    %v8451 = vadd.f32 %v8431, %v8450
    %8452 = vdwg.mxu0
    %8453 = vmatpush.msra.mxu0 %v4842
    %8454 = vmatpush.msra.mxu0 %v4834
    %8455 = vmatpush.msra.mxu0 %v4826
    %8456 = vmatpush.msra.mxu0 %v4818
    %8457 = vmatpush.msra.mxu0 %v4810
    %8458 = vmatpush.msra.mxu0 %v4802
    %8459 = vmatpush.msra.mxu0 %v4794
    %8460 = vmatpush.msra.mxu0 %v4786
    %8461 = vmatpush.msra.mxu0 %v4778
    %8462 = vmatpush.msra.mxu0 %v4770
    %8463 = vmatpush.msra.mxu0 %v4762
    %8464 = vmatpush.msra.mxu0 %v4754
    %8465 = vmatpush.msra.mxu0 %v4746
    %8466 = vmatpush.msra.mxu0 %v4738
    %8467 = vmatpush.msra.mxu0 %v4730
    %8468 = vmatpush.msra.mxu0 %v4722
    %8469 = vmatmul.f32.gmra.mxu0 %v7933
    %v8470 = vpop.f32.mrf.mxu0
    %v8471 = vadd.f32 0.0, %v8470
    %8472 = vdwg.mxu0
    %8473 = vmatpush.msra.mxu0 %v4970
    %8474 = vmatpush.msra.mxu0 %v4962
    %8475 = vmatpush.msra.mxu0 %v4954
    %8476 = vmatpush.msra.mxu0 %v4946
    %8477 = vmatpush.msra.mxu0 %v4938
    %8478 = vmatpush.msra.mxu0 %v4930
    %8479 = vmatpush.msra.mxu0 %v4922
    %8480 = vmatpush.msra.mxu0 %v4914
    %8481 = vmatpush.msra.mxu0 %v4906
    %8482 = vmatpush.msra.mxu0 %v4898
    %8483 = vmatpush.msra.mxu0 %v4890
    %8484 = vmatpush.msra.mxu0 %v4882
    %8485 = vmatpush.msra.mxu0 %v4874
    %8486 = vmatpush.msra.mxu0 %v4866
    %8487 = vmatpush.msra.mxu0 %v4858
    %8488 = vmatpush.msra.mxu0 %v4850
    %8489 = vmatmul.f32.gmra.mxu0 %v7934
    %v8490 = vpop.f32.mrf.mxu0
    %v8491 = vadd.f32 %v8471, %v8490
    %8492 = vdwg.mxu0
    %8493 = vmatpush.msra.mxu0 %v4843
    %8494 = vmatpush.msra.mxu0 %v4835
    %8495 = vmatpush.msra.mxu0 %v4827
    %8496 = vmatpush.msra.mxu0 %v4819
    %8497 = vmatpush.msra.mxu0 %v4811
    %8498 = vmatpush.msra.mxu0 %v4803
    %8499 = vmatpush.msra.mxu0 %v4795
    %8500 = vmatpush.msra.mxu0 %v4787
    %8501 = vmatpush.msra.mxu0 %v4779
    %8502 = vmatpush.msra.mxu0 %v4771
    %8503 = vmatpush.msra.mxu0 %v4763
    %8504 = vmatpush.msra.mxu0 %v4755
    %8505 = vmatpush.msra.mxu0 %v4747
    %8506 = vmatpush.msra.mxu0 %v4739
    %8507 = vmatpush.msra.mxu0 %v4731
    %8508 = vmatpush.msra.mxu0 %v4723
    %8509 = vmatmul.f32.gmra.mxu0 %v7933
    %v8510 = vpop.f32.mrf.mxu0
    %v8511 = vadd.f32 0.0, %v8510
    %8512 = vdwg.mxu0
    %8513 = vmatpush.msra.mxu0 %v4971
    %8514 = vmatpush.msra.mxu0 %v4963
    %8515 = vmatpush.msra.mxu0 %v4955
    %8516 = vmatpush.msra.mxu0 %v4947
    %8517 = vmatpush.msra.mxu0 %v4939
    %8518 = vmatpush.msra.mxu0 %v4931
    %8519 = vmatpush.msra.mxu0 %v4923
    %8520 = vmatpush.msra.mxu0 %v4915
    %8521 = vmatpush.msra.mxu0 %v4907
    %8522 = vmatpush.msra.mxu0 %v4899
    %8523 = vmatpush.msra.mxu0 %v4891
    %8524 = vmatpush.msra.mxu0 %v4883
    %8525 = vmatpush.msra.mxu0 %v4875
    %8526 = vmatpush.msra.mxu0 %v4867
    %8527 = vmatpush.msra.mxu0 %v4859
    %8528 = vmatpush.msra.mxu0 %v4851
    %8529 = vmatmul.f32.gmra.mxu0 %v7934
    %v8530 = vpop.f32.mrf.mxu0
    %v8531 = vadd.f32 %v8511, %v8530
    %8532 = vdwg.mxu0
    %8533 = vmatpush.msra.mxu0 %v4844
    %8534 = vmatpush.msra.mxu0 %v4836
    %8535 = vmatpush.msra.mxu0 %v4828
    %8536 = vmatpush.msra.mxu0 %v4820
    %8537 = vmatpush.msra.mxu0 %v4812
    %8538 = vmatpush.msra.mxu0 %v4804
    %8539 = vmatpush.msra.mxu0 %v4796
    %8540 = vmatpush.msra.mxu0 %v4788
    %8541 = vmatpush.msra.mxu0 %v4780
    %8542 = vmatpush.msra.mxu0 %v4772
    %8543 = vmatpush.msra.mxu0 %v4764
    %8544 = vmatpush.msra.mxu0 %v4756
    %8545 = vmatpush.msra.mxu0 %v4748
    %8546 = vmatpush.msra.mxu0 %v4740
    %8547 = vmatpush.msra.mxu0 %v4732
    %8548 = vmatpush.msra.mxu0 %v4724
    %8549 = vmatmul.f32.gmra.mxu0 %v7933
    %v8550 = vpop.f32.mrf.mxu0
    %v8551 = vadd.f32 0.0, %v8550
    %8552 = vdwg.mxu0
    %8553 = vmatpush.msra.mxu0 %v4972
    %8554 = vmatpush.msra.mxu0 %v4964
    %8555 = vmatpush.msra.mxu0 %v4956
    %8556 = vmatpush.msra.mxu0 %v4948
    %8557 = vmatpush.msra.mxu0 %v4940
    %8558 = vmatpush.msra.mxu0 %v4932
    %8559 = vmatpush.msra.mxu0 %v4924
    %8560 = vmatpush.msra.mxu0 %v4916
    %8561 = vmatpush.msra.mxu0 %v4908
    %8562 = vmatpush.msra.mxu0 %v4900
    %8563 = vmatpush.msra.mxu0 %v4892
    %8564 = vmatpush.msra.mxu0 %v4884
    %8565 = vmatpush.msra.mxu0 %v4876
    %8566 = vmatpush.msra.mxu0 %v4868
    %8567 = vmatpush.msra.mxu0 %v4860
    %8568 = vmatpush.msra.mxu0 %v4852
    %8569 = vmatmul.f32.gmra.mxu0 %v7934
    %v8570 = vpop.f32.mrf.mxu0
    %v8571 = vadd.f32 %v8551, %v8570
    %8572 = vdwg.mxu0
    %8573 = vmatpush.msra.mxu0 %v4845
    %8574 = vmatpush.msra.mxu0 %v4837
    %8575 = vmatpush.msra.mxu0 %v4829
    %8576 = vmatpush.msra.mxu0 %v4821
    %8577 = vmatpush.msra.mxu0 %v4813
    %8578 = vmatpush.msra.mxu0 %v4805
    %8579 = vmatpush.msra.mxu0 %v4797
    %8580 = vmatpush.msra.mxu0 %v4789
    %8581 = vmatpush.msra.mxu0 %v4781
    %8582 = vmatpush.msra.mxu0 %v4773
    %8583 = vmatpush.msra.mxu0 %v4765
    %8584 = vmatpush.msra.mxu0 %v4757
    %8585 = vmatpush.msra.mxu0 %v4749
    %8586 = vmatpush.msra.mxu0 %v4741
    %8587 = vmatpush.msra.mxu0 %v4733
    %8588 = vmatpush.msra.mxu0 %v4725
    %8589 = vmatmul.f32.gmra.mxu0 %v7933
    %v8590 = vpop.f32.mrf.mxu0
    %v8591 = vadd.f32 0.0, %v8590
    %8592 = vdwg.mxu0
    %8593 = vmatpush.msra.mxu0 %v4973
    %8594 = vmatpush.msra.mxu0 %v4965
    %8595 = vmatpush.msra.mxu0 %v4957
    %8596 = vmatpush.msra.mxu0 %v4949
    %8597 = vmatpush.msra.mxu0 %v4941
    %8598 = vmatpush.msra.mxu0 %v4933
    %8599 = vmatpush.msra.mxu0 %v4925
    %8600 = vmatpush.msra.mxu0 %v4917
    %8601 = vmatpush.msra.mxu0 %v4909
    %8602 = vmatpush.msra.mxu0 %v4901
    %8603 = vmatpush.msra.mxu0 %v4893
    %8604 = vmatpush.msra.mxu0 %v4885
    %8605 = vmatpush.msra.mxu0 %v4877
    %8606 = vmatpush.msra.mxu0 %v4869
    %8607 = vmatpush.msra.mxu0 %v4861
    %8608 = vmatpush.msra.mxu0 %v4853
    %8609 = vmatmul.f32.gmra.mxu0 %v7934
    %v8610 = vpop.f32.mrf.mxu0
    %v8611 = vadd.f32 %v8591, %v8610
    %8612 = vdwg.mxu0
    %8613 = vmatpush.msra.mxu0 %v4846
    %8614 = vmatpush.msra.mxu0 %v4838
    %8615 = vmatpush.msra.mxu0 %v4830
    %8616 = vmatpush.msra.mxu0 %v4822
    %8617 = vmatpush.msra.mxu0 %v4814
    %8618 = vmatpush.msra.mxu0 %v4806
    %8619 = vmatpush.msra.mxu0 %v4798
    %8620 = vmatpush.msra.mxu0 %v4790
    %8621 = vmatpush.msra.mxu0 %v4782
    %8622 = vmatpush.msra.mxu0 %v4774
    %8623 = vmatpush.msra.mxu0 %v4766
    %8624 = vmatpush.msra.mxu0 %v4758
    %8625 = vmatpush.msra.mxu0 %v4750
    %8626 = vmatpush.msra.mxu0 %v4742
    %8627 = vmatpush.msra.mxu0 %v4734
    %8628 = vmatpush.msra.mxu0 %v4726
    %8629 = vmatmul.f32.gmra.mxu0 %v7933
    %v8630 = vpop.f32.mrf.mxu0
    %v8631 = vadd.f32 0.0, %v8630
    %8632 = vdwg.mxu0
    %8633 = vmatpush.msra.mxu0 %v4974
    %8634 = vmatpush.msra.mxu0 %v4966
    %8635 = vmatpush.msra.mxu0 %v4958
    %8636 = vmatpush.msra.mxu0 %v4950
    %8637 = vmatpush.msra.mxu0 %v4942
    %8638 = vmatpush.msra.mxu0 %v4934
    %8639 = vmatpush.msra.mxu0 %v4926
    %8640 = vmatpush.msra.mxu0 %v4918
    %8641 = vmatpush.msra.mxu0 %v4910
    %8642 = vmatpush.msra.mxu0 %v4902
    %8643 = vmatpush.msra.mxu0 %v4894
    %8644 = vmatpush.msra.mxu0 %v4886
    %8645 = vmatpush.msra.mxu0 %v4878
    %8646 = vmatpush.msra.mxu0 %v4870
    %8647 = vmatpush.msra.mxu0 %v4862
    %8648 = vmatpush.msra.mxu0 %v4854
    %8649 = vmatmul.f32.gmra.mxu0 %v7934
    %v8650 = vpop.f32.mrf.mxu0
    %v8651 = vadd.f32 %v8631, %v8650
    %8652 = vdwg.mxu0
    %8653 = vmatpush.msra.mxu0 %v4847
    %8654 = vmatpush.msra.mxu0 %v4839
    %8655 = vmatpush.msra.mxu0 %v4831
    %8656 = vmatpush.msra.mxu0 %v4823
    %8657 = vmatpush.msra.mxu0 %v4815
    %8658 = vmatpush.msra.mxu0 %v4807
    %8659 = vmatpush.msra.mxu0 %v4799
    %8660 = vmatpush.msra.mxu0 %v4791
    %8661 = vmatpush.msra.mxu0 %v4783
    %8662 = vmatpush.msra.mxu0 %v4775
    %8663 = vmatpush.msra.mxu0 %v4767
    %8664 = vmatpush.msra.mxu0 %v4759
    %8665 = vmatpush.msra.mxu0 %v4751
    %8666 = vmatpush.msra.mxu0 %v4743
    %8667 = vmatpush.msra.mxu0 %v4735
    %8668 = vmatpush.msra.mxu0 %v4727
    %8669 = vmatmul.f32.gmra.mxu0 %v7933
    %v8670 = vpop.f32.mrf.mxu0
    %v8671 = vadd.f32 0.0, %v8670
    %8672 = vdwg.mxu0
    %8673 = vmatpush.msra.mxu0 %v4975
    %8674 = vmatpush.msra.mxu0 %v4967
    %8675 = vmatpush.msra.mxu0 %v4959
    %8676 = vmatpush.msra.mxu0 %v4951
    %8677 = vmatpush.msra.mxu0 %v4943
    %8678 = vmatpush.msra.mxu0 %v4935
    %8679 = vmatpush.msra.mxu0 %v4927
    %8680 = vmatpush.msra.mxu0 %v4919
    %8681 = vmatpush.msra.mxu0 %v4911
    %8682 = vmatpush.msra.mxu0 %v4903
    %8683 = vmatpush.msra.mxu0 %v4895
    %8684 = vmatpush.msra.mxu0 %v4887
    %8685 = vmatpush.msra.mxu0 %v4879
    %8686 = vmatpush.msra.mxu0 %v4871
    %8687 = vmatpush.msra.mxu0 %v4863
    %8688 = vmatpush.msra.mxu0 %v4855
    %8689 = vmatmul.f32.gmra.mxu0 %v7934
    %v8690 = vpop.f32.mrf.mxu0
    %v8691 = vadd.f32 %v8671, %v8690
    %8692 = vdwg.mxu0
    %8693 = vmatpush.msra.mxu0 %v4848
    %8694 = vmatpush.msra.mxu0 %v4840
    %8695 = vmatpush.msra.mxu0 %v4832
    %8696 = vmatpush.msra.mxu0 %v4824
    %8697 = vmatpush.msra.mxu0 %v4816
    %8698 = vmatpush.msra.mxu0 %v4808
    %8699 = vmatpush.msra.mxu0 %v4800
    %8700 = vmatpush.msra.mxu0 %v4792
    %8701 = vmatpush.msra.mxu0 %v4784
    %8702 = vmatpush.msra.mxu0 %v4776
    %8703 = vmatpush.msra.mxu0 %v4768
    %8704 = vmatpush.msra.mxu0 %v4760
    %8705 = vmatpush.msra.mxu0 %v4752
    %8706 = vmatpush.msra.mxu0 %v4744
    %8707 = vmatpush.msra.mxu0 %v4736
    %8708 = vmatpush.msra.mxu0 %v4728
    %8709 = vmatmul.f32.gmra.mxu0 %v7933
    %v8710 = vpop.f32.mrf.mxu0
    %v8711 = vadd.f32 0.0, %v8710
    %8712 = vdwg.mxu0
    %8713 = vmatpush.msra.mxu0 %v4976
    %8714 = vmatpush.msra.mxu0 %v4968
    %8715 = vmatpush.msra.mxu0 %v4960
    %8716 = vmatpush.msra.mxu0 %v4952
    %8717 = vmatpush.msra.mxu0 %v4944
    %8718 = vmatpush.msra.mxu0 %v4936
    %8719 = vmatpush.msra.mxu0 %v4928
    %8720 = vmatpush.msra.mxu0 %v4920
    %8721 = vmatpush.msra.mxu0 %v4912
    %8722 = vmatpush.msra.mxu0 %v4904
    %8723 = vmatpush.msra.mxu0 %v4896
    %8724 = vmatpush.msra.mxu0 %v4888
    %8725 = vmatpush.msra.mxu0 %v4880
    %8726 = vmatpush.msra.mxu0 %v4872
    %8727 = vmatpush.msra.mxu0 %v4864
    %8728 = vmatpush.msra.mxu0 %v4856
    %8729 = vmatmul.f32.gmra.mxu0 %v7934
    %v8730 = vpop.f32.mrf.mxu0
    %v8731 = vadd.f32 %v8711, %v8730
    %8732 = vdwg.mxu0
    %v8733 = vadd.f32 %v8405, %v8451
    %v8734 = vadd.f32 %v8406, %v8491
    %v8735 = vadd.f32 %v8407, %v8531
    %v8736 = vadd.f32 %v8408, %v8571
    %v8737 = vadd.f32 %v8409, %v8611
    %v8738 = vadd.f32 %v8410, %v8651
    %v8739 = vadd.f32 %v8411, %v8691
    %v8740 = vadd.f32 %v8412, %v8731
    %v8741 = vxor.u32 %v8733, 2147483648
    %v8742 = vxor.u32 %v8734, 2147483648
    %v8743 = vmul.f32 %v8741, 1.442695
    %v8744 = vpow.pop %v8743
    %v8745 = vmul.f32 %v8742, 1.442695
    %v8746 = vpow.pop %v8745
    %v8747 = vadd.f32 %v8744, 1.0
    %v8748 = vadd.f32 %v8746, 1.0
    %v8749 = vrcp.pop %v8747
    %v8750 = vmul.f32 %v8747, %v8749
    %v8751 = vsub.f32 1.0, %v8750
    %v8752 = vmul.f32 %v8749, %v8751
    %v8753 = vadd.f32 %v8749, %v8752
    %vm8754 = vweird.f32 %v8747
    %vm8755 = vweird.f32 %v8749
    %vm8756 = vmor %vm8754, %vm8755
    %v8757 = vsel %vm8756, %v8749, %v8753
    %v8758 = vand.u32 2147483647, %v8747
    %vm8759 = vcmp.eq.f32.partialorder %v8758, 8.507059e+37
    %v8760 = vand.u32 %v8747, 2147483648
    %v8761 = vor.u32 1.1754944e-38, %v8760
    %v8762 = vsel %vm8759, %v8761, %v8757
    %v8763 = vmul.f32 1.0, %v8762
    %v8764 = vrcp.pop %v8748
    %v8765 = vmul.f32 %v8748, %v8764
    %v8766 = vsub.f32 1.0, %v8765
    %v8767 = vmul.f32 %v8764, %v8766
    %v8768 = vadd.f32 %v8764, %v8767
    %vm8769 = vweird.f32 %v8748
    %vm8770 = vweird.f32 %v8764
    %vm8771 = vmor %vm8769, %vm8770
    %v8772 = vsel %vm8771, %v8764, %v8768
    %v8773 = vand.u32 2147483647, %v8748
    %vm8774 = vcmp.eq.f32.partialorder %v8773, 8.507059e+37
    %v8775 = vand.u32 %v8748, 2147483648
    %v8776 = vor.u32 1.1754944e-38, %v8775
    %v8777 = vsel %vm8774, %v8776, %v8772
    %v8778 = vmul.f32 1.0, %v8777
    %v8779 = vxor.u32 %v8735, 2147483648
    %v8780 = vxor.u32 %v8736, 2147483648
    %v8781 = vmul.f32 %v8779, 1.442695
    %v8782 = vpow.pop %v8781
    %v8783 = vmul.f32 %v8780, 1.442695
    %v8784 = vpow.pop %v8783
    %v8785 = vadd.f32 %v8782, 1.0
    %v8786 = vadd.f32 %v8784, 1.0
    %v8787 = vrcp.pop %v8785
    %v8788 = vmul.f32 %v8785, %v8787
    %v8789 = vsub.f32 1.0, %v8788
    %v8790 = vmul.f32 %v8787, %v8789
    %v8791 = vadd.f32 %v8787, %v8790
    %vm8792 = vweird.f32 %v8785
    %vm8793 = vweird.f32 %v8787
    %vm8794 = vmor %vm8792, %vm8793
    %v8795 = vsel %vm8794, %v8787, %v8791
    %v8796 = vand.u32 2147483647, %v8785
    %vm8797 = vcmp.eq.f32.partialorder %v8796, 8.507059e+37
    %v8798 = vand.u32 %v8785, 2147483648
    %v8799 = vor.u32 1.1754944e-38, %v8798
    %v8800 = vsel %vm8797, %v8799, %v8795
    %v8801 = vmul.f32 1.0, %v8800
    %v8802 = vrcp.pop %v8786
    %v8803 = vmul.f32 %v8786, %v8802
    %v8804 = vsub.f32 1.0, %v8803
    %v8805 = vmul.f32 %v8802, %v8804
    %v8806 = vadd.f32 %v8802, %v8805
    %vm8807 = vweird.f32 %v8786
    %vm8808 = vweird.f32 %v8802
    %vm8809 = vmor %vm8807, %vm8808
    %v8810 = vsel %vm8809, %v8802, %v8806
    %v8811 = vand.u32 2147483647, %v8786
    %vm8812 = vcmp.eq.f32.partialorder %v8811, 8.507059e+37
    %v8813 = vand.u32 %v8786, 2147483648
    %v8814 = vor.u32 1.1754944e-38, %v8813
    %v8815 = vsel %vm8812, %v8814, %v8810
    %v8816 = vmul.f32 1.0, %v8815
    %v8817 = vtanh.pop %v8737
    %v8818 = vtanh.pop %v8738
    %v8819 = vxor.u32 %v8739, 2147483648
    %v8820 = vxor.u32 %v8740, 2147483648
    %v8821 = vmul.f32 %v8819, 1.442695
    %v8822 = vpow.pop %v8821
    %v8823 = vmul.f32 %v8820, 1.442695
    %v8824 = vpow.pop %v8823
    %v8825 = vadd.f32 %v8822, 1.0
    %v8826 = vadd.f32 %v8824, 1.0
    %v8827 = vrcp.pop %v8825
    %v8828 = vmul.f32 %v8825, %v8827
    %v8829 = vsub.f32 1.0, %v8828
    %v8830 = vmul.f32 %v8827, %v8829
    %v8831 = vadd.f32 %v8827, %v8830
    %vm8832 = vweird.f32 %v8825
    %vm8833 = vweird.f32 %v8827
    %vm8834 = vmor %vm8832, %vm8833
    %v8835 = vsel %vm8834, %v8827, %v8831
    %v8836 = vand.u32 2147483647, %v8825
    %vm8837 = vcmp.eq.f32.partialorder %v8836, 8.507059e+37
    %v8838 = vand.u32 %v8825, 2147483648
    %v8839 = vor.u32 1.1754944e-38, %v8838
    %v8840 = vsel %vm8837, %v8839, %v8835
    %v8841 = vmul.f32 1.0, %v8840
    %v8842 = vrcp.pop %v8826
    %v8843 = vmul.f32 %v8826, %v8842
    %v8844 = vsub.f32 1.0, %v8843
    %v8845 = vmul.f32 %v8842, %v8844
    %v8846 = vadd.f32 %v8842, %v8845
    %vm8847 = vweird.f32 %v8826
    %vm8848 = vweird.f32 %v8842
    %vm8849 = vmor %vm8847, %vm8848
    %v8850 = vsel %vm8849, %v8842, %v8846
    %v8851 = vand.u32 2147483647, %v8826
    %vm8852 = vcmp.eq.f32.partialorder %v8851, 8.507059e+37
    %v8853 = vand.u32 %v8826, 2147483648
    %v8854 = vor.u32 1.1754944e-38, %v8853
    %v8855 = vsel %vm8852, %v8854, %v8850
    %v8856 = vmul.f32 1.0, %v8855
    %v8857 = vmul.f32 %v8801, %v7929
    %v8858 = vmul.f32 %v8816, %v7930
    %v8859 = vmul.f32 %v8763, %v8817
    %v8860 = vmul.f32 %v8778, %v8818
    %v8861 = vadd.f32 %v8857, %v8859
    %v8862 = vadd.f32 %v8858, %v8860
    %v8863 = vtanh.pop %v8861
    %v8864 = vtanh.pop %v8862
    %v8865 = vmul.f32 %v8841, %v8863
    %v8866 = vmul.f32 %v8856, %v8864
    %v8867 = vld [vmem:[#allocation11] sm:$0xff]
    %v8868 = vld [vmem:[#allocation11 + $0x8] sm:$0xff]
    %v8870 = vrot.slane %v201, 2
    %8872 = vmatpush.xpose.msra.mxu0 0.0
    %8873 = vmatpush.xpose.msra.mxu0 0.0
    %8874 = vmatpush.xpose.msra.mxu0 0.0
    %8875 = vmatpush.xpose.msra.mxu0 0.0
    %8876 = vmatpush.xpose.msra.mxu0 0.0
    %8877 = vmatpush.xpose.msra.mxu0 0.0
    %8878 = vmatpush.xpose.msra.mxu0 0.0
    %8879 = vmatpush.xpose.msra.mxu0 0.0
    %8880 = vmatpush.xpose.msra.mxu0 0.0
    %8881 = vmatpush.xpose.msra.mxu0 0.0
    %8882 = vmatpush.xpose.msra.mxu0 0.0
    %8883 = vmatpush.xpose.msra.mxu0 0.0
    %8884 = vmatpush.xpose.msra.mxu0 0.0
    %8885 = vmatpush.xpose.msra.mxu0 0.0
    %8886 = vmatpush.xpose.msra.mxu0 0.0
    %8887 = vmatpush.xpose.msra.mxu0 %v8867
    %8888 = vmatmul.f32.gmra.mxu0 %v8865
    %v8889 = vpop.f32.mrf.mxu0
    %v8890 = vadd.f32 %v8870, %v8889
    %8891 = vdwg.mxu0
    %8892 = vmatpush.xpose.msra.mxu0 0.0
    %8893 = vmatpush.xpose.msra.mxu0 0.0
    %8894 = vmatpush.xpose.msra.mxu0 0.0
    %8895 = vmatpush.xpose.msra.mxu0 0.0
    %8896 = vmatpush.xpose.msra.mxu0 0.0
    %8897 = vmatpush.xpose.msra.mxu0 0.0
    %8898 = vmatpush.xpose.msra.mxu0 0.0
    %8899 = vmatpush.xpose.msra.mxu0 0.0
    %8900 = vmatpush.xpose.msra.mxu0 0.0
    %8901 = vmatpush.xpose.msra.mxu0 0.0
    %8902 = vmatpush.xpose.msra.mxu0 0.0
    %8903 = vmatpush.xpose.msra.mxu0 0.0
    %8904 = vmatpush.xpose.msra.mxu0 0.0
    %8905 = vmatpush.xpose.msra.mxu0 0.0
    %8906 = vmatpush.xpose.msra.mxu0 0.0
    %8907 = vmatpush.xpose.msra.mxu0 %v8868
    %8908 = vmatmul.f32.gmra.mxu0 %v8866
    %v8909 = vpop.f32.mrf.mxu0
    %v8910 = vadd.f32 %v8890, %v8909
    %8911 = vdwg.mxu0
    %v8912 = vrot.slane %v201, 1
    %8913 = vrot.lane.b32.xlu0 %v8912, 4
    %v8914 = vpop.permute.xlu0 %8913
    %v8916 = vmul.f32 %v8910, %v8914
    %8918 = vrot.lane.b32.xlu0 %v8916, 124
    %v8919 = vpop.permute.xlu0 %8918
    %v8921 = vadd.f32 %v8910, %v8919
    %v8923 = vrot.slane %v2256, 7
    %v8925 = vadd.f32 %v8921, %v8923
    %vm8926 = vcmask 24576
    %8927 = vst.msk [vmem:[#allocation20] sm:$0x1] %vm8926, %v8925
    // Predicated region
    $region90: #{net_forward.1} parent=1 // pred_check
      _
    $region91: #{net_forward.1} parent=1 // pred_check_branch
      %8929 = sbr.rel (0) target = $region93
    $region92: #{net_forward.1} parent=1 // pred_region
      %8931 = vsyncadd [#allocation7], 0
      %s8933 = sshll.u32 [#allocation20], 4
      %s8934 = int_to_ptr.vmem [resolvable:$true] %s8933
      %s8935 = sshll.u32 %s13, 4
      %s8936 = int_to_ptr.hbm [resolvable:$true] %s8935
      %8938 = dma.vmem_to_hbm [thread:$0]  %s8934, 16, %s8936, [#allocation7]
    $region93: #{net_forward.1} parent=1 // pred_fallthru
      _
    // Predicated region
    $region94: #{net_forward.1} parent=1 // pred_check
      _
    $region95: #{net_forward.1} parent=1 // pred_check_branch
      %8940 = sbr.rel (0) target = $region97
    $region96: #{net_forward.1} parent=1 // pred_region
      %8942 = dma.done [#allocation7], 16
    $region97: #{net_forward.1} parent=1 // pred_fallthru
      _
    %8943 = vsyncpa [#allocation6], 1
    %8944 = vsyncpa [#allocation9], 1
    %8945 = vsyncpa [#allocation12], 1
    %8946 = vsyncpa [#allocation15], 1
    %8947 = vsyncpa [#allocation18], 1
    %8948 = vsyncpa [#allocation7], 1
  %8949 = vsyncmov [#allocation4]
  %s8950 = vpop.sfrf %8949
  %p8951 = scmp.eq.s32.totalorder %s8950, 0
  %p8952 = pneg %p8951
  %8954 = shalt.err (%p8952)
  %s8955 = scalar_lea.sflag [#allocation4], 1
  %8956 = vsyncmov %s8955
  %s8957 = vpop.sfrf %8956
  %p8958 = scmp.eq.s32.totalorder %s8957, 0
  %p8959 = pneg %p8958
  %8961 = shalt.err (%p8959)

</llo_original>
